<compile_context>
chip_gen: v6e
topology: v6e:2x2x1
jax: 0.10.0
libtpu: 0.0.40
codegen_flags: <defaults>
</compile_context>

<pallas_src>
import numpy as np
import jax
import jax.numpy as jnp
from jax.experimental import pallas as pl
from jax.experimental.pallas import tpu as pltpu


# --------------------------- fixed architecture ---------------------------
IN_H = IN_W = 32        # input spatial size (forced by fc1 = 16*5*5)
IN_C = 3
K = 5                   # conv kernel size
C1OUT, C1_HW = 6, 28    # conv1: 3->6,  32 -> 28
P1_HW = 14              # pool1: 28 -> 14
C2OUT, C2_HW = 16, 10   # conv2: 6->16, 14 -> 10
P2_HW = 5               # pool2: 10 -> 5
N1, N2, N3 = 120, 84, 10
LANES = 128             # lane-dense width for the FC stage / output

X_W = IN_W * IN_C       # 96   input row width, cols = (w, c)
A1_W = C1_HW * C1OUT    # 168  conv1 row width, cols = (wo, co)
M1_W = A1_W - C1OUT     # 162  expanded pool1 width  (valid cols: 12*wp + c)
A2_W = C2_HW * C2OUT    # 160  conv2 row width, cols = (wo, co)
M2_W = A2_W - C2OUT     # 144  expanded pool2 width  (valid cols: 32*wp + co)

BT = 8                  # images per grid step (stacked along matmul M)


# ------------------------------ Pallas kernel ------------------------------
def _net_kernel(x_ref, w1_ref, b1_ref, w2_ref, b2_ref,
                f1_ref, fb1_ref, f2_ref, fb2_ref, f3_ref, fb3_ref, o_ref):
    f32 = jnp.float32
    bf16 = jnp.bfloat16

    xs = x_ref[...]                         # (BT*32, 96) bf16, rows = b*32 + h
    R0 = BT * IN_H                          # 256 stacked rows
    R1 = R0 - 4                             # conv1 rows   (valid: b*32 + ho,  ho<28)
    R2 = R0 - 13                            # conv2 rows   (valid: b*32 + 2*ho2, ho2<10)
    RF = R0 - 31                            # fc1 rows     (valid: b*32)

    # conv1 (5x5, 3->6): 5 banded MXU matmuls over the whole image stack.
    acc1 = jnp.dot(xs[0:R1], w1_ref[0], preferred_element_type=f32)
    for ki in range(1, K):
        acc1 = acc1 + jnp.dot(xs[ki:ki + R1], w1_ref[ki],
                              preferred_element_type=f32)
    a1 = jnp.maximum(acc1 + b1_ref[...], 0.0)                    # (R1, 168) f32

    # pool1 (2x2/2), expanded: valid rows b*32 + 2*hp, valid cols 12*wp + c.
    m1h = jnp.maximum(a1[0:R1 - 1], a1[1:R1])
    m1 = jnp.maximum(m1h[:, 0:M1_W],
                     m1h[:, C1OUT:C1OUT + M1_W]).astype(bf16)    # (R0-5, 162)

    # conv2 (5x5, 6->16) on the expanded pool1 layout; row shift = 2*ki.
    acc2 = jnp.dot(m1[0:R2], w2_ref[0], preferred_element_type=f32)
    for ki in range(1, K):
        acc2 = acc2 + jnp.dot(m1[2 * ki:2 * ki + R2], w2_ref[ki],
                              preferred_element_type=f32)
    a2 = jnp.maximum(acc2 + b2_ref[...], 0.0)                    # (R2, 160) f32

    # pool2, expanded: valid rows b*32 + 4*hp2, valid cols 32*wp + co.
    m2h = jnp.maximum(a2[0:R2 - 2], a2[2:R2])
    m2 = jnp.maximum(m2h[:, 0:M2_W],
                     m2h[:, C2OUT:C2OUT + M2_W]).astype(bf16)    # (R0-15, 144)

    # fc1: torch (C,H,W) flatten order + stride selection folded into f1;
    # same row-shift trick (shift 4*hp2), valid output rows at b*32.
    y1 = jnp.dot(m2[0:RF], f1_ref[0], preferred_element_type=f32)
    for hp in range(1, P2_HW):
        y1 = y1 + jnp.dot(m2[4 * hp:4 * hp + RF], f1_ref[hp],
                          preferred_element_type=f32)            # (RF, 128) f32

    # Compact to one row per image, then bias + ReLU.
    y = jnp.concatenate([y1[b * IN_H:b * IN_H + 1, :] for b in range(BT)],
                        axis=0)                                  # (BT, 128)
    y = jnp.maximum(y + fb1_ref[...], 0.0)

    # fc2 (+ReLU) and fc3 — lane-dense (128 wide), bf16 operands, f32 acc.
    y = jnp.maximum(jnp.dot(y.astype(bf16), f2_ref[...],
                            preferred_element_type=f32) + fb2_ref[...], 0.0)
    y = jnp.dot(y.astype(bf16), f3_ref[...],
                preferred_element_type=f32) + fb3_ref[...]

    o_ref[...] = y                                               # dense (BT, 128)


# ------------------------------ parameters --------------------------------
def init_params(key):
    """torch-style uniform(-1/sqrt(fan_in), 1/sqrt(fan_in)) init."""
    def uni(k, shape, fan_in):
        bound = 1.0 / np.sqrt(float(fan_in))
        return jax.random.uniform(k, shape, jnp.float32, -bound, bound)

    ks = jax.random.split(key, 10)
    return {
        "conv1_w": uni(ks[0], (6, 3, 5, 5), 3 * 5 * 5),
        "conv1_b": uni(ks[1], (6,), 3 * 5 * 5),
        "conv2_w": uni(ks[2], (16, 6, 5, 5), 6 * 5 * 5),
        "conv2_b": uni(ks[3], (16,), 6 * 5 * 5),
        "fc1_w": uni(ks[4], (120, 400), 400),     # torch layout (out, in)
        "fc1_b": uni(ks[5], (120,), 400),
        "fc2_w": uni(ks[6], (84, 120), 120),
        "fc2_b": uni(ks[7], (84,), 120),
        "fc3_w": uni(ks[8], (10, 84), 84),
        "fc3_b": uni(ks[9], (10,), 84),
    }


def prepare_params(params):
    """One-time (host/numpy) folding of all layout plumbing into weights:
    conv banding, pool stride selection, (C,H,W) flatten order, FC transposes,
    padding to the 128-lane vreg width, and the bf16 cast of MXU operands."""
    w1 = np.asarray(params["conv1_w"], np.float32)
    b1 = np.asarray(params["conv1_b"], np.float32)
    w2 = np.asarray(params["conv2_w"], np.float32)
    b2 = np.asarray(params["conv2_b"], np.float32)
    fw1 = np.asarray(params["fc1_w"], np.float32)
    fb1 = np.asarray(params["fc1_b"], np.float32)
    fw2 = np.asarray(params["fc2_w"], np.float32)
    fb2 = np.asarray(params["fc2_b"], np.float32)
    fw3 = np.asarray(params["fc3_w"], np.float32)
    fb3 = np.asarray(params["fc3_b"], np.float32)

    # conv1 banded matrices: W1m[ki, (wo+kj)*3+ci, wo*6+co] = w1[co, ci, ki, kj].
    W1m = np.zeros((K, X_W, A1_W), np.float32)
    for ki in range(K):
        for kj in range(K):
            blk = w1[:, :, ki, kj].T                        # (Cin=3, Cout=6)
            for wo in range(C1_HW):
                r, c = (wo + kj) * IN_C, wo * C1OUT
                W1m[ki, r:r + IN_C, c:c + C1OUT] = blk
    B1m = np.tile(b1, C1_HW)[None, :]                       # (1, 168)

    # conv2 banded matrices against the expanded pool1 layout
    # (valid input cols 12*wp + ci): W2m[ki, 12*(wo+kj)+ci, 16*wo+co].
    W2m = np.zeros((K, M1_W, A2_W), np.float32)
    for ki in range(K):
        for kj in range(K):
            blk = w2[:, :, ki, kj].T                        # (Cin=6, Cout=16)
            for wo in range(C2_HW):
                r, c = (wo + kj) * 2 * C1OUT, wo * C2OUT
                W2m[ki, r:r + C1OUT, c:c + C2OUT] = blk
    B2m = np.tile(b2, C2_HW)[None, :]                       # (1, 160)

    # fc1 against the expanded pool2 layout (valid cols 32*wp + co), torch
    # (C, H, W) flatten order folded in; output padded to 128 lanes.
    F1m = np.zeros((P2_HW, M2_W, LANES), np.float32)
    for hp in range(P2_HW):
        for wp in range(P2_HW):
            for co in range(C2OUT):
                flat = co * P2_HW * P2_HW + hp * P2_HW + wp
                F1m[hp, 2 * C2OUT * wp + co, :N1] = fw1[:, flat]
    FB1m = np.zeros((1, LANES), np.float32)
    FB1m[0, :N1] = fb1

    F2m = np.zeros((LANES, LANES), np.float32)
    F2m[:N1, :N2] = fw2.T
    FB2m = np.zeros((1, LANES), np.float32)
    FB2m[0, :N2] = fb2

    F3m = np.zeros((LANES, LANES), np.float32)
    F3m[:N2, :N3] = fw3.T
    FB3m = np.zeros((1, LANES), np.float32)
    FB3m[0, :N3] = fb3

    bf16 = jnp.bfloat16
    return {
        "W1": jnp.asarray(W1m, bf16), "B1": jnp.asarray(B1m),
        "W2": jnp.asarray(W2m, bf16), "B2": jnp.asarray(B2m),
        "F1": jnp.asarray(F1m, bf16), "FB1": jnp.asarray(FB1m),
        "F2": jnp.asarray(F2m, bf16), "FB2": jnp.asarray(FB2m),
        "F3": jnp.asarray(F3m, bf16), "FB3": jnp.asarray(FB3m),
    }


# ------------------------------ the model ---------------------------------
@jax.jit
def net_forward(x_nchw, prep):
    """Forward pass of Net.  x_nchw: (B, 3, 32, 32) f32 -> (B, 10) f32."""
    B = x_nchw.shape[0]
    Bp = ((B + BT - 1) // BT) * BT          # pad batch to a multiple of BT
    x = x_nchw
    if Bp != B:
        x = jnp.pad(x, ((0, Bp - B), (0, 0), (0, 0), (0, 0)))

    # NCHW -> stacked rows (Bp*32, 96) with cols = (w, c), bf16: the only
    # per-forward XLA glue outside the fused kernel.
    x2d = jnp.transpose(x, (0, 2, 3, 1)).reshape(Bp * IN_H, X_W)
    x2d = x2d.astype(jnp.bfloat16)

    def c2(i):
        return (0, 0)

    def c3(i):
        return (0, 0, 0)

    out = pl.pallas_call(
        _net_kernel,
        out_shape=jax.ShapeDtypeStruct((Bp, LANES), jnp.float32),
        grid=(Bp // BT,),
        in_specs=[
            pl.BlockSpec((BT * IN_H, X_W), lambda i: (i, 0)),    # BT images
            pl.BlockSpec((K, X_W, A1_W), c3),                    # conv1 bands
            pl.BlockSpec((1, A1_W), c2),                         # conv1 bias row
            pl.BlockSpec((K, M1_W, A2_W), c3),                   # conv2 bands
            pl.BlockSpec((1, A2_W), c2),                         # conv2 bias row
            pl.BlockSpec((P2_HW, M2_W, LANES), c3),              # fc1 (folded)
            pl.BlockSpec((1, LANES), c2),                        # fc1 bias
            pl.BlockSpec((LANES, LANES), c2),                    # fc2
            pl.BlockSpec((1, LANES), c2),                        # fc2 bias
            pl.BlockSpec((LANES, LANES), c2),                    # fc3
            pl.BlockSpec((1, LANES), c2),                        # fc3 bias
        ],
        out_specs=pl.BlockSpec((BT, LANES), lambda i: (i, 0)),   # dense block
        compiler_params=pltpu.CompilerParams(
            dimension_semantics=("parallel",)),
    )(x2d, prep["W1"], prep["B1"], prep["W2"], prep["B2"],
      prep["F1"], prep["FB1"], prep["F2"], prep["FB2"],
      prep["F3"], prep["FB3"])

    return out[:B, :N3]


# --------------------------- pure-JAX reference ----------------------------
def reference_forward(x_nchw, params):
    """Pure-XLA reference (no Pallas) used to validate the fused kernel."""
    prec = jax.lax.Precision.HIGHEST
    x = jnp.transpose(x_nchw, (0, 2, 3, 1))                  # NHWC

    def conv_relu(x, w, b):
        y = jax.lax.conv_general_dilated(
            x, jnp.transpose(w, (2, 3, 1, 0)), (1, 1), "VALID",
            dimension_numbers=("NHWC", "HWIO", "NHWC"), precision=prec)
        return jax.nn.relu(y + b)

    def pool(x):
        return jax.lax.reduce_window(x, -jnp.inf, jax.lax.max,
                                     (1, 2, 2, 1), (1, 2, 2, 1), "VALID")

    x = pool(conv_relu(x, params["conv1_w"], params["conv1_b"]))
    x = pool(conv_relu(x, params["conv2_w"], params["conv2_b"]))
    B = x.shape[0]
    x = jnp.transpose(x, (0, 3, 1, 2)).reshape(B, C2OUT * P2_HW * P2_HW)
    x = jax.nn.relu(jnp.dot(x, params["fc1_w"].T, precision=prec) + params["fc1_b"])
    x = jax.nn.relu(jnp.dot(x, params["fc2_w"].T, precision=prec) + params["fc2_b"])
    return jnp.dot(x, params["fc3_w"].T, precision=prec) + params["fc3_b"]


if __name__ == "__main__":
    key = jax.random.PRNGKey(0)
    k_x, k_p = jax.random.split(key)

    # fc1's 16*5*5 input forces the 32x32x3 input of the blitz CNN.
    x = jax.random.normal(k_x, (2, 3, 32, 32), dtype=jnp.float32)
    params = init_params(k_p)
    prep = prepare_params(params)          # one-time weight folding (host)

    out = jax.block_until_ready(net_forward(x, prep))
    assert out.shape == (2, 10) and out.dtype == jnp.float32

    ref = jax.block_until_ready(reference_forward(x, params))
    # bf16 MXU operands vs. f32 HIGHEST reference -> loose but meaningful tol.
    np.testing.assert_allclose(np.asarray(out), np.asarray(ref),
                               rtol=5e-2, atol=3e-2)
    print("KERNEL_OK")
</pallas_src>

<mosaic_0001>
module attributes {stable_mosaic.version = 11 : i64} {
  func.func @_net_kernel(%arg0: i32, %arg1: memref<256x96xbf16, #tpu.memory_space<vmem>>, %arg2: memref<5x96x168xbf16, #tpu.memory_space<vmem>>, %arg3: memref<1x168xf32, #tpu.memory_space<vmem>>, %arg4: memref<5x162x160xbf16, #tpu.memory_space<vmem>>, %arg5: memref<1x160xf32, #tpu.memory_space<vmem>>, %arg6: memref<5x144x128xbf16, #tpu.memory_space<vmem>>, %arg7: memref<1x128xf32, #tpu.memory_space<vmem>>, %arg8: memref<128x128xbf16, #tpu.memory_space<vmem>>, %arg9: memref<1x128xf32, #tpu.memory_space<vmem>>, %arg10: memref<128x128xbf16, #tpu.memory_space<vmem>>, %arg11: memref<1x128xf32, #tpu.memory_space<vmem>>, %arg12: memref<8x128xf32, #tpu.memory_space<vmem>>) attributes {dimension_semantics = [#tpu.dimension_semantics<parallel>], iteration_bounds = array<i64: 1>, scalar_prefetch = 0 : i64, scratch_operands = 0 : i64, tpu.core_type = #tpu.core_type<tc>, window_params = [{transform_indices = @transform_0, window_bounds = array<i64: 256, 96>}, {pipeline_mode = #tpu.pipeline_mode<synchronous>, transform_indices = @transform_1, window_bounds = array<i64: 5, 96, 168>}, {pipeline_mode = #tpu.pipeline_mode<synchronous>, transform_indices = @transform_2, window_bounds = array<i64: 1, 168>}, {pipeline_mode = #tpu.pipeline_mode<synchronous>, transform_indices = @transform_3, window_bounds = array<i64: 5, 162, 160>}, {pipeline_mode = #tpu.pipeline_mode<synchronous>, transform_indices = @transform_4, window_bounds = array<i64: 1, 160>}, {pipeline_mode = #tpu.pipeline_mode<synchronous>, transform_indices = @transform_5, window_bounds = array<i64: 5, 144, 128>}, {pipeline_mode = #tpu.pipeline_mode<synchronous>, transform_indices = @transform_6, window_bounds = array<i64: 1, 128>}, {pipeline_mode = #tpu.pipeline_mode<synchronous>, transform_indices = @transform_7, window_bounds = array<i64: 128, 128>}, {pipeline_mode = #tpu.pipeline_mode<synchronous>, transform_indices = @transform_8, window_bounds = array<i64: 1, 128>}, {pipeline_mode = #tpu.pipeline_mode<synchronous>, transform_indices = @transform_9, window_bounds = array<i64: 128, 128>}, {pipeline_mode = #tpu.pipeline_mode<synchronous>, transform_indices = @transform_10, window_bounds = array<i64: 1, 128>}, {transform_indices = @transform_11, window_bounds = array<i64: 8, 128>}]} {
    %c0 = arith.constant 0 : index
    %c0_0 = arith.constant 0 : index
    %0 = vector.load %arg1[%c0, %c0_0] : memref<256x96xbf16, #tpu.memory_space<vmem>>, vector<256x96xbf16>
    %1 = vector.extract_strided_slice %0 {offsets = [0, 0], sizes = [252, 96], strides = [1, 1]} : vector<256x96xbf16> to vector<252x96xbf16>
    %c0_1 = arith.constant 0 : index
    %c0_2 = arith.constant 0 : index
    %c0_3 = arith.constant 0 : index
    %2 = vector.load %arg2[%c0_1, %c0_2, %c0_3] : memref<5x96x168xbf16, #tpu.memory_space<vmem>>, vector<1x96x168xbf16>
    %3 = vector.shape_cast %2 : vector<1x96x168xbf16> to vector<96x168xbf16>
    %cst = arith.constant dense<0.000000e+00> : vector<252x168xf32>
    %4 = tpu.matmul %1, %3, %cst {dimension_numbers = #tpu.dot_dimension_numbers<[1], [0], [0], [1], [0, 0, 1, 1], [], []>} : vector<252x96xbf16>, vector<96x168xbf16>, vector<252x168xf32> -> vector<252x168xf32>
    %5 = vector.extract_strided_slice %0 {offsets = [1, 0], sizes = [252, 96], strides = [1, 1]} : vector<256x96xbf16> to vector<252x96xbf16>
    %c1 = arith.constant 1 : index
    %c0_4 = arith.constant 0 : index
    %c0_5 = arith.constant 0 : index
    %6 = vector.load %arg2[%c1, %c0_4, %c0_5] : memref<5x96x168xbf16, #tpu.memory_space<vmem>>, vector<1x96x168xbf16>
    %7 = vector.shape_cast %6 : vector<1x96x168xbf16> to vector<96x168xbf16>
    %cst_6 = arith.constant dense<0.000000e+00> : vector<252x168xf32>
    %8 = tpu.matmul %5, %7, %cst_6 {dimension_numbers = #tpu.dot_dimension_numbers<[1], [0], [0], [1], [0, 0, 1, 1], [], []>} : vector<252x96xbf16>, vector<96x168xbf16>, vector<252x168xf32> -> vector<252x168xf32>
    %9 = arith.addf %4, %8 : vector<252x168xf32>
    %10 = vector.extract_strided_slice %0 {offsets = [2, 0], sizes = [252, 96], strides = [1, 1]} : vector<256x96xbf16> to vector<252x96xbf16>
    %c2 = arith.constant 2 : index
    %c0_7 = arith.constant 0 : index
    %c0_8 = arith.constant 0 : index
    %11 = vector.load %arg2[%c2, %c0_7, %c0_8] : memref<5x96x168xbf16, #tpu.memory_space<vmem>>, vector<1x96x168xbf16>
    %12 = vector.shape_cast %11 : vector<1x96x168xbf16> to vector<96x168xbf16>
    %cst_9 = arith.constant dense<0.000000e+00> : vector<252x168xf32>
    %13 = tpu.matmul %10, %12, %cst_9 {dimension_numbers = #tpu.dot_dimension_numbers<[1], [0], [0], [1], [0, 0, 1, 1], [], []>} : vector<252x96xbf16>, vector<96x168xbf16>, vector<252x168xf32> -> vector<252x168xf32>
    %14 = arith.addf %9, %13 : vector<252x168xf32>
    %15 = vector.extract_strided_slice %0 {offsets = [3, 0], sizes = [252, 96], strides = [1, 1]} : vector<256x96xbf16> to vector<252x96xbf16>
    %c3 = arith.constant 3 : index
    %c0_10 = arith.constant 0 : index
    %c0_11 = arith.constant 0 : index
    %16 = vector.load %arg2[%c3, %c0_10, %c0_11] : memref<5x96x168xbf16, #tpu.memory_space<vmem>>, vector<1x96x168xbf16>
    %17 = vector.shape_cast %16 : vector<1x96x168xbf16> to vector<96x168xbf16>
    %cst_12 = arith.constant dense<0.000000e+00> : vector<252x168xf32>
    %18 = tpu.matmul %15, %17, %cst_12 {dimension_numbers = #tpu.dot_dimension_numbers<[1], [0], [0], [1], [0, 0, 1, 1], [], []>} : vector<252x96xbf16>, vector<96x168xbf16>, vector<252x168xf32> -> vector<252x168xf32>
    %19 = arith.addf %14, %18 : vector<252x168xf32>
    %20 = vector.extract_strided_slice %0 {offsets = [4, 0], sizes = [252, 96], strides = [1, 1]} : vector<256x96xbf16> to vector<252x96xbf16>
    %c4 = arith.constant 4 : index
    %c0_13 = arith.constant 0 : index
    %c0_14 = arith.constant 0 : index
    %21 = vector.load %arg2[%c4, %c0_13, %c0_14] : memref<5x96x168xbf16, #tpu.memory_space<vmem>>, vector<1x96x168xbf16>
    %22 = vector.shape_cast %21 : vector<1x96x168xbf16> to vector<96x168xbf16>
    %cst_15 = arith.constant dense<0.000000e+00> : vector<252x168xf32>
    %23 = tpu.matmul %20, %22, %cst_15 {dimension_numbers = #tpu.dot_dimension_numbers<[1], [0], [0], [1], [0, 0, 1, 1], [], []>} : vector<252x96xbf16>, vector<96x168xbf16>, vector<252x168xf32> -> vector<252x168xf32>
    %24 = arith.addf %19, %23 : vector<252x168xf32>
    %c0_16 = arith.constant 0 : index
    %c0_17 = arith.constant 0 : index
    %25 = vector.load %arg3[%c0_16, %c0_17] : memref<1x168xf32, #tpu.memory_space<vmem>>, vector<1x168xf32>
    %26 = vector.broadcast %25 : vector<1x168xf32> to vector<252x168xf32>
    %27 = arith.addf %24, %26 : vector<252x168xf32>
    %cst_18 = arith.constant 0.000000e+00 : f32
    %28 = vector.broadcast %cst_18 : f32 to vector<252x168xf32>
    %29 = arith.maximumf %27, %28 : vector<252x168xf32>
    %30 = vector.extract_strided_slice %29 {offsets = [0, 0], sizes = [251, 168], strides = [1, 1]} : vector<252x168xf32> to vector<251x168xf32>
    %31 = vector.extract_strided_slice %29 {offsets = [1, 0], sizes = [251, 168], strides = [1, 1]} : vector<252x168xf32> to vector<251x168xf32>
    %32 = arith.maximumf %30, %31 : vector<251x168xf32>
    %33 = vector.extract_strided_slice %32 {offsets = [0, 0], sizes = [251, 162], strides = [1, 1]} : vector<251x168xf32> to vector<251x162xf32>
    %34 = vector.extract_strided_slice %32 {offsets = [0, 6], sizes = [251, 162], strides = [1, 1]} : vector<251x168xf32> to vector<251x162xf32>
    %35 = arith.maximumf %33, %34 : vector<251x162xf32>
    %36 = arith.truncf %35 : vector<251x162xf32> to vector<251x162xbf16>
    %37 = vector.extract_strided_slice %36 {offsets = [0, 0], sizes = [243, 162], strides = [1, 1]} : vector<251x162xbf16> to vector<243x162xbf16>
    %c0_19 = arith.constant 0 : index
    %c0_20 = arith.constant 0 : index
    %c0_21 = arith.constant 0 : index
    %38 = vector.load %arg4[%c0_19, %c0_20, %c0_21] : memref<5x162x160xbf16, #tpu.memory_space<vmem>>, vector<1x162x160xbf16>
    %39 = vector.shape_cast %38 : vector<1x162x160xbf16> to vector<162x160xbf16>
    %cst_22 = arith.constant dense<0.000000e+00> : vector<243x160xf32>
    %40 = tpu.matmul %37, %39, %cst_22 {dimension_numbers = #tpu.dot_dimension_numbers<[1], [0], [0], [1], [0, 0, 1, 1], [], []>} : vector<243x162xbf16>, vector<162x160xbf16>, vector<243x160xf32> -> vector<243x160xf32>
    %41 = vector.extract_strided_slice %36 {offsets = [2, 0], sizes = [243, 162], strides = [1, 1]} : vector<251x162xbf16> to vector<243x162xbf16>
    %c1_23 = arith.constant 1 : index
    %c0_24 = arith.constant 0 : index
    %c0_25 = arith.constant 0 : index
    %42 = vector.load %arg4[%c1_23, %c0_24, %c0_25] : memref<5x162x160xbf16, #tpu.memory_space<vmem>>, vector<1x162x160xbf16>
    %43 = vector.shape_cast %42 : vector<1x162x160xbf16> to vector<162x160xbf16>
    %cst_26 = arith.constant dense<0.000000e+00> : vector<243x160xf32>
    %44 = tpu.matmul %41, %43, %cst_26 {dimension_numbers = #tpu.dot_dimension_numbers<[1], [0], [0], [1], [0, 0, 1, 1], [], []>} : vector<243x162xbf16>, vector<162x160xbf16>, vector<243x160xf32> -> vector<243x160xf32>
    %45 = arith.addf %40, %44 : vector<243x160xf32>
    %46 = vector.extract_strided_slice %36 {offsets = [4, 0], sizes = [243, 162], strides = [1, 1]} : vector<251x162xbf16> to vector<243x162xbf16>
    %c2_27 = arith.constant 2 : index
    %c0_28 = arith.constant 0 : index
    %c0_29 = arith.constant 0 : index
    %47 = vector.load %arg4[%c2_27, %c0_28, %c0_29] : memref<5x162x160xbf16, #tpu.memory_space<vmem>>, vector<1x162x160xbf16>
    %48 = vector.shape_cast %47 : vector<1x162x160xbf16> to vector<162x160xbf16>
    %cst_30 = arith.constant dense<0.000000e+00> : vector<243x160xf32>
    %49 = tpu.matmul %46, %48, %cst_30 {dimension_numbers = #tpu.dot_dimension_numbers<[1], [0], [0], [1], [0, 0, 1, 1], [], []>} : vector<243x162xbf16>, vector<162x160xbf16>, vector<243x160xf32> -> vector<243x160xf32>
    %50 = arith.addf %45, %49 : vector<243x160xf32>
    %51 = vector.extract_strided_slice %36 {offsets = [6, 0], sizes = [243, 162], strides = [1, 1]} : vector<251x162xbf16> to vector<243x162xbf16>
    %c3_31 = arith.constant 3 : index
    %c0_32 = arith.constant 0 : index
    %c0_33 = arith.constant 0 : index
    %52 = vector.load %arg4[%c3_31, %c0_32, %c0_33] : memref<5x162x160xbf16, #tpu.memory_space<vmem>>, vector<1x162x160xbf16>
    %53 = vector.shape_cast %52 : vector<1x162x160xbf16> to vector<162x160xbf16>
    %cst_34 = arith.constant dense<0.000000e+00> : vector<243x160xf32>
    %54 = tpu.matmul %51, %53, %cst_34 {dimension_numbers = #tpu.dot_dimension_numbers<[1], [0], [0], [1], [0, 0, 1, 1], [], []>} : vector<243x162xbf16>, vector<162x160xbf16>, vector<243x160xf32> -> vector<243x160xf32>
    %55 = arith.addf %50, %54 : vector<243x160xf32>
    %56 = vector.extract_strided_slice %36 {offsets = [8, 0], sizes = [243, 162], strides = [1, 1]} : vector<251x162xbf16> to vector<243x162xbf16>
    %c4_35 = arith.constant 4 : index
    %c0_36 = arith.constant 0 : index
    %c0_37 = arith.constant 0 : index
    %57 = vector.load %arg4[%c4_35, %c0_36, %c0_37] : memref<5x162x160xbf16, #tpu.memory_space<vmem>>, vector<1x162x160xbf16>
    %58 = vector.shape_cast %57 : vector<1x162x160xbf16> to vector<162x160xbf16>
    %cst_38 = arith.constant dense<0.000000e+00> : vector<243x160xf32>
    %59 = tpu.matmul %56, %58, %cst_38 {dimension_numbers = #tpu.dot_dimension_numbers<[1], [0], [0], [1], [0, 0, 1, 1], [], []>} : vector<243x162xbf16>, vector<162x160xbf16>, vector<243x160xf32> -> vector<243x160xf32>
    %60 = arith.addf %55, %59 : vector<243x160xf32>
    %c0_39 = arith.constant 0 : index
    %c0_40 = arith.constant 0 : index
    %61 = vector.load %arg5[%c0_39, %c0_40] : memref<1x160xf32, #tpu.memory_space<vmem>>, vector<1x160xf32>
    %62 = vector.broadcast %61 : vector<1x160xf32> to vector<243x160xf32>
    %63 = arith.addf %60, %62 : vector<243x160xf32>
    %cst_41 = arith.constant 0.000000e+00 : f32
    %64 = vector.broadcast %cst_41 : f32 to vector<243x160xf32>
    %65 = arith.maximumf %63, %64 : vector<243x160xf32>
    %66 = vector.extract_strided_slice %65 {offsets = [0, 0], sizes = [241, 160], strides = [1, 1]} : vector<243x160xf32> to vector<241x160xf32>
    %67 = vector.extract_strided_slice %65 {offsets = [2, 0], sizes = [241, 160], strides = [1, 1]} : vector<243x160xf32> to vector<241x160xf32>
    %68 = arith.maximumf %66, %67 : vector<241x160xf32>
    %69 = vector.extract_strided_slice %68 {offsets = [0, 0], sizes = [241, 144], strides = [1, 1]} : vector<241x160xf32> to vector<241x144xf32>
    %70 = vector.extract_strided_slice %68 {offsets = [0, 16], sizes = [241, 144], strides = [1, 1]} : vector<241x160xf32> to vector<241x144xf32>
    %71 = arith.maximumf %69, %70 : vector<241x144xf32>
    %72 = arith.truncf %71 : vector<241x144xf32> to vector<241x144xbf16>
    %73 = vector.extract_strided_slice %72 {offsets = [0, 0], sizes = [225, 144], strides = [1, 1]} : vector<241x144xbf16> to vector<225x144xbf16>
    %c0_42 = arith.constant 0 : index
    %c0_43 = arith.constant 0 : index
    %c0_44 = arith.constant 0 : index
    %74 = vector.load %arg6[%c0_42, %c0_43, %c0_44] : memref<5x144x128xbf16, #tpu.memory_space<vmem>>, vector<1x144x128xbf16>
    %75 = vector.shape_cast %74 : vector<1x144x128xbf16> to vector<144x128xbf16>
    %cst_45 = arith.constant dense<0.000000e+00> : vector<225x128xf32>
    %76 = tpu.matmul %73, %75, %cst_45 {dimension_numbers = #tpu.dot_dimension_numbers<[1], [0], [0], [1], [0, 0, 1, 1], [], []>} : vector<225x144xbf16>, vector<144x128xbf16>, vector<225x128xf32> -> vector<225x128xf32>
    %77 = vector.extract_strided_slice %72 {offsets = [4, 0], sizes = [225, 144], strides = [1, 1]} : vector<241x144xbf16> to vector<225x144xbf16>
    %c1_46 = arith.constant 1 : index
    %c0_47 = arith.constant 0 : index
    %c0_48 = arith.constant 0 : index
    %78 = vector.load %arg6[%c1_46, %c0_47, %c0_48] : memref<5x144x128xbf16, #tpu.memory_space<vmem>>, vector<1x144x128xbf16>
    %79 = vector.shape_cast %78 : vector<1x144x128xbf16> to vector<144x128xbf16>
    %cst_49 = arith.constant dense<0.000000e+00> : vector<225x128xf32>
    %80 = tpu.matmul %77, %79, %cst_49 {dimension_numbers = #tpu.dot_dimension_numbers<[1], [0], [0], [1], [0, 0, 1, 1], [], []>} : vector<225x144xbf16>, vector<144x128xbf16>, vector<225x128xf32> -> vector<225x128xf32>
    %81 = arith.addf %76, %80 : vector<225x128xf32>
    %82 = vector.extract_strided_slice %72 {offsets = [8, 0], sizes = [225, 144], strides = [1, 1]} : vector<241x144xbf16> to vector<225x144xbf16>
    %c2_50 = arith.constant 2 : index
    %c0_51 = arith.constant 0 : index
    %c0_52 = arith.constant 0 : index
    %83 = vector.load %arg6[%c2_50, %c0_51, %c0_52] : memref<5x144x128xbf16, #tpu.memory_space<vmem>>, vector<1x144x128xbf16>
    %84 = vector.shape_cast %83 : vector<1x144x128xbf16> to vector<144x128xbf16>
    %cst_53 = arith.constant dense<0.000000e+00> : vector<225x128xf32>
    %85 = tpu.matmul %82, %84, %cst_53 {dimension_numbers = #tpu.dot_dimension_numbers<[1], [0], [0], [1], [0, 0, 1, 1], [], []>} : vector<225x144xbf16>, vector<144x128xbf16>, vector<225x128xf32> -> vector<225x128xf32>
    %86 = arith.addf %81, %85 : vector<225x128xf32>
    %87 = vector.extract_strided_slice %72 {offsets = [12, 0], sizes = [225, 144], strides = [1, 1]} : vector<241x144xbf16> to vector<225x144xbf16>
    %c3_54 = arith.constant 3 : index
    %c0_55 = arith.constant 0 : index
    %c0_56 = arith.constant 0 : index
    %88 = vector.load %arg6[%c3_54, %c0_55, %c0_56] : memref<5x144x128xbf16, #tpu.memory_space<vmem>>, vector<1x144x128xbf16>
    %89 = vector.shape_cast %88 : vector<1x144x128xbf16> to vector<144x128xbf16>
    %cst_57 = arith.constant dense<0.000000e+00> : vector<225x128xf32>
    %90 = tpu.matmul %87, %89, %cst_57 {dimension_numbers = #tpu.dot_dimension_numbers<[1], [0], [0], [1], [0, 0, 1, 1], [], []>} : vector<225x144xbf16>, vector<144x128xbf16>, vector<225x128xf32> -> vector<225x128xf32>
    %91 = arith.addf %86, %90 : vector<225x128xf32>
    %92 = vector.extract_strided_slice %72 {offsets = [16, 0], sizes = [225, 144], strides = [1, 1]} : vector<241x144xbf16> to vector<225x144xbf16>
    %c4_58 = arith.constant 4 : index
    %c0_59 = arith.constant 0 : index
    %c0_60 = arith.constant 0 : index
    %93 = vector.load %arg6[%c4_58, %c0_59, %c0_60] : memref<5x144x128xbf16, #tpu.memory_space<vmem>>, vector<1x144x128xbf16>
    %94 = vector.shape_cast %93 : vector<1x144x128xbf16> to vector<144x128xbf16>
    %cst_61 = arith.constant dense<0.000000e+00> : vector<225x128xf32>
    %95 = tpu.matmul %92, %94, %cst_61 {dimension_numbers = #tpu.dot_dimension_numbers<[1], [0], [0], [1], [0, 0, 1, 1], [], []>} : vector<225x144xbf16>, vector<144x128xbf16>, vector<225x128xf32> -> vector<225x128xf32>
    %96 = arith.addf %91, %95 : vector<225x128xf32>
    %97 = vector.extract_strided_slice %96 {offsets = [0, 0], sizes = [1, 128], strides = [1, 1]} : vector<225x128xf32> to vector<1x128xf32>
    %98 = vector.extract_strided_slice %96 {offsets = [32, 0], sizes = [1, 128], strides = [1, 1]} : vector<225x128xf32> to vector<1x128xf32>
    %99 = vector.extract_strided_slice %96 {offsets = [64, 0], sizes = [1, 128], strides = [1, 1]} : vector<225x128xf32> to vector<1x128xf32>
    %100 = vector.extract_strided_slice %96 {offsets = [96, 0], sizes = [1, 128], strides = [1, 1]} : vector<225x128xf32> to vector<1x128xf32>
    %101 = vector.extract_strided_slice %96 {offsets = [128, 0], sizes = [1, 128], strides = [1, 1]} : vector<225x128xf32> to vector<1x128xf32>
    %102 = vector.extract_strided_slice %96 {offsets = [160, 0], sizes = [1, 128], strides = [1, 1]} : vector<225x128xf32> to vector<1x128xf32>
    %103 = vector.extract_strided_slice %96 {offsets = [192, 0], sizes = [1, 128], strides = [1, 1]} : vector<225x128xf32> to vector<1x128xf32>
    %104 = vector.extract_strided_slice %96 {offsets = [224, 0], sizes = [1, 128], strides = [1, 1]} : vector<225x128xf32> to vector<1x128xf32>
    %105 = tpu.concatenate %97, %98, %99, %100, %101, %102, %103, %104 in 0 : vector<1x128xf32>, vector<1x128xf32>, vector<1x128xf32>, vector<1x128xf32>, vector<1x128xf32>, vector<1x128xf32>, vector<1x128xf32>, vector<1x128xf32> -> vector<8x128xf32>
    %c0_62 = arith.constant 0 : index
    %c0_63 = arith.constant 0 : index
    %106 = vector.load %arg7[%c0_62, %c0_63] : memref<1x128xf32, #tpu.memory_space<vmem>>, vector<1x128xf32>
    %107 = vector.broadcast %106 : vector<1x128xf32> to vector<8x128xf32>
    %108 = arith.addf %105, %107 : vector<8x128xf32>
    %cst_64 = arith.constant 0.000000e+00 : f32
    %109 = vector.broadcast %cst_64 : f32 to vector<8x128xf32>
    %110 = arith.maximumf %108, %109 : vector<8x128xf32>
    %111 = arith.truncf %110 : vector<8x128xf32> to vector<8x128xbf16>
    %c0_65 = arith.constant 0 : index
    %c0_66 = arith.constant 0 : index
    %112 = vector.load %arg8[%c0_65, %c0_66] : memref<128x128xbf16, #tpu.memory_space<vmem>>, vector<128x128xbf16>
    %cst_67 = arith.constant dense<0.000000e+00> : vector<8x128xf32>
    %113 = tpu.matmul %111, %112, %cst_67 {dimension_numbers = #tpu.dot_dimension_numbers<[1], [0], [0], [1], [0, 0, 1, 1], [], []>} : vector<8x128xbf16>, vector<128x128xbf16>, vector<8x128xf32> -> vector<8x128xf32>
    %c0_68 = arith.constant 0 : index
    %c0_69 = arith.constant 0 : index
    %114 = vector.load %arg9[%c0_68, %c0_69] : memref<1x128xf32, #tpu.memory_space<vmem>>, vector<1x128xf32>
    %115 = vector.broadcast %114 : vector<1x128xf32> to vector<8x128xf32>
    %116 = arith.addf %113, %115 : vector<8x128xf32>
    %cst_70 = arith.constant 0.000000e+00 : f32
    %117 = vector.broadcast %cst_70 : f32 to vector<8x128xf32>
    %118 = arith.maximumf %116, %117 : vector<8x128xf32>
    %119 = arith.truncf %118 : vector<8x128xf32> to vector<8x128xbf16>
    %c0_71 = arith.constant 0 : index
    %c0_72 = arith.constant 0 : index
    %120 = vector.load %arg10[%c0_71, %c0_72] : memref<128x128xbf16, #tpu.memory_space<vmem>>, vector<128x128xbf16>
    %cst_73 = arith.constant dense<0.000000e+00> : vector<8x128xf32>
    %121 = tpu.matmul %119, %120, %cst_73 {dimension_numbers = #tpu.dot_dimension_numbers<[1], [0], [0], [1], [0, 0, 1, 1], [], []>} : vector<8x128xbf16>, vector<128x128xbf16>, vector<8x128xf32> -> vector<8x128xf32>
    %c0_74 = arith.constant 0 : index
    %c0_75 = arith.constant 0 : index
    %122 = vector.load %arg11[%c0_74, %c0_75] : memref<1x128xf32, #tpu.memory_space<vmem>>, vector<1x128xf32>
    %123 = vector.broadcast %122 : vector<1x128xf32> to vector<8x128xf32>
    %124 = arith.addf %121, %123 : vector<8x128xf32>
    %c0_76 = arith.constant 0 : index
    %c0_77 = arith.constant 0 : index
    %125 = vector.load %arg12[%c0_76, %c0_77] : memref<8x128xf32, #tpu.memory_space<vmem>>, vector<8x128xf32>
    tpu.vector_store %arg12[%c0_76, %c0_77], %124 {strides = array<i32>} : memref<8x128xf32, #tpu.memory_space<vmem>>, vector<8x128xf32>,
    return
  }
  func.func @transform_0(%arg0: i32) -> (i32, i32) {
    %c0_i32 = arith.constant 0 : i32
    %c0_i32_0 = arith.constant 0 : i32
    return %arg0, %c0_i32 : i32, i32
  }
  func.func @transform_1(%arg0: i32) -> (i32, i32, i32) {
    %c0_i32 = arith.constant 0 : i32
    %c0_i32_0 = arith.constant 0 : i32
    %c0_i32_1 = arith.constant 0 : i32
    %c0_i32_2 = arith.constant 0 : i32
    return %c0_i32, %c0_i32_0, %c0_i32_1 : i32, i32, i32
  }
  func.func @transform_2(%arg0: i32) -> (i32, i32) {
    %c0_i32 = arith.constant 0 : i32
    %c0_i32_0 = arith.constant 0 : i32
    %c0_i32_1 = arith.constant 0 : i32
    return %c0_i32, %c0_i32_0 : i32, i32
  }
  func.func @transform_3(%arg0: i32) -> (i32, i32, i32) {
    %c0_i32 = arith.constant 0 : i32
    %c0_i32_0 = arith.constant 0 : i32
    %c0_i32_1 = arith.constant 0 : i32
    %c0_i32_2 = arith.constant 0 : i32
    return %c0_i32, %c0_i32_0, %c0_i32_1 : i32, i32, i32
  }
  func.func @transform_4(%arg0: i32) -> (i32, i32) {
    %c0_i32 = arith.constant 0 : i32
    %c0_i32_0 = arith.constant 0 : i32
    %c0_i32_1 = arith.constant 0 : i32
    return %c0_i32, %c0_i32_0 : i32, i32
  }
  func.func @transform_5(%arg0: i32) -> (i32, i32, i32) {
    %c0_i32 = arith.constant 0 : i32
    %c0_i32_0 = arith.constant 0 : i32
    %c0_i32_1 = arith.constant 0 : i32
    %c0_i32_2 = arith.constant 0 : i32
    return %c0_i32, %c0_i32_0, %c0_i32_1 : i32, i32, i32
  }
  func.func @transform_6(%arg0: i32) -> (i32, i32) {
    %c0_i32 = arith.constant 0 : i32
    %c0_i32_0 = arith.constant 0 : i32
    %c0_i32_1 = arith.constant 0 : i32
    return %c0_i32, %c0_i32_0 : i32, i32
  }
  func.func @transform_7(%arg0: i32) -> (i32, i32) {
    %c0_i32 = arith.constant 0 : i32
    %c0_i32_0 = arith.constant 0 : i32
    %c0_i32_1 = arith.constant 0 : i32
    return %c0_i32, %c0_i32_0 : i32, i32
  }
  func.func @transform_8(%arg0: i32) -> (i32, i32) {
    %c0_i32 = arith.constant 0 : i32
    %c0_i32_0 = arith.constant 0 : i32
    %c0_i32_1 = arith.constant 0 : i32
    return %c0_i32, %c0_i32_0 : i32, i32
  }
  func.func @transform_9(%arg0: i32) -> (i32, i32) {
    %c0_i32 = arith.constant 0 : i32
    %c0_i32_0 = arith.constant 0 : i32
    %c0_i32_1 = arith.constant 0 : i32
    return %c0_i32, %c0_i32_0 : i32, i32
  }
  func.func @transform_10(%arg0: i32) -> (i32, i32) {
    %c0_i32 = arith.constant 0 : i32
    %c0_i32_0 = arith.constant 0 : i32
    %c0_i32_1 = arith.constant 0 : i32
    return %c0_i32, %c0_i32_0 : i32, i32
  }
  func.func @transform_11(%arg0: i32) -> (i32, i32) {
    %c0_i32 = arith.constant 0 : i32
    %c0_i32_0 = arith.constant 0 : i32
    return %arg0, %c0_i32 : i32, i32
  }
}

</mosaic_0001>

<llo_original>
// kernel: net_forward.1
$region0: #{net_forward.1}
  #allocation0 [shape = 'u32[]', space=smem, size = 0x4, offset = 0x4, fixed_abs, tag = 'smem constant byte address 0x4 - core index']
  #allocation1 [shape = 'u32[144,128]{1,0:T(1,128)}', space=vmem, size = 0x12000, scoped, tag = 'internal scratch']
  %s0 = inlined_call_operand.vmem [shape: bf16[256,96], index: 0, kind: input, shape index: {}]
  %s1 = inlined_call_operand.vmem [shape: bf16[5,96,168], index: 1, kind: input, shape index: {}]
  %s2 = inlined_call_operand.vmem [shape: f32[1,168], index: 2, kind: input, shape index: {}]
  %s3 = inlined_call_operand.vmem [shape: bf16[5,162,160], index: 3, kind: input, shape index: {}]
  %s4 = inlined_call_operand.vmem [shape: f32[1,160], index: 4, kind: input, shape index: {}]
  %s5 = inlined_call_operand.vmem [shape: bf16[5,144,128], index: 5, kind: input, shape index: {}]
  %s6 = inlined_call_operand.vmem [shape: f32[1,128], index: 6, kind: input, shape index: {}]
  %s7 = inlined_call_operand.vmem [shape: bf16[128,128], index: 7, kind: input, shape index: {}]
  %s8 = inlined_call_operand.vmem [shape: f32[1,128], index: 8, kind: input, shape index: {}]
  %s9 = inlined_call_operand.vmem [shape: bf16[128,128], index: 9, kind: input, shape index: {}]
  %s10 = inlined_call_operand.vmem [shape: f32[1,128], index: 10, kind: input, shape index: {}]
  %s11 = inlined_call_operand.vmem [shape: f32[8,128], index: 11, kind: output, shape index: {}]
  %s12 = sld [smem:[#allocation0]]
  $region54: #{net_forward.1} parent=0
    _
  %s14 = ssub.s32 1, %s12
  %s15 = scalar_select 0, %s14, %s12
  // Predicated region
  $region2: #{net_forward.1} parent=0 // pred_check
    _
  $region3: #{net_forward.1} parent=0 // pred_check_branch
    %17 = sbr.rel (0) target = $region5
  $region4: #{net_forward.1} parent=0 // pred_region
    _
  $region5: #{net_forward.1} parent=0 // pred_fallthru
    _
  // Predicated region
  $region6: #{net_forward.1} parent=0 // pred_check
    _
  $region7: #{net_forward.1} parent=0 // pred_check_branch
    %19 = sbr.rel (0) target = $region9
  $region8: #{net_forward.1} parent=0 // pred_region
    _
  $region9: #{net_forward.1} parent=0 // pred_fallthru
    _
  // Predicated region
  $region10: #{net_forward.1} parent=0 // pred_check
    _
  $region11: #{net_forward.1} parent=0 // pred_check_branch
    %21 = sbr.rel (0) target = $region13
  $region12: #{net_forward.1} parent=0 // pred_region
    _
  $region13: #{net_forward.1} parent=0 // pred_fallthru
    _
  // Predicated region
  $region14: #{net_forward.1} parent=0 // pred_check
    _
  $region15: #{net_forward.1} parent=0 // pred_check_branch
    %23 = sbr.rel (0) target = $region17
  $region16: #{net_forward.1} parent=0 // pred_region
    _
  $region17: #{net_forward.1} parent=0 // pred_fallthru
    _
  // Predicated region
  $region18: #{net_forward.1} parent=0 // pred_check
    _
  $region19: #{net_forward.1} parent=0 // pred_check_branch
    %25 = sbr.rel (0) target = $region21
  $region20: #{net_forward.1} parent=0 // pred_region
    _
  $region21: #{net_forward.1} parent=0 // pred_fallthru
    _
  // Predicated region
  $region22: #{net_forward.1} parent=0 // pred_check
    _
  $region23: #{net_forward.1} parent=0 // pred_check_branch
    %27 = sbr.rel (0) target = $region25
  $region24: #{net_forward.1} parent=0 // pred_region
    _
  $region25: #{net_forward.1} parent=0 // pred_fallthru
    _
  // Predicated region
  $region26: #{net_forward.1} parent=0 // pred_check
    _
  $region27: #{net_forward.1} parent=0 // pred_check_branch
    %29 = sbr.rel (0) target = $region29
  $region28: #{net_forward.1} parent=0 // pred_region
    _
  $region29: #{net_forward.1} parent=0 // pred_fallthru
    _
  // Predicated region
  $region30: #{net_forward.1} parent=0 // pred_check
    _
  $region31: #{net_forward.1} parent=0 // pred_check_branch
    %31 = sbr.rel (0) target = $region33
  $region32: #{net_forward.1} parent=0 // pred_region
    _
  $region33: #{net_forward.1} parent=0 // pred_fallthru
    _
  // Predicated region
  $region34: #{net_forward.1} parent=0 // pred_check
    _
  $region35: #{net_forward.1} parent=0 // pred_check_branch
    %33 = sbr.rel (0) target = $region37
  $region36: #{net_forward.1} parent=0 // pred_region
    _
  $region37: #{net_forward.1} parent=0 // pred_fallthru
    _
  // Predicated region
  $region38: #{net_forward.1} parent=0 // pred_check
    _
  $region39: #{net_forward.1} parent=0 // pred_check_branch
    %35 = sbr.rel (0) target = $region41
  $region40: #{net_forward.1} parent=0 // pred_region
    _
  $region41: #{net_forward.1} parent=0 // pred_fallthru
    _
  // Predicated region
  $region42: #{net_forward.1} parent=0 // pred_check
    _
  $region43: #{net_forward.1} parent=0 // pred_check_branch
    %37 = sbr.rel (0) target = $region45
  $region44: #{net_forward.1} parent=0 // pred_region
    _
  $region45: #{net_forward.1} parent=0 // pred_fallthru
    _
  %v39 = vld [vmem:[%s0] sm:$0xf]
  %v40 = vld [vmem:[%s0 + $0x4] sm:$0xf]
  %v41 = vld [vmem:[%s0 + $0x8] sm:$0xf]
  %v42 = vld [vmem:[%s0 + $0xc] sm:$0xf]
  %v43 = vld [vmem:[%s0 + $0x10] sm:$0xf]
  %v44 = vld [vmem:[%s0 + $0x14] sm:$0xf]
  %v45 = vld [vmem:[%s0 + $0x18] sm:$0xf]
  %v46 = vld [vmem:[%s0 + $0x1c] sm:$0xf]
  %v47 = vld [vmem:[%s0 + $0x20] sm:$0xf]
  %v48 = vld [vmem:[%s0 + $0x24] sm:$0xf]
  %v49 = vld [vmem:[%s0 + $0x28] sm:$0xf]
  %v50 = vld [vmem:[%s0 + $0x2c] sm:$0xf]
  %v51 = vld [vmem:[%s0 + $0x30] sm:$0xf]
  %v52 = vld [vmem:[%s0 + $0x34] sm:$0xf]
  %v53 = vld [vmem:[%s0 + $0x38] sm:$0xf]
  %v54 = vld [vmem:[%s0 + $0x3c] sm:$0xf]
  %v55 = vld [vmem:[%s0 + $0x40] sm:$0xf]
  %v56 = vld [vmem:[%s0 + $0x44] sm:$0xf]
  %v57 = vld [vmem:[%s0 + $0x48] sm:$0xf]
  %v58 = vld [vmem:[%s0 + $0x4c] sm:$0xf]
  %v59 = vld [vmem:[%s0 + $0x50] sm:$0xf]
  %v60 = vld [vmem:[%s0 + $0x54] sm:$0xf]
  %v61 = vld [vmem:[%s0 + $0x58] sm:$0xf]
  %v62 = vld [vmem:[%s0 + $0x5c] sm:$0xf]
  %v63 = vld [vmem:[%s0 + $0x60] sm:$0xf]
  %v64 = vld [vmem:[%s0 + $0x64] sm:$0xf]
  %v65 = vld [vmem:[%s0 + $0x68] sm:$0xf]
  %v66 = vld [vmem:[%s0 + $0x6c] sm:$0xf]
  %v67 = vld [vmem:[%s0 + $0x70] sm:$0xf]
  %v68 = vld [vmem:[%s0 + $0x74] sm:$0xf]
  %v69 = vld [vmem:[%s0 + $0x78] sm:$0xf]
  %v70 = vld [vmem:[%s0 + $0x7c] sm:$0xf]
  %v71 = vld [vmem:[%s1] sm:$0xff]
  %v72 = vld [vmem:[%s1 + $0x8] sm:$0xff]
  %v73 = vld [vmem:[%s1 + $0x10] sm:$0xff]
  %v74 = vld [vmem:[%s1 + $0x18] sm:$0xff]
  %v75 = vld [vmem:[%s1 + $0x20] sm:$0xff]
  %v76 = vld [vmem:[%s1 + $0x28] sm:$0xff]
  %v77 = vld [vmem:[%s1 + $0x30] sm:$0xff]
  %v78 = vld [vmem:[%s1 + $0x38] sm:$0xff]
  %v79 = vld [vmem:[%s1 + $0x40] sm:$0xff]
  %v80 = vld [vmem:[%s1 + $0x48] sm:$0xff]
  %v81 = vld [vmem:[%s1 + $0x50] sm:$0xff]
  %v82 = vld [vmem:[%s1 + $0x58] sm:$0xff]
  %s83 = scalar_lea.vmem %s1, 96
  %v84 = vld [vmem:[%s83] sm:$0xff]
  %v85 = vld [vmem:[%s83 + $0x8] sm:$0xff]
  %v86 = vld [vmem:[%s83 + $0x10] sm:$0xff]
  %v87 = vld [vmem:[%s83 + $0x18] sm:$0xff]
  %v88 = vld [vmem:[%s83 + $0x20] sm:$0xff]
  %v89 = vld [vmem:[%s83 + $0x28] sm:$0xff]
  %v90 = vld [vmem:[%s83 + $0x30] sm:$0xff]
  %v91 = vld [vmem:[%s83 + $0x38] sm:$0xff]
  %v92 = vld [vmem:[%s83 + $0x40] sm:$0xff]
  %v93 = vld [vmem:[%s83 + $0x48] sm:$0xff]
  %v94 = vld [vmem:[%s83 + $0x50] sm:$0xff]
  %v95 = vld [vmem:[%s83 + $0x58] sm:$0xff]
  %v128 = vunpack.c.l.b16 %v39
  %v129 = vunpack.c.l.b16 %v40
  %v130 = vunpack.c.l.b16 %v41
  %v131 = vunpack.c.l.b16 %v42
  %v132 = vunpack.c.l.b16 %v43
  %v133 = vunpack.c.l.b16 %v44
  %v134 = vunpack.c.l.b16 %v45
  %v135 = vunpack.c.l.b16 %v46
  %v136 = vunpack.c.l.b16 %v47
  %v137 = vunpack.c.l.b16 %v48
  %v138 = vunpack.c.l.b16 %v49
  %v139 = vunpack.c.l.b16 %v50
  %v140 = vunpack.c.l.b16 %v51
  %v141 = vunpack.c.l.b16 %v52
  %v142 = vunpack.c.l.b16 %v53
  %v143 = vunpack.c.l.b16 %v54
  %v144 = vunpack.c.l.b16 %v55
  %v145 = vunpack.c.l.b16 %v56
  %v146 = vunpack.c.l.b16 %v57
  %v147 = vunpack.c.l.b16 %v58
  %v148 = vunpack.c.l.b16 %v59
  %v149 = vunpack.c.l.b16 %v60
  %v150 = vunpack.c.l.b16 %v61
  %v151 = vunpack.c.l.b16 %v62
  %v152 = vunpack.c.l.b16 %v63
  %v153 = vunpack.c.l.b16 %v64
  %v154 = vunpack.c.l.b16 %v65
  %v155 = vunpack.c.l.b16 %v66
  %v156 = vunpack.c.l.b16 %v67
  %v157 = vunpack.c.l.b16 %v68
  %v158 = vunpack.c.l.b16 %v69
  %v159 = vunpack.c.l.b16 %v70
  %v160 = vpack.c.b16 %v129, %v128
  %v161 = vpack.c.b16 %v131, %v130
  %v162 = vpack.c.b16 %v133, %v132
  %v163 = vpack.c.b16 %v135, %v134
  %v164 = vpack.c.b16 %v137, %v136
  %v165 = vpack.c.b16 %v139, %v138
  %v166 = vpack.c.b16 %v141, %v140
  %v167 = vpack.c.b16 %v143, %v142
  %v168 = vpack.c.b16 %v145, %v144
  %v169 = vpack.c.b16 %v147, %v146
  %v170 = vpack.c.b16 %v149, %v148
  %v171 = vpack.c.b16 %v151, %v150
  %v172 = vpack.c.b16 %v153, %v152
  %v173 = vpack.c.b16 %v155, %v154
  %v174 = vpack.c.b16 %v157, %v156
  %v175 = vpack.c.b16 %v159, %v158
  %vm176 = vsmask.f32 7424
  %v178 = vshrl.u32 %v160, 16
  %v180 = vshll.u32 %v160, 16
  %v182 = vrot.slane %v180, 1
  %v183 = vor.u32 %v178, %v182
  %v185 = vshll.u32 %v161, 16
  %v187 = vrot.slane %v185, 1
  %v188 = vsel %vm176, %v183, %v187
  %v189 = vshrl.u32 %v161, 16
  %v191 = vor.u32 %v189, %v187
  %v193 = vshll.u32 %v162, 16
  %v195 = vrot.slane %v193, 1
  %v196 = vsel %vm176, %v191, %v195
  %v197 = vshrl.u32 %v162, 16
  %v199 = vor.u32 %v197, %v195
  %v201 = vshll.u32 %v163, 16
  %v203 = vrot.slane %v201, 1
  %v204 = vsel %vm176, %v199, %v203
  %v205 = vshrl.u32 %v163, 16
  %v207 = vor.u32 %v205, %v203
  %v209 = vshll.u32 %v164, 16
  %v211 = vrot.slane %v209, 1
  %v212 = vsel %vm176, %v207, %v211
  %v213 = vshrl.u32 %v164, 16
  %v215 = vor.u32 %v213, %v211
  %v217 = vshll.u32 %v165, 16
  %v219 = vrot.slane %v217, 1
  %v220 = vsel %vm176, %v215, %v219
  %v221 = vshrl.u32 %v165, 16
  %v223 = vor.u32 %v221, %v219
  %v225 = vshll.u32 %v166, 16
  %v227 = vrot.slane %v225, 1
  %v228 = vsel %vm176, %v223, %v227
  %v229 = vshrl.u32 %v166, 16
  %v231 = vor.u32 %v229, %v227
  %v233 = vshll.u32 %v167, 16
  %v235 = vrot.slane %v233, 1
  %v236 = vsel %vm176, %v231, %v235
  %v237 = vshrl.u32 %v167, 16
  %v239 = vor.u32 %v237, %v235
  %v241 = vshll.u32 %v168, 16
  %v243 = vrot.slane %v241, 1
  %v244 = vsel %vm176, %v239, %v243
  %v245 = vshrl.u32 %v168, 16
  %v247 = vor.u32 %v245, %v243
  %v249 = vshll.u32 %v169, 16
  %v251 = vrot.slane %v249, 1
  %v252 = vsel %vm176, %v247, %v251
  %v253 = vshrl.u32 %v169, 16
  %v255 = vor.u32 %v253, %v251
  %v257 = vshll.u32 %v170, 16
  %v259 = vrot.slane %v257, 1
  %v260 = vsel %vm176, %v255, %v259
  %v261 = vshrl.u32 %v170, 16
  %v263 = vor.u32 %v261, %v259
  %v265 = vshll.u32 %v171, 16
  %v267 = vrot.slane %v265, 1
  %v268 = vsel %vm176, %v263, %v267
  %v269 = vshrl.u32 %v171, 16
  %v271 = vor.u32 %v269, %v267
  %v273 = vshll.u32 %v172, 16
  %v275 = vrot.slane %v273, 1
  %v276 = vsel %vm176, %v271, %v275
  %v277 = vshrl.u32 %v172, 16
  %v279 = vor.u32 %v277, %v275
  %v281 = vshll.u32 %v173, 16
  %v283 = vrot.slane %v281, 1
  %v284 = vsel %vm176, %v279, %v283
  %v285 = vshrl.u32 %v173, 16
  %v287 = vor.u32 %v285, %v283
  %v289 = vshll.u32 %v174, 16
  %v291 = vrot.slane %v289, 1
  %v292 = vsel %vm176, %v287, %v291
  %v293 = vshrl.u32 %v174, 16
  %v295 = vor.u32 %v293, %v291
  %v297 = vshll.u32 %v175, 16
  %v299 = vrot.slane %v297, 1
  %v300 = vsel %vm176, %v295, %v299
  %v301 = vshrl.u32 %v175, 16
  %v303 = vor.u32 %v301, %v299
  %v316 = vunpack.c.l.b16 %v84
  %v317 = vunpack.c.h.b16 %v84
  %v318 = vunpack.c.l.b16 %v85
  %v319 = vunpack.c.h.b16 %v85
  %v320 = vunpack.c.l.b16 %v86
  %v321 = vunpack.c.h.b16 %v86
  %v322 = vunpack.c.l.b16 %v87
  %v323 = vunpack.c.h.b16 %v87
  %v324 = vunpack.c.l.b16 %v88
  %v325 = vunpack.c.h.b16 %v88
  %v326 = vunpack.c.l.b16 %v89
  %v327 = vunpack.c.h.b16 %v89
  %v328 = vunpack.c.l.b16 %v90
  %v329 = vunpack.c.h.b16 %v90
  %v330 = vunpack.c.l.b16 %v91
  %v331 = vunpack.c.h.b16 %v91
  %v332 = vunpack.c.l.b16 %v92
  %v333 = vunpack.c.h.b16 %v92
  %v334 = vunpack.c.l.b16 %v93
  %v335 = vunpack.c.h.b16 %v93
  %v336 = vunpack.c.l.b16 %v94
  %v337 = vunpack.c.h.b16 %v94
  %v338 = vunpack.c.l.b16 %v95
  %v339 = vunpack.c.h.b16 %v95
  %v340 = vpack.c.b16 %v318, %v316
  %v341 = vpack.c.b16 %v319, %v317
  %v342 = vpack.c.b16 %v322, %v320
  %v343 = vpack.c.b16 %v323, %v321
  %v344 = vpack.c.b16 %v326, %v324
  %v345 = vpack.c.b16 %v327, %v325
  %v346 = vpack.c.b16 %v330, %v328
  %v347 = vpack.c.b16 %v331, %v329
  %v348 = vpack.c.b16 %v334, %v332
  %v349 = vpack.c.b16 %v335, %v333
  %v350 = vpack.c.b16 %v338, %v336
  %v351 = vpack.c.b16 %v339, %v337
  %vm364 = vcmask 785408
  %v366 = vsel %vm364, %v188, 0
  %v369 = vsel %vm364, %v196, 0
  %v372 = vsel %vm364, %v204, 0
  %v375 = vsel %vm364, %v212, 0
  %v378 = vsel %vm364, %v220, 0
  %v381 = vsel %vm364, %v228, 0
  %v384 = vsel %vm364, %v236, 0
  %v387 = vsel %vm364, %v244, 0
  %v390 = vsel %vm364, %v252, 0
  %v393 = vsel %vm364, %v260, 0
  %v396 = vsel %vm364, %v268, 0
  %v399 = vsel %vm364, %v276, 0
  %v402 = vsel %vm364, %v284, 0
  %v405 = vsel %vm364, %v292, 0
  %v408 = vsel %vm364, %v300, 0
  %v411 = vsel %vm364, %v303, 0
  %413 = vmatprep.subr.bf16.mxu0 0
  %414 = vmatpush1.bf16.msra.mxu0 0
  %415 = vmatprep.subr.bf16.mxu0 0
  %416 = vmatpush1.bf16.msra.mxu0 0
  %417 = vmatprep.subr.bf16.mxu0 %v351
  %418 = vmatpush1.bf16.msra.mxu0 %v350
  %419 = vmatprep.subr.bf16.mxu0 %v349
  %420 = vmatpush1.bf16.msra.mxu0 %v348
  %421 = vmatprep.subr.bf16.mxu0 %v347
  %422 = vmatpush1.bf16.msra.mxu0 %v346
  %423 = vmatprep.subr.bf16.mxu0 %v345
  %424 = vmatpush1.bf16.msra.mxu0 %v344
  %425 = vmatprep.subr.bf16.mxu0 %v343
  %426 = vmatpush1.bf16.msra.mxu0 %v342
  %427 = vmatprep.subr.bf16.mxu0 %v341
  %428 = vmatpush1.bf16.msra.mxu0 %v340
  %429 = vmatprep.subr.bf16.mxu0 0
  %430 = vmatpush2.bf16.msra.mxu0 0
  %431 = vmatprep.subr.bf16.mxu0 0
  %432 = vmatpush2.bf16.msra.mxu0 0
  %433 = vmatprep.subr.bf16.mxu0 0
  %434 = vmatpush2.bf16.msra.mxu0 0
  %435 = vmatprep.subr.bf16.mxu0 0
  %436 = vmatpush2.bf16.msra.mxu0 0
  %437 = vmatprep.subr.bf16.mxu0 0
  %438 = vmatpush2.bf16.msra.mxu0 0
  %439 = vmatprep.subr.bf16.mxu0 0
  %440 = vmatpush2.bf16.msra.mxu0 0
  %441 = vmatprep.subr.bf16.mxu0 0
  %442 = vmatpush2.bf16.msra.mxu0 0
  %443 = vmatprep.subr.bf16.mxu0 0
  %444 = vmatpush2.bf16.msra.mxu0 0
  %445 = vmatprep.mubr.bf16.mxu0 0
  %446 = vmatmul.mubr.bf16.gmra.mxu0 %v366
  %v447 = vpop.f32.mrf.mxu0
  %v448 = vadd.f32 0.0, %v447
  %v449 = vpop.f32.mrf.mxu0
  %v450 = vadd.f32 0.0, %v449
  %v451 = vpop.f32.mrf.mxu0
  %v452 = vadd.f32 0.0, %v451
  %v453 = vpop.f32.mrf.mxu0
  %v454 = vadd.f32 0.0, %v453
  %455 = vmatprep.mubr.bf16.mxu0 0
  %456 = vmatmul.mubr.bf16.gmra.mxu0 %v369
  %v457 = vpop.f32.mrf.mxu0
  %v458 = vadd.f32 0.0, %v457
  %v459 = vpop.f32.mrf.mxu0
  %v460 = vadd.f32 0.0, %v459
  %v461 = vpop.f32.mrf.mxu0
  %v462 = vadd.f32 0.0, %v461
  %v463 = vpop.f32.mrf.mxu0
  %v464 = vadd.f32 0.0, %v463
  %465 = vmatprep.mubr.bf16.mxu0 0
  %466 = vmatmul.mubr.bf16.gmra.mxu0 %v372
  %v467 = vpop.f32.mrf.mxu0
  %v468 = vadd.f32 0.0, %v467
  %v469 = vpop.f32.mrf.mxu0
  %v470 = vadd.f32 0.0, %v469
  %v471 = vpop.f32.mrf.mxu0
  %v472 = vadd.f32 0.0, %v471
  %v473 = vpop.f32.mrf.mxu0
  %v474 = vadd.f32 0.0, %v473
  %475 = vmatprep.mubr.bf16.mxu0 0
  %476 = vmatmul.mubr.bf16.gmra.mxu0 %v375
  %v477 = vpop.f32.mrf.mxu0
  %v478 = vadd.f32 0.0, %v477
  %v479 = vpop.f32.mrf.mxu0
  %v480 = vadd.f32 0.0, %v479
  %v481 = vpop.f32.mrf.mxu0
  %v482 = vadd.f32 0.0, %v481
  %v483 = vpop.f32.mrf.mxu0
  %v484 = vadd.f32 0.0, %v483
  %485 = vmatprep.mubr.bf16.mxu0 0
  %486 = vmatmul.mubr.bf16.gmra.mxu0 %v378
  %v487 = vpop.f32.mrf.mxu0
  %v488 = vadd.f32 0.0, %v487
  %v489 = vpop.f32.mrf.mxu0
  %v490 = vadd.f32 0.0, %v489
  %v491 = vpop.f32.mrf.mxu0
  %v492 = vadd.f32 0.0, %v491
  %v493 = vpop.f32.mrf.mxu0
  %v494 = vadd.f32 0.0, %v493
  %495 = vmatprep.mubr.bf16.mxu0 0
  %496 = vmatmul.mubr.bf16.gmra.mxu0 %v381
  %v497 = vpop.f32.mrf.mxu0
  %v498 = vadd.f32 0.0, %v497
  %v499 = vpop.f32.mrf.mxu0
  %v500 = vadd.f32 0.0, %v499
  %v501 = vpop.f32.mrf.mxu0
  %v502 = vadd.f32 0.0, %v501
  %v503 = vpop.f32.mrf.mxu0
  %v504 = vadd.f32 0.0, %v503
  %505 = vmatprep.mubr.bf16.mxu0 0
  %506 = vmatmul.mubr.bf16.gmra.mxu0 %v384
  %v507 = vpop.f32.mrf.mxu0
  %v508 = vadd.f32 0.0, %v507
  %v509 = vpop.f32.mrf.mxu0
  %v510 = vadd.f32 0.0, %v509
  %v511 = vpop.f32.mrf.mxu0
  %v512 = vadd.f32 0.0, %v511
  %v513 = vpop.f32.mrf.mxu0
  %v514 = vadd.f32 0.0, %v513
  %515 = vmatprep.mubr.bf16.mxu0 0
  %516 = vmatmul.mubr.bf16.gmra.mxu0 %v387
  %v517 = vpop.f32.mrf.mxu0
  %v518 = vadd.f32 0.0, %v517
  %v519 = vpop.f32.mrf.mxu0
  %v520 = vadd.f32 0.0, %v519
  %v521 = vpop.f32.mrf.mxu0
  %v522 = vadd.f32 0.0, %v521
  %v523 = vpop.f32.mrf.mxu0
  %v524 = vadd.f32 0.0, %v523
  %525 = vmatprep.mubr.bf16.mxu0 0
  %526 = vmatmul.mubr.bf16.gmra.mxu0 %v390
  %v527 = vpop.f32.mrf.mxu0
  %v528 = vadd.f32 0.0, %v527
  %v529 = vpop.f32.mrf.mxu0
  %v530 = vadd.f32 0.0, %v529
  %v531 = vpop.f32.mrf.mxu0
  %v532 = vadd.f32 0.0, %v531
  %v533 = vpop.f32.mrf.mxu0
  %v534 = vadd.f32 0.0, %v533
  %535 = vmatprep.mubr.bf16.mxu0 0
  %536 = vmatmul.mubr.bf16.gmra.mxu0 %v393
  %v537 = vpop.f32.mrf.mxu0
  %v538 = vadd.f32 0.0, %v537
  %v539 = vpop.f32.mrf.mxu0
  %v540 = vadd.f32 0.0, %v539
  %v541 = vpop.f32.mrf.mxu0
  %v542 = vadd.f32 0.0, %v541
  %v543 = vpop.f32.mrf.mxu0
  %v544 = vadd.f32 0.0, %v543
  %545 = vmatprep.mubr.bf16.mxu0 0
  %546 = vmatmul.mubr.bf16.gmra.mxu0 %v396
  %v547 = vpop.f32.mrf.mxu0
  %v548 = vadd.f32 0.0, %v547
  %v549 = vpop.f32.mrf.mxu0
  %v550 = vadd.f32 0.0, %v549
  %v551 = vpop.f32.mrf.mxu0
  %v552 = vadd.f32 0.0, %v551
  %v553 = vpop.f32.mrf.mxu0
  %v554 = vadd.f32 0.0, %v553
  %555 = vmatprep.mubr.bf16.mxu0 0
  %556 = vmatmul.mubr.bf16.gmra.mxu0 %v399
  %v557 = vpop.f32.mrf.mxu0
  %v558 = vadd.f32 0.0, %v557
  %v559 = vpop.f32.mrf.mxu0
  %v560 = vadd.f32 0.0, %v559
  %v561 = vpop.f32.mrf.mxu0
  %v562 = vadd.f32 0.0, %v561
  %v563 = vpop.f32.mrf.mxu0
  %v564 = vadd.f32 0.0, %v563
  %565 = vmatprep.mubr.bf16.mxu0 0
  %566 = vmatmul.mubr.bf16.gmra.mxu0 %v402
  %v567 = vpop.f32.mrf.mxu0
  %v568 = vadd.f32 0.0, %v567
  %v569 = vpop.f32.mrf.mxu0
  %v570 = vadd.f32 0.0, %v569
  %v571 = vpop.f32.mrf.mxu0
  %v572 = vadd.f32 0.0, %v571
  %v573 = vpop.f32.mrf.mxu0
  %v574 = vadd.f32 0.0, %v573
  %575 = vmatprep.mubr.bf16.mxu0 0
  %576 = vmatmul.mubr.bf16.gmra.mxu0 %v405
  %v577 = vpop.f32.mrf.mxu0
  %v578 = vadd.f32 0.0, %v577
  %v579 = vpop.f32.mrf.mxu0
  %v580 = vadd.f32 0.0, %v579
  %v581 = vpop.f32.mrf.mxu0
  %v582 = vadd.f32 0.0, %v581
  %v583 = vpop.f32.mrf.mxu0
  %v584 = vadd.f32 0.0, %v583
  %585 = vmatprep.mubr.bf16.mxu0 0
  %586 = vmatmul.mubr.bf16.gmra.mxu0 %v408
  %v587 = vpop.f32.mrf.mxu0
  %v588 = vadd.f32 0.0, %v587
  %v589 = vpop.f32.mrf.mxu0
  %v590 = vadd.f32 0.0, %v589
  %v591 = vpop.f32.mrf.mxu0
  %v592 = vadd.f32 0.0, %v591
  %v593 = vpop.f32.mrf.mxu0
  %v594 = vadd.f32 0.0, %v593
  %595 = vmatprep.mubr.bf16.mxu0 0
  %596 = vmatmul.mubr.bf16.gmra.mxu0 %v411
  %v597 = vpop.f32.mrf.mxu0
  %v598 = vadd.f32 0.0, %v597
  %v599 = vpop.f32.mrf.mxu0
  %v600 = vadd.f32 0.0, %v599
  %v601 = vpop.f32.mrf.mxu0
  %v602 = vadd.f32 0.0, %v601
  %v603 = vpop.f32.mrf.mxu0
  %v604 = vadd.f32 0.0, %v603
  %605 = vdwg.mxu0
  %v618 = vunpack.c.l.b16 %v71
  %v619 = vunpack.c.h.b16 %v71
  %v620 = vunpack.c.l.b16 %v72
  %v621 = vunpack.c.h.b16 %v72
  %v622 = vunpack.c.l.b16 %v73
  %v623 = vunpack.c.h.b16 %v73
  %v624 = vunpack.c.l.b16 %v74
  %v625 = vunpack.c.h.b16 %v74
  %v626 = vunpack.c.l.b16 %v75
  %v627 = vunpack.c.h.b16 %v75
  %v628 = vunpack.c.l.b16 %v76
  %v629 = vunpack.c.h.b16 %v76
  %v630 = vunpack.c.l.b16 %v77
  %v631 = vunpack.c.h.b16 %v77
  %v632 = vunpack.c.l.b16 %v78
  %v633 = vunpack.c.h.b16 %v78
  %v634 = vunpack.c.l.b16 %v79
  %v635 = vunpack.c.h.b16 %v79
  %v636 = vunpack.c.l.b16 %v80
  %v637 = vunpack.c.h.b16 %v80
  %v638 = vunpack.c.l.b16 %v81
  %v639 = vunpack.c.h.b16 %v81
  %v640 = vunpack.c.l.b16 %v82
  %v641 = vunpack.c.h.b16 %v82
  %v642 = vpack.c.b16 %v620, %v618
  %v643 = vpack.c.b16 %v621, %v619
  %v644 = vpack.c.b16 %v624, %v622
  %v645 = vpack.c.b16 %v625, %v623
  %v646 = vpack.c.b16 %v628, %v626
  %v647 = vpack.c.b16 %v629, %v627
  %v648 = vpack.c.b16 %v632, %v630
  %v649 = vpack.c.b16 %v633, %v631
  %v650 = vpack.c.b16 %v636, %v634
  %v651 = vpack.c.b16 %v637, %v635
  %v652 = vpack.c.b16 %v640, %v638
  %v653 = vpack.c.b16 %v641, %v639
  %v666 = vsel %vm364, %v160, 0
  %v668 = vsel %vm364, %v161, 0
  %v670 = vsel %vm364, %v162, 0
  %v672 = vsel %vm364, %v163, 0
  %v674 = vsel %vm364, %v164, 0
  %v676 = vsel %vm364, %v165, 0
  %v678 = vsel %vm364, %v166, 0
  %v680 = vsel %vm364, %v167, 0
  %v682 = vsel %vm364, %v168, 0
  %v684 = vsel %vm364, %v169, 0
  %v686 = vsel %vm364, %v170, 0
  %v688 = vsel %vm364, %v171, 0
  %v690 = vsel %vm364, %v172, 0
  %v692 = vsel %vm364, %v173, 0
  %v694 = vsel %vm364, %v174, 0
  %v696 = vsel %vm364, %v175, 0
  %698 = vmatprep.subr.bf16.mxu0 0
  %699 = vmatpush1.bf16.msra.mxu0 0
  %700 = vmatprep.subr.bf16.mxu0 0
  %701 = vmatpush1.bf16.msra.mxu0 0
  %702 = vmatprep.subr.bf16.mxu0 %v653
  %703 = vmatpush1.bf16.msra.mxu0 %v652
  %704 = vmatprep.subr.bf16.mxu0 %v651
  %705 = vmatpush1.bf16.msra.mxu0 %v650
  %706 = vmatprep.subr.bf16.mxu0 %v649
  %707 = vmatpush1.bf16.msra.mxu0 %v648
  %708 = vmatprep.subr.bf16.mxu0 %v647
  %709 = vmatpush1.bf16.msra.mxu0 %v646
  %710 = vmatprep.subr.bf16.mxu0 %v645
  %711 = vmatpush1.bf16.msra.mxu0 %v644
  %712 = vmatprep.subr.bf16.mxu0 %v643
  %713 = vmatpush1.bf16.msra.mxu0 %v642
  %714 = vmatprep.subr.bf16.mxu0 0
  %715 = vmatpush2.bf16.msra.mxu0 0
  %716 = vmatprep.subr.bf16.mxu0 0
  %717 = vmatpush2.bf16.msra.mxu0 0
  %718 = vmatprep.subr.bf16.mxu0 0
  %719 = vmatpush2.bf16.msra.mxu0 0
  %720 = vmatprep.subr.bf16.mxu0 0
  %721 = vmatpush2.bf16.msra.mxu0 0
  %722 = vmatprep.subr.bf16.mxu0 0
  %723 = vmatpush2.bf16.msra.mxu0 0
  %724 = vmatprep.subr.bf16.mxu0 0
  %725 = vmatpush2.bf16.msra.mxu0 0
  %726 = vmatprep.subr.bf16.mxu0 0
  %727 = vmatpush2.bf16.msra.mxu0 0
  %728 = vmatprep.subr.bf16.mxu0 0
  %729 = vmatpush2.bf16.msra.mxu0 0
  %730 = vmatprep.mubr.bf16.mxu0 0
  %731 = vmatmul.mubr.bf16.gmra.mxu0 %v666
  %v732 = vpop.f32.mrf.mxu0
  %v733 = vadd.f32 %v448, %v732
  %v734 = vpop.f32.mrf.mxu0
  %v735 = vadd.f32 %v450, %v734
  %v736 = vpop.f32.mrf.mxu0
  %v737 = vadd.f32 %v452, %v736
  %v738 = vpop.f32.mrf.mxu0
  %v739 = vadd.f32 %v454, %v738
  %740 = vmatprep.mubr.bf16.mxu0 0
  %741 = vmatmul.mubr.bf16.gmra.mxu0 %v668
  %v742 = vpop.f32.mrf.mxu0
  %v743 = vadd.f32 %v458, %v742
  %v744 = vpop.f32.mrf.mxu0
  %v745 = vadd.f32 %v460, %v744
  %v746 = vpop.f32.mrf.mxu0
  %v747 = vadd.f32 %v462, %v746
  %v748 = vpop.f32.mrf.mxu0
  %v749 = vadd.f32 %v464, %v748
  %750 = vmatprep.mubr.bf16.mxu0 0
  %751 = vmatmul.mubr.bf16.gmra.mxu0 %v670
  %v752 = vpop.f32.mrf.mxu0
  %v753 = vadd.f32 %v468, %v752
  %v754 = vpop.f32.mrf.mxu0
  %v755 = vadd.f32 %v470, %v754
  %v756 = vpop.f32.mrf.mxu0
  %v757 = vadd.f32 %v472, %v756
  %v758 = vpop.f32.mrf.mxu0
  %v759 = vadd.f32 %v474, %v758
  %760 = vmatprep.mubr.bf16.mxu0 0
  %761 = vmatmul.mubr.bf16.gmra.mxu0 %v672
  %v762 = vpop.f32.mrf.mxu0
  %v763 = vadd.f32 %v478, %v762
  %v764 = vpop.f32.mrf.mxu0
  %v765 = vadd.f32 %v480, %v764
  %v766 = vpop.f32.mrf.mxu0
  %v767 = vadd.f32 %v482, %v766
  %v768 = vpop.f32.mrf.mxu0
  %v769 = vadd.f32 %v484, %v768
  %770 = vmatprep.mubr.bf16.mxu0 0
  %771 = vmatmul.mubr.bf16.gmra.mxu0 %v674
  %v772 = vpop.f32.mrf.mxu0
  %v773 = vadd.f32 %v488, %v772
  %v774 = vpop.f32.mrf.mxu0
  %v775 = vadd.f32 %v490, %v774
  %v776 = vpop.f32.mrf.mxu0
  %v777 = vadd.f32 %v492, %v776
  %v778 = vpop.f32.mrf.mxu0
  %v779 = vadd.f32 %v494, %v778
  %780 = vmatprep.mubr.bf16.mxu0 0
  %781 = vmatmul.mubr.bf16.gmra.mxu0 %v676
  %v782 = vpop.f32.mrf.mxu0
  %v783 = vadd.f32 %v498, %v782
  %v784 = vpop.f32.mrf.mxu0
  %v785 = vadd.f32 %v500, %v784
  %v786 = vpop.f32.mrf.mxu0
  %v787 = vadd.f32 %v502, %v786
  %v788 = vpop.f32.mrf.mxu0
  %v789 = vadd.f32 %v504, %v788
  %790 = vmatprep.mubr.bf16.mxu0 0
  %791 = vmatmul.mubr.bf16.gmra.mxu0 %v678
  %v792 = vpop.f32.mrf.mxu0
  %v793 = vadd.f32 %v508, %v792
  %v794 = vpop.f32.mrf.mxu0
  %v795 = vadd.f32 %v510, %v794
  %v796 = vpop.f32.mrf.mxu0
  %v797 = vadd.f32 %v512, %v796
  %v798 = vpop.f32.mrf.mxu0
  %v799 = vadd.f32 %v514, %v798
  %800 = vmatprep.mubr.bf16.mxu0 0
  %801 = vmatmul.mubr.bf16.gmra.mxu0 %v680
  %v802 = vpop.f32.mrf.mxu0
  %v803 = vadd.f32 %v518, %v802
  %v804 = vpop.f32.mrf.mxu0
  %v805 = vadd.f32 %v520, %v804
  %v806 = vpop.f32.mrf.mxu0
  %v807 = vadd.f32 %v522, %v806
  %v808 = vpop.f32.mrf.mxu0
  %v809 = vadd.f32 %v524, %v808
  %810 = vmatprep.mubr.bf16.mxu0 0
  %811 = vmatmul.mubr.bf16.gmra.mxu0 %v682
  %v812 = vpop.f32.mrf.mxu0
  %v813 = vadd.f32 %v528, %v812
  %v814 = vpop.f32.mrf.mxu0
  %v815 = vadd.f32 %v530, %v814
  %v816 = vpop.f32.mrf.mxu0
  %v817 = vadd.f32 %v532, %v816
  %v818 = vpop.f32.mrf.mxu0
  %v819 = vadd.f32 %v534, %v818
  %820 = vmatprep.mubr.bf16.mxu0 0
  %821 = vmatmul.mubr.bf16.gmra.mxu0 %v684
  %v822 = vpop.f32.mrf.mxu0
  %v823 = vadd.f32 %v538, %v822
  %v824 = vpop.f32.mrf.mxu0
  %v825 = vadd.f32 %v540, %v824
  %v826 = vpop.f32.mrf.mxu0
  %v827 = vadd.f32 %v542, %v826
  %v828 = vpop.f32.mrf.mxu0
  %v829 = vadd.f32 %v544, %v828
  %830 = vmatprep.mubr.bf16.mxu0 0
  %831 = vmatmul.mubr.bf16.gmra.mxu0 %v686
  %v832 = vpop.f32.mrf.mxu0
  %v833 = vadd.f32 %v548, %v832
  %v834 = vpop.f32.mrf.mxu0
  %v835 = vadd.f32 %v550, %v834
  %v836 = vpop.f32.mrf.mxu0
  %v837 = vadd.f32 %v552, %v836
  %v838 = vpop.f32.mrf.mxu0
  %v839 = vadd.f32 %v554, %v838
  %840 = vmatprep.mubr.bf16.mxu0 0
  %841 = vmatmul.mubr.bf16.gmra.mxu0 %v688
  %v842 = vpop.f32.mrf.mxu0
  %v843 = vadd.f32 %v558, %v842
  %v844 = vpop.f32.mrf.mxu0
  %v845 = vadd.f32 %v560, %v844
  %v846 = vpop.f32.mrf.mxu0
  %v847 = vadd.f32 %v562, %v846
  %v848 = vpop.f32.mrf.mxu0
  %v849 = vadd.f32 %v564, %v848
  %850 = vmatprep.mubr.bf16.mxu0 0
  %851 = vmatmul.mubr.bf16.gmra.mxu0 %v690
  %v852 = vpop.f32.mrf.mxu0
  %v853 = vadd.f32 %v568, %v852
  %v854 = vpop.f32.mrf.mxu0
  %v855 = vadd.f32 %v570, %v854
  %v856 = vpop.f32.mrf.mxu0
  %v857 = vadd.f32 %v572, %v856
  %v858 = vpop.f32.mrf.mxu0
  %v859 = vadd.f32 %v574, %v858
  %860 = vmatprep.mubr.bf16.mxu0 0
  %861 = vmatmul.mubr.bf16.gmra.mxu0 %v692
  %v862 = vpop.f32.mrf.mxu0
  %v863 = vadd.f32 %v578, %v862
  %v864 = vpop.f32.mrf.mxu0
  %v865 = vadd.f32 %v580, %v864
  %v866 = vpop.f32.mrf.mxu0
  %v867 = vadd.f32 %v582, %v866
  %v868 = vpop.f32.mrf.mxu0
  %v869 = vadd.f32 %v584, %v868
  %870 = vmatprep.mubr.bf16.mxu0 0
  %871 = vmatmul.mubr.bf16.gmra.mxu0 %v694
  %v872 = vpop.f32.mrf.mxu0
  %v873 = vadd.f32 %v588, %v872
  %v874 = vpop.f32.mrf.mxu0
  %v875 = vadd.f32 %v590, %v874
  %v876 = vpop.f32.mrf.mxu0
  %v877 = vadd.f32 %v592, %v876
  %v878 = vpop.f32.mrf.mxu0
  %v879 = vadd.f32 %v594, %v878
  %880 = vmatprep.mubr.bf16.mxu0 0
  %881 = vmatmul.mubr.bf16.gmra.mxu0 %v696
  %v882 = vpop.f32.mrf.mxu0
  %v883 = vadd.f32 %v598, %v882
  %v884 = vpop.f32.mrf.mxu0
  %v885 = vadd.f32 %v600, %v884
  %v886 = vpop.f32.mrf.mxu0
  %v887 = vadd.f32 %v602, %v886
  %v888 = vpop.f32.mrf.mxu0
  %v889 = vadd.f32 %v604, %v888
  %890 = vdwg.mxu0
  %s891 = scalar_lea.vmem %s1, 192
  %v892 = vld [vmem:[%s891] sm:$0xff]
  %v893 = vld [vmem:[%s891 + $0x8] sm:$0xff]
  %v894 = vld [vmem:[%s891 + $0x10] sm:$0xff]
  %v895 = vld [vmem:[%s891 + $0x18] sm:$0xff]
  %v896 = vld [vmem:[%s891 + $0x20] sm:$0xff]
  %v897 = vld [vmem:[%s891 + $0x28] sm:$0xff]
  %v898 = vld [vmem:[%s891 + $0x30] sm:$0xff]
  %v899 = vld [vmem:[%s891 + $0x38] sm:$0xff]
  %v900 = vld [vmem:[%s891 + $0x40] sm:$0xff]
  %v901 = vld [vmem:[%s891 + $0x48] sm:$0xff]
  %v902 = vld [vmem:[%s891 + $0x50] sm:$0xff]
  %v903 = vld [vmem:[%s891 + $0x58] sm:$0xff]
  %vm904 = vcmask 1046528
  %v905 = vrot.slane %v160, 1
  %v906 = vrot.slane %v161, 1
  %v907 = vsel %vm904, %v905, %v906
  %v908 = vrot.slane %v162, 1
  %v909 = vsel %vm904, %v906, %v908
  %v910 = vrot.slane %v163, 1
  %v911 = vsel %vm904, %v908, %v910
  %v912 = vrot.slane %v164, 1
  %v913 = vsel %vm904, %v910, %v912
  %v914 = vrot.slane %v165, 1
  %v915 = vsel %vm904, %v912, %v914
  %v916 = vrot.slane %v166, 1
  %v917 = vsel %vm904, %v914, %v916
  %v918 = vrot.slane %v167, 1
  %v919 = vsel %vm904, %v916, %v918
  %v920 = vrot.slane %v168, 1
  %v921 = vsel %vm904, %v918, %v920
  %v922 = vrot.slane %v169, 1
  %v923 = vsel %vm904, %v920, %v922
  %v924 = vrot.slane %v170, 1
  %v925 = vsel %vm904, %v922, %v924
  %v926 = vrot.slane %v171, 1
  %v927 = vsel %vm904, %v924, %v926
  %v928 = vrot.slane %v172, 1
  %v929 = vsel %vm904, %v926, %v928
  %v930 = vrot.slane %v173, 1
  %v931 = vsel %vm904, %v928, %v930
  %v932 = vrot.slane %v174, 1
  %v933 = vsel %vm904, %v930, %v932
  %v934 = vrot.slane %v175, 1
  %v935 = vsel %vm904, %v932, %v934
  %v948 = vunpack.c.l.b16 %v892
  %v949 = vunpack.c.h.b16 %v892
  %v950 = vunpack.c.l.b16 %v893
  %v951 = vunpack.c.h.b16 %v893
  %v952 = vunpack.c.l.b16 %v894
  %v953 = vunpack.c.h.b16 %v894
  %v954 = vunpack.c.l.b16 %v895
  %v955 = vunpack.c.h.b16 %v895
  %v956 = vunpack.c.l.b16 %v896
  %v957 = vunpack.c.h.b16 %v896
  %v958 = vunpack.c.l.b16 %v897
  %v959 = vunpack.c.h.b16 %v897
  %v960 = vunpack.c.l.b16 %v898
  %v961 = vunpack.c.h.b16 %v898
  %v962 = vunpack.c.l.b16 %v899
  %v963 = vunpack.c.h.b16 %v899
  %v964 = vunpack.c.l.b16 %v900
  %v965 = vunpack.c.h.b16 %v900
  %v966 = vunpack.c.l.b16 %v901
  %v967 = vunpack.c.h.b16 %v901
  %v968 = vunpack.c.l.b16 %v902
  %v969 = vunpack.c.h.b16 %v902
  %v970 = vunpack.c.l.b16 %v903
  %v971 = vunpack.c.h.b16 %v903
  %v972 = vpack.c.b16 %v950, %v948
  %v973 = vpack.c.b16 %v951, %v949
  %v974 = vpack.c.b16 %v954, %v952
  %v975 = vpack.c.b16 %v955, %v953
  %v976 = vpack.c.b16 %v958, %v956
  %v977 = vpack.c.b16 %v959, %v957
  %v978 = vpack.c.b16 %v962, %v960
  %v979 = vpack.c.b16 %v963, %v961
  %v980 = vpack.c.b16 %v966, %v964
  %v981 = vpack.c.b16 %v967, %v965
  %v982 = vpack.c.b16 %v970, %v968
  %v983 = vpack.c.b16 %v971, %v969
  %v997 = vsel %vm364, %v907, 0
  %v1000 = vsel %vm364, %v909, 0
  %v1003 = vsel %vm364, %v911, 0
  %v1006 = vsel %vm364, %v913, 0
  %v1009 = vsel %vm364, %v915, 0
  %v1012 = vsel %vm364, %v917, 0
  %v1015 = vsel %vm364, %v919, 0
  %v1018 = vsel %vm364, %v921, 0
  %v1021 = vsel %vm364, %v923, 0
  %v1024 = vsel %vm364, %v925, 0
  %v1027 = vsel %vm364, %v927, 0
  %v1030 = vsel %vm364, %v929, 0
  %v1033 = vsel %vm364, %v931, 0
  %v1036 = vsel %vm364, %v933, 0
  %v1039 = vsel %vm364, %v935, 0
  %v1042 = vsel %vm364, %v934, 0
  %1044 = vmatprep.subr.bf16.mxu0 0
  %1045 = vmatpush1.bf16.msra.mxu0 0
  %1046 = vmatprep.subr.bf16.mxu0 0
  %1047 = vmatpush1.bf16.msra.mxu0 0
  %1048 = vmatprep.subr.bf16.mxu0 %v983
  %1049 = vmatpush1.bf16.msra.mxu0 %v982
  %1050 = vmatprep.subr.bf16.mxu0 %v981
  %1051 = vmatpush1.bf16.msra.mxu0 %v980
  %1052 = vmatprep.subr.bf16.mxu0 %v979
  %1053 = vmatpush1.bf16.msra.mxu0 %v978
  %1054 = vmatprep.subr.bf16.mxu0 %v977
  %1055 = vmatpush1.bf16.msra.mxu0 %v976
  %1056 = vmatprep.subr.bf16.mxu0 %v975
  %1057 = vmatpush1.bf16.msra.mxu0 %v974
  %1058 = vmatprep.subr.bf16.mxu0 %v973
  %1059 = vmatpush1.bf16.msra.mxu0 %v972
  %1060 = vmatprep.subr.bf16.mxu0 0
  %1061 = vmatpush2.bf16.msra.mxu0 0
  %1062 = vmatprep.subr.bf16.mxu0 0
  %1063 = vmatpush2.bf16.msra.mxu0 0
  %1064 = vmatprep.subr.bf16.mxu0 0
  %1065 = vmatpush2.bf16.msra.mxu0 0
  %1066 = vmatprep.subr.bf16.mxu0 0
  %1067 = vmatpush2.bf16.msra.mxu0 0
  %1068 = vmatprep.subr.bf16.mxu0 0
  %1069 = vmatpush2.bf16.msra.mxu0 0
  %1070 = vmatprep.subr.bf16.mxu0 0
  %1071 = vmatpush2.bf16.msra.mxu0 0
  %1072 = vmatprep.subr.bf16.mxu0 0
  %1073 = vmatpush2.bf16.msra.mxu0 0
  %1074 = vmatprep.subr.bf16.mxu0 0
  %1075 = vmatpush2.bf16.msra.mxu0 0
  %1076 = vmatprep.mubr.bf16.mxu0 0
  %1077 = vmatmul.mubr.bf16.gmra.mxu0 %v997
  %v1078 = vpop.f32.mrf.mxu0
  %v1079 = vadd.f32 0.0, %v1078
  %v1080 = vpop.f32.mrf.mxu0
  %v1081 = vadd.f32 0.0, %v1080
  %v1082 = vpop.f32.mrf.mxu0
  %v1083 = vadd.f32 0.0, %v1082
  %v1084 = vpop.f32.mrf.mxu0
  %v1085 = vadd.f32 0.0, %v1084
  %1086 = vmatprep.mubr.bf16.mxu0 0
  %1087 = vmatmul.mubr.bf16.gmra.mxu0 %v1000
  %v1088 = vpop.f32.mrf.mxu0
  %v1089 = vadd.f32 0.0, %v1088
  %v1090 = vpop.f32.mrf.mxu0
  %v1091 = vadd.f32 0.0, %v1090
  %v1092 = vpop.f32.mrf.mxu0
  %v1093 = vadd.f32 0.0, %v1092
  %v1094 = vpop.f32.mrf.mxu0
  %v1095 = vadd.f32 0.0, %v1094
  %1096 = vmatprep.mubr.bf16.mxu0 0
  %1097 = vmatmul.mubr.bf16.gmra.mxu0 %v1003
  %v1098 = vpop.f32.mrf.mxu0
  %v1099 = vadd.f32 0.0, %v1098
  %v1100 = vpop.f32.mrf.mxu0
  %v1101 = vadd.f32 0.0, %v1100
  %v1102 = vpop.f32.mrf.mxu0
  %v1103 = vadd.f32 0.0, %v1102
  %v1104 = vpop.f32.mrf.mxu0
  %v1105 = vadd.f32 0.0, %v1104
  %1106 = vmatprep.mubr.bf16.mxu0 0
  %1107 = vmatmul.mubr.bf16.gmra.mxu0 %v1006
  %v1108 = vpop.f32.mrf.mxu0
  %v1109 = vadd.f32 0.0, %v1108
  %v1110 = vpop.f32.mrf.mxu0
  %v1111 = vadd.f32 0.0, %v1110
  %v1112 = vpop.f32.mrf.mxu0
  %v1113 = vadd.f32 0.0, %v1112
  %v1114 = vpop.f32.mrf.mxu0
  %v1115 = vadd.f32 0.0, %v1114
  %1116 = vmatprep.mubr.bf16.mxu0 0
  %1117 = vmatmul.mubr.bf16.gmra.mxu0 %v1009
  %v1118 = vpop.f32.mrf.mxu0
  %v1119 = vadd.f32 0.0, %v1118
  %v1120 = vpop.f32.mrf.mxu0
  %v1121 = vadd.f32 0.0, %v1120
  %v1122 = vpop.f32.mrf.mxu0
  %v1123 = vadd.f32 0.0, %v1122
  %v1124 = vpop.f32.mrf.mxu0
  %v1125 = vadd.f32 0.0, %v1124
  %1126 = vmatprep.mubr.bf16.mxu0 0
  %1127 = vmatmul.mubr.bf16.gmra.mxu0 %v1012
  %v1128 = vpop.f32.mrf.mxu0
  %v1129 = vadd.f32 0.0, %v1128
  %v1130 = vpop.f32.mrf.mxu0
  %v1131 = vadd.f32 0.0, %v1130
  %v1132 = vpop.f32.mrf.mxu0
  %v1133 = vadd.f32 0.0, %v1132
  %v1134 = vpop.f32.mrf.mxu0
  %v1135 = vadd.f32 0.0, %v1134
  %1136 = vmatprep.mubr.bf16.mxu0 0
  %1137 = vmatmul.mubr.bf16.gmra.mxu0 %v1015
  %v1138 = vpop.f32.mrf.mxu0
  %v1139 = vadd.f32 0.0, %v1138
  %v1140 = vpop.f32.mrf.mxu0
  %v1141 = vadd.f32 0.0, %v1140
  %v1142 = vpop.f32.mrf.mxu0
  %v1143 = vadd.f32 0.0, %v1142
  %v1144 = vpop.f32.mrf.mxu0
  %v1145 = vadd.f32 0.0, %v1144
  %1146 = vmatprep.mubr.bf16.mxu0 0
  %1147 = vmatmul.mubr.bf16.gmra.mxu0 %v1018
  %v1148 = vpop.f32.mrf.mxu0
  %v1149 = vadd.f32 0.0, %v1148
  %v1150 = vpop.f32.mrf.mxu0
  %v1151 = vadd.f32 0.0, %v1150
  %v1152 = vpop.f32.mrf.mxu0
  %v1153 = vadd.f32 0.0, %v1152
  %v1154 = vpop.f32.mrf.mxu0
  %v1155 = vadd.f32 0.0, %v1154
  %1156 = vmatprep.mubr.bf16.mxu0 0
  %1157 = vmatmul.mubr.bf16.gmra.mxu0 %v1021
  %v1158 = vpop.f32.mrf.mxu0
  %v1159 = vadd.f32 0.0, %v1158
  %v1160 = vpop.f32.mrf.mxu0
  %v1161 = vadd.f32 0.0, %v1160
  %v1162 = vpop.f32.mrf.mxu0
  %v1163 = vadd.f32 0.0, %v1162
  %v1164 = vpop.f32.mrf.mxu0
  %v1165 = vadd.f32 0.0, %v1164
  %1166 = vmatprep.mubr.bf16.mxu0 0
  %1167 = vmatmul.mubr.bf16.gmra.mxu0 %v1024
  %v1168 = vpop.f32.mrf.mxu0
  %v1169 = vadd.f32 0.0, %v1168
  %v1170 = vpop.f32.mrf.mxu0
  %v1171 = vadd.f32 0.0, %v1170
  %v1172 = vpop.f32.mrf.mxu0
  %v1173 = vadd.f32 0.0, %v1172
  %v1174 = vpop.f32.mrf.mxu0
  %v1175 = vadd.f32 0.0, %v1174
  %1176 = vmatprep.mubr.bf16.mxu0 0
  %1177 = vmatmul.mubr.bf16.gmra.mxu0 %v1027
  %v1178 = vpop.f32.mrf.mxu0
  %v1179 = vadd.f32 0.0, %v1178
  %v1180 = vpop.f32.mrf.mxu0
  %v1181 = vadd.f32 0.0, %v1180
  %v1182 = vpop.f32.mrf.mxu0
  %v1183 = vadd.f32 0.0, %v1182
  %v1184 = vpop.f32.mrf.mxu0
  %v1185 = vadd.f32 0.0, %v1184
  %1186 = vmatprep.mubr.bf16.mxu0 0
  %1187 = vmatmul.mubr.bf16.gmra.mxu0 %v1030
  %v1188 = vpop.f32.mrf.mxu0
  %v1189 = vadd.f32 0.0, %v1188
  %v1190 = vpop.f32.mrf.mxu0
  %v1191 = vadd.f32 0.0, %v1190
  %v1192 = vpop.f32.mrf.mxu0
  %v1193 = vadd.f32 0.0, %v1192
  %v1194 = vpop.f32.mrf.mxu0
  %v1195 = vadd.f32 0.0, %v1194
  %1196 = vmatprep.mubr.bf16.mxu0 0
  %1197 = vmatmul.mubr.bf16.gmra.mxu0 %v1033
  %v1198 = vpop.f32.mrf.mxu0
  %v1199 = vadd.f32 0.0, %v1198
  %v1200 = vpop.f32.mrf.mxu0
  %v1201 = vadd.f32 0.0, %v1200
  %v1202 = vpop.f32.mrf.mxu0
  %v1203 = vadd.f32 0.0, %v1202
  %v1204 = vpop.f32.mrf.mxu0
  %v1205 = vadd.f32 0.0, %v1204
  %1206 = vmatprep.mubr.bf16.mxu0 0
  %1207 = vmatmul.mubr.bf16.gmra.mxu0 %v1036
  %v1208 = vpop.f32.mrf.mxu0
  %v1209 = vadd.f32 0.0, %v1208
  %v1210 = vpop.f32.mrf.mxu0
  %v1211 = vadd.f32 0.0, %v1210
  %v1212 = vpop.f32.mrf.mxu0
  %v1213 = vadd.f32 0.0, %v1212
  %v1214 = vpop.f32.mrf.mxu0
  %v1215 = vadd.f32 0.0, %v1214
  %1216 = vmatprep.mubr.bf16.mxu0 0
  %1217 = vmatmul.mubr.bf16.gmra.mxu0 %v1039
  %v1218 = vpop.f32.mrf.mxu0
  %v1219 = vadd.f32 0.0, %v1218
  %v1220 = vpop.f32.mrf.mxu0
  %v1221 = vadd.f32 0.0, %v1220
  %v1222 = vpop.f32.mrf.mxu0
  %v1223 = vadd.f32 0.0, %v1222
  %v1224 = vpop.f32.mrf.mxu0
  %v1225 = vadd.f32 0.0, %v1224
  %1226 = vmatprep.mubr.bf16.mxu0 0
  %1227 = vmatmul.mubr.bf16.gmra.mxu0 %v1042
  %v1228 = vpop.f32.mrf.mxu0
  %v1229 = vadd.f32 0.0, %v1228
  %v1230 = vpop.f32.mrf.mxu0
  %v1231 = vadd.f32 0.0, %v1230
  %v1232 = vpop.f32.mrf.mxu0
  %v1233 = vadd.f32 0.0, %v1232
  %v1234 = vpop.f32.mrf.mxu0
  %v1235 = vadd.f32 0.0, %v1234
  %1236 = vdwg.mxu0
  %v1237 = vadd.f32 %v733, %v1079
  %v1238 = vadd.f32 %v735, %v1081
  %v1239 = vadd.f32 %v737, %v1083
  %v1240 = vadd.f32 %v739, %v1085
  %v1241 = vadd.f32 %v743, %v1089
  %v1242 = vadd.f32 %v745, %v1091
  %v1243 = vadd.f32 %v747, %v1093
  %v1244 = vadd.f32 %v749, %v1095
  %v1245 = vadd.f32 %v753, %v1099
  %v1246 = vadd.f32 %v755, %v1101
  %v1247 = vadd.f32 %v757, %v1103
  %v1248 = vadd.f32 %v759, %v1105
  %v1249 = vadd.f32 %v763, %v1109
  %v1250 = vadd.f32 %v765, %v1111
  %v1251 = vadd.f32 %v767, %v1113
  %v1252 = vadd.f32 %v769, %v1115
  %v1253 = vadd.f32 %v773, %v1119
  %v1254 = vadd.f32 %v775, %v1121
  %v1255 = vadd.f32 %v777, %v1123
  %v1256 = vadd.f32 %v779, %v1125
  %v1257 = vadd.f32 %v783, %v1129
  %v1258 = vadd.f32 %v785, %v1131
  %v1259 = vadd.f32 %v787, %v1133
  %v1260 = vadd.f32 %v789, %v1135
  %v1261 = vadd.f32 %v793, %v1139
  %v1262 = vadd.f32 %v795, %v1141
  %v1263 = vadd.f32 %v797, %v1143
  %v1264 = vadd.f32 %v799, %v1145
  %v1265 = vadd.f32 %v803, %v1149
  %v1266 = vadd.f32 %v805, %v1151
  %v1267 = vadd.f32 %v807, %v1153
  %v1268 = vadd.f32 %v809, %v1155
  %v1269 = vadd.f32 %v813, %v1159
  %v1270 = vadd.f32 %v815, %v1161
  %v1271 = vadd.f32 %v817, %v1163
  %v1272 = vadd.f32 %v819, %v1165
  %v1273 = vadd.f32 %v823, %v1169
  %v1274 = vadd.f32 %v825, %v1171
  %v1275 = vadd.f32 %v827, %v1173
  %v1276 = vadd.f32 %v829, %v1175
  %v1277 = vadd.f32 %v833, %v1179
  %v1278 = vadd.f32 %v835, %v1181
  %v1279 = vadd.f32 %v837, %v1183
  %v1280 = vadd.f32 %v839, %v1185
  %v1281 = vadd.f32 %v843, %v1189
  %v1282 = vadd.f32 %v845, %v1191
  %v1283 = vadd.f32 %v847, %v1193
  %v1284 = vadd.f32 %v849, %v1195
  %v1285 = vadd.f32 %v853, %v1199
  %v1286 = vadd.f32 %v855, %v1201
  %v1287 = vadd.f32 %v857, %v1203
  %v1288 = vadd.f32 %v859, %v1205
  %v1289 = vadd.f32 %v863, %v1209
  %v1290 = vadd.f32 %v865, %v1211
  %v1291 = vadd.f32 %v867, %v1213
  %v1292 = vadd.f32 %v869, %v1215
  %v1293 = vadd.f32 %v873, %v1219
  %v1294 = vadd.f32 %v875, %v1221
  %v1295 = vadd.f32 %v877, %v1223
  %v1296 = vadd.f32 %v879, %v1225
  %v1297 = vadd.f32 %v883, %v1229
  %v1298 = vadd.f32 %v885, %v1231
  %v1299 = vadd.f32 %v887, %v1233
  %v1300 = vadd.f32 %v889, %v1235
  %s1301 = scalar_lea.vmem %s1, 288
  %v1302 = vld [vmem:[%s1301] sm:$0xff]
  %v1303 = vld [vmem:[%s1301 + $0x8] sm:$0xff]
  %v1304 = vld [vmem:[%s1301 + $0x10] sm:$0xff]
  %v1305 = vld [vmem:[%s1301 + $0x18] sm:$0xff]
  %v1306 = vld [vmem:[%s1301 + $0x20] sm:$0xff]
  %v1307 = vld [vmem:[%s1301 + $0x28] sm:$0xff]
  %v1308 = vld [vmem:[%s1301 + $0x30] sm:$0xff]
  %v1309 = vld [vmem:[%s1301 + $0x38] sm:$0xff]
  %v1310 = vld [vmem:[%s1301 + $0x40] sm:$0xff]
  %v1311 = vld [vmem:[%s1301 + $0x48] sm:$0xff]
  %v1312 = vld [vmem:[%s1301 + $0x50] sm:$0xff]
  %v1313 = vld [vmem:[%s1301 + $0x58] sm:$0xff]
  %vm1314 = vsmask.f32 6400
  %v1315 = vrot.slane %v178, 1
  %v1316 = vrot.slane %v180, 2
  %v1317 = vor.u32 %v1315, %v1316
  %v1318 = vrot.slane %v189, 1
  %v1319 = vrot.slane %v185, 2
  %v1320 = vor.u32 %v1318, %v1319
  %v1321 = vsel %vm1314, %v1317, %v1320
  %v1322 = vrot.slane %v197, 1
  %v1323 = vrot.slane %v193, 2
  %v1324 = vor.u32 %v1322, %v1323
  %v1325 = vsel %vm1314, %v1320, %v1324
  %v1326 = vrot.slane %v205, 1
  %v1327 = vrot.slane %v201, 2
  %v1328 = vor.u32 %v1326, %v1327
  %v1329 = vsel %vm1314, %v1324, %v1328
  %v1330 = vrot.slane %v213, 1
  %v1331 = vrot.slane %v209, 2
  %v1332 = vor.u32 %v1330, %v1331
  %v1333 = vsel %vm1314, %v1328, %v1332
  %v1334 = vrot.slane %v221, 1
  %v1335 = vrot.slane %v217, 2
  %v1336 = vor.u32 %v1334, %v1335
  %v1337 = vsel %vm1314, %v1332, %v1336
  %v1338 = vrot.slane %v229, 1
  %v1339 = vrot.slane %v225, 2
  %v1340 = vor.u32 %v1338, %v1339
  %v1341 = vsel %vm1314, %v1336, %v1340
  %v1342 = vrot.slane %v237, 1
  %v1343 = vrot.slane %v233, 2
  %v1344 = vor.u32 %v1342, %v1343
  %v1345 = vsel %vm1314, %v1340, %v1344
  %v1346 = vrot.slane %v245, 1
  %v1347 = vrot.slane %v241, 2
  %v1348 = vor.u32 %v1346, %v1347
  %v1349 = vsel %vm1314, %v1344, %v1348
  %v1350 = vrot.slane %v253, 1
  %v1351 = vrot.slane %v249, 2
  %v1352 = vor.u32 %v1350, %v1351
  %v1353 = vsel %vm1314, %v1348, %v1352
  %v1354 = vrot.slane %v261, 1
  %v1355 = vrot.slane %v257, 2
  %v1356 = vor.u32 %v1354, %v1355
  %v1357 = vsel %vm1314, %v1352, %v1356
  %v1358 = vrot.slane %v269, 1
  %v1359 = vrot.slane %v265, 2
  %v1360 = vor.u32 %v1358, %v1359
  %v1361 = vsel %vm1314, %v1356, %v1360
  %v1362 = vrot.slane %v277, 1
  %v1363 = vrot.slane %v273, 2
  %v1364 = vor.u32 %v1362, %v1363
  %v1365 = vsel %vm1314, %v1360, %v1364
  %v1366 = vrot.slane %v285, 1
  %v1367 = vrot.slane %v281, 2
  %v1368 = vor.u32 %v1366, %v1367
  %v1369 = vsel %vm1314, %v1364, %v1368
  %v1370 = vrot.slane %v293, 1
  %v1371 = vrot.slane %v289, 2
  %v1372 = vor.u32 %v1370, %v1371
  %v1373 = vsel %vm1314, %v1368, %v1372
  %v1374 = vrot.slane %v301, 1
  %v1375 = vrot.slane %v297, 2
  %v1376 = vor.u32 %v1374, %v1375
  %v1377 = vsel %vm1314, %v1372, %v1376
  %v1390 = vunpack.c.l.b16 %v1302
  %v1391 = vunpack.c.h.b16 %v1302
  %v1392 = vunpack.c.l.b16 %v1303
  %v1393 = vunpack.c.h.b16 %v1303
  %v1394 = vunpack.c.l.b16 %v1304
  %v1395 = vunpack.c.h.b16 %v1304
  %v1396 = vunpack.c.l.b16 %v1305
  %v1397 = vunpack.c.h.b16 %v1305
  %v1398 = vunpack.c.l.b16 %v1306
  %v1399 = vunpack.c.h.b16 %v1306
  %v1400 = vunpack.c.l.b16 %v1307
  %v1401 = vunpack.c.h.b16 %v1307
  %v1402 = vunpack.c.l.b16 %v1308
  %v1403 = vunpack.c.h.b16 %v1308
  %v1404 = vunpack.c.l.b16 %v1309
  %v1405 = vunpack.c.h.b16 %v1309
  %v1406 = vunpack.c.l.b16 %v1310
  %v1407 = vunpack.c.h.b16 %v1310
  %v1408 = vunpack.c.l.b16 %v1311
  %v1409 = vunpack.c.h.b16 %v1311
  %v1410 = vunpack.c.l.b16 %v1312
  %v1411 = vunpack.c.h.b16 %v1312
  %v1412 = vunpack.c.l.b16 %v1313
  %v1413 = vunpack.c.h.b16 %v1313
  %v1414 = vpack.c.b16 %v1392, %v1390
  %v1415 = vpack.c.b16 %v1393, %v1391
  %v1416 = vpack.c.b16 %v1396, %v1394
  %v1417 = vpack.c.b16 %v1397, %v1395
  %v1418 = vpack.c.b16 %v1400, %v1398
  %v1419 = vpack.c.b16 %v1401, %v1399
  %v1420 = vpack.c.b16 %v1404, %v1402
  %v1421 = vpack.c.b16 %v1405, %v1403
  %v1422 = vpack.c.b16 %v1408, %v1406
  %v1423 = vpack.c.b16 %v1409, %v1407
  %v1424 = vpack.c.b16 %v1412, %v1410
  %v1425 = vpack.c.b16 %v1413, %v1411
  %v1439 = vsel %vm364, %v1321, 0
  %v1442 = vsel %vm364, %v1325, 0
  %v1445 = vsel %vm364, %v1329, 0
  %v1448 = vsel %vm364, %v1333, 0
  %v1451 = vsel %vm364, %v1337, 0
  %v1454 = vsel %vm364, %v1341, 0
  %v1457 = vsel %vm364, %v1345, 0
  %v1460 = vsel %vm364, %v1349, 0
  %v1463 = vsel %vm364, %v1353, 0
  %v1466 = vsel %vm364, %v1357, 0
  %v1469 = vsel %vm364, %v1361, 0
  %v1472 = vsel %vm364, %v1365, 0
  %v1475 = vsel %vm364, %v1369, 0
  %v1478 = vsel %vm364, %v1373, 0
  %v1481 = vsel %vm364, %v1377, 0
  %v1484 = vsel %vm364, %v1376, 0
  %1486 = vmatprep.subr.bf16.mxu0 0
  %1487 = vmatpush1.bf16.msra.mxu0 0
  %1488 = vmatprep.subr.bf16.mxu0 0
  %1489 = vmatpush1.bf16.msra.mxu0 0
  %1490 = vmatprep.subr.bf16.mxu0 %v1425
  %1491 = vmatpush1.bf16.msra.mxu0 %v1424
  %1492 = vmatprep.subr.bf16.mxu0 %v1423
  %1493 = vmatpush1.bf16.msra.mxu0 %v1422
  %1494 = vmatprep.subr.bf16.mxu0 %v1421
  %1495 = vmatpush1.bf16.msra.mxu0 %v1420
  %1496 = vmatprep.subr.bf16.mxu0 %v1419
  %1497 = vmatpush1.bf16.msra.mxu0 %v1418
  %1498 = vmatprep.subr.bf16.mxu0 %v1417
  %1499 = vmatpush1.bf16.msra.mxu0 %v1416
  %1500 = vmatprep.subr.bf16.mxu0 %v1415
  %1501 = vmatpush1.bf16.msra.mxu0 %v1414
  %1502 = vmatprep.subr.bf16.mxu0 0
  %1503 = vmatpush2.bf16.msra.mxu0 0
  %1504 = vmatprep.subr.bf16.mxu0 0
  %1505 = vmatpush2.bf16.msra.mxu0 0
  %1506 = vmatprep.subr.bf16.mxu0 0
  %1507 = vmatpush2.bf16.msra.mxu0 0
  %1508 = vmatprep.subr.bf16.mxu0 0
  %1509 = vmatpush2.bf16.msra.mxu0 0
  %1510 = vmatprep.subr.bf16.mxu0 0
  %1511 = vmatpush2.bf16.msra.mxu0 0
  %1512 = vmatprep.subr.bf16.mxu0 0
  %1513 = vmatpush2.bf16.msra.mxu0 0
  %1514 = vmatprep.subr.bf16.mxu0 0
  %1515 = vmatpush2.bf16.msra.mxu0 0
  %1516 = vmatprep.subr.bf16.mxu0 0
  %1517 = vmatpush2.bf16.msra.mxu0 0
  %1518 = vmatprep.mubr.bf16.mxu0 0
  %1519 = vmatmul.mubr.bf16.gmra.mxu0 %v1439
  %v1520 = vpop.f32.mrf.mxu0
  %v1521 = vadd.f32 0.0, %v1520
  %v1522 = vpop.f32.mrf.mxu0
  %v1523 = vadd.f32 0.0, %v1522
  %v1524 = vpop.f32.mrf.mxu0
  %v1525 = vadd.f32 0.0, %v1524
  %v1526 = vpop.f32.mrf.mxu0
  %v1527 = vadd.f32 0.0, %v1526
  %1528 = vmatprep.mubr.bf16.mxu0 0
  %1529 = vmatmul.mubr.bf16.gmra.mxu0 %v1442
  %v1530 = vpop.f32.mrf.mxu0
  %v1531 = vadd.f32 0.0, %v1530
  %v1532 = vpop.f32.mrf.mxu0
  %v1533 = vadd.f32 0.0, %v1532
  %v1534 = vpop.f32.mrf.mxu0
  %v1535 = vadd.f32 0.0, %v1534
  %v1536 = vpop.f32.mrf.mxu0
  %v1537 = vadd.f32 0.0, %v1536
  %1538 = vmatprep.mubr.bf16.mxu0 0
  %1539 = vmatmul.mubr.bf16.gmra.mxu0 %v1445
  %v1540 = vpop.f32.mrf.mxu0
  %v1541 = vadd.f32 0.0, %v1540
  %v1542 = vpop.f32.mrf.mxu0
  %v1543 = vadd.f32 0.0, %v1542
  %v1544 = vpop.f32.mrf.mxu0
  %v1545 = vadd.f32 0.0, %v1544
  %v1546 = vpop.f32.mrf.mxu0
  %v1547 = vadd.f32 0.0, %v1546
  %1548 = vmatprep.mubr.bf16.mxu0 0
  %1549 = vmatmul.mubr.bf16.gmra.mxu0 %v1448
  %v1550 = vpop.f32.mrf.mxu0
  %v1551 = vadd.f32 0.0, %v1550
  %v1552 = vpop.f32.mrf.mxu0
  %v1553 = vadd.f32 0.0, %v1552
  %v1554 = vpop.f32.mrf.mxu0
  %v1555 = vadd.f32 0.0, %v1554
  %v1556 = vpop.f32.mrf.mxu0
  %v1557 = vadd.f32 0.0, %v1556
  %1558 = vmatprep.mubr.bf16.mxu0 0
  %1559 = vmatmul.mubr.bf16.gmra.mxu0 %v1451
  %v1560 = vpop.f32.mrf.mxu0
  %v1561 = vadd.f32 0.0, %v1560
  %v1562 = vpop.f32.mrf.mxu0
  %v1563 = vadd.f32 0.0, %v1562
  %v1564 = vpop.f32.mrf.mxu0
  %v1565 = vadd.f32 0.0, %v1564
  %v1566 = vpop.f32.mrf.mxu0
  %v1567 = vadd.f32 0.0, %v1566
  %1568 = vmatprep.mubr.bf16.mxu0 0
  %1569 = vmatmul.mubr.bf16.gmra.mxu0 %v1454
  %v1570 = vpop.f32.mrf.mxu0
  %v1571 = vadd.f32 0.0, %v1570
  %v1572 = vpop.f32.mrf.mxu0
  %v1573 = vadd.f32 0.0, %v1572
  %v1574 = vpop.f32.mrf.mxu0
  %v1575 = vadd.f32 0.0, %v1574
  %v1576 = vpop.f32.mrf.mxu0
  %v1577 = vadd.f32 0.0, %v1576
  %1578 = vmatprep.mubr.bf16.mxu0 0
  %1579 = vmatmul.mubr.bf16.gmra.mxu0 %v1457
  %v1580 = vpop.f32.mrf.mxu0
  %v1581 = vadd.f32 0.0, %v1580
  %v1582 = vpop.f32.mrf.mxu0
  %v1583 = vadd.f32 0.0, %v1582
  %v1584 = vpop.f32.mrf.mxu0
  %v1585 = vadd.f32 0.0, %v1584
  %v1586 = vpop.f32.mrf.mxu0
  %v1587 = vadd.f32 0.0, %v1586
  %1588 = vmatprep.mubr.bf16.mxu0 0
  %1589 = vmatmul.mubr.bf16.gmra.mxu0 %v1460
  %v1590 = vpop.f32.mrf.mxu0
  %v1591 = vadd.f32 0.0, %v1590
  %v1592 = vpop.f32.mrf.mxu0
  %v1593 = vadd.f32 0.0, %v1592
  %v1594 = vpop.f32.mrf.mxu0
  %v1595 = vadd.f32 0.0, %v1594
  %v1596 = vpop.f32.mrf.mxu0
  %v1597 = vadd.f32 0.0, %v1596
  %1598 = vmatprep.mubr.bf16.mxu0 0
  %1599 = vmatmul.mubr.bf16.gmra.mxu0 %v1463
  %v1600 = vpop.f32.mrf.mxu0
  %v1601 = vadd.f32 0.0, %v1600
  %v1602 = vpop.f32.mrf.mxu0
  %v1603 = vadd.f32 0.0, %v1602
  %v1604 = vpop.f32.mrf.mxu0
  %v1605 = vadd.f32 0.0, %v1604
  %v1606 = vpop.f32.mrf.mxu0
  %v1607 = vadd.f32 0.0, %v1606
  %1608 = vmatprep.mubr.bf16.mxu0 0
  %1609 = vmatmul.mubr.bf16.gmra.mxu0 %v1466
  %v1610 = vpop.f32.mrf.mxu0
  %v1611 = vadd.f32 0.0, %v1610
  %v1612 = vpop.f32.mrf.mxu0
  %v1613 = vadd.f32 0.0, %v1612
  %v1614 = vpop.f32.mrf.mxu0
  %v1615 = vadd.f32 0.0, %v1614
  %v1616 = vpop.f32.mrf.mxu0
  %v1617 = vadd.f32 0.0, %v1616
  %1618 = vmatprep.mubr.bf16.mxu0 0
  %1619 = vmatmul.mubr.bf16.gmra.mxu0 %v1469
  %v1620 = vpop.f32.mrf.mxu0
  %v1621 = vadd.f32 0.0, %v1620
  %v1622 = vpop.f32.mrf.mxu0
  %v1623 = vadd.f32 0.0, %v1622
  %v1624 = vpop.f32.mrf.mxu0
  %v1625 = vadd.f32 0.0, %v1624
  %v1626 = vpop.f32.mrf.mxu0
  %v1627 = vadd.f32 0.0, %v1626
  %1628 = vmatprep.mubr.bf16.mxu0 0
  %1629 = vmatmul.mubr.bf16.gmra.mxu0 %v1472
  %v1630 = vpop.f32.mrf.mxu0
  %v1631 = vadd.f32 0.0, %v1630
  %v1632 = vpop.f32.mrf.mxu0
  %v1633 = vadd.f32 0.0, %v1632
  %v1634 = vpop.f32.mrf.mxu0
  %v1635 = vadd.f32 0.0, %v1634
  %v1636 = vpop.f32.mrf.mxu0
  %v1637 = vadd.f32 0.0, %v1636
  %1638 = vmatprep.mubr.bf16.mxu0 0
  %1639 = vmatmul.mubr.bf16.gmra.mxu0 %v1475
  %v1640 = vpop.f32.mrf.mxu0
  %v1641 = vadd.f32 0.0, %v1640
  %v1642 = vpop.f32.mrf.mxu0
  %v1643 = vadd.f32 0.0, %v1642
  %v1644 = vpop.f32.mrf.mxu0
  %v1645 = vadd.f32 0.0, %v1644
  %v1646 = vpop.f32.mrf.mxu0
  %v1647 = vadd.f32 0.0, %v1646
  %1648 = vmatprep.mubr.bf16.mxu0 0
  %1649 = vmatmul.mubr.bf16.gmra.mxu0 %v1478
  %v1650 = vpop.f32.mrf.mxu0
  %v1651 = vadd.f32 0.0, %v1650
  %v1652 = vpop.f32.mrf.mxu0
  %v1653 = vadd.f32 0.0, %v1652
  %v1654 = vpop.f32.mrf.mxu0
  %v1655 = vadd.f32 0.0, %v1654
  %v1656 = vpop.f32.mrf.mxu0
  %v1657 = vadd.f32 0.0, %v1656
  %1658 = vmatprep.mubr.bf16.mxu0 0
  %1659 = vmatmul.mubr.bf16.gmra.mxu0 %v1481
  %v1660 = vpop.f32.mrf.mxu0
  %v1661 = vadd.f32 0.0, %v1660
  %v1662 = vpop.f32.mrf.mxu0
  %v1663 = vadd.f32 0.0, %v1662
  %v1664 = vpop.f32.mrf.mxu0
  %v1665 = vadd.f32 0.0, %v1664
  %v1666 = vpop.f32.mrf.mxu0
  %v1667 = vadd.f32 0.0, %v1666
  %1668 = vmatprep.mubr.bf16.mxu0 0
  %1669 = vmatmul.mubr.bf16.gmra.mxu0 %v1484
  %v1670 = vpop.f32.mrf.mxu0
  %v1671 = vadd.f32 0.0, %v1670
  %v1672 = vpop.f32.mrf.mxu0
  %v1673 = vadd.f32 0.0, %v1672
  %v1674 = vpop.f32.mrf.mxu0
  %v1675 = vadd.f32 0.0, %v1674
  %v1676 = vpop.f32.mrf.mxu0
  %v1677 = vadd.f32 0.0, %v1676
  %1678 = vdwg.mxu0
  %v1679 = vadd.f32 %v1237, %v1521
  %v1680 = vadd.f32 %v1238, %v1523
  %v1681 = vadd.f32 %v1239, %v1525
  %v1682 = vadd.f32 %v1240, %v1527
  %v1683 = vadd.f32 %v1241, %v1531
  %v1684 = vadd.f32 %v1242, %v1533
  %v1685 = vadd.f32 %v1243, %v1535
  %v1686 = vadd.f32 %v1244, %v1537
  %v1687 = vadd.f32 %v1245, %v1541
  %v1688 = vadd.f32 %v1246, %v1543
  %v1689 = vadd.f32 %v1247, %v1545
  %v1690 = vadd.f32 %v1248, %v1547
  %v1691 = vadd.f32 %v1249, %v1551
  %v1692 = vadd.f32 %v1250, %v1553
  %v1693 = vadd.f32 %v1251, %v1555
  %v1694 = vadd.f32 %v1252, %v1557
  %v1695 = vadd.f32 %v1253, %v1561
  %v1696 = vadd.f32 %v1254, %v1563
  %v1697 = vadd.f32 %v1255, %v1565
  %v1698 = vadd.f32 %v1256, %v1567
  %v1699 = vadd.f32 %v1257, %v1571
  %v1700 = vadd.f32 %v1258, %v1573
  %v1701 = vadd.f32 %v1259, %v1575
  %v1702 = vadd.f32 %v1260, %v1577
  %v1703 = vadd.f32 %v1261, %v1581
  %v1704 = vadd.f32 %v1262, %v1583
  %v1705 = vadd.f32 %v1263, %v1585
  %v1706 = vadd.f32 %v1264, %v1587
  %v1707 = vadd.f32 %v1265, %v1591
  %v1708 = vadd.f32 %v1266, %v1593
  %v1709 = vadd.f32 %v1267, %v1595
  %v1710 = vadd.f32 %v1268, %v1597
  %v1711 = vadd.f32 %v1269, %v1601
  %v1712 = vadd.f32 %v1270, %v1603
  %v1713 = vadd.f32 %v1271, %v1605
  %v1714 = vadd.f32 %v1272, %v1607
  %v1715 = vadd.f32 %v1273, %v1611
  %v1716 = vadd.f32 %v1274, %v1613
  %v1717 = vadd.f32 %v1275, %v1615
  %v1718 = vadd.f32 %v1276, %v1617
  %v1719 = vadd.f32 %v1277, %v1621
  %v1720 = vadd.f32 %v1278, %v1623
  %v1721 = vadd.f32 %v1279, %v1625
  %v1722 = vadd.f32 %v1280, %v1627
  %v1723 = vadd.f32 %v1281, %v1631
  %v1724 = vadd.f32 %v1282, %v1633
  %v1725 = vadd.f32 %v1283, %v1635
  %v1726 = vadd.f32 %v1284, %v1637
  %v1727 = vadd.f32 %v1285, %v1641
  %v1728 = vadd.f32 %v1286, %v1643
  %v1729 = vadd.f32 %v1287, %v1645
  %v1730 = vadd.f32 %v1288, %v1647
  %v1731 = vadd.f32 %v1289, %v1651
  %v1732 = vadd.f32 %v1290, %v1653
  %v1733 = vadd.f32 %v1291, %v1655
  %v1734 = vadd.f32 %v1292, %v1657
  %v1735 = vadd.f32 %v1293, %v1661
  %v1736 = vadd.f32 %v1294, %v1663
  %v1737 = vadd.f32 %v1295, %v1665
  %v1738 = vadd.f32 %v1296, %v1667
  %v1739 = vadd.f32 %v1297, %v1671
  %v1740 = vadd.f32 %v1298, %v1673
  %v1741 = vadd.f32 %v1299, %v1675
  %v1742 = vadd.f32 %v1300, %v1677
  %s1743 = scalar_lea.vmem %s1, 384
  %v1744 = vld [vmem:[%s1743] sm:$0xff]
  %v1745 = vld [vmem:[%s1743 + $0x8] sm:$0xff]
  %v1746 = vld [vmem:[%s1743 + $0x10] sm:$0xff]
  %v1747 = vld [vmem:[%s1743 + $0x18] sm:$0xff]
  %v1748 = vld [vmem:[%s1743 + $0x20] sm:$0xff]
  %v1749 = vld [vmem:[%s1743 + $0x28] sm:$0xff]
  %v1750 = vld [vmem:[%s1743 + $0x30] sm:$0xff]
  %v1751 = vld [vmem:[%s1743 + $0x38] sm:$0xff]
  %v1752 = vld [vmem:[%s1743 + $0x40] sm:$0xff]
  %v1753 = vld [vmem:[%s1743 + $0x48] sm:$0xff]
  %v1754 = vld [vmem:[%s1743 + $0x50] sm:$0xff]
  %v1755 = vld [vmem:[%s1743 + $0x58] sm:$0xff]
  %vm1756 = vcmask 1045504
  %v1757 = vrot.slane %v160, 2
  %v1758 = vrot.slane %v161, 2
  %v1759 = vsel %vm1756, %v1757, %v1758
  %v1760 = vrot.slane %v162, 2
  %v1761 = vsel %vm1756, %v1758, %v1760
  %v1762 = vrot.slane %v163, 2
  %v1763 = vsel %vm1756, %v1760, %v1762
  %v1764 = vrot.slane %v164, 2
  %v1765 = vsel %vm1756, %v1762, %v1764
  %v1766 = vrot.slane %v165, 2
  %v1767 = vsel %vm1756, %v1764, %v1766
  %v1768 = vrot.slane %v166, 2
  %v1769 = vsel %vm1756, %v1766, %v1768
  %v1770 = vrot.slane %v167, 2
  %v1771 = vsel %vm1756, %v1768, %v1770
  %v1772 = vrot.slane %v168, 2
  %v1773 = vsel %vm1756, %v1770, %v1772
  %v1774 = vrot.slane %v169, 2
  %v1775 = vsel %vm1756, %v1772, %v1774
  %v1776 = vrot.slane %v170, 2
  %v1777 = vsel %vm1756, %v1774, %v1776
  %v1778 = vrot.slane %v171, 2
  %v1779 = vsel %vm1756, %v1776, %v1778
  %v1780 = vrot.slane %v172, 2
  %v1781 = vsel %vm1756, %v1778, %v1780
  %v1782 = vrot.slane %v173, 2
  %v1783 = vsel %vm1756, %v1780, %v1782
  %v1784 = vrot.slane %v174, 2
  %v1785 = vsel %vm1756, %v1782, %v1784
  %v1786 = vrot.slane %v175, 2
  %v1787 = vsel %vm1756, %v1784, %v1786
  %v1800 = vunpack.c.l.b16 %v1744
  %v1801 = vunpack.c.h.b16 %v1744
  %v1802 = vunpack.c.l.b16 %v1745
  %v1803 = vunpack.c.h.b16 %v1745
  %v1804 = vunpack.c.l.b16 %v1746
  %v1805 = vunpack.c.h.b16 %v1746
  %v1806 = vunpack.c.l.b16 %v1747
  %v1807 = vunpack.c.h.b16 %v1747
  %v1808 = vunpack.c.l.b16 %v1748
  %v1809 = vunpack.c.h.b16 %v1748
  %v1810 = vunpack.c.l.b16 %v1749
  %v1811 = vunpack.c.h.b16 %v1749
  %v1812 = vunpack.c.l.b16 %v1750
  %v1813 = vunpack.c.h.b16 %v1750
  %v1814 = vunpack.c.l.b16 %v1751
  %v1815 = vunpack.c.h.b16 %v1751
  %v1816 = vunpack.c.l.b16 %v1752
  %v1817 = vunpack.c.h.b16 %v1752
  %v1818 = vunpack.c.l.b16 %v1753
  %v1819 = vunpack.c.h.b16 %v1753
  %v1820 = vunpack.c.l.b16 %v1754
  %v1821 = vunpack.c.h.b16 %v1754
  %v1822 = vunpack.c.l.b16 %v1755
  %v1823 = vunpack.c.h.b16 %v1755
  %v1824 = vpack.c.b16 %v1802, %v1800
  %v1825 = vpack.c.b16 %v1803, %v1801
  %v1826 = vpack.c.b16 %v1806, %v1804
  %v1827 = vpack.c.b16 %v1807, %v1805
  %v1828 = vpack.c.b16 %v1810, %v1808
  %v1829 = vpack.c.b16 %v1811, %v1809
  %v1830 = vpack.c.b16 %v1814, %v1812
  %v1831 = vpack.c.b16 %v1815, %v1813
  %v1832 = vpack.c.b16 %v1818, %v1816
  %v1833 = vpack.c.b16 %v1819, %v1817
  %v1834 = vpack.c.b16 %v1822, %v1820
  %v1835 = vpack.c.b16 %v1823, %v1821
  %v1849 = vsel %vm364, %v1759, 0
  %v1852 = vsel %vm364, %v1761, 0
  %v1855 = vsel %vm364, %v1763, 0
  %v1858 = vsel %vm364, %v1765, 0
  %v1861 = vsel %vm364, %v1767, 0
  %v1864 = vsel %vm364, %v1769, 0
  %v1867 = vsel %vm364, %v1771, 0
  %v1870 = vsel %vm364, %v1773, 0
  %v1873 = vsel %vm364, %v1775, 0
  %v1876 = vsel %vm364, %v1777, 0
  %v1879 = vsel %vm364, %v1779, 0
  %v1882 = vsel %vm364, %v1781, 0
  %v1885 = vsel %vm364, %v1783, 0
  %v1888 = vsel %vm364, %v1785, 0
  %v1891 = vsel %vm364, %v1787, 0
  %v1894 = vsel %vm364, %v1786, 0
  %1896 = vmatprep.subr.bf16.mxu0 0
  %1897 = vmatpush1.bf16.msra.mxu0 0
  %1898 = vmatprep.subr.bf16.mxu0 0
  %1899 = vmatpush1.bf16.msra.mxu0 0
  %1900 = vmatprep.subr.bf16.mxu0 %v1835
  %1901 = vmatpush1.bf16.msra.mxu0 %v1834
  %1902 = vmatprep.subr.bf16.mxu0 %v1833
  %1903 = vmatpush1.bf16.msra.mxu0 %v1832
  %1904 = vmatprep.subr.bf16.mxu0 %v1831
  %1905 = vmatpush1.bf16.msra.mxu0 %v1830
  %1906 = vmatprep.subr.bf16.mxu0 %v1829
  %1907 = vmatpush1.bf16.msra.mxu0 %v1828
  %1908 = vmatprep.subr.bf16.mxu0 %v1827
  %1909 = vmatpush1.bf16.msra.mxu0 %v1826
  %1910 = vmatprep.subr.bf16.mxu0 %v1825
  %1911 = vmatpush1.bf16.msra.mxu0 %v1824
  %1912 = vmatprep.subr.bf16.mxu0 0
  %1913 = vmatpush2.bf16.msra.mxu0 0
  %1914 = vmatprep.subr.bf16.mxu0 0
  %1915 = vmatpush2.bf16.msra.mxu0 0
  %1916 = vmatprep.subr.bf16.mxu0 0
  %1917 = vmatpush2.bf16.msra.mxu0 0
  %1918 = vmatprep.subr.bf16.mxu0 0
  %1919 = vmatpush2.bf16.msra.mxu0 0
  %1920 = vmatprep.subr.bf16.mxu0 0
  %1921 = vmatpush2.bf16.msra.mxu0 0
  %1922 = vmatprep.subr.bf16.mxu0 0
  %1923 = vmatpush2.bf16.msra.mxu0 0
  %1924 = vmatprep.subr.bf16.mxu0 0
  %1925 = vmatpush2.bf16.msra.mxu0 0
  %1926 = vmatprep.subr.bf16.mxu0 0
  %1927 = vmatpush2.bf16.msra.mxu0 0
  %1928 = vmatprep.mubr.bf16.mxu0 0
  %1929 = vmatmul.mubr.bf16.gmra.mxu0 %v1849
  %v1930 = vpop.f32.mrf.mxu0
  %v1931 = vadd.f32 0.0, %v1930
  %v1932 = vpop.f32.mrf.mxu0
  %v1933 = vadd.f32 0.0, %v1932
  %v1934 = vpop.f32.mrf.mxu0
  %v1935 = vadd.f32 0.0, %v1934
  %v1936 = vpop.f32.mrf.mxu0
  %v1937 = vadd.f32 0.0, %v1936
  %1938 = vmatprep.mubr.bf16.mxu0 0
  %1939 = vmatmul.mubr.bf16.gmra.mxu0 %v1852
  %v1940 = vpop.f32.mrf.mxu0
  %v1941 = vadd.f32 0.0, %v1940
  %v1942 = vpop.f32.mrf.mxu0
  %v1943 = vadd.f32 0.0, %v1942
  %v1944 = vpop.f32.mrf.mxu0
  %v1945 = vadd.f32 0.0, %v1944
  %v1946 = vpop.f32.mrf.mxu0
  %v1947 = vadd.f32 0.0, %v1946
  %1948 = vmatprep.mubr.bf16.mxu0 0
  %1949 = vmatmul.mubr.bf16.gmra.mxu0 %v1855
  %v1950 = vpop.f32.mrf.mxu0
  %v1951 = vadd.f32 0.0, %v1950
  %v1952 = vpop.f32.mrf.mxu0
  %v1953 = vadd.f32 0.0, %v1952
  %v1954 = vpop.f32.mrf.mxu0
  %v1955 = vadd.f32 0.0, %v1954
  %v1956 = vpop.f32.mrf.mxu0
  %v1957 = vadd.f32 0.0, %v1956
  %1958 = vmatprep.mubr.bf16.mxu0 0
  %1959 = vmatmul.mubr.bf16.gmra.mxu0 %v1858
  %v1960 = vpop.f32.mrf.mxu0
  %v1961 = vadd.f32 0.0, %v1960
  %v1962 = vpop.f32.mrf.mxu0
  %v1963 = vadd.f32 0.0, %v1962
  %v1964 = vpop.f32.mrf.mxu0
  %v1965 = vadd.f32 0.0, %v1964
  %v1966 = vpop.f32.mrf.mxu0
  %v1967 = vadd.f32 0.0, %v1966
  %1968 = vmatprep.mubr.bf16.mxu0 0
  %1969 = vmatmul.mubr.bf16.gmra.mxu0 %v1861
  %v1970 = vpop.f32.mrf.mxu0
  %v1971 = vadd.f32 0.0, %v1970
  %v1972 = vpop.f32.mrf.mxu0
  %v1973 = vadd.f32 0.0, %v1972
  %v1974 = vpop.f32.mrf.mxu0
  %v1975 = vadd.f32 0.0, %v1974
  %v1976 = vpop.f32.mrf.mxu0
  %v1977 = vadd.f32 0.0, %v1976
  %1978 = vmatprep.mubr.bf16.mxu0 0
  %1979 = vmatmul.mubr.bf16.gmra.mxu0 %v1864
  %v1980 = vpop.f32.mrf.mxu0
  %v1981 = vadd.f32 0.0, %v1980
  %v1982 = vpop.f32.mrf.mxu0
  %v1983 = vadd.f32 0.0, %v1982
  %v1984 = vpop.f32.mrf.mxu0
  %v1985 = vadd.f32 0.0, %v1984
  %v1986 = vpop.f32.mrf.mxu0
  %v1987 = vadd.f32 0.0, %v1986
  %1988 = vmatprep.mubr.bf16.mxu0 0
  %1989 = vmatmul.mubr.bf16.gmra.mxu0 %v1867
  %v1990 = vpop.f32.mrf.mxu0
  %v1991 = vadd.f32 0.0, %v1990
  %v1992 = vpop.f32.mrf.mxu0
  %v1993 = vadd.f32 0.0, %v1992
  %v1994 = vpop.f32.mrf.mxu0
  %v1995 = vadd.f32 0.0, %v1994
  %v1996 = vpop.f32.mrf.mxu0
  %v1997 = vadd.f32 0.0, %v1996
  %1998 = vmatprep.mubr.bf16.mxu0 0
  %1999 = vmatmul.mubr.bf16.gmra.mxu0 %v1870
  %v2000 = vpop.f32.mrf.mxu0
  %v2001 = vadd.f32 0.0, %v2000
  %v2002 = vpop.f32.mrf.mxu0
  %v2003 = vadd.f32 0.0, %v2002
  %v2004 = vpop.f32.mrf.mxu0
  %v2005 = vadd.f32 0.0, %v2004
  %v2006 = vpop.f32.mrf.mxu0
  %v2007 = vadd.f32 0.0, %v2006
  %2008 = vmatprep.mubr.bf16.mxu0 0
  %2009 = vmatmul.mubr.bf16.gmra.mxu0 %v1873
  %v2010 = vpop.f32.mrf.mxu0
  %v2011 = vadd.f32 0.0, %v2010
  %v2012 = vpop.f32.mrf.mxu0
  %v2013 = vadd.f32 0.0, %v2012
  %v2014 = vpop.f32.mrf.mxu0
  %v2015 = vadd.f32 0.0, %v2014
  %v2016 = vpop.f32.mrf.mxu0
  %v2017 = vadd.f32 0.0, %v2016
  %2018 = vmatprep.mubr.bf16.mxu0 0
  %2019 = vmatmul.mubr.bf16.gmra.mxu0 %v1876
  %v2020 = vpop.f32.mrf.mxu0
  %v2021 = vadd.f32 0.0, %v2020
  %v2022 = vpop.f32.mrf.mxu0
  %v2023 = vadd.f32 0.0, %v2022
  %v2024 = vpop.f32.mrf.mxu0
  %v2025 = vadd.f32 0.0, %v2024
  %v2026 = vpop.f32.mrf.mxu0
  %v2027 = vadd.f32 0.0, %v2026
  %2028 = vmatprep.mubr.bf16.mxu0 0
  %2029 = vmatmul.mubr.bf16.gmra.mxu0 %v1879
  %v2030 = vpop.f32.mrf.mxu0
  %v2031 = vadd.f32 0.0, %v2030
  %v2032 = vpop.f32.mrf.mxu0
  %v2033 = vadd.f32 0.0, %v2032
  %v2034 = vpop.f32.mrf.mxu0
  %v2035 = vadd.f32 0.0, %v2034
  %v2036 = vpop.f32.mrf.mxu0
  %v2037 = vadd.f32 0.0, %v2036
  %2038 = vmatprep.mubr.bf16.mxu0 0
  %2039 = vmatmul.mubr.bf16.gmra.mxu0 %v1882
  %v2040 = vpop.f32.mrf.mxu0
  %v2041 = vadd.f32 0.0, %v2040
  %v2042 = vpop.f32.mrf.mxu0
  %v2043 = vadd.f32 0.0, %v2042
  %v2044 = vpop.f32.mrf.mxu0
  %v2045 = vadd.f32 0.0, %v2044
  %v2046 = vpop.f32.mrf.mxu0
  %v2047 = vadd.f32 0.0, %v2046
  %2048 = vmatprep.mubr.bf16.mxu0 0
  %2049 = vmatmul.mubr.bf16.gmra.mxu0 %v1885
  %v2050 = vpop.f32.mrf.mxu0
  %v2051 = vadd.f32 0.0, %v2050
  %v2052 = vpop.f32.mrf.mxu0
  %v2053 = vadd.f32 0.0, %v2052
  %v2054 = vpop.f32.mrf.mxu0
  %v2055 = vadd.f32 0.0, %v2054
  %v2056 = vpop.f32.mrf.mxu0
  %v2057 = vadd.f32 0.0, %v2056
  %2058 = vmatprep.mubr.bf16.mxu0 0
  %2059 = vmatmul.mubr.bf16.gmra.mxu0 %v1888
  %v2060 = vpop.f32.mrf.mxu0
  %v2061 = vadd.f32 0.0, %v2060
  %v2062 = vpop.f32.mrf.mxu0
  %v2063 = vadd.f32 0.0, %v2062
  %v2064 = vpop.f32.mrf.mxu0
  %v2065 = vadd.f32 0.0, %v2064
  %v2066 = vpop.f32.mrf.mxu0
  %v2067 = vadd.f32 0.0, %v2066
  %2068 = vmatprep.mubr.bf16.mxu0 0
  %2069 = vmatmul.mubr.bf16.gmra.mxu0 %v1891
  %v2070 = vpop.f32.mrf.mxu0
  %v2071 = vadd.f32 0.0, %v2070
  %v2072 = vpop.f32.mrf.mxu0
  %v2073 = vadd.f32 0.0, %v2072
  %v2074 = vpop.f32.mrf.mxu0
  %v2075 = vadd.f32 0.0, %v2074
  %v2076 = vpop.f32.mrf.mxu0
  %v2077 = vadd.f32 0.0, %v2076
  %2078 = vmatprep.mubr.bf16.mxu0 0
  %2079 = vmatmul.mubr.bf16.gmra.mxu0 %v1894
  %v2080 = vpop.f32.mrf.mxu0
  %v2081 = vadd.f32 0.0, %v2080
  %v2082 = vpop.f32.mrf.mxu0
  %v2083 = vadd.f32 0.0, %v2082
  %v2084 = vpop.f32.mrf.mxu0
  %v2085 = vadd.f32 0.0, %v2084
  %v2086 = vpop.f32.mrf.mxu0
  %v2087 = vadd.f32 0.0, %v2086
  %2088 = vdwg.mxu0
  %v2089 = vadd.f32 %v1679, %v1931
  %v2090 = vadd.f32 %v1680, %v1933
  %v2091 = vadd.f32 %v1681, %v1935
  %v2092 = vadd.f32 %v1682, %v1937
  %v2093 = vadd.f32 %v1683, %v1941
  %v2094 = vadd.f32 %v1684, %v1943
  %v2095 = vadd.f32 %v1685, %v1945
  %v2096 = vadd.f32 %v1686, %v1947
  %v2097 = vadd.f32 %v1687, %v1951
  %v2098 = vadd.f32 %v1688, %v1953
  %v2099 = vadd.f32 %v1689, %v1955
  %v2100 = vadd.f32 %v1690, %v1957
  %v2101 = vadd.f32 %v1691, %v1961
  %v2102 = vadd.f32 %v1692, %v1963
  %v2103 = vadd.f32 %v1693, %v1965
  %v2104 = vadd.f32 %v1694, %v1967
  %v2105 = vadd.f32 %v1695, %v1971
  %v2106 = vadd.f32 %v1696, %v1973
  %v2107 = vadd.f32 %v1697, %v1975
  %v2108 = vadd.f32 %v1698, %v1977
  %v2109 = vadd.f32 %v1699, %v1981
  %v2110 = vadd.f32 %v1700, %v1983
  %v2111 = vadd.f32 %v1701, %v1985
  %v2112 = vadd.f32 %v1702, %v1987
  %v2113 = vadd.f32 %v1703, %v1991
  %v2114 = vadd.f32 %v1704, %v1993
  %v2115 = vadd.f32 %v1705, %v1995
  %v2116 = vadd.f32 %v1706, %v1997
  %v2117 = vadd.f32 %v1707, %v2001
  %v2118 = vadd.f32 %v1708, %v2003
  %v2119 = vadd.f32 %v1709, %v2005
  %v2120 = vadd.f32 %v1710, %v2007
  %v2121 = vadd.f32 %v1711, %v2011
  %v2122 = vadd.f32 %v1712, %v2013
  %v2123 = vadd.f32 %v1713, %v2015
  %v2124 = vadd.f32 %v1714, %v2017
  %v2125 = vadd.f32 %v1715, %v2021
  %v2126 = vadd.f32 %v1716, %v2023
  %v2127 = vadd.f32 %v1717, %v2025
  %v2128 = vadd.f32 %v1718, %v2027
  %v2129 = vadd.f32 %v1719, %v2031
  %v2130 = vadd.f32 %v1720, %v2033
  %v2131 = vadd.f32 %v1721, %v2035
  %v2132 = vadd.f32 %v1722, %v2037
  %v2133 = vadd.f32 %v1723, %v2041
  %v2134 = vadd.f32 %v1724, %v2043
  %v2135 = vadd.f32 %v1725, %v2045
  %v2136 = vadd.f32 %v1726, %v2047
  %v2137 = vadd.f32 %v1727, %v2051
  %v2138 = vadd.f32 %v1728, %v2053
  %v2139 = vadd.f32 %v1729, %v2055
  %v2140 = vadd.f32 %v1730, %v2057
  %v2141 = vadd.f32 %v1731, %v2061
  %v2142 = vadd.f32 %v1732, %v2063
  %v2143 = vadd.f32 %v1733, %v2065
  %v2144 = vadd.f32 %v1734, %v2067
  %v2145 = vadd.f32 %v1735, %v2071
  %v2146 = vadd.f32 %v1736, %v2073
  %v2147 = vadd.f32 %v1737, %v2075
  %v2148 = vadd.f32 %v1738, %v2077
  %v2149 = vadd.f32 %v1739, %v2081
  %v2150 = vadd.f32 %v1740, %v2083
  %v2151 = vadd.f32 %v1741, %v2085
  %v2152 = vadd.f32 %v1742, %v2087
  %v2153 = vld [vmem:[%s2] sm:$0x3]
  %v2155 = vlaneseq
  %v2156 = vshrl.u32 %v2155, 7
  %v2157 = vsub.s32 0, %v2156
  %v2158 = vrot.slane %v2153, %v2157
  %v2159 = vlaneseq
  %v2160 = vshrl.u32 %v2159, 7
  %v2161 = vsub.s32 1, %v2160
  %v2162 = vrot.slane %v2153, %v2161
  %v2165 = vadd.f32 %v2089, %v2158
  %v2166 = vadd.f32 %v2090, %v2162
  %v2167 = vadd.f32 %v2091, %v2158
  %v2168 = vadd.f32 %v2092, %v2162
  %v2169 = vadd.f32 %v2093, %v2158
  %v2170 = vadd.f32 %v2094, %v2162
  %v2171 = vadd.f32 %v2095, %v2158
  %v2172 = vadd.f32 %v2096, %v2162
  %v2173 = vadd.f32 %v2097, %v2158
  %v2174 = vadd.f32 %v2098, %v2162
  %v2175 = vadd.f32 %v2099, %v2158
  %v2176 = vadd.f32 %v2100, %v2162
  %v2177 = vadd.f32 %v2101, %v2158
  %v2178 = vadd.f32 %v2102, %v2162
  %v2179 = vadd.f32 %v2103, %v2158
  %v2180 = vadd.f32 %v2104, %v2162
  %v2181 = vadd.f32 %v2105, %v2158
  %v2182 = vadd.f32 %v2106, %v2162
  %v2183 = vadd.f32 %v2107, %v2158
  %v2184 = vadd.f32 %v2108, %v2162
  %v2185 = vadd.f32 %v2109, %v2158
  %v2186 = vadd.f32 %v2110, %v2162
  %v2187 = vadd.f32 %v2111, %v2158
  %v2188 = vadd.f32 %v2112, %v2162
  %v2189 = vadd.f32 %v2113, %v2158
  %v2190 = vadd.f32 %v2114, %v2162
  %v2191 = vadd.f32 %v2115, %v2158
  %v2192 = vadd.f32 %v2116, %v2162
  %v2193 = vadd.f32 %v2117, %v2158
  %v2194 = vadd.f32 %v2118, %v2162
  %v2195 = vadd.f32 %v2119, %v2158
  %v2196 = vadd.f32 %v2120, %v2162
  %v2197 = vadd.f32 %v2121, %v2158
  %v2198 = vadd.f32 %v2122, %v2162
  %v2199 = vadd.f32 %v2123, %v2158
  %v2200 = vadd.f32 %v2124, %v2162
  %v2201 = vadd.f32 %v2125, %v2158
  %v2202 = vadd.f32 %v2126, %v2162
  %v2203 = vadd.f32 %v2127, %v2158
  %v2204 = vadd.f32 %v2128, %v2162
  %v2205 = vadd.f32 %v2129, %v2158
  %v2206 = vadd.f32 %v2130, %v2162
  %v2207 = vadd.f32 %v2131, %v2158
  %v2208 = vadd.f32 %v2132, %v2162
  %v2209 = vadd.f32 %v2133, %v2158
  %v2210 = vadd.f32 %v2134, %v2162
  %v2211 = vadd.f32 %v2135, %v2158
  %v2212 = vadd.f32 %v2136, %v2162
  %v2213 = vadd.f32 %v2137, %v2158
  %v2214 = vadd.f32 %v2138, %v2162
  %v2215 = vadd.f32 %v2139, %v2158
  %v2216 = vadd.f32 %v2140, %v2162
  %v2217 = vadd.f32 %v2141, %v2158
  %v2218 = vadd.f32 %v2142, %v2162
  %v2219 = vadd.f32 %v2143, %v2158
  %v2220 = vadd.f32 %v2144, %v2162
  %v2221 = vadd.f32 %v2145, %v2158
  %v2222 = vadd.f32 %v2146, %v2162
  %v2223 = vadd.f32 %v2147, %v2158
  %v2224 = vadd.f32 %v2148, %v2162
  %v2225 = vadd.f32 %v2149, %v2158
  %v2226 = vadd.f32 %v2150, %v2162
  %v2227 = vadd.f32 %v2151, %v2158
  %v2228 = vadd.f32 %v2152, %v2162
  %v2229 = vmax.f32 %v2165, 0.0
  %v2230 = vmax.f32 %v2166, 0.0
  %v2231 = vmax.f32 %v2167, 0.0
  %v2232 = vmax.f32 %v2168, 0.0
  %v2233 = vmax.f32 %v2169, 0.0
  %v2234 = vmax.f32 %v2170, 0.0
  %v2235 = vmax.f32 %v2171, 0.0
  %v2236 = vmax.f32 %v2172, 0.0
  %v2237 = vmax.f32 %v2173, 0.0
  %v2238 = vmax.f32 %v2174, 0.0
  %v2239 = vmax.f32 %v2175, 0.0
  %v2240 = vmax.f32 %v2176, 0.0
  %v2241 = vmax.f32 %v2177, 0.0
  %v2242 = vmax.f32 %v2178, 0.0
  %v2243 = vmax.f32 %v2179, 0.0
  %v2244 = vmax.f32 %v2180, 0.0
  %v2245 = vmax.f32 %v2181, 0.0
  %v2246 = vmax.f32 %v2182, 0.0
  %v2247 = vmax.f32 %v2183, 0.0
  %v2248 = vmax.f32 %v2184, 0.0
  %v2249 = vmax.f32 %v2185, 0.0
  %v2250 = vmax.f32 %v2186, 0.0
  %v2251 = vmax.f32 %v2187, 0.0
  %v2252 = vmax.f32 %v2188, 0.0
  %v2253 = vmax.f32 %v2189, 0.0
  %v2254 = vmax.f32 %v2190, 0.0
  %v2255 = vmax.f32 %v2191, 0.0
  %v2256 = vmax.f32 %v2192, 0.0
  %v2257 = vmax.f32 %v2193, 0.0
  %v2258 = vmax.f32 %v2194, 0.0
  %v2259 = vmax.f32 %v2195, 0.0
  %v2260 = vmax.f32 %v2196, 0.0
  %v2261 = vmax.f32 %v2197, 0.0
  %v2262 = vmax.f32 %v2198, 0.0
  %v2263 = vmax.f32 %v2199, 0.0
  %v2264 = vmax.f32 %v2200, 0.0
  %v2265 = vmax.f32 %v2201, 0.0
  %v2266 = vmax.f32 %v2202, 0.0
  %v2267 = vmax.f32 %v2203, 0.0
  %v2268 = vmax.f32 %v2204, 0.0
  %v2269 = vmax.f32 %v2205, 0.0
  %v2270 = vmax.f32 %v2206, 0.0
  %v2271 = vmax.f32 %v2207, 0.0
  %v2272 = vmax.f32 %v2208, 0.0
  %v2273 = vmax.f32 %v2209, 0.0
  %v2274 = vmax.f32 %v2210, 0.0
  %v2275 = vmax.f32 %v2211, 0.0
  %v2276 = vmax.f32 %v2212, 0.0
  %v2277 = vmax.f32 %v2213, 0.0
  %v2278 = vmax.f32 %v2214, 0.0
  %v2279 = vmax.f32 %v2215, 0.0
  %v2280 = vmax.f32 %v2216, 0.0
  %v2281 = vmax.f32 %v2217, 0.0
  %v2282 = vmax.f32 %v2218, 0.0
  %v2283 = vmax.f32 %v2219, 0.0
  %v2284 = vmax.f32 %v2220, 0.0
  %v2285 = vmax.f32 %v2221, 0.0
  %v2286 = vmax.f32 %v2222, 0.0
  %v2287 = vmax.f32 %v2223, 0.0
  %v2288 = vmax.f32 %v2224, 0.0
  %v2289 = vmax.f32 %v2225, 0.0
  %v2290 = vmax.f32 %v2226, 0.0
  %v2291 = vmax.f32 %v2227, 0.0
  %v2292 = vmax.f32 %v2228, 0.0
  %vm2357 = vcmask 1046528
  %v2358 = vrot.slane %v2229, 1
  %v2359 = vrot.slane %v2231, 1
  %v2360 = vsel %vm2357, %v2358, %v2359
  %v2361 = vrot.slane %v2230, 1
  %v2362 = vrot.slane %v2232, 1
  %v2363 = vsel %vm2357, %v2361, %v2362
  %v2364 = vrot.slane %v2233, 1
  %v2365 = vsel %vm2357, %v2359, %v2364
  %v2366 = vrot.slane %v2234, 1
  %v2367 = vsel %vm2357, %v2362, %v2366
  %v2368 = vrot.slane %v2235, 1
  %v2369 = vsel %vm2357, %v2364, %v2368
  %v2370 = vrot.slane %v2236, 1
  %v2371 = vsel %vm2357, %v2366, %v2370
  %v2372 = vrot.slane %v2237, 1
  %v2373 = vsel %vm2357, %v2368, %v2372
  %v2374 = vrot.slane %v2238, 1
  %v2375 = vsel %vm2357, %v2370, %v2374
  %v2376 = vrot.slane %v2239, 1
  %v2377 = vsel %vm2357, %v2372, %v2376
  %v2378 = vrot.slane %v2240, 1
  %v2379 = vsel %vm2357, %v2374, %v2378
  %v2380 = vrot.slane %v2241, 1
  %v2381 = vsel %vm2357, %v2376, %v2380
  %v2382 = vrot.slane %v2242, 1
  %v2383 = vsel %vm2357, %v2378, %v2382
  %v2384 = vrot.slane %v2243, 1
  %v2385 = vsel %vm2357, %v2380, %v2384
  %v2386 = vrot.slane %v2244, 1
  %v2387 = vsel %vm2357, %v2382, %v2386
  %v2388 = vrot.slane %v2245, 1
  %v2389 = vsel %vm2357, %v2384, %v2388
  %v2390 = vrot.slane %v2246, 1
  %v2391 = vsel %vm2357, %v2386, %v2390
  %v2392 = vrot.slane %v2247, 1
  %v2393 = vsel %vm2357, %v2388, %v2392
  %v2394 = vrot.slane %v2248, 1
  %v2395 = vsel %vm2357, %v2390, %v2394
  %v2396 = vrot.slane %v2249, 1
  %v2397 = vsel %vm2357, %v2392, %v2396
  %v2398 = vrot.slane %v2250, 1
  %v2399 = vsel %vm2357, %v2394, %v2398
  %v2400 = vrot.slane %v2251, 1
  %v2401 = vsel %vm2357, %v2396, %v2400
  %v2402 = vrot.slane %v2252, 1
  %v2403 = vsel %vm2357, %v2398, %v2402
  %v2404 = vrot.slane %v2253, 1
  %v2405 = vsel %vm2357, %v2400, %v2404
  %v2406 = vrot.slane %v2254, 1
  %v2407 = vsel %vm2357, %v2402, %v2406
  %v2408 = vrot.slane %v2255, 1
  %v2409 = vsel %vm2357, %v2404, %v2408
  %v2410 = vrot.slane %v2256, 1
  %v2411 = vsel %vm2357, %v2406, %v2410
  %v2412 = vrot.slane %v2257, 1
  %v2413 = vsel %vm2357, %v2408, %v2412
  %v2414 = vrot.slane %v2258, 1
  %v2415 = vsel %vm2357, %v2410, %v2414
  %v2416 = vrot.slane %v2259, 1
  %v2417 = vsel %vm2357, %v2412, %v2416
  %v2418 = vrot.slane %v2260, 1
  %v2419 = vsel %vm2357, %v2414, %v2418
  %v2420 = vrot.slane %v2261, 1
  %v2421 = vsel %vm2357, %v2416, %v2420
  %v2422 = vrot.slane %v2262, 1
  %v2423 = vsel %vm2357, %v2418, %v2422
  %v2424 = vrot.slane %v2263, 1
  %v2425 = vsel %vm2357, %v2420, %v2424
  %v2426 = vrot.slane %v2264, 1
  %v2427 = vsel %vm2357, %v2422, %v2426
  %v2428 = vrot.slane %v2265, 1
  %v2429 = vsel %vm2357, %v2424, %v2428
  %v2430 = vrot.slane %v2266, 1
  %v2431 = vsel %vm2357, %v2426, %v2430
  %v2432 = vrot.slane %v2267, 1
  %v2433 = vsel %vm2357, %v2428, %v2432
  %v2434 = vrot.slane %v2268, 1
  %v2435 = vsel %vm2357, %v2430, %v2434
  %v2436 = vrot.slane %v2269, 1
  %v2437 = vsel %vm2357, %v2432, %v2436
  %v2438 = vrot.slane %v2270, 1
  %v2439 = vsel %vm2357, %v2434, %v2438
  %v2440 = vrot.slane %v2271, 1
  %v2441 = vsel %vm2357, %v2436, %v2440
  %v2442 = vrot.slane %v2272, 1
  %v2443 = vsel %vm2357, %v2438, %v2442
  %v2444 = vrot.slane %v2273, 1
  %v2445 = vsel %vm2357, %v2440, %v2444
  %v2446 = vrot.slane %v2274, 1
  %v2447 = vsel %vm2357, %v2442, %v2446
  %v2448 = vrot.slane %v2275, 1
  %v2449 = vsel %vm2357, %v2444, %v2448
  %v2450 = vrot.slane %v2276, 1
  %v2451 = vsel %vm2357, %v2446, %v2450
  %v2452 = vrot.slane %v2277, 1
  %v2453 = vsel %vm2357, %v2448, %v2452
  %v2454 = vrot.slane %v2278, 1
  %v2455 = vsel %vm2357, %v2450, %v2454
  %v2456 = vrot.slane %v2279, 1
  %v2457 = vsel %vm2357, %v2452, %v2456
  %v2458 = vrot.slane %v2280, 1
  %v2459 = vsel %vm2357, %v2454, %v2458
  %v2460 = vrot.slane %v2281, 1
  %v2461 = vsel %vm2357, %v2456, %v2460
  %v2462 = vrot.slane %v2282, 1
  %v2463 = vsel %vm2357, %v2458, %v2462
  %v2464 = vrot.slane %v2283, 1
  %v2465 = vsel %vm2357, %v2460, %v2464
  %v2466 = vrot.slane %v2284, 1
  %v2467 = vsel %vm2357, %v2462, %v2466
  %v2468 = vrot.slane %v2285, 1
  %v2469 = vsel %vm2357, %v2464, %v2468
  %v2470 = vrot.slane %v2286, 1
  %v2471 = vsel %vm2357, %v2466, %v2470
  %v2472 = vrot.slane %v2287, 1
  %v2473 = vsel %vm2357, %v2468, %v2472
  %v2474 = vrot.slane %v2288, 1
  %v2475 = vsel %vm2357, %v2470, %v2474
  %v2476 = vrot.slane %v2289, 1
  %v2477 = vsel %vm2357, %v2472, %v2476
  %v2478 = vrot.slane %v2290, 1
  %v2479 = vsel %vm2357, %v2474, %v2478
  %v2480 = vrot.slane %v2291, 1
  %v2481 = vsel %vm2357, %v2476, %v2480
  %v2482 = vrot.slane %v2292, 1
  %v2483 = vsel %vm2357, %v2478, %v2482
  %v2548 = vmax.f32 %v2229, %v2360
  %v2549 = vmax.f32 %v2230, %v2363
  %v2550 = vmax.f32 %v2231, %v2365
  %v2551 = vmax.f32 %v2232, %v2367
  %v2552 = vmax.f32 %v2233, %v2369
  %v2553 = vmax.f32 %v2234, %v2371
  %v2554 = vmax.f32 %v2235, %v2373
  %v2555 = vmax.f32 %v2236, %v2375
  %v2556 = vmax.f32 %v2237, %v2377
  %v2557 = vmax.f32 %v2238, %v2379
  %v2558 = vmax.f32 %v2239, %v2381
  %v2559 = vmax.f32 %v2240, %v2383
  %v2560 = vmax.f32 %v2241, %v2385
  %v2561 = vmax.f32 %v2242, %v2387
  %v2562 = vmax.f32 %v2243, %v2389
  %v2563 = vmax.f32 %v2244, %v2391
  %v2564 = vmax.f32 %v2245, %v2393
  %v2565 = vmax.f32 %v2246, %v2395
  %v2566 = vmax.f32 %v2247, %v2397
  %v2567 = vmax.f32 %v2248, %v2399
  %v2568 = vmax.f32 %v2249, %v2401
  %v2569 = vmax.f32 %v2250, %v2403
  %v2570 = vmax.f32 %v2251, %v2405
  %v2571 = vmax.f32 %v2252, %v2407
  %v2572 = vmax.f32 %v2253, %v2409
  %v2573 = vmax.f32 %v2254, %v2411
  %v2574 = vmax.f32 %v2255, %v2413
  %v2575 = vmax.f32 %v2256, %v2415
  %v2576 = vmax.f32 %v2257, %v2417
  %v2577 = vmax.f32 %v2258, %v2419
  %v2578 = vmax.f32 %v2259, %v2421
  %v2579 = vmax.f32 %v2260, %v2423
  %v2580 = vmax.f32 %v2261, %v2425
  %v2581 = vmax.f32 %v2262, %v2427
  %v2582 = vmax.f32 %v2263, %v2429
  %v2583 = vmax.f32 %v2264, %v2431
  %v2584 = vmax.f32 %v2265, %v2433
  %v2585 = vmax.f32 %v2266, %v2435
  %v2586 = vmax.f32 %v2267, %v2437
  %v2587 = vmax.f32 %v2268, %v2439
  %v2588 = vmax.f32 %v2269, %v2441
  %v2589 = vmax.f32 %v2270, %v2443
  %v2590 = vmax.f32 %v2271, %v2445
  %v2591 = vmax.f32 %v2272, %v2447
  %v2592 = vmax.f32 %v2273, %v2449
  %v2593 = vmax.f32 %v2274, %v2451
  %v2594 = vmax.f32 %v2275, %v2453
  %v2595 = vmax.f32 %v2276, %v2455
  %v2596 = vmax.f32 %v2277, %v2457
  %v2597 = vmax.f32 %v2278, %v2459
  %v2598 = vmax.f32 %v2279, %v2461
  %v2599 = vmax.f32 %v2280, %v2463
  %v2600 = vmax.f32 %v2281, %v2465
  %v2601 = vmax.f32 %v2282, %v2467
  %v2602 = vmax.f32 %v2283, %v2469
  %v2603 = vmax.f32 %v2284, %v2471
  %v2604 = vmax.f32 %v2285, %v2473
  %v2605 = vmax.f32 %v2286, %v2475
  %v2606 = vmax.f32 %v2287, %v2477
  %v2607 = vmax.f32 %v2288, %v2479
  %v2608 = vmax.f32 %v2289, %v2481
  %v2609 = vmax.f32 %v2290, %v2483
  %v2610 = vmax.f32 %v2291, %v2480
  %v2611 = vmax.f32 %v2292, %v2482
  %2676 = vrot.lane.b32.xlu0 %v2548, 122
  %v2677 = vpop.permute.xlu0 %2676
  %2678 = vrot.lane.b32.xlu0 %v2549, 122
  %v2679 = vpop.permute.xlu0 %2678
  %2680 = vrot.lane.b32.xlu0 %v2550, 122
  %v2681 = vpop.permute.xlu0 %2680
  %2682 = vrot.lane.b32.xlu0 %v2551, 122
  %v2683 = vpop.permute.xlu0 %2682
  %2684 = vrot.lane.b32.xlu0 %v2552, 122
  %v2685 = vpop.permute.xlu0 %2684
  %2686 = vrot.lane.b32.xlu0 %v2553, 122
  %v2687 = vpop.permute.xlu0 %2686
  %2688 = vrot.lane.b32.xlu0 %v2554, 122
  %v2689 = vpop.permute.xlu0 %2688
  %2690 = vrot.lane.b32.xlu0 %v2555, 122
  %v2691 = vpop.permute.xlu0 %2690
  %2692 = vrot.lane.b32.xlu0 %v2556, 122
  %v2693 = vpop.permute.xlu0 %2692
  %2694 = vrot.lane.b32.xlu0 %v2557, 122
  %v2695 = vpop.permute.xlu0 %2694
  %2696 = vrot.lane.b32.xlu0 %v2558, 122
  %v2697 = vpop.permute.xlu0 %2696
  %2698 = vrot.lane.b32.xlu0 %v2559, 122
  %v2699 = vpop.permute.xlu0 %2698
  %2700 = vrot.lane.b32.xlu0 %v2560, 122
  %v2701 = vpop.permute.xlu0 %2700
  %2702 = vrot.lane.b32.xlu0 %v2561, 122
  %v2703 = vpop.permute.xlu0 %2702
  %2704 = vrot.lane.b32.xlu0 %v2562, 122
  %v2705 = vpop.permute.xlu0 %2704
  %2706 = vrot.lane.b32.xlu0 %v2563, 122
  %v2707 = vpop.permute.xlu0 %2706
  %2708 = vrot.lane.b32.xlu0 %v2564, 122
  %v2709 = vpop.permute.xlu0 %2708
  %2710 = vrot.lane.b32.xlu0 %v2565, 122
  %v2711 = vpop.permute.xlu0 %2710
  %2712 = vrot.lane.b32.xlu0 %v2566, 122
  %v2713 = vpop.permute.xlu0 %2712
  %2714 = vrot.lane.b32.xlu0 %v2567, 122
  %v2715 = vpop.permute.xlu0 %2714
  %2716 = vrot.lane.b32.xlu0 %v2568, 122
  %v2717 = vpop.permute.xlu0 %2716
  %2718 = vrot.lane.b32.xlu0 %v2569, 122
  %v2719 = vpop.permute.xlu0 %2718
  %2720 = vrot.lane.b32.xlu0 %v2570, 122
  %v2721 = vpop.permute.xlu0 %2720
  %2722 = vrot.lane.b32.xlu0 %v2571, 122
  %v2723 = vpop.permute.xlu0 %2722
  %2724 = vrot.lane.b32.xlu0 %v2572, 122
  %v2725 = vpop.permute.xlu0 %2724
  %2726 = vrot.lane.b32.xlu0 %v2573, 122
  %v2727 = vpop.permute.xlu0 %2726
  %2728 = vrot.lane.b32.xlu0 %v2574, 122
  %v2729 = vpop.permute.xlu0 %2728
  %2730 = vrot.lane.b32.xlu0 %v2575, 122
  %v2731 = vpop.permute.xlu0 %2730
  %2732 = vrot.lane.b32.xlu0 %v2576, 122
  %v2733 = vpop.permute.xlu0 %2732
  %2734 = vrot.lane.b32.xlu0 %v2577, 122
  %v2735 = vpop.permute.xlu0 %2734
  %2736 = vrot.lane.b32.xlu0 %v2578, 122
  %v2737 = vpop.permute.xlu0 %2736
  %2738 = vrot.lane.b32.xlu0 %v2579, 122
  %v2739 = vpop.permute.xlu0 %2738
  %2740 = vrot.lane.b32.xlu0 %v2580, 122
  %v2741 = vpop.permute.xlu0 %2740
  %2742 = vrot.lane.b32.xlu0 %v2581, 122
  %v2743 = vpop.permute.xlu0 %2742
  %2744 = vrot.lane.b32.xlu0 %v2582, 122
  %v2745 = vpop.permute.xlu0 %2744
  %2746 = vrot.lane.b32.xlu0 %v2583, 122
  %v2747 = vpop.permute.xlu0 %2746
  %2748 = vrot.lane.b32.xlu0 %v2584, 122
  %v2749 = vpop.permute.xlu0 %2748
  %2750 = vrot.lane.b32.xlu0 %v2585, 122
  %v2751 = vpop.permute.xlu0 %2750
  %2752 = vrot.lane.b32.xlu0 %v2586, 122
  %v2753 = vpop.permute.xlu0 %2752
  %2754 = vrot.lane.b32.xlu0 %v2587, 122
  %v2755 = vpop.permute.xlu0 %2754
  %2756 = vrot.lane.b32.xlu0 %v2588, 122
  %v2757 = vpop.permute.xlu0 %2756
  %2758 = vrot.lane.b32.xlu0 %v2589, 122
  %v2759 = vpop.permute.xlu0 %2758
  %2760 = vrot.lane.b32.xlu0 %v2590, 122
  %v2761 = vpop.permute.xlu0 %2760
  %2762 = vrot.lane.b32.xlu0 %v2591, 122
  %v2763 = vpop.permute.xlu0 %2762
  %2764 = vrot.lane.b32.xlu0 %v2592, 122
  %v2765 = vpop.permute.xlu0 %2764
  %2766 = vrot.lane.b32.xlu0 %v2593, 122
  %v2767 = vpop.permute.xlu0 %2766
  %2768 = vrot.lane.b32.xlu0 %v2594, 122
  %v2769 = vpop.permute.xlu0 %2768
  %2770 = vrot.lane.b32.xlu0 %v2595, 122
  %v2771 = vpop.permute.xlu0 %2770
  %2772 = vrot.lane.b32.xlu0 %v2596, 122
  %v2773 = vpop.permute.xlu0 %2772
  %2774 = vrot.lane.b32.xlu0 %v2597, 122
  %v2775 = vpop.permute.xlu0 %2774
  %2776 = vrot.lane.b32.xlu0 %v2598, 122
  %v2777 = vpop.permute.xlu0 %2776
  %2778 = vrot.lane.b32.xlu0 %v2599, 122
  %v2779 = vpop.permute.xlu0 %2778
  %2780 = vrot.lane.b32.xlu0 %v2600, 122
  %v2781 = vpop.permute.xlu0 %2780
  %2782 = vrot.lane.b32.xlu0 %v2601, 122
  %v2783 = vpop.permute.xlu0 %2782
  %2784 = vrot.lane.b32.xlu0 %v2602, 122
  %v2785 = vpop.permute.xlu0 %2784
  %2786 = vrot.lane.b32.xlu0 %v2603, 122
  %v2787 = vpop.permute.xlu0 %2786
  %2788 = vrot.lane.b32.xlu0 %v2604, 122
  %v2789 = vpop.permute.xlu0 %2788
  %2790 = vrot.lane.b32.xlu0 %v2605, 122
  %v2791 = vpop.permute.xlu0 %2790
  %2792 = vrot.lane.b32.xlu0 %v2606, 122
  %v2793 = vpop.permute.xlu0 %2792
  %2794 = vrot.lane.b32.xlu0 %v2607, 122
  %v2795 = vpop.permute.xlu0 %2794
  %2796 = vrot.lane.b32.xlu0 %v2608, 122
  %v2797 = vpop.permute.xlu0 %2796
  %2798 = vrot.lane.b32.xlu0 %v2609, 122
  %v2799 = vpop.permute.xlu0 %2798
  %2800 = vrot.lane.b32.xlu0 %v2610, 122
  %v2801 = vpop.permute.xlu0 %2800
  %2802 = vrot.lane.b32.xlu0 %v2611, 122
  %v2803 = vpop.permute.xlu0 %2802
  %vm2804 = vcmask 998400
  %v2805 = vsel %vm2804, %v2677, %v2679
  %v2806 = vsel %vm2804, %v2681, %v2683
  %v2807 = vsel %vm2804, %v2685, %v2687
  %v2808 = vsel %vm2804, %v2689, %v2691
  %v2809 = vsel %vm2804, %v2693, %v2695
  %v2810 = vsel %vm2804, %v2697, %v2699
  %v2811 = vsel %vm2804, %v2701, %v2703
  %v2812 = vsel %vm2804, %v2705, %v2707
  %v2813 = vsel %vm2804, %v2709, %v2711
  %v2814 = vsel %vm2804, %v2713, %v2715
  %v2815 = vsel %vm2804, %v2717, %v2719
  %v2816 = vsel %vm2804, %v2721, %v2723
  %v2817 = vsel %vm2804, %v2725, %v2727
  %v2818 = vsel %vm2804, %v2729, %v2731
  %v2819 = vsel %vm2804, %v2733, %v2735
  %v2820 = vsel %vm2804, %v2737, %v2739
  %v2821 = vsel %vm2804, %v2741, %v2743
  %v2822 = vsel %vm2804, %v2745, %v2747
  %v2823 = vsel %vm2804, %v2749, %v2751
  %v2824 = vsel %vm2804, %v2753, %v2755
  %v2825 = vsel %vm2804, %v2757, %v2759
  %v2826 = vsel %vm2804, %v2761, %v2763
  %v2827 = vsel %vm2804, %v2765, %v2767
  %v2828 = vsel %vm2804, %v2769, %v2771
  %v2829 = vsel %vm2804, %v2773, %v2775
  %v2830 = vsel %vm2804, %v2777, %v2779
  %v2831 = vsel %vm2804, %v2781, %v2783
  %v2832 = vsel %vm2804, %v2785, %v2787
  %v2833 = vsel %vm2804, %v2789, %v2791
  %v2834 = vsel %vm2804, %v2793, %v2795
  %v2835 = vsel %vm2804, %v2797, %v2799
  %v2836 = vsel %vm2804, %v2801, %v2803
  %v2901 = vmax.f32 %v2548, %v2805
  %v2902 = vmax.f32 %v2549, %v2679
  %v2903 = vmax.f32 %v2550, %v2806
  %v2904 = vmax.f32 %v2551, %v2683
  %v2905 = vmax.f32 %v2552, %v2807
  %v2906 = vmax.f32 %v2553, %v2687
  %v2907 = vmax.f32 %v2554, %v2808
  %v2908 = vmax.f32 %v2555, %v2691
  %v2909 = vmax.f32 %v2556, %v2809
  %v2910 = vmax.f32 %v2557, %v2695
  %v2911 = vmax.f32 %v2558, %v2810
  %v2912 = vmax.f32 %v2559, %v2699
  %v2913 = vmax.f32 %v2560, %v2811
  %v2914 = vmax.f32 %v2561, %v2703
  %v2915 = vmax.f32 %v2562, %v2812
  %v2916 = vmax.f32 %v2563, %v2707
  %v2917 = vmax.f32 %v2564, %v2813
  %v2918 = vmax.f32 %v2565, %v2711
  %v2919 = vmax.f32 %v2566, %v2814
  %v2920 = vmax.f32 %v2567, %v2715
  %v2921 = vmax.f32 %v2568, %v2815
  %v2922 = vmax.f32 %v2569, %v2719
  %v2923 = vmax.f32 %v2570, %v2816
  %v2924 = vmax.f32 %v2571, %v2723
  %v2925 = vmax.f32 %v2572, %v2817
  %v2926 = vmax.f32 %v2573, %v2727
  %v2927 = vmax.f32 %v2574, %v2818
  %v2928 = vmax.f32 %v2575, %v2731
  %v2929 = vmax.f32 %v2576, %v2819
  %v2930 = vmax.f32 %v2577, %v2735
  %v2931 = vmax.f32 %v2578, %v2820
  %v2932 = vmax.f32 %v2579, %v2739
  %v2933 = vmax.f32 %v2580, %v2821
  %v2934 = vmax.f32 %v2581, %v2743
  %v2935 = vmax.f32 %v2582, %v2822
  %v2936 = vmax.f32 %v2583, %v2747
  %v2937 = vmax.f32 %v2584, %v2823
  %v2938 = vmax.f32 %v2585, %v2751
  %v2939 = vmax.f32 %v2586, %v2824
  %v2940 = vmax.f32 %v2587, %v2755
  %v2941 = vmax.f32 %v2588, %v2825
  %v2942 = vmax.f32 %v2589, %v2759
  %v2943 = vmax.f32 %v2590, %v2826
  %v2944 = vmax.f32 %v2591, %v2763
  %v2945 = vmax.f32 %v2592, %v2827
  %v2946 = vmax.f32 %v2593, %v2767
  %v2947 = vmax.f32 %v2594, %v2828
  %v2948 = vmax.f32 %v2595, %v2771
  %v2949 = vmax.f32 %v2596, %v2829
  %v2950 = vmax.f32 %v2597, %v2775
  %v2951 = vmax.f32 %v2598, %v2830
  %v2952 = vmax.f32 %v2599, %v2779
  %v2953 = vmax.f32 %v2600, %v2831
  %v2954 = vmax.f32 %v2601, %v2783
  %v2955 = vmax.f32 %v2602, %v2832
  %v2956 = vmax.f32 %v2603, %v2787
  %v2957 = vmax.f32 %v2604, %v2833
  %v2958 = vmax.f32 %v2605, %v2791
  %v2959 = vmax.f32 %v2606, %v2834
  %v2960 = vmax.f32 %v2607, %v2795
  %v2961 = vmax.f32 %v2608, %v2835
  %v2962 = vmax.f32 %v2609, %v2799
  %v2963 = vmax.f32 %v2610, %v2836
  %v2964 = vmax.f32 %v2611, %v2803
  %v2965 = vpack.c.bf16 %v2903, %v2901
  %v2966 = vpack.c.bf16 %v2904, %v2902
  %v2967 = vpack.c.bf16 %v2907, %v2905
  %v2968 = vpack.c.bf16 %v2908, %v2906
  %v2969 = vpack.c.bf16 %v2911, %v2909
  %v2970 = vpack.c.bf16 %v2912, %v2910
  %v2971 = vpack.c.bf16 %v2915, %v2913
  %v2972 = vpack.c.bf16 %v2916, %v2914
  %v2973 = vpack.c.bf16 %v2919, %v2917
  %v2974 = vpack.c.bf16 %v2920, %v2918
  %v2975 = vpack.c.bf16 %v2923, %v2921
  %v2976 = vpack.c.bf16 %v2924, %v2922
  %v2977 = vpack.c.bf16 %v2927, %v2925
  %v2978 = vpack.c.bf16 %v2928, %v2926
  %v2979 = vpack.c.bf16 %v2931, %v2929
  %v2980 = vpack.c.bf16 %v2932, %v2930
  %v2981 = vpack.c.bf16 %v2935, %v2933
  %v2982 = vpack.c.bf16 %v2936, %v2934
  %v2983 = vpack.c.bf16 %v2939, %v2937
  %v2984 = vpack.c.bf16 %v2940, %v2938
  %v2985 = vpack.c.bf16 %v2943, %v2941
  %v2986 = vpack.c.bf16 %v2944, %v2942
  %v2987 = vpack.c.bf16 %v2947, %v2945
  %v2988 = vpack.c.bf16 %v2948, %v2946
  %v2989 = vpack.c.bf16 %v2951, %v2949
  %v2990 = vpack.c.bf16 %v2952, %v2950
  %v2991 = vpack.c.bf16 %v2955, %v2953
  %v2992 = vpack.c.bf16 %v2956, %v2954
  %v2993 = vpack.c.bf16 %v2959, %v2957
  %v2994 = vpack.c.bf16 %v2960, %v2958
  %v2995 = vpack.c.bf16 %v2963, %v2961
  %v2996 = vpack.c.bf16 %v2964, %v2962
  %v2997 = vld [vmem:[%s3] sm:$0xff]
  %v2998 = vld [vmem:[%s3 + $0x8] sm:$0xff]
  %v2999 = vld [vmem:[%s3 + $0x10] sm:$0xff]
  %v3000 = vld [vmem:[%s3 + $0x18] sm:$0xff]
  %v3001 = vld [vmem:[%s3 + $0x20] sm:$0xff]
  %v3002 = vld [vmem:[%s3 + $0x28] sm:$0xff]
  %v3003 = vld [vmem:[%s3 + $0x30] sm:$0xff]
  %v3004 = vld [vmem:[%s3 + $0x38] sm:$0xff]
  %v3005 = vld [vmem:[%s3 + $0x40] sm:$0xff]
  %v3006 = vld [vmem:[%s3 + $0x48] sm:$0xff]
  %v3007 = vld [vmem:[%s3 + $0x50] sm:$0xff]
  %v3008 = vld [vmem:[%s3 + $0x58] sm:$0xff]
  %v3009 = vld [vmem:[%s3 + $0x60] sm:$0xff]
  %v3010 = vld [vmem:[%s3 + $0x68] sm:$0xff]
  %v3011 = vld [vmem:[%s3 + $0x70] sm:$0xff]
  %v3012 = vld [vmem:[%s3 + $0x78] sm:$0xff]
  %v3013 = vld [vmem:[%s3 + $0x80] sm:$0xff]
  %v3014 = vld [vmem:[%s3 + $0x88] sm:$0xff]
  %v3015 = vld [vmem:[%s3 + $0x90] sm:$0xff]
  %v3016 = vld [vmem:[%s3 + $0x98] sm:$0xff]
  %v3017 = vld [vmem:[%s3 + $0xa0] sm:$0x11]
  %s3018 = scalar_lea.vmem %s3, 168
  %v3019 = vld [vmem:[%s3018] sm:$0xff]
  %v3020 = vld [vmem:[%s3018 + $0x8] sm:$0xff]
  %v3021 = vld [vmem:[%s3018 + $0x10] sm:$0xff]
  %v3022 = vld [vmem:[%s3018 + $0x18] sm:$0xff]
  %v3023 = vld [vmem:[%s3018 + $0x20] sm:$0xff]
  %v3024 = vld [vmem:[%s3018 + $0x28] sm:$0xff]
  %v3025 = vld [vmem:[%s3018 + $0x30] sm:$0xff]
  %v3026 = vld [vmem:[%s3018 + $0x38] sm:$0xff]
  %v3027 = vld [vmem:[%s3018 + $0x40] sm:$0xff]
  %v3028 = vld [vmem:[%s3018 + $0x48] sm:$0xff]
  %v3029 = vld [vmem:[%s3018 + $0x50] sm:$0xff]
  %v3030 = vld [vmem:[%s3018 + $0x58] sm:$0xff]
  %v3031 = vld [vmem:[%s3018 + $0x60] sm:$0xff]
  %v3032 = vld [vmem:[%s3018 + $0x68] sm:$0xff]
  %v3033 = vld [vmem:[%s3018 + $0x70] sm:$0xff]
  %v3034 = vld [vmem:[%s3018 + $0x78] sm:$0xff]
  %v3035 = vld [vmem:[%s3018 + $0x80] sm:$0xff]
  %v3036 = vld [vmem:[%s3018 + $0x88] sm:$0xff]
  %v3037 = vld [vmem:[%s3018 + $0x90] sm:$0xff]
  %v3038 = vld [vmem:[%s3018 + $0x98] sm:$0xff]
  %v3039 = vld [vmem:[%s3018 + $0xa0] sm:$0x11]
  %v3072 = vrot.slane %v2965, 1
  %v3073 = vrot.slane %v2967, 1
  %v3074 = vsel %vm904, %v3072, %v3073
  %v3075 = vrot.slane %v2966, 1
  %v3076 = vrot.slane %v2968, 1
  %v3077 = vsel %vm904, %v3075, %v3076
  %v3078 = vrot.slane %v2969, 1
  %v3079 = vsel %vm904, %v3073, %v3078
  %v3080 = vrot.slane %v2970, 1
  %v3081 = vsel %vm904, %v3076, %v3080
  %v3082 = vrot.slane %v2971, 1
  %v3083 = vsel %vm904, %v3078, %v3082
  %v3084 = vrot.slane %v2972, 1
  %v3085 = vsel %vm904, %v3080, %v3084
  %v3086 = vrot.slane %v2973, 1
  %v3087 = vsel %vm904, %v3082, %v3086
  %v3088 = vrot.slane %v2974, 1
  %v3089 = vsel %vm904, %v3084, %v3088
  %v3090 = vrot.slane %v2975, 1
  %v3091 = vsel %vm904, %v3086, %v3090
  %v3092 = vrot.slane %v2976, 1
  %v3093 = vsel %vm904, %v3088, %v3092
  %v3094 = vrot.slane %v2977, 1
  %v3095 = vsel %vm904, %v3090, %v3094
  %v3096 = vrot.slane %v2978, 1
  %v3097 = vsel %vm904, %v3092, %v3096
  %v3098 = vrot.slane %v2979, 1
  %v3099 = vsel %vm904, %v3094, %v3098
  %v3100 = vrot.slane %v2980, 1
  %v3101 = vsel %vm904, %v3096, %v3100
  %v3102 = vrot.slane %v2981, 1
  %v3103 = vsel %vm904, %v3098, %v3102
  %v3104 = vrot.slane %v2982, 1
  %v3105 = vsel %vm904, %v3100, %v3104
  %v3106 = vrot.slane %v2983, 1
  %v3107 = vsel %vm904, %v3102, %v3106
  %v3108 = vrot.slane %v2984, 1
  %v3109 = vsel %vm904, %v3104, %v3108
  %v3110 = vrot.slane %v2985, 1
  %v3111 = vsel %vm904, %v3106, %v3110
  %v3112 = vrot.slane %v2986, 1
  %v3113 = vsel %vm904, %v3108, %v3112
  %v3114 = vrot.slane %v2987, 1
  %v3115 = vsel %vm904, %v3110, %v3114
  %v3116 = vrot.slane %v2988, 1
  %v3117 = vsel %vm904, %v3112, %v3116
  %v3118 = vrot.slane %v2989, 1
  %v3119 = vsel %vm904, %v3114, %v3118
  %v3120 = vrot.slane %v2990, 1
  %v3121 = vsel %vm904, %v3116, %v3120
  %v3122 = vrot.slane %v2991, 1
  %v3123 = vsel %vm904, %v3118, %v3122
  %v3124 = vrot.slane %v2992, 1
  %v3125 = vsel %vm904, %v3120, %v3124
  %v3126 = vrot.slane %v2993, 1
  %v3127 = vsel %vm904, %v3122, %v3126
  %v3128 = vrot.slane %v2994, 1
  %v3129 = vsel %vm904, %v3124, %v3128
  %v3130 = vrot.slane %v2995, 1
  %v3131 = vsel %vm904, %v3126, %v3130
  %v3132 = vrot.slane %v2996, 1
  %v3133 = vsel %vm904, %v3128, %v3132
  %v3171 = vunpack.c.l.b16 %v3019
  %v3172 = vunpack.c.h.b16 %v3019
  %v3173 = vunpack.c.l.b16 %v3020
  %v3174 = vunpack.c.h.b16 %v3020
  %v3175 = vunpack.c.l.b16 %v3021
  %v3176 = vunpack.c.h.b16 %v3021
  %v3177 = vunpack.c.l.b16 %v3022
  %v3178 = vunpack.c.h.b16 %v3022
  %v3179 = vunpack.c.l.b16 %v3023
  %v3180 = vunpack.c.h.b16 %v3023
  %v3181 = vunpack.c.l.b16 %v3024
  %v3182 = vunpack.c.h.b16 %v3024
  %v3183 = vunpack.c.l.b16 %v3025
  %v3184 = vunpack.c.h.b16 %v3025
  %v3185 = vunpack.c.l.b16 %v3026
  %v3186 = vunpack.c.h.b16 %v3026
  %v3187 = vunpack.c.l.b16 %v3027
  %v3188 = vunpack.c.h.b16 %v3027
  %v3189 = vunpack.c.l.b16 %v3028
  %v3190 = vunpack.c.h.b16 %v3028
  %v3191 = vunpack.c.l.b16 %v3029
  %v3192 = vunpack.c.h.b16 %v3029
  %v3193 = vunpack.c.l.b16 %v3030
  %v3194 = vunpack.c.h.b16 %v3030
  %v3195 = vunpack.c.l.b16 %v3031
  %v3196 = vunpack.c.h.b16 %v3031
  %v3197 = vunpack.c.l.b16 %v3032
  %v3198 = vunpack.c.h.b16 %v3032
  %v3199 = vunpack.c.l.b16 %v3033
  %v3200 = vunpack.c.h.b16 %v3033
  %v3201 = vunpack.c.l.b16 %v3034
  %v3202 = vunpack.c.h.b16 %v3034
  %v3203 = vunpack.c.l.b16 %v3035
  %v3204 = vunpack.c.h.b16 %v3035
  %v3205 = vunpack.c.l.b16 %v3036
  %v3206 = vunpack.c.h.b16 %v3036
  %v3207 = vunpack.c.l.b16 %v3037
  %v3208 = vunpack.c.h.b16 %v3037
  %v3209 = vunpack.c.l.b16 %v3038
  %v3210 = vunpack.c.h.b16 %v3038
  %v3211 = vunpack.c.l.b16 %v3039
  %v3212 = vunpack.c.h.b16 %v3039
  %v3213 = vpack.c.b16 %v3173, %v3171
  %v3214 = vpack.c.b16 %v3174, %v3172
  %v3215 = vpack.c.b16 %v3177, %v3175
  %v3216 = vpack.c.b16 %v3178, %v3176
  %v3217 = vpack.c.b16 %v3181, %v3179
  %v3218 = vpack.c.b16 %v3182, %v3180
  %v3219 = vpack.c.b16 %v3185, %v3183
  %v3220 = vpack.c.b16 %v3186, %v3184
  %v3221 = vpack.c.b16 %v3189, %v3187
  %v3222 = vpack.c.b16 %v3190, %v3188
  %v3223 = vpack.c.b16 %v3193, %v3191
  %v3224 = vpack.c.b16 %v3194, %v3192
  %v3225 = vpack.c.b16 %v3197, %v3195
  %v3226 = vpack.c.b16 %v3198, %v3196
  %v3227 = vpack.c.b16 %v3201, %v3199
  %v3228 = vpack.c.b16 %v3202, %v3200
  %v3229 = vpack.c.b16 %v3205, %v3203
  %v3230 = vpack.c.b16 %v3206, %v3204
  %v3231 = vpack.c.b16 %v3209, %v3207
  %v3232 = vpack.c.b16 %v3210, %v3208
  %v3233 = vpack.c.b16 %v3211, %v3211
  %v3234 = vpack.c.b16 %v3212, %v3212
  %vm3255 = vcmask 277504
  %v3257 = vsel %vm3255, %v3077, 0
  %v3260 = vsel %vm3255, %v3081, 0
  %v3263 = vsel %vm3255, %v3085, 0
  %v3266 = vsel %vm3255, %v3089, 0
  %v3269 = vsel %vm3255, %v3093, 0
  %v3272 = vsel %vm3255, %v3097, 0
  %v3275 = vsel %vm3255, %v3101, 0
  %v3278 = vsel %vm3255, %v3105, 0
  %v3281 = vsel %vm3255, %v3109, 0
  %v3284 = vsel %vm3255, %v3113, 0
  %v3287 = vsel %vm3255, %v3117, 0
  %v3290 = vsel %vm3255, %v3121, 0
  %v3293 = vsel %vm3255, %v3125, 0
  %v3296 = vsel %vm3255, %v3129, 0
  %v3299 = vsel %vm3255, %v3133, 0
  %v3302 = vsel %vm3255, %v3132, 0
  %vm3304 = vcmask 1040384
  %v3306 = vsel %vm3304, %v3233, 0
  %v3309 = vsel %vm3304, %v3234, 0
  %3311 = vmatprep.subr.bf16.mxu0 %v3228
  %3312 = vmatpush1.bf16.msra.mxu0 %v3227
  %3313 = vmatprep.subr.bf16.mxu0 %v3226
  %3314 = vmatpush1.bf16.msra.mxu0 %v3225
  %3315 = vmatprep.subr.bf16.mxu0 %v3224
  %3316 = vmatpush1.bf16.msra.mxu0 %v3223
  %3317 = vmatprep.subr.bf16.mxu0 %v3222
  %3318 = vmatpush1.bf16.msra.mxu0 %v3221
  %3319 = vmatprep.subr.bf16.mxu0 %v3220
  %3320 = vmatpush1.bf16.msra.mxu0 %v3219
  %3321 = vmatprep.subr.bf16.mxu0 %v3218
  %3322 = vmatpush1.bf16.msra.mxu0 %v3217
  %3323 = vmatprep.subr.bf16.mxu0 %v3216
  %3324 = vmatpush1.bf16.msra.mxu0 %v3215
  %3325 = vmatprep.subr.bf16.mxu0 %v3214
  %3326 = vmatpush1.bf16.msra.mxu0 %v3213
  %3327 = vmatprep.subr.bf16.mxu0 0
  %3328 = vmatpush2.bf16.msra.mxu0 0
  %3329 = vmatprep.subr.bf16.mxu0 0
  %3330 = vmatpush2.bf16.msra.mxu0 0
  %3331 = vmatprep.subr.bf16.mxu0 0
  %3332 = vmatpush2.bf16.msra.mxu0 0
  %3333 = vmatprep.subr.bf16.mxu0 0
  %3334 = vmatpush2.bf16.msra.mxu0 0
  %3335 = vmatprep.subr.bf16.mxu0 0
  %3336 = vmatpush2.bf16.msra.mxu0 0
  %3337 = vmatprep.subr.bf16.mxu0 %v3309
  %3338 = vmatpush2.bf16.msra.mxu0 %v3306
  %3339 = vmatprep.subr.bf16.mxu0 %v3232
  %3340 = vmatpush2.bf16.msra.mxu0 %v3231
  %3341 = vmatprep.subr.bf16.mxu0 %v3230
  %3342 = vmatpush2.bf16.msra.mxu0 %v3229
  %3343 = vmatprep.mubr.bf16.mxu0 %v3257
  %3344 = vmatmul.mubr.bf16.gmra.mxu0 %v3074
  %v3345 = vpop.f32.mrf.mxu0
  %v3346 = vadd.f32 0.0, %v3345
  %v3347 = vpop.f32.mrf.mxu0
  %v3348 = vadd.f32 0.0, %v3347
  %v3349 = vpop.f32.mrf.mxu0
  %v3350 = vadd.f32 0.0, %v3349
  %v3351 = vpop.f32.mrf.mxu0
  %v3352 = vadd.f32 0.0, %v3351
  %3353 = vmatprep.mubr.bf16.mxu0 %v3260
  %3354 = vmatmul.mubr.bf16.gmra.mxu0 %v3079
  %v3355 = vpop.f32.mrf.mxu0
  %v3356 = vadd.f32 0.0, %v3355
  %v3357 = vpop.f32.mrf.mxu0
  %v3358 = vadd.f32 0.0, %v3357
  %v3359 = vpop.f32.mrf.mxu0
  %v3360 = vadd.f32 0.0, %v3359
  %v3361 = vpop.f32.mrf.mxu0
  %v3362 = vadd.f32 0.0, %v3361
  %3363 = vmatprep.mubr.bf16.mxu0 %v3263
  %3364 = vmatmul.mubr.bf16.gmra.mxu0 %v3083
  %v3365 = vpop.f32.mrf.mxu0
  %v3366 = vadd.f32 0.0, %v3365
  %v3367 = vpop.f32.mrf.mxu0
  %v3368 = vadd.f32 0.0, %v3367
  %v3369 = vpop.f32.mrf.mxu0
  %v3370 = vadd.f32 0.0, %v3369
  %v3371 = vpop.f32.mrf.mxu0
  %v3372 = vadd.f32 0.0, %v3371
  %3373 = vmatprep.mubr.bf16.mxu0 %v3266
  %3374 = vmatmul.mubr.bf16.gmra.mxu0 %v3087
  %v3375 = vpop.f32.mrf.mxu0
  %v3376 = vadd.f32 0.0, %v3375
  %v3377 = vpop.f32.mrf.mxu0
  %v3378 = vadd.f32 0.0, %v3377
  %v3379 = vpop.f32.mrf.mxu0
  %v3380 = vadd.f32 0.0, %v3379
  %v3381 = vpop.f32.mrf.mxu0
  %v3382 = vadd.f32 0.0, %v3381
  %3383 = vmatprep.mubr.bf16.mxu0 %v3269
  %3384 = vmatmul.mubr.bf16.gmra.mxu0 %v3091
  %v3385 = vpop.f32.mrf.mxu0
  %v3386 = vadd.f32 0.0, %v3385
  %v3387 = vpop.f32.mrf.mxu0
  %v3388 = vadd.f32 0.0, %v3387
  %v3389 = vpop.f32.mrf.mxu0
  %v3390 = vadd.f32 0.0, %v3389
  %v3391 = vpop.f32.mrf.mxu0
  %v3392 = vadd.f32 0.0, %v3391
  %3393 = vmatprep.mubr.bf16.mxu0 %v3272
  %3394 = vmatmul.mubr.bf16.gmra.mxu0 %v3095
  %v3395 = vpop.f32.mrf.mxu0
  %v3396 = vadd.f32 0.0, %v3395
  %v3397 = vpop.f32.mrf.mxu0
  %v3398 = vadd.f32 0.0, %v3397
  %v3399 = vpop.f32.mrf.mxu0
  %v3400 = vadd.f32 0.0, %v3399
  %v3401 = vpop.f32.mrf.mxu0
  %v3402 = vadd.f32 0.0, %v3401
  %3403 = vmatprep.mubr.bf16.mxu0 %v3275
  %3404 = vmatmul.mubr.bf16.gmra.mxu0 %v3099
  %v3405 = vpop.f32.mrf.mxu0
  %v3406 = vadd.f32 0.0, %v3405
  %v3407 = vpop.f32.mrf.mxu0
  %v3408 = vadd.f32 0.0, %v3407
  %v3409 = vpop.f32.mrf.mxu0
  %v3410 = vadd.f32 0.0, %v3409
  %v3411 = vpop.f32.mrf.mxu0
  %v3412 = vadd.f32 0.0, %v3411
  %3413 = vmatprep.mubr.bf16.mxu0 %v3278
  %3414 = vmatmul.mubr.bf16.gmra.mxu0 %v3103
  %v3415 = vpop.f32.mrf.mxu0
  %v3416 = vadd.f32 0.0, %v3415
  %v3417 = vpop.f32.mrf.mxu0
  %v3418 = vadd.f32 0.0, %v3417
  %v3419 = vpop.f32.mrf.mxu0
  %v3420 = vadd.f32 0.0, %v3419
  %v3421 = vpop.f32.mrf.mxu0
  %v3422 = vadd.f32 0.0, %v3421
  %3423 = vmatprep.mubr.bf16.mxu0 %v3281
  %3424 = vmatmul.mubr.bf16.gmra.mxu0 %v3107
  %v3425 = vpop.f32.mrf.mxu0
  %v3426 = vadd.f32 0.0, %v3425
  %v3427 = vpop.f32.mrf.mxu0
  %v3428 = vadd.f32 0.0, %v3427
  %v3429 = vpop.f32.mrf.mxu0
  %v3430 = vadd.f32 0.0, %v3429
  %v3431 = vpop.f32.mrf.mxu0
  %v3432 = vadd.f32 0.0, %v3431
  %3433 = vmatprep.mubr.bf16.mxu0 %v3284
  %3434 = vmatmul.mubr.bf16.gmra.mxu0 %v3111
  %v3435 = vpop.f32.mrf.mxu0
  %v3436 = vadd.f32 0.0, %v3435
  %v3437 = vpop.f32.mrf.mxu0
  %v3438 = vadd.f32 0.0, %v3437
  %v3439 = vpop.f32.mrf.mxu0
  %v3440 = vadd.f32 0.0, %v3439
  %v3441 = vpop.f32.mrf.mxu0
  %v3442 = vadd.f32 0.0, %v3441
  %3443 = vmatprep.mubr.bf16.mxu0 %v3287
  %3444 = vmatmul.mubr.bf16.gmra.mxu0 %v3115
  %v3445 = vpop.f32.mrf.mxu0
  %v3446 = vadd.f32 0.0, %v3445
  %v3447 = vpop.f32.mrf.mxu0
  %v3448 = vadd.f32 0.0, %v3447
  %v3449 = vpop.f32.mrf.mxu0
  %v3450 = vadd.f32 0.0, %v3449
  %v3451 = vpop.f32.mrf.mxu0
  %v3452 = vadd.f32 0.0, %v3451
  %3453 = vmatprep.mubr.bf16.mxu0 %v3290
  %3454 = vmatmul.mubr.bf16.gmra.mxu0 %v3119
  %v3455 = vpop.f32.mrf.mxu0
  %v3456 = vadd.f32 0.0, %v3455
  %v3457 = vpop.f32.mrf.mxu0
  %v3458 = vadd.f32 0.0, %v3457
  %v3459 = vpop.f32.mrf.mxu0
  %v3460 = vadd.f32 0.0, %v3459
  %v3461 = vpop.f32.mrf.mxu0
  %v3462 = vadd.f32 0.0, %v3461
  %3463 = vmatprep.mubr.bf16.mxu0 %v3293
  %3464 = vmatmul.mubr.bf16.gmra.mxu0 %v3123
  %v3465 = vpop.f32.mrf.mxu0
  %v3466 = vadd.f32 0.0, %v3465
  %v3467 = vpop.f32.mrf.mxu0
  %v3468 = vadd.f32 0.0, %v3467
  %v3469 = vpop.f32.mrf.mxu0
  %v3470 = vadd.f32 0.0, %v3469
  %v3471 = vpop.f32.mrf.mxu0
  %v3472 = vadd.f32 0.0, %v3471
  %3473 = vmatprep.mubr.bf16.mxu0 %v3296
  %3474 = vmatmul.mubr.bf16.gmra.mxu0 %v3127
  %v3475 = vpop.f32.mrf.mxu0
  %v3476 = vadd.f32 0.0, %v3475
  %v3477 = vpop.f32.mrf.mxu0
  %v3478 = vadd.f32 0.0, %v3477
  %v3479 = vpop.f32.mrf.mxu0
  %v3480 = vadd.f32 0.0, %v3479
  %v3481 = vpop.f32.mrf.mxu0
  %v3482 = vadd.f32 0.0, %v3481
  %3483 = vmatprep.mubr.bf16.mxu0 %v3299
  %3484 = vmatmul.mubr.bf16.gmra.mxu0 %v3131
  %v3485 = vpop.f32.mrf.mxu0
  %v3486 = vadd.f32 0.0, %v3485
  %v3487 = vpop.f32.mrf.mxu0
  %v3488 = vadd.f32 0.0, %v3487
  %v3489 = vpop.f32.mrf.mxu0
  %v3490 = vadd.f32 0.0, %v3489
  %v3491 = vpop.f32.mrf.mxu0
  %v3492 = vadd.f32 0.0, %v3491
  %3493 = vmatprep.mubr.bf16.mxu0 %v3302
  %3494 = vmatmul.mubr.bf16.gmra.mxu0 %v3130
  %v3495 = vpop.f32.mrf.mxu0
  %v3496 = vadd.f32 0.0, %v3495
  %v3497 = vpop.f32.mrf.mxu0
  %v3498 = vadd.f32 0.0, %v3497
  %v3499 = vpop.f32.mrf.mxu0
  %v3500 = vpop.f32.mrf.mxu0
  %3501 = vdwg.mxu0
  %v3523 = vunpack.c.l.b16 %v2997
  %v3524 = vunpack.c.h.b16 %v2997
  %v3525 = vunpack.c.l.b16 %v2998
  %v3526 = vunpack.c.h.b16 %v2998
  %v3527 = vunpack.c.l.b16 %v2999
  %v3528 = vunpack.c.h.b16 %v2999
  %v3529 = vunpack.c.l.b16 %v3000
  %v3530 = vunpack.c.h.b16 %v3000
  %v3531 = vunpack.c.l.b16 %v3001
  %v3532 = vunpack.c.h.b16 %v3001
  %v3533 = vunpack.c.l.b16 %v3002
  %v3534 = vunpack.c.h.b16 %v3002
  %v3535 = vunpack.c.l.b16 %v3003
  %v3536 = vunpack.c.h.b16 %v3003
  %v3537 = vunpack.c.l.b16 %v3004
  %v3538 = vunpack.c.h.b16 %v3004
  %v3539 = vunpack.c.l.b16 %v3005
  %v3540 = vunpack.c.h.b16 %v3005
  %v3541 = vunpack.c.l.b16 %v3006
  %v3542 = vunpack.c.h.b16 %v3006
  %v3543 = vunpack.c.l.b16 %v3007
  %v3544 = vunpack.c.h.b16 %v3007
  %v3545 = vunpack.c.l.b16 %v3008
  %v3546 = vunpack.c.h.b16 %v3008
  %v3547 = vunpack.c.l.b16 %v3009
  %v3548 = vunpack.c.h.b16 %v3009
  %v3549 = vunpack.c.l.b16 %v3010
  %v3550 = vunpack.c.h.b16 %v3010
  %v3551 = vunpack.c.l.b16 %v3011
  %v3552 = vunpack.c.h.b16 %v3011
  %v3553 = vunpack.c.l.b16 %v3012
  %v3554 = vunpack.c.h.b16 %v3012
  %v3555 = vunpack.c.l.b16 %v3013
  %v3556 = vunpack.c.h.b16 %v3013
  %v3557 = vunpack.c.l.b16 %v3014
  %v3558 = vunpack.c.h.b16 %v3014
  %v3559 = vunpack.c.l.b16 %v3015
  %v3560 = vunpack.c.h.b16 %v3015
  %v3561 = vunpack.c.l.b16 %v3016
  %v3562 = vunpack.c.h.b16 %v3016
  %v3563 = vunpack.c.l.b16 %v3017
  %v3564 = vunpack.c.h.b16 %v3017
  %v3565 = vpack.c.b16 %v3525, %v3523
  %v3566 = vpack.c.b16 %v3526, %v3524
  %v3567 = vpack.c.b16 %v3529, %v3527
  %v3568 = vpack.c.b16 %v3530, %v3528
  %v3569 = vpack.c.b16 %v3533, %v3531
  %v3570 = vpack.c.b16 %v3534, %v3532
  %v3571 = vpack.c.b16 %v3537, %v3535
  %v3572 = vpack.c.b16 %v3538, %v3536
  %v3573 = vpack.c.b16 %v3541, %v3539
  %v3574 = vpack.c.b16 %v3542, %v3540
  %v3575 = vpack.c.b16 %v3545, %v3543
  %v3576 = vpack.c.b16 %v3546, %v3544
  %v3577 = vpack.c.b16 %v3549, %v3547
  %v3578 = vpack.c.b16 %v3550, %v3548
  %v3579 = vpack.c.b16 %v3553, %v3551
  %v3580 = vpack.c.b16 %v3554, %v3552
  %v3581 = vpack.c.b16 %v3557, %v3555
  %v3582 = vpack.c.b16 %v3558, %v3556
  %v3583 = vpack.c.b16 %v3561, %v3559
  %v3584 = vpack.c.b16 %v3562, %v3560
  %v3585 = vpack.c.b16 %v3563, %v3563
  %v3586 = vpack.c.b16 %v3564, %v3564
  %v3608 = vsel %vm3255, %v2966, 0
  %v3611 = vsel %vm3255, %v2968, 0
  %v3614 = vsel %vm3255, %v2970, 0
  %v3617 = vsel %vm3255, %v2972, 0
  %v3620 = vsel %vm3255, %v2974, 0
  %v3623 = vsel %vm3255, %v2976, 0
  %v3626 = vsel %vm3255, %v2978, 0
  %v3629 = vsel %vm3255, %v2980, 0
  %v3632 = vsel %vm3255, %v2982, 0
  %v3635 = vsel %vm3255, %v2984, 0
  %v3638 = vsel %vm3255, %v2986, 0
  %v3641 = vsel %vm3255, %v2988, 0
  %v3644 = vsel %vm3255, %v2990, 0
  %v3647 = vsel %vm3255, %v2992, 0
  %v3650 = vsel %vm3255, %v2994, 0
  %v3653 = vsel %vm3255, %v2996, 0
  %v3656 = vsel %vm3304, %v3585, 0
  %v3659 = vsel %vm3304, %v3586, 0
  %3661 = vmatprep.subr.bf16.mxu0 %v3580
  %3662 = vmatpush1.bf16.msra.mxu0 %v3579
  %3663 = vmatprep.subr.bf16.mxu0 %v3578
  %3664 = vmatpush1.bf16.msra.mxu0 %v3577
  %3665 = vmatprep.subr.bf16.mxu0 %v3576
  %3666 = vmatpush1.bf16.msra.mxu0 %v3575
  %3667 = vmatprep.subr.bf16.mxu0 %v3574
  %3668 = vmatpush1.bf16.msra.mxu0 %v3573
  %3669 = vmatprep.subr.bf16.mxu0 %v3572
  %3670 = vmatpush1.bf16.msra.mxu0 %v3571
  %3671 = vmatprep.subr.bf16.mxu0 %v3570
  %3672 = vmatpush1.bf16.msra.mxu0 %v3569
  %3673 = vmatprep.subr.bf16.mxu0 %v3568
  %3674 = vmatpush1.bf16.msra.mxu0 %v3567
  %3675 = vmatprep.subr.bf16.mxu0 %v3566
  %3676 = vmatpush1.bf16.msra.mxu0 %v3565
  %3677 = vmatprep.subr.bf16.mxu0 0
  %3678 = vmatpush2.bf16.msra.mxu0 0
  %3679 = vmatprep.subr.bf16.mxu0 0
  %3680 = vmatpush2.bf16.msra.mxu0 0
  %3681 = vmatprep.subr.bf16.mxu0 0
  %3682 = vmatpush2.bf16.msra.mxu0 0
  %3683 = vmatprep.subr.bf16.mxu0 0
  %3684 = vmatpush2.bf16.msra.mxu0 0
  %3685 = vmatprep.subr.bf16.mxu0 0
  %3686 = vmatpush2.bf16.msra.mxu0 0
  %3687 = vmatprep.subr.bf16.mxu0 %v3659
  %3688 = vmatpush2.bf16.msra.mxu0 %v3656
  %3689 = vmatprep.subr.bf16.mxu0 %v3584
  %3690 = vmatpush2.bf16.msra.mxu0 %v3583
  %3691 = vmatprep.subr.bf16.mxu0 %v3582
  %3692 = vmatpush2.bf16.msra.mxu0 %v3581
  %3693 = vmatprep.mubr.bf16.mxu0 %v3608
  %3694 = vmatmul.mubr.bf16.gmra.mxu0 %v2965
  %v3695 = vpop.f32.mrf.mxu0
  %v3696 = vadd.f32 %v3346, %v3695
  %v3697 = vpop.f32.mrf.mxu0
  %v3698 = vadd.f32 %v3348, %v3697
  %v3699 = vpop.f32.mrf.mxu0
  %v3700 = vadd.f32 %v3350, %v3699
  %v3701 = vpop.f32.mrf.mxu0
  %v3702 = vadd.f32 %v3352, %v3701
  %3703 = vmatprep.mubr.bf16.mxu0 %v3611
  %3704 = vmatmul.mubr.bf16.gmra.mxu0 %v2967
  %v3705 = vpop.f32.mrf.mxu0
  %v3706 = vadd.f32 %v3356, %v3705
  %v3707 = vpop.f32.mrf.mxu0
  %v3708 = vadd.f32 %v3358, %v3707
  %v3709 = vpop.f32.mrf.mxu0
  %v3710 = vadd.f32 %v3360, %v3709
  %v3711 = vpop.f32.mrf.mxu0
  %v3712 = vadd.f32 %v3362, %v3711
  %3713 = vmatprep.mubr.bf16.mxu0 %v3614
  %3714 = vmatmul.mubr.bf16.gmra.mxu0 %v2969
  %v3715 = vpop.f32.mrf.mxu0
  %v3716 = vadd.f32 %v3366, %v3715
  %v3717 = vpop.f32.mrf.mxu0
  %v3718 = vadd.f32 %v3368, %v3717
  %v3719 = vpop.f32.mrf.mxu0
  %v3720 = vadd.f32 %v3370, %v3719
  %v3721 = vpop.f32.mrf.mxu0
  %v3722 = vadd.f32 %v3372, %v3721
  %3723 = vmatprep.mubr.bf16.mxu0 %v3617
  %3724 = vmatmul.mubr.bf16.gmra.mxu0 %v2971
  %v3725 = vpop.f32.mrf.mxu0
  %v3726 = vadd.f32 %v3376, %v3725
  %v3727 = vpop.f32.mrf.mxu0
  %v3728 = vadd.f32 %v3378, %v3727
  %v3729 = vpop.f32.mrf.mxu0
  %v3730 = vadd.f32 %v3380, %v3729
  %v3731 = vpop.f32.mrf.mxu0
  %v3732 = vadd.f32 %v3382, %v3731
  %3733 = vmatprep.mubr.bf16.mxu0 %v3620
  %3734 = vmatmul.mubr.bf16.gmra.mxu0 %v2973
  %v3735 = vpop.f32.mrf.mxu0
  %v3736 = vadd.f32 %v3386, %v3735
  %v3737 = vpop.f32.mrf.mxu0
  %v3738 = vadd.f32 %v3388, %v3737
  %v3739 = vpop.f32.mrf.mxu0
  %v3740 = vadd.f32 %v3390, %v3739
  %v3741 = vpop.f32.mrf.mxu0
  %v3742 = vadd.f32 %v3392, %v3741
  %3743 = vmatprep.mubr.bf16.mxu0 %v3623
  %3744 = vmatmul.mubr.bf16.gmra.mxu0 %v2975
  %v3745 = vpop.f32.mrf.mxu0
  %v3746 = vadd.f32 %v3396, %v3745
  %v3747 = vpop.f32.mrf.mxu0
  %v3748 = vadd.f32 %v3398, %v3747
  %v3749 = vpop.f32.mrf.mxu0
  %v3750 = vadd.f32 %v3400, %v3749
  %v3751 = vpop.f32.mrf.mxu0
  %v3752 = vadd.f32 %v3402, %v3751
  %3753 = vmatprep.mubr.bf16.mxu0 %v3626
  %3754 = vmatmul.mubr.bf16.gmra.mxu0 %v2977
  %v3755 = vpop.f32.mrf.mxu0
  %v3756 = vadd.f32 %v3406, %v3755
  %v3757 = vpop.f32.mrf.mxu0
  %v3758 = vadd.f32 %v3408, %v3757
  %v3759 = vpop.f32.mrf.mxu0
  %v3760 = vadd.f32 %v3410, %v3759
  %v3761 = vpop.f32.mrf.mxu0
  %v3762 = vadd.f32 %v3412, %v3761
  %3763 = vmatprep.mubr.bf16.mxu0 %v3629
  %3764 = vmatmul.mubr.bf16.gmra.mxu0 %v2979
  %v3765 = vpop.f32.mrf.mxu0
  %v3766 = vadd.f32 %v3416, %v3765
  %v3767 = vpop.f32.mrf.mxu0
  %v3768 = vadd.f32 %v3418, %v3767
  %v3769 = vpop.f32.mrf.mxu0
  %v3770 = vadd.f32 %v3420, %v3769
  %v3771 = vpop.f32.mrf.mxu0
  %v3772 = vadd.f32 %v3422, %v3771
  %3773 = vmatprep.mubr.bf16.mxu0 %v3632
  %3774 = vmatmul.mubr.bf16.gmra.mxu0 %v2981
  %v3775 = vpop.f32.mrf.mxu0
  %v3776 = vadd.f32 %v3426, %v3775
  %v3777 = vpop.f32.mrf.mxu0
  %v3778 = vadd.f32 %v3428, %v3777
  %v3779 = vpop.f32.mrf.mxu0
  %v3780 = vadd.f32 %v3430, %v3779
  %v3781 = vpop.f32.mrf.mxu0
  %v3782 = vadd.f32 %v3432, %v3781
  %3783 = vmatprep.mubr.bf16.mxu0 %v3635
  %3784 = vmatmul.mubr.bf16.gmra.mxu0 %v2983
  %v3785 = vpop.f32.mrf.mxu0
  %v3786 = vadd.f32 %v3436, %v3785
  %v3787 = vpop.f32.mrf.mxu0
  %v3788 = vadd.f32 %v3438, %v3787
  %v3789 = vpop.f32.mrf.mxu0
  %v3790 = vadd.f32 %v3440, %v3789
  %v3791 = vpop.f32.mrf.mxu0
  %v3792 = vadd.f32 %v3442, %v3791
  %3793 = vmatprep.mubr.bf16.mxu0 %v3638
  %3794 = vmatmul.mubr.bf16.gmra.mxu0 %v2985
  %v3795 = vpop.f32.mrf.mxu0
  %v3796 = vadd.f32 %v3446, %v3795
  %v3797 = vpop.f32.mrf.mxu0
  %v3798 = vadd.f32 %v3448, %v3797
  %v3799 = vpop.f32.mrf.mxu0
  %v3800 = vadd.f32 %v3450, %v3799
  %v3801 = vpop.f32.mrf.mxu0
  %v3802 = vadd.f32 %v3452, %v3801
  %3803 = vmatprep.mubr.bf16.mxu0 %v3641
  %3804 = vmatmul.mubr.bf16.gmra.mxu0 %v2987
  %v3805 = vpop.f32.mrf.mxu0
  %v3806 = vadd.f32 %v3456, %v3805
  %v3807 = vpop.f32.mrf.mxu0
  %v3808 = vadd.f32 %v3458, %v3807
  %v3809 = vpop.f32.mrf.mxu0
  %v3810 = vadd.f32 %v3460, %v3809
  %v3811 = vpop.f32.mrf.mxu0
  %v3812 = vadd.f32 %v3462, %v3811
  %3813 = vmatprep.mubr.bf16.mxu0 %v3644
  %3814 = vmatmul.mubr.bf16.gmra.mxu0 %v2989
  %v3815 = vpop.f32.mrf.mxu0
  %v3816 = vadd.f32 %v3466, %v3815
  %v3817 = vpop.f32.mrf.mxu0
  %v3818 = vadd.f32 %v3468, %v3817
  %v3819 = vpop.f32.mrf.mxu0
  %v3820 = vadd.f32 %v3470, %v3819
  %v3821 = vpop.f32.mrf.mxu0
  %v3822 = vadd.f32 %v3472, %v3821
  %3823 = vmatprep.mubr.bf16.mxu0 %v3647
  %3824 = vmatmul.mubr.bf16.gmra.mxu0 %v2991
  %v3825 = vpop.f32.mrf.mxu0
  %v3826 = vadd.f32 %v3476, %v3825
  %v3827 = vpop.f32.mrf.mxu0
  %v3828 = vadd.f32 %v3478, %v3827
  %v3829 = vpop.f32.mrf.mxu0
  %v3830 = vadd.f32 %v3480, %v3829
  %v3831 = vpop.f32.mrf.mxu0
  %v3832 = vadd.f32 %v3482, %v3831
  %3833 = vmatprep.mubr.bf16.mxu0 %v3650
  %3834 = vmatmul.mubr.bf16.gmra.mxu0 %v2993
  %v3835 = vpop.f32.mrf.mxu0
  %v3836 = vadd.f32 %v3486, %v3835
  %v3837 = vpop.f32.mrf.mxu0
  %v3838 = vadd.f32 %v3488, %v3837
  %v3839 = vpop.f32.mrf.mxu0
  %v3840 = vadd.f32 %v3490, %v3839
  %v3841 = vpop.f32.mrf.mxu0
  %v3842 = vadd.f32 %v3492, %v3841
  %3843 = vmatprep.mubr.bf16.mxu0 %v3653
  %3844 = vmatmul.mubr.bf16.gmra.mxu0 %v2995
  %v3845 = vpop.f32.mrf.mxu0
  %v3846 = vadd.f32 %v3496, %v3845
  %v3847 = vpop.f32.mrf.mxu0
  %v3848 = vadd.f32 %v3498, %v3847
  %v3849 = vpop.f32.mrf.mxu0
  %v3850 = vpop.f32.mrf.mxu0
  %3851 = vdwg.mxu0
  %s3852 = scalar_lea.vmem %s3, 336
  %v3853 = vld [vmem:[%s3852] sm:$0xff]
  %v3854 = vld [vmem:[%s3852 + $0x8] sm:$0xff]
  %v3855 = vld [vmem:[%s3852 + $0x10] sm:$0xff]
  %v3856 = vld [vmem:[%s3852 + $0x18] sm:$0xff]
  %v3857 = vld [vmem:[%s3852 + $0x20] sm:$0xff]
  %v3858 = vld [vmem:[%s3852 + $0x28] sm:$0xff]
  %v3859 = vld [vmem:[%s3852 + $0x30] sm:$0xff]
  %v3860 = vld [vmem:[%s3852 + $0x38] sm:$0xff]
  %v3861 = vld [vmem:[%s3852 + $0x40] sm:$0xff]
  %v3862 = vld [vmem:[%s3852 + $0x48] sm:$0xff]
  %v3863 = vld [vmem:[%s3852 + $0x50] sm:$0xff]
  %v3864 = vld [vmem:[%s3852 + $0x58] sm:$0xff]
  %v3865 = vld [vmem:[%s3852 + $0x60] sm:$0xff]
  %v3866 = vld [vmem:[%s3852 + $0x68] sm:$0xff]
  %v3867 = vld [vmem:[%s3852 + $0x70] sm:$0xff]
  %v3868 = vld [vmem:[%s3852 + $0x78] sm:$0xff]
  %v3869 = vld [vmem:[%s3852 + $0x80] sm:$0xff]
  %v3870 = vld [vmem:[%s3852 + $0x88] sm:$0xff]
  %v3871 = vld [vmem:[%s3852 + $0x90] sm:$0xff]
  %v3872 = vld [vmem:[%s3852 + $0x98] sm:$0xff]
  %v3873 = vld [vmem:[%s3852 + $0xa0] sm:$0x11]
  %v3874 = vrot.slane %v2965, 2
  %v3875 = vrot.slane %v2967, 2
  %v3876 = vsel %vm1756, %v3874, %v3875
  %v3877 = vrot.slane %v2966, 2
  %v3878 = vrot.slane %v2968, 2
  %v3879 = vsel %vm1756, %v3877, %v3878
  %v3880 = vrot.slane %v2969, 2
  %v3881 = vsel %vm1756, %v3875, %v3880
  %v3882 = vrot.slane %v2970, 2
  %v3883 = vsel %vm1756, %v3878, %v3882
  %v3884 = vrot.slane %v2971, 2
  %v3885 = vsel %vm1756, %v3880, %v3884
  %v3886 = vrot.slane %v2972, 2
  %v3887 = vsel %vm1756, %v3882, %v3886
  %v3888 = vrot.slane %v2973, 2
  %v3889 = vsel %vm1756, %v3884, %v3888
  %v3890 = vrot.slane %v2974, 2
  %v3891 = vsel %vm1756, %v3886, %v3890
  %v3892 = vrot.slane %v2975, 2
  %v3893 = vsel %vm1756, %v3888, %v3892
  %v3894 = vrot.slane %v2976, 2
  %v3895 = vsel %vm1756, %v3890, %v3894
  %v3896 = vrot.slane %v2977, 2
  %v3897 = vsel %vm1756, %v3892, %v3896
  %v3898 = vrot.slane %v2978, 2
  %v3899 = vsel %vm1756, %v3894, %v3898
  %v3900 = vrot.slane %v2979, 2
  %v3901 = vsel %vm1756, %v3896, %v3900
  %v3902 = vrot.slane %v2980, 2
  %v3903 = vsel %vm1756, %v3898, %v3902
  %v3904 = vrot.slane %v2981, 2
  %v3905 = vsel %vm1756, %v3900, %v3904
  %v3906 = vrot.slane %v2982, 2
  %v3907 = vsel %vm1756, %v3902, %v3906
  %v3908 = vrot.slane %v2983, 2
  %v3909 = vsel %vm1756, %v3904, %v3908
  %v3910 = vrot.slane %v2984, 2
  %v3911 = vsel %vm1756, %v3906, %v3910
  %v3912 = vrot.slane %v2985, 2
  %v3913 = vsel %vm1756, %v3908, %v3912
  %v3914 = vrot.slane %v2986, 2
  %v3915 = vsel %vm1756, %v3910, %v3914
  %v3916 = vrot.slane %v2987, 2
  %v3917 = vsel %vm1756, %v3912, %v3916
  %v3918 = vrot.slane %v2988, 2
  %v3919 = vsel %vm1756, %v3914, %v3918
  %v3920 = vrot.slane %v2989, 2
  %v3921 = vsel %vm1756, %v3916, %v3920
  %v3922 = vrot.slane %v2990, 2
  %v3923 = vsel %vm1756, %v3918, %v3922
  %v3924 = vrot.slane %v2991, 2
  %v3925 = vsel %vm1756, %v3920, %v3924
  %v3926 = vrot.slane %v2992, 2
  %v3927 = vsel %vm1756, %v3922, %v3926
  %v3928 = vrot.slane %v2993, 2
  %v3929 = vsel %vm1756, %v3924, %v3928
  %v3930 = vrot.slane %v2994, 2
  %v3931 = vsel %vm1756, %v3926, %v3930
  %v3932 = vrot.slane %v2995, 2
  %v3933 = vsel %vm1756, %v3928, %v3932
  %v3934 = vrot.slane %v2996, 2
  %v3935 = vsel %vm1756, %v3930, %v3934
  %v3973 = vunpack.c.l.b16 %v3853
  %v3974 = vunpack.c.h.b16 %v3853
  %v3975 = vunpack.c.l.b16 %v3854
  %v3976 = vunpack.c.h.b16 %v3854
  %v3977 = vunpack.c.l.b16 %v3855
  %v3978 = vunpack.c.h.b16 %v3855
  %v3979 = vunpack.c.l.b16 %v3856
  %v3980 = vunpack.c.h.b16 %v3856
  %v3981 = vunpack.c.l.b16 %v3857
  %v3982 = vunpack.c.h.b16 %v3857
  %v3983 = vunpack.c.l.b16 %v3858
  %v3984 = vunpack.c.h.b16 %v3858
  %v3985 = vunpack.c.l.b16 %v3859
  %v3986 = vunpack.c.h.b16 %v3859
  %v3987 = vunpack.c.l.b16 %v3860
  %v3988 = vunpack.c.h.b16 %v3860
  %v3989 = vunpack.c.l.b16 %v3861
  %v3990 = vunpack.c.h.b16 %v3861
  %v3991 = vunpack.c.l.b16 %v3862
  %v3992 = vunpack.c.h.b16 %v3862
  %v3993 = vunpack.c.l.b16 %v3863
  %v3994 = vunpack.c.h.b16 %v3863
  %v3995 = vunpack.c.l.b16 %v3864
  %v3996 = vunpack.c.h.b16 %v3864
  %v3997 = vunpack.c.l.b16 %v3865
  %v3998 = vunpack.c.h.b16 %v3865
  %v3999 = vunpack.c.l.b16 %v3866
  %v4000 = vunpack.c.h.b16 %v3866
  %v4001 = vunpack.c.l.b16 %v3867
  %v4002 = vunpack.c.h.b16 %v3867
  %v4003 = vunpack.c.l.b16 %v3868
  %v4004 = vunpack.c.h.b16 %v3868
  %v4005 = vunpack.c.l.b16 %v3869
  %v4006 = vunpack.c.h.b16 %v3869
  %v4007 = vunpack.c.l.b16 %v3870
  %v4008 = vunpack.c.h.b16 %v3870
  %v4009 = vunpack.c.l.b16 %v3871
  %v4010 = vunpack.c.h.b16 %v3871
  %v4011 = vunpack.c.l.b16 %v3872
  %v4012 = vunpack.c.h.b16 %v3872
  %v4013 = vunpack.c.l.b16 %v3873
  %v4014 = vunpack.c.h.b16 %v3873
  %v4015 = vpack.c.b16 %v3975, %v3973
  %v4016 = vpack.c.b16 %v3976, %v3974
  %v4017 = vpack.c.b16 %v3979, %v3977
  %v4018 = vpack.c.b16 %v3980, %v3978
  %v4019 = vpack.c.b16 %v3983, %v3981
  %v4020 = vpack.c.b16 %v3984, %v3982
  %v4021 = vpack.c.b16 %v3987, %v3985
  %v4022 = vpack.c.b16 %v3988, %v3986
  %v4023 = vpack.c.b16 %v3991, %v3989
  %v4024 = vpack.c.b16 %v3992, %v3990
  %v4025 = vpack.c.b16 %v3995, %v3993
  %v4026 = vpack.c.b16 %v3996, %v3994
  %v4027 = vpack.c.b16 %v3999, %v3997
  %v4028 = vpack.c.b16 %v4000, %v3998
  %v4029 = vpack.c.b16 %v4003, %v4001
  %v4030 = vpack.c.b16 %v4004, %v4002
  %v4031 = vpack.c.b16 %v4007, %v4005
  %v4032 = vpack.c.b16 %v4008, %v4006
  %v4033 = vpack.c.b16 %v4011, %v4009
  %v4034 = vpack.c.b16 %v4012, %v4010
  %v4035 = vpack.c.b16 %v4013, %v4013
  %v4036 = vpack.c.b16 %v4014, %v4014
  %v4058 = vsel %vm3255, %v3879, 0
  %v4061 = vsel %vm3255, %v3883, 0
  %v4064 = vsel %vm3255, %v3887, 0
  %v4067 = vsel %vm3255, %v3891, 0
  %v4070 = vsel %vm3255, %v3895, 0
  %v4073 = vsel %vm3255, %v3899, 0
  %v4076 = vsel %vm3255, %v3903, 0
  %v4079 = vsel %vm3255, %v3907, 0
  %v4082 = vsel %vm3255, %v3911, 0
  %v4085 = vsel %vm3255, %v3915, 0
  %v4088 = vsel %vm3255, %v3919, 0
  %v4091 = vsel %vm3255, %v3923, 0
  %v4094 = vsel %vm3255, %v3927, 0
  %v4097 = vsel %vm3255, %v3931, 0
  %v4100 = vsel %vm3255, %v3935, 0
  %v4103 = vsel %vm3255, %v3934, 0
  %v4106 = vsel %vm3304, %v4035, 0
  %v4109 = vsel %vm3304, %v4036, 0
  %4111 = vmatprep.subr.bf16.mxu0 %v4030
  %4112 = vmatpush1.bf16.msra.mxu0 %v4029
  %4113 = vmatprep.subr.bf16.mxu0 %v4028
  %4114 = vmatpush1.bf16.msra.mxu0 %v4027
  %4115 = vmatprep.subr.bf16.mxu0 %v4026
  %4116 = vmatpush1.bf16.msra.mxu0 %v4025
  %4117 = vmatprep.subr.bf16.mxu0 %v4024
  %4118 = vmatpush1.bf16.msra.mxu0 %v4023
  %4119 = vmatprep.subr.bf16.mxu0 %v4022
  %4120 = vmatpush1.bf16.msra.mxu0 %v4021
  %4121 = vmatprep.subr.bf16.mxu0 %v4020
  %4122 = vmatpush1.bf16.msra.mxu0 %v4019
  %4123 = vmatprep.subr.bf16.mxu0 %v4018
  %4124 = vmatpush1.bf16.msra.mxu0 %v4017
  %4125 = vmatprep.subr.bf16.mxu0 %v4016
  %4126 = vmatpush1.bf16.msra.mxu0 %v4015
  %4127 = vmatprep.subr.bf16.mxu0 0
  %4128 = vmatpush2.bf16.msra.mxu0 0
  %4129 = vmatprep.subr.bf16.mxu0 0
  %4130 = vmatpush2.bf16.msra.mxu0 0
  %4131 = vmatprep.subr.bf16.mxu0 0
  %4132 = vmatpush2.bf16.msra.mxu0 0
  %4133 = vmatprep.subr.bf16.mxu0 0
  %4134 = vmatpush2.bf16.msra.mxu0 0
  %4135 = vmatprep.subr.bf16.mxu0 0
  %4136 = vmatpush2.bf16.msra.mxu0 0
  %4137 = vmatprep.subr.bf16.mxu0 %v4109
  %4138 = vmatpush2.bf16.msra.mxu0 %v4106
  %4139 = vmatprep.subr.bf16.mxu0 %v4034
  %4140 = vmatpush2.bf16.msra.mxu0 %v4033
  %4141 = vmatprep.subr.bf16.mxu0 %v4032
  %4142 = vmatpush2.bf16.msra.mxu0 %v4031
  %4143 = vmatprep.mubr.bf16.mxu0 %v4058
  %4144 = vmatmul.mubr.bf16.gmra.mxu0 %v3876
  %v4145 = vpop.f32.mrf.mxu0
  %v4146 = vadd.f32 0.0, %v4145
  %v4147 = vpop.f32.mrf.mxu0
  %v4148 = vadd.f32 0.0, %v4147
  %v4149 = vpop.f32.mrf.mxu0
  %v4150 = vadd.f32 0.0, %v4149
  %v4151 = vpop.f32.mrf.mxu0
  %v4152 = vadd.f32 0.0, %v4151
  %4153 = vmatprep.mubr.bf16.mxu0 %v4061
  %4154 = vmatmul.mubr.bf16.gmra.mxu0 %v3881
  %v4155 = vpop.f32.mrf.mxu0
  %v4156 = vadd.f32 0.0, %v4155
  %v4157 = vpop.f32.mrf.mxu0
  %v4158 = vadd.f32 0.0, %v4157
  %v4159 = vpop.f32.mrf.mxu0
  %v4160 = vadd.f32 0.0, %v4159
  %v4161 = vpop.f32.mrf.mxu0
  %v4162 = vadd.f32 0.0, %v4161
  %4163 = vmatprep.mubr.bf16.mxu0 %v4064
  %4164 = vmatmul.mubr.bf16.gmra.mxu0 %v3885
  %v4165 = vpop.f32.mrf.mxu0
  %v4166 = vadd.f32 0.0, %v4165
  %v4167 = vpop.f32.mrf.mxu0
  %v4168 = vadd.f32 0.0, %v4167
  %v4169 = vpop.f32.mrf.mxu0
  %v4170 = vadd.f32 0.0, %v4169
  %v4171 = vpop.f32.mrf.mxu0
  %v4172 = vadd.f32 0.0, %v4171
  %4173 = vmatprep.mubr.bf16.mxu0 %v4067
  %4174 = vmatmul.mubr.bf16.gmra.mxu0 %v3889
  %v4175 = vpop.f32.mrf.mxu0
  %v4176 = vadd.f32 0.0, %v4175
  %v4177 = vpop.f32.mrf.mxu0
  %v4178 = vadd.f32 0.0, %v4177
  %v4179 = vpop.f32.mrf.mxu0
  %v4180 = vadd.f32 0.0, %v4179
  %v4181 = vpop.f32.mrf.mxu0
  %v4182 = vadd.f32 0.0, %v4181
  %4183 = vmatprep.mubr.bf16.mxu0 %v4070
  %4184 = vmatmul.mubr.bf16.gmra.mxu0 %v3893
  %v4185 = vpop.f32.mrf.mxu0
  %v4186 = vadd.f32 0.0, %v4185
  %v4187 = vpop.f32.mrf.mxu0
  %v4188 = vadd.f32 0.0, %v4187
  %v4189 = vpop.f32.mrf.mxu0
  %v4190 = vadd.f32 0.0, %v4189
  %v4191 = vpop.f32.mrf.mxu0
  %v4192 = vadd.f32 0.0, %v4191
  %4193 = vmatprep.mubr.bf16.mxu0 %v4073
  %4194 = vmatmul.mubr.bf16.gmra.mxu0 %v3897
  %v4195 = vpop.f32.mrf.mxu0
  %v4196 = vadd.f32 0.0, %v4195
  %v4197 = vpop.f32.mrf.mxu0
  %v4198 = vadd.f32 0.0, %v4197
  %v4199 = vpop.f32.mrf.mxu0
  %v4200 = vadd.f32 0.0, %v4199
  %v4201 = vpop.f32.mrf.mxu0
  %v4202 = vadd.f32 0.0, %v4201
  %4203 = vmatprep.mubr.bf16.mxu0 %v4076
  %4204 = vmatmul.mubr.bf16.gmra.mxu0 %v3901
  %v4205 = vpop.f32.mrf.mxu0
  %v4206 = vadd.f32 0.0, %v4205
  %v4207 = vpop.f32.mrf.mxu0
  %v4208 = vadd.f32 0.0, %v4207
  %v4209 = vpop.f32.mrf.mxu0
  %v4210 = vadd.f32 0.0, %v4209
  %v4211 = vpop.f32.mrf.mxu0
  %v4212 = vadd.f32 0.0, %v4211
  %4213 = vmatprep.mubr.bf16.mxu0 %v4079
  %4214 = vmatmul.mubr.bf16.gmra.mxu0 %v3905
  %v4215 = vpop.f32.mrf.mxu0
  %v4216 = vadd.f32 0.0, %v4215
  %v4217 = vpop.f32.mrf.mxu0
  %v4218 = vadd.f32 0.0, %v4217
  %v4219 = vpop.f32.mrf.mxu0
  %v4220 = vadd.f32 0.0, %v4219
  %v4221 = vpop.f32.mrf.mxu0
  %v4222 = vadd.f32 0.0, %v4221
  %4223 = vmatprep.mubr.bf16.mxu0 %v4082
  %4224 = vmatmul.mubr.bf16.gmra.mxu0 %v3909
  %v4225 = vpop.f32.mrf.mxu0
  %v4226 = vadd.f32 0.0, %v4225
  %v4227 = vpop.f32.mrf.mxu0
  %v4228 = vadd.f32 0.0, %v4227
  %v4229 = vpop.f32.mrf.mxu0
  %v4230 = vadd.f32 0.0, %v4229
  %v4231 = vpop.f32.mrf.mxu0
  %v4232 = vadd.f32 0.0, %v4231
  %4233 = vmatprep.mubr.bf16.mxu0 %v4085
  %4234 = vmatmul.mubr.bf16.gmra.mxu0 %v3913
  %v4235 = vpop.f32.mrf.mxu0
  %v4236 = vadd.f32 0.0, %v4235
  %v4237 = vpop.f32.mrf.mxu0
  %v4238 = vadd.f32 0.0, %v4237
  %v4239 = vpop.f32.mrf.mxu0
  %v4240 = vadd.f32 0.0, %v4239
  %v4241 = vpop.f32.mrf.mxu0
  %v4242 = vadd.f32 0.0, %v4241
  %4243 = vmatprep.mubr.bf16.mxu0 %v4088
  %4244 = vmatmul.mubr.bf16.gmra.mxu0 %v3917
  %v4245 = vpop.f32.mrf.mxu0
  %v4246 = vadd.f32 0.0, %v4245
  %v4247 = vpop.f32.mrf.mxu0
  %v4248 = vadd.f32 0.0, %v4247
  %v4249 = vpop.f32.mrf.mxu0
  %v4250 = vadd.f32 0.0, %v4249
  %v4251 = vpop.f32.mrf.mxu0
  %v4252 = vadd.f32 0.0, %v4251
  %4253 = vmatprep.mubr.bf16.mxu0 %v4091
  %4254 = vmatmul.mubr.bf16.gmra.mxu0 %v3921
  %v4255 = vpop.f32.mrf.mxu0
  %v4256 = vadd.f32 0.0, %v4255
  %v4257 = vpop.f32.mrf.mxu0
  %v4258 = vadd.f32 0.0, %v4257
  %v4259 = vpop.f32.mrf.mxu0
  %v4260 = vadd.f32 0.0, %v4259
  %v4261 = vpop.f32.mrf.mxu0
  %v4262 = vadd.f32 0.0, %v4261
  %4263 = vmatprep.mubr.bf16.mxu0 %v4094
  %4264 = vmatmul.mubr.bf16.gmra.mxu0 %v3925
  %v4265 = vpop.f32.mrf.mxu0
  %v4266 = vadd.f32 0.0, %v4265
  %v4267 = vpop.f32.mrf.mxu0
  %v4268 = vadd.f32 0.0, %v4267
  %v4269 = vpop.f32.mrf.mxu0
  %v4270 = vadd.f32 0.0, %v4269
  %v4271 = vpop.f32.mrf.mxu0
  %v4272 = vadd.f32 0.0, %v4271
  %4273 = vmatprep.mubr.bf16.mxu0 %v4097
  %4274 = vmatmul.mubr.bf16.gmra.mxu0 %v3929
  %v4275 = vpop.f32.mrf.mxu0
  %v4276 = vadd.f32 0.0, %v4275
  %v4277 = vpop.f32.mrf.mxu0
  %v4278 = vadd.f32 0.0, %v4277
  %v4279 = vpop.f32.mrf.mxu0
  %v4280 = vadd.f32 0.0, %v4279
  %v4281 = vpop.f32.mrf.mxu0
  %v4282 = vadd.f32 0.0, %v4281
  %4283 = vmatprep.mubr.bf16.mxu0 %v4100
  %4284 = vmatmul.mubr.bf16.gmra.mxu0 %v3933
  %v4285 = vpop.f32.mrf.mxu0
  %v4286 = vadd.f32 0.0, %v4285
  %v4287 = vpop.f32.mrf.mxu0
  %v4288 = vadd.f32 0.0, %v4287
  %v4289 = vpop.f32.mrf.mxu0
  %v4290 = vadd.f32 0.0, %v4289
  %v4291 = vpop.f32.mrf.mxu0
  %v4292 = vadd.f32 0.0, %v4291
  %4293 = vmatprep.mubr.bf16.mxu0 %v4103
  %4294 = vmatmul.mubr.bf16.gmra.mxu0 %v3932
  %v4295 = vpop.f32.mrf.mxu0
  %v4296 = vadd.f32 0.0, %v4295
  %v4297 = vpop.f32.mrf.mxu0
  %v4298 = vadd.f32 0.0, %v4297
  %v4299 = vpop.f32.mrf.mxu0
  %v4300 = vpop.f32.mrf.mxu0
  %4301 = vdwg.mxu0
  %v4302 = vadd.f32 %v3696, %v4146
  %v4303 = vadd.f32 %v3698, %v4148
  %v4304 = vadd.f32 %v3700, %v4150
  %v4305 = vadd.f32 %v3702, %v4152
  %v4306 = vadd.f32 %v3706, %v4156
  %v4307 = vadd.f32 %v3708, %v4158
  %v4308 = vadd.f32 %v3710, %v4160
  %v4309 = vadd.f32 %v3712, %v4162
  %v4310 = vadd.f32 %v3716, %v4166
  %v4311 = vadd.f32 %v3718, %v4168
  %v4312 = vadd.f32 %v3720, %v4170
  %v4313 = vadd.f32 %v3722, %v4172
  %v4314 = vadd.f32 %v3726, %v4176
  %v4315 = vadd.f32 %v3728, %v4178
  %v4316 = vadd.f32 %v3730, %v4180
  %v4317 = vadd.f32 %v3732, %v4182
  %v4318 = vadd.f32 %v3736, %v4186
  %v4319 = vadd.f32 %v3738, %v4188
  %v4320 = vadd.f32 %v3740, %v4190
  %v4321 = vadd.f32 %v3742, %v4192
  %v4322 = vadd.f32 %v3746, %v4196
  %v4323 = vadd.f32 %v3748, %v4198
  %v4324 = vadd.f32 %v3750, %v4200
  %v4325 = vadd.f32 %v3752, %v4202
  %v4326 = vadd.f32 %v3756, %v4206
  %v4327 = vadd.f32 %v3758, %v4208
  %v4328 = vadd.f32 %v3760, %v4210
  %v4329 = vadd.f32 %v3762, %v4212
  %v4330 = vadd.f32 %v3766, %v4216
  %v4331 = vadd.f32 %v3768, %v4218
  %v4332 = vadd.f32 %v3770, %v4220
  %v4333 = vadd.f32 %v3772, %v4222
  %v4334 = vadd.f32 %v3776, %v4226
  %v4335 = vadd.f32 %v3778, %v4228
  %v4336 = vadd.f32 %v3780, %v4230
  %v4337 = vadd.f32 %v3782, %v4232
  %v4338 = vadd.f32 %v3786, %v4236
  %v4339 = vadd.f32 %v3788, %v4238
  %v4340 = vadd.f32 %v3790, %v4240
  %v4341 = vadd.f32 %v3792, %v4242
  %v4342 = vadd.f32 %v3796, %v4246
  %v4343 = vadd.f32 %v3798, %v4248
  %v4344 = vadd.f32 %v3800, %v4250
  %v4345 = vadd.f32 %v3802, %v4252
  %v4346 = vadd.f32 %v3806, %v4256
  %v4347 = vadd.f32 %v3808, %v4258
  %v4348 = vadd.f32 %v3810, %v4260
  %v4349 = vadd.f32 %v3812, %v4262
  %v4350 = vadd.f32 %v3816, %v4266
  %v4351 = vadd.f32 %v3818, %v4268
  %v4352 = vadd.f32 %v3820, %v4270
  %v4353 = vadd.f32 %v3822, %v4272
  %v4354 = vadd.f32 %v3826, %v4276
  %v4355 = vadd.f32 %v3828, %v4278
  %v4356 = vadd.f32 %v3830, %v4280
  %v4357 = vadd.f32 %v3832, %v4282
  %v4358 = vadd.f32 %v3836, %v4286
  %v4359 = vadd.f32 %v3838, %v4288
  %v4360 = vadd.f32 %v3840, %v4290
  %v4361 = vadd.f32 %v3842, %v4292
  %v4362 = vadd.f32 %v3846, %v4296
  %v4363 = vadd.f32 %v3848, %v4298
  %s4364 = scalar_lea.vmem %s3, 504
  %v4365 = vld [vmem:[%s4364] sm:$0xff]
  %v4366 = vld [vmem:[%s4364 + $0x8] sm:$0xff]
  %v4367 = vld [vmem:[%s4364 + $0x10] sm:$0xff]
  %v4368 = vld [vmem:[%s4364 + $0x18] sm:$0xff]
  %v4369 = vld [vmem:[%s4364 + $0x20] sm:$0xff]
  %v4370 = vld [vmem:[%s4364 + $0x28] sm:$0xff]
  %v4371 = vld [vmem:[%s4364 + $0x30] sm:$0xff]
  %v4372 = vld [vmem:[%s4364 + $0x38] sm:$0xff]
  %v4373 = vld [vmem:[%s4364 + $0x40] sm:$0xff]
  %v4374 = vld [vmem:[%s4364 + $0x48] sm:$0xff]
  %v4375 = vld [vmem:[%s4364 + $0x50] sm:$0xff]
  %v4376 = vld [vmem:[%s4364 + $0x58] sm:$0xff]
  %v4377 = vld [vmem:[%s4364 + $0x60] sm:$0xff]
  %v4378 = vld [vmem:[%s4364 + $0x68] sm:$0xff]
  %v4379 = vld [vmem:[%s4364 + $0x70] sm:$0xff]
  %v4380 = vld [vmem:[%s4364 + $0x78] sm:$0xff]
  %v4381 = vld [vmem:[%s4364 + $0x80] sm:$0xff]
  %v4382 = vld [vmem:[%s4364 + $0x88] sm:$0xff]
  %v4383 = vld [vmem:[%s4364 + $0x90] sm:$0xff]
  %v4384 = vld [vmem:[%s4364 + $0x98] sm:$0xff]
  %v4385 = vld [vmem:[%s4364 + $0xa0] sm:$0x11]
  %vm4386 = vcmask 1044480
  %v4387 = vrot.slane %v2965, 3
  %v4388 = vrot.slane %v2967, 3
  %v4389 = vsel %vm4386, %v4387, %v4388
  %v4390 = vrot.slane %v2966, 3
  %v4391 = vrot.slane %v2968, 3
  %v4392 = vsel %vm4386, %v4390, %v4391
  %v4393 = vrot.slane %v2969, 3
  %v4394 = vsel %vm4386, %v4388, %v4393
  %v4395 = vrot.slane %v2970, 3
  %v4396 = vsel %vm4386, %v4391, %v4395
  %v4397 = vrot.slane %v2971, 3
  %v4398 = vsel %vm4386, %v4393, %v4397
  %v4399 = vrot.slane %v2972, 3
  %v4400 = vsel %vm4386, %v4395, %v4399
  %v4401 = vrot.slane %v2973, 3
  %v4402 = vsel %vm4386, %v4397, %v4401
  %v4403 = vrot.slane %v2974, 3
  %v4404 = vsel %vm4386, %v4399, %v4403
  %v4405 = vrot.slane %v2975, 3
  %v4406 = vsel %vm4386, %v4401, %v4405
  %v4407 = vrot.slane %v2976, 3
  %v4408 = vsel %vm4386, %v4403, %v4407
  %v4409 = vrot.slane %v2977, 3
  %v4410 = vsel %vm4386, %v4405, %v4409
  %v4411 = vrot.slane %v2978, 3
  %v4412 = vsel %vm4386, %v4407, %v4411
  %v4413 = vrot.slane %v2979, 3
  %v4414 = vsel %vm4386, %v4409, %v4413
  %v4415 = vrot.slane %v2980, 3
  %v4416 = vsel %vm4386, %v4411, %v4415
  %v4417 = vrot.slane %v2981, 3
  %v4418 = vsel %vm4386, %v4413, %v4417
  %v4419 = vrot.slane %v2982, 3
  %v4420 = vsel %vm4386, %v4415, %v4419
  %v4421 = vrot.slane %v2983, 3
  %v4422 = vsel %vm4386, %v4417, %v4421
  %v4423 = vrot.slane %v2984, 3
  %v4424 = vsel %vm4386, %v4419, %v4423
  %v4425 = vrot.slane %v2985, 3
  %v4426 = vsel %vm4386, %v4421, %v4425
  %v4427 = vrot.slane %v2986, 3
  %v4428 = vsel %vm4386, %v4423, %v4427
  %v4429 = vrot.slane %v2987, 3
  %v4430 = vsel %vm4386, %v4425, %v4429
  %v4431 = vrot.slane %v2988, 3
  %v4432 = vsel %vm4386, %v4427, %v4431
  %v4433 = vrot.slane %v2989, 3
  %v4434 = vsel %vm4386, %v4429, %v4433
  %v4435 = vrot.slane %v2990, 3
  %v4436 = vsel %vm4386, %v4431, %v4435
  %v4437 = vrot.slane %v2991, 3
  %v4438 = vsel %vm4386, %v4433, %v4437
  %v4439 = vrot.slane %v2992, 3
  %v4440 = vsel %vm4386, %v4435, %v4439
  %v4441 = vrot.slane %v2993, 3
  %v4442 = vsel %vm4386, %v4437, %v4441
  %v4443 = vrot.slane %v2994, 3
  %v4444 = vsel %vm4386, %v4439, %v4443
  %v4445 = vrot.slane %v2995, 3
  %v4446 = vsel %vm4386, %v4441, %v4445
  %v4447 = vrot.slane %v2996, 3
  %v4448 = vsel %vm4386, %v4443, %v4447
  %v4486 = vunpack.c.l.b16 %v4365
  %v4487 = vunpack.c.h.b16 %v4365
  %v4488 = vunpack.c.l.b16 %v4366
  %v4489 = vunpack.c.h.b16 %v4366
  %v4490 = vunpack.c.l.b16 %v4367
  %v4491 = vunpack.c.h.b16 %v4367
  %v4492 = vunpack.c.l.b16 %v4368
  %v4493 = vunpack.c.h.b16 %v4368
  %v4494 = vunpack.c.l.b16 %v4369
  %v4495 = vunpack.c.h.b16 %v4369
  %v4496 = vunpack.c.l.b16 %v4370
  %v4497 = vunpack.c.h.b16 %v4370
  %v4498 = vunpack.c.l.b16 %v4371
  %v4499 = vunpack.c.h.b16 %v4371
  %v4500 = vunpack.c.l.b16 %v4372
  %v4501 = vunpack.c.h.b16 %v4372
  %v4502 = vunpack.c.l.b16 %v4373
  %v4503 = vunpack.c.h.b16 %v4373
  %v4504 = vunpack.c.l.b16 %v4374
  %v4505 = vunpack.c.h.b16 %v4374
  %v4506 = vunpack.c.l.b16 %v4375
  %v4507 = vunpack.c.h.b16 %v4375
  %v4508 = vunpack.c.l.b16 %v4376
  %v4509 = vunpack.c.h.b16 %v4376
  %v4510 = vunpack.c.l.b16 %v4377
  %v4511 = vunpack.c.h.b16 %v4377
  %v4512 = vunpack.c.l.b16 %v4378
  %v4513 = vunpack.c.h.b16 %v4378
  %v4514 = vunpack.c.l.b16 %v4379
  %v4515 = vunpack.c.h.b16 %v4379
  %v4516 = vunpack.c.l.b16 %v4380
  %v4517 = vunpack.c.h.b16 %v4380
  %v4518 = vunpack.c.l.b16 %v4381
  %v4519 = vunpack.c.h.b16 %v4381
  %v4520 = vunpack.c.l.b16 %v4382
  %v4521 = vunpack.c.h.b16 %v4382
  %v4522 = vunpack.c.l.b16 %v4383
  %v4523 = vunpack.c.h.b16 %v4383
  %v4524 = vunpack.c.l.b16 %v4384
  %v4525 = vunpack.c.h.b16 %v4384
  %v4526 = vunpack.c.l.b16 %v4385
  %v4527 = vunpack.c.h.b16 %v4385
  %v4528 = vpack.c.b16 %v4488, %v4486
  %v4529 = vpack.c.b16 %v4489, %v4487
  %v4530 = vpack.c.b16 %v4492, %v4490
  %v4531 = vpack.c.b16 %v4493, %v4491
  %v4532 = vpack.c.b16 %v4496, %v4494
  %v4533 = vpack.c.b16 %v4497, %v4495
  %v4534 = vpack.c.b16 %v4500, %v4498
  %v4535 = vpack.c.b16 %v4501, %v4499
  %v4536 = vpack.c.b16 %v4504, %v4502
  %v4537 = vpack.c.b16 %v4505, %v4503
  %v4538 = vpack.c.b16 %v4508, %v4506
  %v4539 = vpack.c.b16 %v4509, %v4507
  %v4540 = vpack.c.b16 %v4512, %v4510
  %v4541 = vpack.c.b16 %v4513, %v4511
  %v4542 = vpack.c.b16 %v4516, %v4514
  %v4543 = vpack.c.b16 %v4517, %v4515
  %v4544 = vpack.c.b16 %v4520, %v4518
  %v4545 = vpack.c.b16 %v4521, %v4519
  %v4546 = vpack.c.b16 %v4524, %v4522
  %v4547 = vpack.c.b16 %v4525, %v4523
  %v4548 = vpack.c.b16 %v4526, %v4526
  %v4549 = vpack.c.b16 %v4527, %v4527
  %v4571 = vsel %vm3255, %v4392, 0
  %v4574 = vsel %vm3255, %v4396, 0
  %v4577 = vsel %vm3255, %v4400, 0
  %v4580 = vsel %vm3255, %v4404, 0
  %v4583 = vsel %vm3255, %v4408, 0
  %v4586 = vsel %vm3255, %v4412, 0
  %v4589 = vsel %vm3255, %v4416, 0
  %v4592 = vsel %vm3255, %v4420, 0
  %v4595 = vsel %vm3255, %v4424, 0
  %v4598 = vsel %vm3255, %v4428, 0
  %v4601 = vsel %vm3255, %v4432, 0
  %v4604 = vsel %vm3255, %v4436, 0
  %v4607 = vsel %vm3255, %v4440, 0
  %v4610 = vsel %vm3255, %v4444, 0
  %v4613 = vsel %vm3255, %v4448, 0
  %v4616 = vsel %vm3255, %v4447, 0
  %v4619 = vsel %vm3304, %v4548, 0
  %v4622 = vsel %vm3304, %v4549, 0
  %4624 = vmatprep.subr.bf16.mxu0 %v4543
  %4625 = vmatpush1.bf16.msra.mxu0 %v4542
  %4626 = vmatprep.subr.bf16.mxu0 %v4541
  %4627 = vmatpush1.bf16.msra.mxu0 %v4540
  %4628 = vmatprep.subr.bf16.mxu0 %v4539
  %4629 = vmatpush1.bf16.msra.mxu0 %v4538
  %4630 = vmatprep.subr.bf16.mxu0 %v4537
  %4631 = vmatpush1.bf16.msra.mxu0 %v4536
  %4632 = vmatprep.subr.bf16.mxu0 %v4535
  %4633 = vmatpush1.bf16.msra.mxu0 %v4534
  %4634 = vmatprep.subr.bf16.mxu0 %v4533
  %4635 = vmatpush1.bf16.msra.mxu0 %v4532
  %4636 = vmatprep.subr.bf16.mxu0 %v4531
  %4637 = vmatpush1.bf16.msra.mxu0 %v4530
  %4638 = vmatprep.subr.bf16.mxu0 %v4529
  %4639 = vmatpush1.bf16.msra.mxu0 %v4528
  %4640 = vmatprep.subr.bf16.mxu0 0
  %4641 = vmatpush2.bf16.msra.mxu0 0
  %4642 = vmatprep.subr.bf16.mxu0 0
  %4643 = vmatpush2.bf16.msra.mxu0 0
  %4644 = vmatprep.subr.bf16.mxu0 0
  %4645 = vmatpush2.bf16.msra.mxu0 0
  %4646 = vmatprep.subr.bf16.mxu0 0
  %4647 = vmatpush2.bf16.msra.mxu0 0
  %4648 = vmatprep.subr.bf16.mxu0 0
  %4649 = vmatpush2.bf16.msra.mxu0 0
  %4650 = vmatprep.subr.bf16.mxu0 %v4622
  %4651 = vmatpush2.bf16.msra.mxu0 %v4619
  %4652 = vmatprep.subr.bf16.mxu0 %v4547
  %4653 = vmatpush2.bf16.msra.mxu0 %v4546
  %4654 = vmatprep.subr.bf16.mxu0 %v4545
  %4655 = vmatpush2.bf16.msra.mxu0 %v4544
  %4656 = vmatprep.mubr.bf16.mxu0 %v4571
  %4657 = vmatmul.mubr.bf16.gmra.mxu0 %v4389
  %v4658 = vpop.f32.mrf.mxu0
  %v4659 = vadd.f32 0.0, %v4658
  %v4660 = vpop.f32.mrf.mxu0
  %v4661 = vadd.f32 0.0, %v4660
  %v4662 = vpop.f32.mrf.mxu0
  %v4663 = vadd.f32 0.0, %v4662
  %v4664 = vpop.f32.mrf.mxu0
  %v4665 = vadd.f32 0.0, %v4664
  %4666 = vmatprep.mubr.bf16.mxu0 %v4574
  %4667 = vmatmul.mubr.bf16.gmra.mxu0 %v4394
  %v4668 = vpop.f32.mrf.mxu0
  %v4669 = vadd.f32 0.0, %v4668
  %v4670 = vpop.f32.mrf.mxu0
  %v4671 = vadd.f32 0.0, %v4670
  %v4672 = vpop.f32.mrf.mxu0
  %v4673 = vadd.f32 0.0, %v4672
  %v4674 = vpop.f32.mrf.mxu0
  %v4675 = vadd.f32 0.0, %v4674
  %4676 = vmatprep.mubr.bf16.mxu0 %v4577
  %4677 = vmatmul.mubr.bf16.gmra.mxu0 %v4398
  %v4678 = vpop.f32.mrf.mxu0
  %v4679 = vadd.f32 0.0, %v4678
  %v4680 = vpop.f32.mrf.mxu0
  %v4681 = vadd.f32 0.0, %v4680
  %v4682 = vpop.f32.mrf.mxu0
  %v4683 = vadd.f32 0.0, %v4682
  %v4684 = vpop.f32.mrf.mxu0
  %v4685 = vadd.f32 0.0, %v4684
  %4686 = vmatprep.mubr.bf16.mxu0 %v4580
  %4687 = vmatmul.mubr.bf16.gmra.mxu0 %v4402
  %v4688 = vpop.f32.mrf.mxu0
  %v4689 = vadd.f32 0.0, %v4688
  %v4690 = vpop.f32.mrf.mxu0
  %v4691 = vadd.f32 0.0, %v4690
  %v4692 = vpop.f32.mrf.mxu0
  %v4693 = vadd.f32 0.0, %v4692
  %v4694 = vpop.f32.mrf.mxu0
  %v4695 = vadd.f32 0.0, %v4694
  %4696 = vmatprep.mubr.bf16.mxu0 %v4583
  %4697 = vmatmul.mubr.bf16.gmra.mxu0 %v4406
  %v4698 = vpop.f32.mrf.mxu0
  %v4699 = vadd.f32 0.0, %v4698
  %v4700 = vpop.f32.mrf.mxu0
  %v4701 = vadd.f32 0.0, %v4700
  %v4702 = vpop.f32.mrf.mxu0
  %v4703 = vadd.f32 0.0, %v4702
  %v4704 = vpop.f32.mrf.mxu0
  %v4705 = vadd.f32 0.0, %v4704
  %4706 = vmatprep.mubr.bf16.mxu0 %v4586
  %4707 = vmatmul.mubr.bf16.gmra.mxu0 %v4410
  %v4708 = vpop.f32.mrf.mxu0
  %v4709 = vadd.f32 0.0, %v4708
  %v4710 = vpop.f32.mrf.mxu0
  %v4711 = vadd.f32 0.0, %v4710
  %v4712 = vpop.f32.mrf.mxu0
  %v4713 = vadd.f32 0.0, %v4712
  %v4714 = vpop.f32.mrf.mxu0
  %v4715 = vadd.f32 0.0, %v4714
  %4716 = vmatprep.mubr.bf16.mxu0 %v4589
  %4717 = vmatmul.mubr.bf16.gmra.mxu0 %v4414
  %v4718 = vpop.f32.mrf.mxu0
  %v4719 = vadd.f32 0.0, %v4718
  %v4720 = vpop.f32.mrf.mxu0
  %v4721 = vadd.f32 0.0, %v4720
  %v4722 = vpop.f32.mrf.mxu0
  %v4723 = vadd.f32 0.0, %v4722
  %v4724 = vpop.f32.mrf.mxu0
  %v4725 = vadd.f32 0.0, %v4724
  %4726 = vmatprep.mubr.bf16.mxu0 %v4592
  %4727 = vmatmul.mubr.bf16.gmra.mxu0 %v4418
  %v4728 = vpop.f32.mrf.mxu0
  %v4729 = vadd.f32 0.0, %v4728
  %v4730 = vpop.f32.mrf.mxu0
  %v4731 = vadd.f32 0.0, %v4730
  %v4732 = vpop.f32.mrf.mxu0
  %v4733 = vadd.f32 0.0, %v4732
  %v4734 = vpop.f32.mrf.mxu0
  %v4735 = vadd.f32 0.0, %v4734
  %4736 = vmatprep.mubr.bf16.mxu0 %v4595
  %4737 = vmatmul.mubr.bf16.gmra.mxu0 %v4422
  %v4738 = vpop.f32.mrf.mxu0
  %v4739 = vadd.f32 0.0, %v4738
  %v4740 = vpop.f32.mrf.mxu0
  %v4741 = vadd.f32 0.0, %v4740
  %v4742 = vpop.f32.mrf.mxu0
  %v4743 = vadd.f32 0.0, %v4742
  %v4744 = vpop.f32.mrf.mxu0
  %v4745 = vadd.f32 0.0, %v4744
  %4746 = vmatprep.mubr.bf16.mxu0 %v4598
  %4747 = vmatmul.mubr.bf16.gmra.mxu0 %v4426
  %v4748 = vpop.f32.mrf.mxu0
  %v4749 = vadd.f32 0.0, %v4748
  %v4750 = vpop.f32.mrf.mxu0
  %v4751 = vadd.f32 0.0, %v4750
  %v4752 = vpop.f32.mrf.mxu0
  %v4753 = vadd.f32 0.0, %v4752
  %v4754 = vpop.f32.mrf.mxu0
  %v4755 = vadd.f32 0.0, %v4754
  %4756 = vmatprep.mubr.bf16.mxu0 %v4601
  %4757 = vmatmul.mubr.bf16.gmra.mxu0 %v4430
  %v4758 = vpop.f32.mrf.mxu0
  %v4759 = vadd.f32 0.0, %v4758
  %v4760 = vpop.f32.mrf.mxu0
  %v4761 = vadd.f32 0.0, %v4760
  %v4762 = vpop.f32.mrf.mxu0
  %v4763 = vadd.f32 0.0, %v4762
  %v4764 = vpop.f32.mrf.mxu0
  %v4765 = vadd.f32 0.0, %v4764
  %4766 = vmatprep.mubr.bf16.mxu0 %v4604
  %4767 = vmatmul.mubr.bf16.gmra.mxu0 %v4434
  %v4768 = vpop.f32.mrf.mxu0
  %v4769 = vadd.f32 0.0, %v4768
  %v4770 = vpop.f32.mrf.mxu0
  %v4771 = vadd.f32 0.0, %v4770
  %v4772 = vpop.f32.mrf.mxu0
  %v4773 = vadd.f32 0.0, %v4772
  %v4774 = vpop.f32.mrf.mxu0
  %v4775 = vadd.f32 0.0, %v4774
  %4776 = vmatprep.mubr.bf16.mxu0 %v4607
  %4777 = vmatmul.mubr.bf16.gmra.mxu0 %v4438
  %v4778 = vpop.f32.mrf.mxu0
  %v4779 = vadd.f32 0.0, %v4778
  %v4780 = vpop.f32.mrf.mxu0
  %v4781 = vadd.f32 0.0, %v4780
  %v4782 = vpop.f32.mrf.mxu0
  %v4783 = vadd.f32 0.0, %v4782
  %v4784 = vpop.f32.mrf.mxu0
  %v4785 = vadd.f32 0.0, %v4784
  %4786 = vmatprep.mubr.bf16.mxu0 %v4610
  %4787 = vmatmul.mubr.bf16.gmra.mxu0 %v4442
  %v4788 = vpop.f32.mrf.mxu0
  %v4789 = vadd.f32 0.0, %v4788
  %v4790 = vpop.f32.mrf.mxu0
  %v4791 = vadd.f32 0.0, %v4790
  %v4792 = vpop.f32.mrf.mxu0
  %v4793 = vadd.f32 0.0, %v4792
  %v4794 = vpop.f32.mrf.mxu0
  %v4795 = vadd.f32 0.0, %v4794
  %4796 = vmatprep.mubr.bf16.mxu0 %v4613
  %4797 = vmatmul.mubr.bf16.gmra.mxu0 %v4446
  %v4798 = vpop.f32.mrf.mxu0
  %v4799 = vadd.f32 0.0, %v4798
  %v4800 = vpop.f32.mrf.mxu0
  %v4801 = vadd.f32 0.0, %v4800
  %v4802 = vpop.f32.mrf.mxu0
  %v4803 = vadd.f32 0.0, %v4802
  %v4804 = vpop.f32.mrf.mxu0
  %v4805 = vadd.f32 0.0, %v4804
  %4806 = vmatprep.mubr.bf16.mxu0 %v4616
  %4807 = vmatmul.mubr.bf16.gmra.mxu0 %v4445
  %v4808 = vpop.f32.mrf.mxu0
  %v4809 = vadd.f32 0.0, %v4808
  %v4810 = vpop.f32.mrf.mxu0
  %v4811 = vadd.f32 0.0, %v4810
  %v4812 = vpop.f32.mrf.mxu0
  %v4813 = vpop.f32.mrf.mxu0
  %4814 = vdwg.mxu0
  %v4815 = vadd.f32 %v4302, %v4659
  %v4816 = vadd.f32 %v4303, %v4661
  %v4817 = vadd.f32 %v4304, %v4663
  %v4818 = vadd.f32 %v4305, %v4665
  %v4819 = vadd.f32 %v4306, %v4669
  %v4820 = vadd.f32 %v4307, %v4671
  %v4821 = vadd.f32 %v4308, %v4673
  %v4822 = vadd.f32 %v4309, %v4675
  %v4823 = vadd.f32 %v4310, %v4679
  %v4824 = vadd.f32 %v4311, %v4681
  %v4825 = vadd.f32 %v4312, %v4683
  %v4826 = vadd.f32 %v4313, %v4685
  %v4827 = vadd.f32 %v4314, %v4689
  %v4828 = vadd.f32 %v4315, %v4691
  %v4829 = vadd.f32 %v4316, %v4693
  %v4830 = vadd.f32 %v4317, %v4695
  %v4831 = vadd.f32 %v4318, %v4699
  %v4832 = vadd.f32 %v4319, %v4701
  %v4833 = vadd.f32 %v4320, %v4703
  %v4834 = vadd.f32 %v4321, %v4705
  %v4835 = vadd.f32 %v4322, %v4709
  %v4836 = vadd.f32 %v4323, %v4711
  %v4837 = vadd.f32 %v4324, %v4713
  %v4838 = vadd.f32 %v4325, %v4715
  %v4839 = vadd.f32 %v4326, %v4719
  %v4840 = vadd.f32 %v4327, %v4721
  %v4841 = vadd.f32 %v4328, %v4723
  %v4842 = vadd.f32 %v4329, %v4725
  %v4843 = vadd.f32 %v4330, %v4729
  %v4844 = vadd.f32 %v4331, %v4731
  %v4845 = vadd.f32 %v4332, %v4733
  %v4846 = vadd.f32 %v4333, %v4735
  %v4847 = vadd.f32 %v4334, %v4739
  %v4848 = vadd.f32 %v4335, %v4741
  %v4849 = vadd.f32 %v4336, %v4743
  %v4850 = vadd.f32 %v4337, %v4745
  %v4851 = vadd.f32 %v4338, %v4749
  %v4852 = vadd.f32 %v4339, %v4751
  %v4853 = vadd.f32 %v4340, %v4753
  %v4854 = vadd.f32 %v4341, %v4755
  %v4855 = vadd.f32 %v4342, %v4759
  %v4856 = vadd.f32 %v4343, %v4761
  %v4857 = vadd.f32 %v4344, %v4763
  %v4858 = vadd.f32 %v4345, %v4765
  %v4859 = vadd.f32 %v4346, %v4769
  %v4860 = vadd.f32 %v4347, %v4771
  %v4861 = vadd.f32 %v4348, %v4773
  %v4862 = vadd.f32 %v4349, %v4775
  %v4863 = vadd.f32 %v4350, %v4779
  %v4864 = vadd.f32 %v4351, %v4781
  %v4865 = vadd.f32 %v4352, %v4783
  %v4866 = vadd.f32 %v4353, %v4785
  %v4867 = vadd.f32 %v4354, %v4789
  %v4868 = vadd.f32 %v4355, %v4791
  %v4869 = vadd.f32 %v4356, %v4793
  %v4870 = vadd.f32 %v4357, %v4795
  %v4871 = vadd.f32 %v4358, %v4799
  %v4872 = vadd.f32 %v4359, %v4801
  %v4873 = vadd.f32 %v4360, %v4803
  %v4874 = vadd.f32 %v4361, %v4805
  %v4875 = vadd.f32 %v4362, %v4809
  %v4876 = vadd.f32 %v4363, %v4811
  %s4877 = scalar_lea.vmem %s3, 672
  %v4878 = vld [vmem:[%s4877] sm:$0xff]
  %v4879 = vld [vmem:[%s4877 + $0x8] sm:$0xff]
  %v4880 = vld [vmem:[%s4877 + $0x10] sm:$0xff]
  %v4881 = vld [vmem:[%s4877 + $0x18] sm:$0xff]
  %v4882 = vld [vmem:[%s4877 + $0x20] sm:$0xff]
  %v4883 = vld [vmem:[%s4877 + $0x28] sm:$0xff]
  %v4884 = vld [vmem:[%s4877 + $0x30] sm:$0xff]
  %v4885 = vld [vmem:[%s4877 + $0x38] sm:$0xff]
  %v4886 = vld [vmem:[%s4877 + $0x40] sm:$0xff]
  %v4887 = vld [vmem:[%s4877 + $0x48] sm:$0xff]
  %v4888 = vld [vmem:[%s4877 + $0x50] sm:$0xff]
  %v4889 = vld [vmem:[%s4877 + $0x58] sm:$0xff]
  %v4890 = vld [vmem:[%s4877 + $0x60] sm:$0xff]
  %v4891 = vld [vmem:[%s4877 + $0x68] sm:$0xff]
  %v4892 = vld [vmem:[%s4877 + $0x70] sm:$0xff]
  %v4893 = vld [vmem:[%s4877 + $0x78] sm:$0xff]
  %v4894 = vld [vmem:[%s4877 + $0x80] sm:$0xff]
  %v4895 = vld [vmem:[%s4877 + $0x88] sm:$0xff]
  %v4896 = vld [vmem:[%s4877 + $0x90] sm:$0xff]
  %v4897 = vld [vmem:[%s4877 + $0x98] sm:$0xff]
  %v4898 = vld [vmem:[%s4877 + $0xa0] sm:$0x11]
  %vm4899 = vcmask 1043456
  %v4900 = vrot.slane %v2965, 4
  %v4901 = vrot.slane %v2967, 4
  %v4902 = vsel %vm4899, %v4900, %v4901
  %v4903 = vrot.slane %v2966, 4
  %v4904 = vrot.slane %v2968, 4
  %v4905 = vsel %vm4899, %v4903, %v4904
  %v4906 = vrot.slane %v2969, 4
  %v4907 = vsel %vm4899, %v4901, %v4906
  %v4908 = vrot.slane %v2970, 4
  %v4909 = vsel %vm4899, %v4904, %v4908
  %v4910 = vrot.slane %v2971, 4
  %v4911 = vsel %vm4899, %v4906, %v4910
  %v4912 = vrot.slane %v2972, 4
  %v4913 = vsel %vm4899, %v4908, %v4912
  %v4914 = vrot.slane %v2973, 4
  %v4915 = vsel %vm4899, %v4910, %v4914
  %v4916 = vrot.slane %v2974, 4
  %v4917 = vsel %vm4899, %v4912, %v4916
  %v4918 = vrot.slane %v2975, 4
  %v4919 = vsel %vm4899, %v4914, %v4918
  %v4920 = vrot.slane %v2976, 4
  %v4921 = vsel %vm4899, %v4916, %v4920
  %v4922 = vrot.slane %v2977, 4
  %v4923 = vsel %vm4899, %v4918, %v4922
  %v4924 = vrot.slane %v2978, 4
  %v4925 = vsel %vm4899, %v4920, %v4924
  %v4926 = vrot.slane %v2979, 4
  %v4927 = vsel %vm4899, %v4922, %v4926
  %v4928 = vrot.slane %v2980, 4
  %v4929 = vsel %vm4899, %v4924, %v4928
  %v4930 = vrot.slane %v2981, 4
  %v4931 = vsel %vm4899, %v4926, %v4930
  %v4932 = vrot.slane %v2982, 4
  %v4933 = vsel %vm4899, %v4928, %v4932
  %v4934 = vrot.slane %v2983, 4
  %v4935 = vsel %vm4899, %v4930, %v4934
  %v4936 = vrot.slane %v2984, 4
  %v4937 = vsel %vm4899, %v4932, %v4936
  %v4938 = vrot.slane %v2985, 4
  %v4939 = vsel %vm4899, %v4934, %v4938
  %v4940 = vrot.slane %v2986, 4
  %v4941 = vsel %vm4899, %v4936, %v4940
  %v4942 = vrot.slane %v2987, 4
  %v4943 = vsel %vm4899, %v4938, %v4942
  %v4944 = vrot.slane %v2988, 4
  %v4945 = vsel %vm4899, %v4940, %v4944
  %v4946 = vrot.slane %v2989, 4
  %v4947 = vsel %vm4899, %v4942, %v4946
  %v4948 = vrot.slane %v2990, 4
  %v4949 = vsel %vm4899, %v4944, %v4948
  %v4950 = vrot.slane %v2991, 4
  %v4951 = vsel %vm4899, %v4946, %v4950
  %v4952 = vrot.slane %v2992, 4
  %v4953 = vsel %vm4899, %v4948, %v4952
  %v4954 = vrot.slane %v2993, 4
  %v4955 = vsel %vm4899, %v4950, %v4954
  %v4956 = vrot.slane %v2994, 4
  %v4957 = vsel %vm4899, %v4952, %v4956
  %v4958 = vrot.slane %v2995, 4
  %v4959 = vsel %vm4899, %v4954, %v4958
  %v4960 = vrot.slane %v2996, 4
  %v4961 = vsel %vm4899, %v4956, %v4960
  %v4999 = vunpack.c.l.b16 %v4878
  %v5000 = vunpack.c.h.b16 %v4878
  %v5001 = vunpack.c.l.b16 %v4879
  %v5002 = vunpack.c.h.b16 %v4879
  %v5003 = vunpack.c.l.b16 %v4880
  %v5004 = vunpack.c.h.b16 %v4880
  %v5005 = vunpack.c.l.b16 %v4881
  %v5006 = vunpack.c.h.b16 %v4881
  %v5007 = vunpack.c.l.b16 %v4882
  %v5008 = vunpack.c.h.b16 %v4882
  %v5009 = vunpack.c.l.b16 %v4883
  %v5010 = vunpack.c.h.b16 %v4883
  %v5011 = vunpack.c.l.b16 %v4884
  %v5012 = vunpack.c.h.b16 %v4884
  %v5013 = vunpack.c.l.b16 %v4885
  %v5014 = vunpack.c.h.b16 %v4885
  %v5015 = vunpack.c.l.b16 %v4886
  %v5016 = vunpack.c.h.b16 %v4886
  %v5017 = vunpack.c.l.b16 %v4887
  %v5018 = vunpack.c.h.b16 %v4887
  %v5019 = vunpack.c.l.b16 %v4888
  %v5020 = vunpack.c.h.b16 %v4888
  %v5021 = vunpack.c.l.b16 %v4889
  %v5022 = vunpack.c.h.b16 %v4889
  %v5023 = vunpack.c.l.b16 %v4890
  %v5024 = vunpack.c.h.b16 %v4890
  %v5025 = vunpack.c.l.b16 %v4891
  %v5026 = vunpack.c.h.b16 %v4891
  %v5027 = vunpack.c.l.b16 %v4892
  %v5028 = vunpack.c.h.b16 %v4892
  %v5029 = vunpack.c.l.b16 %v4893
  %v5030 = vunpack.c.h.b16 %v4893
  %v5031 = vunpack.c.l.b16 %v4894
  %v5032 = vunpack.c.h.b16 %v4894
  %v5033 = vunpack.c.l.b16 %v4895
  %v5034 = vunpack.c.h.b16 %v4895
  %v5035 = vunpack.c.l.b16 %v4896
  %v5036 = vunpack.c.h.b16 %v4896
  %v5037 = vunpack.c.l.b16 %v4897
  %v5038 = vunpack.c.h.b16 %v4897
  %v5039 = vunpack.c.l.b16 %v4898
  %v5040 = vunpack.c.h.b16 %v4898
  %v5041 = vpack.c.b16 %v5001, %v4999
  %v5042 = vpack.c.b16 %v5002, %v5000
  %v5043 = vpack.c.b16 %v5005, %v5003
  %v5044 = vpack.c.b16 %v5006, %v5004
  %v5045 = vpack.c.b16 %v5009, %v5007
  %v5046 = vpack.c.b16 %v5010, %v5008
  %v5047 = vpack.c.b16 %v5013, %v5011
  %v5048 = vpack.c.b16 %v5014, %v5012
  %v5049 = vpack.c.b16 %v5017, %v5015
  %v5050 = vpack.c.b16 %v5018, %v5016
  %v5051 = vpack.c.b16 %v5021, %v5019
  %v5052 = vpack.c.b16 %v5022, %v5020
  %v5053 = vpack.c.b16 %v5025, %v5023
  %v5054 = vpack.c.b16 %v5026, %v5024
  %v5055 = vpack.c.b16 %v5029, %v5027
  %v5056 = vpack.c.b16 %v5030, %v5028
  %v5057 = vpack.c.b16 %v5033, %v5031
  %v5058 = vpack.c.b16 %v5034, %v5032
  %v5059 = vpack.c.b16 %v5037, %v5035
  %v5060 = vpack.c.b16 %v5038, %v5036
  %v5061 = vpack.c.b16 %v5039, %v5039
  %v5062 = vpack.c.b16 %v5040, %v5040
  %v5084 = vsel %vm3255, %v4905, 0
  %v5087 = vsel %vm3255, %v4909, 0
  %v5090 = vsel %vm3255, %v4913, 0
  %v5093 = vsel %vm3255, %v4917, 0
  %v5096 = vsel %vm3255, %v4921, 0
  %v5099 = vsel %vm3255, %v4925, 0
  %v5102 = vsel %vm3255, %v4929, 0
  %v5105 = vsel %vm3255, %v4933, 0
  %v5108 = vsel %vm3255, %v4937, 0
  %v5111 = vsel %vm3255, %v4941, 0
  %v5114 = vsel %vm3255, %v4945, 0
  %v5117 = vsel %vm3255, %v4949, 0
  %v5120 = vsel %vm3255, %v4953, 0
  %v5123 = vsel %vm3255, %v4957, 0
  %v5126 = vsel %vm3255, %v4961, 0
  %v5129 = vsel %vm3255, %v4960, 0
  %v5132 = vsel %vm3304, %v5061, 0
  %v5135 = vsel %vm3304, %v5062, 0
  %5137 = vmatprep.subr.bf16.mxu0 %v5056
  %5138 = vmatpush1.bf16.msra.mxu0 %v5055
  %5139 = vmatprep.subr.bf16.mxu0 %v5054
  %5140 = vmatpush1.bf16.msra.mxu0 %v5053
  %5141 = vmatprep.subr.bf16.mxu0 %v5052
  %5142 = vmatpush1.bf16.msra.mxu0 %v5051
  %5143 = vmatprep.subr.bf16.mxu0 %v5050
  %5144 = vmatpush1.bf16.msra.mxu0 %v5049
  %5145 = vmatprep.subr.bf16.mxu0 %v5048
  %5146 = vmatpush1.bf16.msra.mxu0 %v5047
  %5147 = vmatprep.subr.bf16.mxu0 %v5046
  %5148 = vmatpush1.bf16.msra.mxu0 %v5045
  %5149 = vmatprep.subr.bf16.mxu0 %v5044
  %5150 = vmatpush1.bf16.msra.mxu0 %v5043
  %5151 = vmatprep.subr.bf16.mxu0 %v5042
  %5152 = vmatpush1.bf16.msra.mxu0 %v5041
  %5153 = vmatprep.subr.bf16.mxu0 0
  %5154 = vmatpush2.bf16.msra.mxu0 0
  %5155 = vmatprep.subr.bf16.mxu0 0
  %5156 = vmatpush2.bf16.msra.mxu0 0
  %5157 = vmatprep.subr.bf16.mxu0 0
  %5158 = vmatpush2.bf16.msra.mxu0 0
  %5159 = vmatprep.subr.bf16.mxu0 0
  %5160 = vmatpush2.bf16.msra.mxu0 0
  %5161 = vmatprep.subr.bf16.mxu0 0
  %5162 = vmatpush2.bf16.msra.mxu0 0
  %5163 = vmatprep.subr.bf16.mxu0 %v5135
  %5164 = vmatpush2.bf16.msra.mxu0 %v5132
  %5165 = vmatprep.subr.bf16.mxu0 %v5060
  %5166 = vmatpush2.bf16.msra.mxu0 %v5059
  %5167 = vmatprep.subr.bf16.mxu0 %v5058
  %5168 = vmatpush2.bf16.msra.mxu0 %v5057
  %5169 = vmatprep.mubr.bf16.mxu0 %v5084
  %5170 = vmatmul.mubr.bf16.gmra.mxu0 %v4902
  %v5171 = vpop.f32.mrf.mxu0
  %v5172 = vadd.f32 0.0, %v5171
  %v5173 = vpop.f32.mrf.mxu0
  %v5174 = vadd.f32 0.0, %v5173
  %v5175 = vpop.f32.mrf.mxu0
  %v5176 = vadd.f32 0.0, %v5175
  %v5177 = vpop.f32.mrf.mxu0
  %v5178 = vadd.f32 0.0, %v5177
  %5179 = vmatprep.mubr.bf16.mxu0 %v5087
  %5180 = vmatmul.mubr.bf16.gmra.mxu0 %v4907
  %v5181 = vpop.f32.mrf.mxu0
  %v5182 = vadd.f32 0.0, %v5181
  %v5183 = vpop.f32.mrf.mxu0
  %v5184 = vadd.f32 0.0, %v5183
  %v5185 = vpop.f32.mrf.mxu0
  %v5186 = vadd.f32 0.0, %v5185
  %v5187 = vpop.f32.mrf.mxu0
  %v5188 = vadd.f32 0.0, %v5187
  %5189 = vmatprep.mubr.bf16.mxu0 %v5090
  %5190 = vmatmul.mubr.bf16.gmra.mxu0 %v4911
  %v5191 = vpop.f32.mrf.mxu0
  %v5192 = vadd.f32 0.0, %v5191
  %v5193 = vpop.f32.mrf.mxu0
  %v5194 = vadd.f32 0.0, %v5193
  %v5195 = vpop.f32.mrf.mxu0
  %v5196 = vadd.f32 0.0, %v5195
  %v5197 = vpop.f32.mrf.mxu0
  %v5198 = vadd.f32 0.0, %v5197
  %5199 = vmatprep.mubr.bf16.mxu0 %v5093
  %5200 = vmatmul.mubr.bf16.gmra.mxu0 %v4915
  %v5201 = vpop.f32.mrf.mxu0
  %v5202 = vadd.f32 0.0, %v5201
  %v5203 = vpop.f32.mrf.mxu0
  %v5204 = vadd.f32 0.0, %v5203
  %v5205 = vpop.f32.mrf.mxu0
  %v5206 = vadd.f32 0.0, %v5205
  %v5207 = vpop.f32.mrf.mxu0
  %v5208 = vadd.f32 0.0, %v5207
  %5209 = vmatprep.mubr.bf16.mxu0 %v5096
  %5210 = vmatmul.mubr.bf16.gmra.mxu0 %v4919
  %v5211 = vpop.f32.mrf.mxu0
  %v5212 = vadd.f32 0.0, %v5211
  %v5213 = vpop.f32.mrf.mxu0
  %v5214 = vadd.f32 0.0, %v5213
  %v5215 = vpop.f32.mrf.mxu0
  %v5216 = vadd.f32 0.0, %v5215
  %v5217 = vpop.f32.mrf.mxu0
  %v5218 = vadd.f32 0.0, %v5217
  %5219 = vmatprep.mubr.bf16.mxu0 %v5099
  %5220 = vmatmul.mubr.bf16.gmra.mxu0 %v4923
  %v5221 = vpop.f32.mrf.mxu0
  %v5222 = vadd.f32 0.0, %v5221
  %v5223 = vpop.f32.mrf.mxu0
  %v5224 = vadd.f32 0.0, %v5223
  %v5225 = vpop.f32.mrf.mxu0
  %v5226 = vadd.f32 0.0, %v5225
  %v5227 = vpop.f32.mrf.mxu0
  %v5228 = vadd.f32 0.0, %v5227
  %5229 = vmatprep.mubr.bf16.mxu0 %v5102
  %5230 = vmatmul.mubr.bf16.gmra.mxu0 %v4927
  %v5231 = vpop.f32.mrf.mxu0
  %v5232 = vadd.f32 0.0, %v5231
  %v5233 = vpop.f32.mrf.mxu0
  %v5234 = vadd.f32 0.0, %v5233
  %v5235 = vpop.f32.mrf.mxu0
  %v5236 = vadd.f32 0.0, %v5235
  %v5237 = vpop.f32.mrf.mxu0
  %v5238 = vadd.f32 0.0, %v5237
  %5239 = vmatprep.mubr.bf16.mxu0 %v5105
  %5240 = vmatmul.mubr.bf16.gmra.mxu0 %v4931
  %v5241 = vpop.f32.mrf.mxu0
  %v5242 = vadd.f32 0.0, %v5241
  %v5243 = vpop.f32.mrf.mxu0
  %v5244 = vadd.f32 0.0, %v5243
  %v5245 = vpop.f32.mrf.mxu0
  %v5246 = vadd.f32 0.0, %v5245
  %v5247 = vpop.f32.mrf.mxu0
  %v5248 = vadd.f32 0.0, %v5247
  %5249 = vmatprep.mubr.bf16.mxu0 %v5108
  %5250 = vmatmul.mubr.bf16.gmra.mxu0 %v4935
  %v5251 = vpop.f32.mrf.mxu0
  %v5252 = vadd.f32 0.0, %v5251
  %v5253 = vpop.f32.mrf.mxu0
  %v5254 = vadd.f32 0.0, %v5253
  %v5255 = vpop.f32.mrf.mxu0
  %v5256 = vadd.f32 0.0, %v5255
  %v5257 = vpop.f32.mrf.mxu0
  %v5258 = vadd.f32 0.0, %v5257
  %5259 = vmatprep.mubr.bf16.mxu0 %v5111
  %5260 = vmatmul.mubr.bf16.gmra.mxu0 %v4939
  %v5261 = vpop.f32.mrf.mxu0
  %v5262 = vadd.f32 0.0, %v5261
  %v5263 = vpop.f32.mrf.mxu0
  %v5264 = vadd.f32 0.0, %v5263
  %v5265 = vpop.f32.mrf.mxu0
  %v5266 = vadd.f32 0.0, %v5265
  %v5267 = vpop.f32.mrf.mxu0
  %v5268 = vadd.f32 0.0, %v5267
  %5269 = vmatprep.mubr.bf16.mxu0 %v5114
  %5270 = vmatmul.mubr.bf16.gmra.mxu0 %v4943
  %v5271 = vpop.f32.mrf.mxu0
  %v5272 = vadd.f32 0.0, %v5271
  %v5273 = vpop.f32.mrf.mxu0
  %v5274 = vadd.f32 0.0, %v5273
  %v5275 = vpop.f32.mrf.mxu0
  %v5276 = vadd.f32 0.0, %v5275
  %v5277 = vpop.f32.mrf.mxu0
  %v5278 = vadd.f32 0.0, %v5277
  %5279 = vmatprep.mubr.bf16.mxu0 %v5117
  %5280 = vmatmul.mubr.bf16.gmra.mxu0 %v4947
  %v5281 = vpop.f32.mrf.mxu0
  %v5282 = vadd.f32 0.0, %v5281
  %v5283 = vpop.f32.mrf.mxu0
  %v5284 = vadd.f32 0.0, %v5283
  %v5285 = vpop.f32.mrf.mxu0
  %v5286 = vadd.f32 0.0, %v5285
  %v5287 = vpop.f32.mrf.mxu0
  %v5288 = vadd.f32 0.0, %v5287
  %5289 = vmatprep.mubr.bf16.mxu0 %v5120
  %5290 = vmatmul.mubr.bf16.gmra.mxu0 %v4951
  %v5291 = vpop.f32.mrf.mxu0
  %v5292 = vadd.f32 0.0, %v5291
  %v5293 = vpop.f32.mrf.mxu0
  %v5294 = vadd.f32 0.0, %v5293
  %v5295 = vpop.f32.mrf.mxu0
  %v5296 = vadd.f32 0.0, %v5295
  %v5297 = vpop.f32.mrf.mxu0
  %v5298 = vadd.f32 0.0, %v5297
  %5299 = vmatprep.mubr.bf16.mxu0 %v5123
  %5300 = vmatmul.mubr.bf16.gmra.mxu0 %v4955
  %v5301 = vpop.f32.mrf.mxu0
  %v5302 = vadd.f32 0.0, %v5301
  %v5303 = vpop.f32.mrf.mxu0
  %v5304 = vadd.f32 0.0, %v5303
  %v5305 = vpop.f32.mrf.mxu0
  %v5306 = vadd.f32 0.0, %v5305
  %v5307 = vpop.f32.mrf.mxu0
  %v5308 = vadd.f32 0.0, %v5307
  %5309 = vmatprep.mubr.bf16.mxu0 %v5126
  %5310 = vmatmul.mubr.bf16.gmra.mxu0 %v4959
  %v5311 = vpop.f32.mrf.mxu0
  %v5312 = vadd.f32 0.0, %v5311
  %v5313 = vpop.f32.mrf.mxu0
  %v5314 = vadd.f32 0.0, %v5313
  %v5315 = vpop.f32.mrf.mxu0
  %v5316 = vadd.f32 0.0, %v5315
  %v5317 = vpop.f32.mrf.mxu0
  %v5318 = vadd.f32 0.0, %v5317
  %5319 = vmatprep.mubr.bf16.mxu0 %v5129
  %5320 = vmatmul.mubr.bf16.gmra.mxu0 %v4958
  %v5321 = vpop.f32.mrf.mxu0
  %v5322 = vadd.f32 0.0, %v5321
  %v5323 = vpop.f32.mrf.mxu0
  %v5324 = vadd.f32 0.0, %v5323
  %v5325 = vpop.f32.mrf.mxu0
  %v5326 = vpop.f32.mrf.mxu0
  %5327 = vdwg.mxu0
  %v5328 = vadd.f32 %v4815, %v5172
  %v5329 = vadd.f32 %v4816, %v5174
  %v5330 = vadd.f32 %v4817, %v5176
  %v5331 = vadd.f32 %v4818, %v5178
  %v5332 = vadd.f32 %v4819, %v5182
  %v5333 = vadd.f32 %v4820, %v5184
  %v5334 = vadd.f32 %v4821, %v5186
  %v5335 = vadd.f32 %v4822, %v5188
  %v5336 = vadd.f32 %v4823, %v5192
  %v5337 = vadd.f32 %v4824, %v5194
  %v5338 = vadd.f32 %v4825, %v5196
  %v5339 = vadd.f32 %v4826, %v5198
  %v5340 = vadd.f32 %v4827, %v5202
  %v5341 = vadd.f32 %v4828, %v5204
  %v5342 = vadd.f32 %v4829, %v5206
  %v5343 = vadd.f32 %v4830, %v5208
  %v5344 = vadd.f32 %v4831, %v5212
  %v5345 = vadd.f32 %v4832, %v5214
  %v5346 = vadd.f32 %v4833, %v5216
  %v5347 = vadd.f32 %v4834, %v5218
  %v5348 = vadd.f32 %v4835, %v5222
  %v5349 = vadd.f32 %v4836, %v5224
  %v5350 = vadd.f32 %v4837, %v5226
  %v5351 = vadd.f32 %v4838, %v5228
  %v5352 = vadd.f32 %v4839, %v5232
  %v5353 = vadd.f32 %v4840, %v5234
  %v5354 = vadd.f32 %v4841, %v5236
  %v5355 = vadd.f32 %v4842, %v5238
  %v5356 = vadd.f32 %v4843, %v5242
  %v5357 = vadd.f32 %v4844, %v5244
  %v5358 = vadd.f32 %v4845, %v5246
  %v5359 = vadd.f32 %v4846, %v5248
  %v5360 = vadd.f32 %v4847, %v5252
  %v5361 = vadd.f32 %v4848, %v5254
  %v5362 = vadd.f32 %v4849, %v5256
  %v5363 = vadd.f32 %v4850, %v5258
  %v5364 = vadd.f32 %v4851, %v5262
  %v5365 = vadd.f32 %v4852, %v5264
  %v5366 = vadd.f32 %v4853, %v5266
  %v5367 = vadd.f32 %v4854, %v5268
  %v5368 = vadd.f32 %v4855, %v5272
  %v5369 = vadd.f32 %v4856, %v5274
  %v5370 = vadd.f32 %v4857, %v5276
  %v5371 = vadd.f32 %v4858, %v5278
  %v5372 = vadd.f32 %v4859, %v5282
  %v5373 = vadd.f32 %v4860, %v5284
  %v5374 = vadd.f32 %v4861, %v5286
  %v5375 = vadd.f32 %v4862, %v5288
  %v5376 = vadd.f32 %v4863, %v5292
  %v5377 = vadd.f32 %v4864, %v5294
  %v5378 = vadd.f32 %v4865, %v5296
  %v5379 = vadd.f32 %v4866, %v5298
  %v5380 = vadd.f32 %v4867, %v5302
  %v5381 = vadd.f32 %v4868, %v5304
  %v5382 = vadd.f32 %v4869, %v5306
  %v5383 = vadd.f32 %v4870, %v5308
  %v5384 = vadd.f32 %v4871, %v5312
  %v5385 = vadd.f32 %v4872, %v5314
  %v5386 = vadd.f32 %v4873, %v5316
  %v5387 = vadd.f32 %v4874, %v5318
  %v5388 = vadd.f32 %v4875, %v5322
  %v5389 = vadd.f32 %v4876, %v5324
  %v5390 = vld [vmem:[%s4] sm:$0x3]
  %v5392 = vlaneseq
  %v5393 = vshrl.u32 %v5392, 7
  %v5394 = vsub.s32 0, %v5393
  %v5395 = vrot.slane %v5390, %v5394
  %v5396 = vlaneseq
  %v5397 = vshrl.u32 %v5396, 7
  %v5398 = vsub.s32 1, %v5397
  %v5399 = vrot.slane %v5390, %v5398
  %v5402 = vadd.f32 %v5328, %v5395
  %v5403 = vadd.f32 %v5329, %v5399
  %v5404 = vadd.f32 %v5330, %v5395
  %v5405 = vadd.f32 %v5331, %v5399
  %v5406 = vadd.f32 %v5332, %v5395
  %v5407 = vadd.f32 %v5333, %v5399
  %v5408 = vadd.f32 %v5334, %v5395
  %v5409 = vadd.f32 %v5335, %v5399
  %v5410 = vadd.f32 %v5336, %v5395
  %v5411 = vadd.f32 %v5337, %v5399
  %v5412 = vadd.f32 %v5338, %v5395
  %v5413 = vadd.f32 %v5339, %v5399
  %v5414 = vadd.f32 %v5340, %v5395
  %v5415 = vadd.f32 %v5341, %v5399
  %v5416 = vadd.f32 %v5342, %v5395
  %v5417 = vadd.f32 %v5343, %v5399
  %v5418 = vadd.f32 %v5344, %v5395
  %v5419 = vadd.f32 %v5345, %v5399
  %v5420 = vadd.f32 %v5346, %v5395
  %v5421 = vadd.f32 %v5347, %v5399
  %v5422 = vadd.f32 %v5348, %v5395
  %v5423 = vadd.f32 %v5349, %v5399
  %v5424 = vadd.f32 %v5350, %v5395
  %v5425 = vadd.f32 %v5351, %v5399
  %v5426 = vadd.f32 %v5352, %v5395
  %v5427 = vadd.f32 %v5353, %v5399
  %v5428 = vadd.f32 %v5354, %v5395
  %v5429 = vadd.f32 %v5355, %v5399
  %v5430 = vadd.f32 %v5356, %v5395
  %v5431 = vadd.f32 %v5357, %v5399
  %v5432 = vadd.f32 %v5358, %v5395
  %v5433 = vadd.f32 %v5359, %v5399
  %v5434 = vadd.f32 %v5360, %v5395
  %v5435 = vadd.f32 %v5361, %v5399
  %v5436 = vadd.f32 %v5362, %v5395
  %v5437 = vadd.f32 %v5363, %v5399
  %v5438 = vadd.f32 %v5364, %v5395
  %v5439 = vadd.f32 %v5365, %v5399
  %v5440 = vadd.f32 %v5366, %v5395
  %v5441 = vadd.f32 %v5367, %v5399
  %v5442 = vadd.f32 %v5368, %v5395
  %v5443 = vadd.f32 %v5369, %v5399
  %v5444 = vadd.f32 %v5370, %v5395
  %v5445 = vadd.f32 %v5371, %v5399
  %v5446 = vadd.f32 %v5372, %v5395
  %v5447 = vadd.f32 %v5373, %v5399
  %v5448 = vadd.f32 %v5374, %v5395
  %v5449 = vadd.f32 %v5375, %v5399
  %v5450 = vadd.f32 %v5376, %v5395
  %v5451 = vadd.f32 %v5377, %v5399
  %v5452 = vadd.f32 %v5378, %v5395
  %v5453 = vadd.f32 %v5379, %v5399
  %v5454 = vadd.f32 %v5380, %v5395
  %v5455 = vadd.f32 %v5381, %v5399
  %v5456 = vadd.f32 %v5382, %v5395
  %v5457 = vadd.f32 %v5383, %v5399
  %v5458 = vadd.f32 %v5384, %v5395
  %v5459 = vadd.f32 %v5385, %v5399
  %v5460 = vadd.f32 %v5386, %v5395
  %v5461 = vadd.f32 %v5387, %v5399
  %v5462 = vadd.f32 %v5388, %v5395
  %v5463 = vadd.f32 %v5389, %v5399
  %v5464 = vmax.f32 %v5402, 0.0
  %v5465 = vmax.f32 %v5403, 0.0
  %v5466 = vmax.f32 %v5404, 0.0
  %v5467 = vmax.f32 %v5405, 0.0
  %v5468 = vmax.f32 %v5406, 0.0
  %v5469 = vmax.f32 %v5407, 0.0
  %v5470 = vmax.f32 %v5408, 0.0
  %v5471 = vmax.f32 %v5409, 0.0
  %v5472 = vmax.f32 %v5410, 0.0
  %v5473 = vmax.f32 %v5411, 0.0
  %v5474 = vmax.f32 %v5412, 0.0
  %v5475 = vmax.f32 %v5413, 0.0
  %v5476 = vmax.f32 %v5414, 0.0
  %v5477 = vmax.f32 %v5415, 0.0
  %v5478 = vmax.f32 %v5416, 0.0
  %v5479 = vmax.f32 %v5417, 0.0
  %v5480 = vmax.f32 %v5418, 0.0
  %v5481 = vmax.f32 %v5419, 0.0
  %v5482 = vmax.f32 %v5420, 0.0
  %v5483 = vmax.f32 %v5421, 0.0
  %v5484 = vmax.f32 %v5422, 0.0
  %v5485 = vmax.f32 %v5423, 0.0
  %v5486 = vmax.f32 %v5424, 0.0
  %v5487 = vmax.f32 %v5425, 0.0
  %v5488 = vmax.f32 %v5426, 0.0
  %v5489 = vmax.f32 %v5427, 0.0
  %v5490 = vmax.f32 %v5428, 0.0
  %v5491 = vmax.f32 %v5429, 0.0
  %v5492 = vmax.f32 %v5430, 0.0
  %v5493 = vmax.f32 %v5431, 0.0
  %v5494 = vmax.f32 %v5432, 0.0
  %v5495 = vmax.f32 %v5433, 0.0
  %v5496 = vmax.f32 %v5434, 0.0
  %v5497 = vmax.f32 %v5435, 0.0
  %v5498 = vmax.f32 %v5436, 0.0
  %v5499 = vmax.f32 %v5437, 0.0
  %v5500 = vmax.f32 %v5438, 0.0
  %v5501 = vmax.f32 %v5439, 0.0
  %v5502 = vmax.f32 %v5440, 0.0
  %v5503 = vmax.f32 %v5441, 0.0
  %v5504 = vmax.f32 %v5442, 0.0
  %v5505 = vmax.f32 %v5443, 0.0
  %v5506 = vmax.f32 %v5444, 0.0
  %v5507 = vmax.f32 %v5445, 0.0
  %v5508 = vmax.f32 %v5446, 0.0
  %v5509 = vmax.f32 %v5447, 0.0
  %v5510 = vmax.f32 %v5448, 0.0
  %v5511 = vmax.f32 %v5449, 0.0
  %v5512 = vmax.f32 %v5450, 0.0
  %v5513 = vmax.f32 %v5451, 0.0
  %v5514 = vmax.f32 %v5452, 0.0
  %v5515 = vmax.f32 %v5453, 0.0
  %v5516 = vmax.f32 %v5454, 0.0
  %v5517 = vmax.f32 %v5455, 0.0
  %v5518 = vmax.f32 %v5456, 0.0
  %v5519 = vmax.f32 %v5457, 0.0
  %v5520 = vmax.f32 %v5458, 0.0
  %v5521 = vmax.f32 %v5459, 0.0
  %v5522 = vmax.f32 %v5460, 0.0
  %v5523 = vmax.f32 %v5461, 0.0
  %v5524 = vmax.f32 %v5462, 0.0
  %v5525 = vmax.f32 %v5463, 0.0
  %vm5588 = vcmask 1045504
  %v5589 = vrot.slane %v5464, 2
  %v5590 = vrot.slane %v5466, 2
  %v5591 = vsel %vm5588, %v5589, %v5590
  %v5592 = vrot.slane %v5465, 2
  %v5593 = vrot.slane %v5467, 2
  %v5594 = vsel %vm5588, %v5592, %v5593
  %v5595 = vrot.slane %v5468, 2
  %v5596 = vsel %vm5588, %v5590, %v5595
  %v5597 = vrot.slane %v5469, 2
  %v5598 = vsel %vm5588, %v5593, %v5597
  %v5599 = vrot.slane %v5470, 2
  %v5600 = vsel %vm5588, %v5595, %v5599
  %v5601 = vrot.slane %v5471, 2
  %v5602 = vsel %vm5588, %v5597, %v5601
  %v5603 = vrot.slane %v5472, 2
  %v5604 = vsel %vm5588, %v5599, %v5603
  %v5605 = vrot.slane %v5473, 2
  %v5606 = vsel %vm5588, %v5601, %v5605
  %v5607 = vrot.slane %v5474, 2
  %v5608 = vsel %vm5588, %v5603, %v5607
  %v5609 = vrot.slane %v5475, 2
  %v5610 = vsel %vm5588, %v5605, %v5609
  %v5611 = vrot.slane %v5476, 2
  %v5612 = vsel %vm5588, %v5607, %v5611
  %v5613 = vrot.slane %v5477, 2
  %v5614 = vsel %vm5588, %v5609, %v5613
  %v5615 = vrot.slane %v5478, 2
  %v5616 = vsel %vm5588, %v5611, %v5615
  %v5617 = vrot.slane %v5479, 2
  %v5618 = vsel %vm5588, %v5613, %v5617
  %v5619 = vrot.slane %v5480, 2
  %v5620 = vsel %vm5588, %v5615, %v5619
  %v5621 = vrot.slane %v5481, 2
  %v5622 = vsel %vm5588, %v5617, %v5621
  %v5623 = vrot.slane %v5482, 2
  %v5624 = vsel %vm5588, %v5619, %v5623
  %v5625 = vrot.slane %v5483, 2
  %v5626 = vsel %vm5588, %v5621, %v5625
  %v5627 = vrot.slane %v5484, 2
  %v5628 = vsel %vm5588, %v5623, %v5627
  %v5629 = vrot.slane %v5485, 2
  %v5630 = vsel %vm5588, %v5625, %v5629
  %v5631 = vrot.slane %v5486, 2
  %v5632 = vsel %vm5588, %v5627, %v5631
  %v5633 = vrot.slane %v5487, 2
  %v5634 = vsel %vm5588, %v5629, %v5633
  %v5635 = vrot.slane %v5488, 2
  %v5636 = vsel %vm5588, %v5631, %v5635
  %v5637 = vrot.slane %v5489, 2
  %v5638 = vsel %vm5588, %v5633, %v5637
  %v5639 = vrot.slane %v5490, 2
  %v5640 = vsel %vm5588, %v5635, %v5639
  %v5641 = vrot.slane %v5491, 2
  %v5642 = vsel %vm5588, %v5637, %v5641
  %v5643 = vrot.slane %v5492, 2
  %v5644 = vsel %vm5588, %v5639, %v5643
  %v5645 = vrot.slane %v5493, 2
  %v5646 = vsel %vm5588, %v5641, %v5645
  %v5647 = vrot.slane %v5494, 2
  %v5648 = vsel %vm5588, %v5643, %v5647
  %v5649 = vrot.slane %v5495, 2
  %v5650 = vsel %vm5588, %v5645, %v5649
  %v5651 = vrot.slane %v5496, 2
  %v5652 = vsel %vm5588, %v5647, %v5651
  %v5653 = vrot.slane %v5497, 2
  %v5654 = vsel %vm5588, %v5649, %v5653
  %v5655 = vrot.slane %v5498, 2
  %v5656 = vsel %vm5588, %v5651, %v5655
  %v5657 = vrot.slane %v5499, 2
  %v5658 = vsel %vm5588, %v5653, %v5657
  %v5659 = vrot.slane %v5500, 2
  %v5660 = vsel %vm5588, %v5655, %v5659
  %v5661 = vrot.slane %v5501, 2
  %v5662 = vsel %vm5588, %v5657, %v5661
  %v5663 = vrot.slane %v5502, 2
  %v5664 = vsel %vm5588, %v5659, %v5663
  %v5665 = vrot.slane %v5503, 2
  %v5666 = vsel %vm5588, %v5661, %v5665
  %v5667 = vrot.slane %v5504, 2
  %v5668 = vsel %vm5588, %v5663, %v5667
  %v5669 = vrot.slane %v5505, 2
  %v5670 = vsel %vm5588, %v5665, %v5669
  %v5671 = vrot.slane %v5506, 2
  %v5672 = vsel %vm5588, %v5667, %v5671
  %v5673 = vrot.slane %v5507, 2
  %v5674 = vsel %vm5588, %v5669, %v5673
  %v5675 = vrot.slane %v5508, 2
  %v5676 = vsel %vm5588, %v5671, %v5675
  %v5677 = vrot.slane %v5509, 2
  %v5678 = vsel %vm5588, %v5673, %v5677
  %v5679 = vrot.slane %v5510, 2
  %v5680 = vsel %vm5588, %v5675, %v5679
  %v5681 = vrot.slane %v5511, 2
  %v5682 = vsel %vm5588, %v5677, %v5681
  %v5683 = vrot.slane %v5512, 2
  %v5684 = vsel %vm5588, %v5679, %v5683
  %v5685 = vrot.slane %v5513, 2
  %v5686 = vsel %vm5588, %v5681, %v5685
  %v5687 = vrot.slane %v5514, 2
  %v5688 = vsel %vm5588, %v5683, %v5687
  %v5689 = vrot.slane %v5515, 2
  %v5690 = vsel %vm5588, %v5685, %v5689
  %v5691 = vrot.slane %v5516, 2
  %v5692 = vsel %vm5588, %v5687, %v5691
  %v5693 = vrot.slane %v5517, 2
  %v5694 = vsel %vm5588, %v5689, %v5693
  %v5695 = vrot.slane %v5518, 2
  %v5696 = vsel %vm5588, %v5691, %v5695
  %v5697 = vrot.slane %v5519, 2
  %v5698 = vsel %vm5588, %v5693, %v5697
  %v5699 = vrot.slane %v5520, 2
  %v5700 = vsel %vm5588, %v5695, %v5699
  %v5701 = vrot.slane %v5521, 2
  %v5702 = vsel %vm5588, %v5697, %v5701
  %v5703 = vrot.slane %v5522, 2
  %v5704 = vsel %vm5588, %v5699, %v5703
  %v5705 = vrot.slane %v5523, 2
  %v5706 = vsel %vm5588, %v5701, %v5705
  %v5707 = vrot.slane %v5524, 2
  %v5708 = vsel %vm5588, %v5703, %v5707
  %v5709 = vrot.slane %v5525, 2
  %v5710 = vsel %vm5588, %v5705, %v5709
  %v5773 = vmax.f32 %v5464, %v5591
  %v5774 = vmax.f32 %v5465, %v5594
  %v5775 = vmax.f32 %v5466, %v5596
  %v5776 = vmax.f32 %v5467, %v5598
  %v5777 = vmax.f32 %v5468, %v5600
  %v5778 = vmax.f32 %v5469, %v5602
  %v5779 = vmax.f32 %v5470, %v5604
  %v5780 = vmax.f32 %v5471, %v5606
  %v5781 = vmax.f32 %v5472, %v5608
  %v5782 = vmax.f32 %v5473, %v5610
  %v5783 = vmax.f32 %v5474, %v5612
  %v5784 = vmax.f32 %v5475, %v5614
  %v5785 = vmax.f32 %v5476, %v5616
  %v5786 = vmax.f32 %v5477, %v5618
  %v5787 = vmax.f32 %v5478, %v5620
  %v5788 = vmax.f32 %v5479, %v5622
  %v5789 = vmax.f32 %v5480, %v5624
  %v5790 = vmax.f32 %v5481, %v5626
  %v5791 = vmax.f32 %v5482, %v5628
  %v5792 = vmax.f32 %v5483, %v5630
  %v5793 = vmax.f32 %v5484, %v5632
  %v5794 = vmax.f32 %v5485, %v5634
  %v5795 = vmax.f32 %v5486, %v5636
  %v5796 = vmax.f32 %v5487, %v5638
  %v5797 = vmax.f32 %v5488, %v5640
  %v5798 = vmax.f32 %v5489, %v5642
  %v5799 = vmax.f32 %v5490, %v5644
  %v5800 = vmax.f32 %v5491, %v5646
  %v5801 = vmax.f32 %v5492, %v5648
  %v5802 = vmax.f32 %v5493, %v5650
  %v5803 = vmax.f32 %v5494, %v5652
  %v5804 = vmax.f32 %v5495, %v5654
  %v5805 = vmax.f32 %v5496, %v5656
  %v5806 = vmax.f32 %v5497, %v5658
  %v5807 = vmax.f32 %v5498, %v5660
  %v5808 = vmax.f32 %v5499, %v5662
  %v5809 = vmax.f32 %v5500, %v5664
  %v5810 = vmax.f32 %v5501, %v5666
  %v5811 = vmax.f32 %v5502, %v5668
  %v5812 = vmax.f32 %v5503, %v5670
  %v5813 = vmax.f32 %v5504, %v5672
  %v5814 = vmax.f32 %v5505, %v5674
  %v5815 = vmax.f32 %v5506, %v5676
  %v5816 = vmax.f32 %v5507, %v5678
  %v5817 = vmax.f32 %v5508, %v5680
  %v5818 = vmax.f32 %v5509, %v5682
  %v5819 = vmax.f32 %v5510, %v5684
  %v5820 = vmax.f32 %v5511, %v5686
  %v5821 = vmax.f32 %v5512, %v5688
  %v5822 = vmax.f32 %v5513, %v5690
  %v5823 = vmax.f32 %v5514, %v5692
  %v5824 = vmax.f32 %v5515, %v5694
  %v5825 = vmax.f32 %v5516, %v5696
  %v5826 = vmax.f32 %v5517, %v5698
  %v5827 = vmax.f32 %v5518, %v5700
  %v5828 = vmax.f32 %v5519, %v5702
  %v5829 = vmax.f32 %v5520, %v5704
  %v5830 = vmax.f32 %v5521, %v5706
  %v5831 = vmax.f32 %v5522, %v5708
  %v5832 = vmax.f32 %v5523, %v5710
  %v5833 = vmax.f32 %v5524, %v5707
  %v5834 = vmax.f32 %v5525, %v5709
  %5897 = vrot.lane.b32.xlu0 %v5773, 112
  %v5898 = vpop.permute.xlu0 %5897
  %5899 = vrot.lane.b32.xlu0 %v5774, 112
  %v5900 = vpop.permute.xlu0 %5899
  %5901 = vrot.lane.b32.xlu0 %v5775, 112
  %v5902 = vpop.permute.xlu0 %5901
  %5903 = vrot.lane.b32.xlu0 %v5776, 112
  %v5904 = vpop.permute.xlu0 %5903
  %5905 = vrot.lane.b32.xlu0 %v5777, 112
  %v5906 = vpop.permute.xlu0 %5905
  %5907 = vrot.lane.b32.xlu0 %v5778, 112
  %v5908 = vpop.permute.xlu0 %5907
  %5909 = vrot.lane.b32.xlu0 %v5779, 112
  %v5910 = vpop.permute.xlu0 %5909
  %5911 = vrot.lane.b32.xlu0 %v5780, 112
  %v5912 = vpop.permute.xlu0 %5911
  %5913 = vrot.lane.b32.xlu0 %v5781, 112
  %v5914 = vpop.permute.xlu0 %5913
  %5915 = vrot.lane.b32.xlu0 %v5782, 112
  %v5916 = vpop.permute.xlu0 %5915
  %5917 = vrot.lane.b32.xlu0 %v5783, 112
  %v5918 = vpop.permute.xlu0 %5917
  %5919 = vrot.lane.b32.xlu0 %v5784, 112
  %v5920 = vpop.permute.xlu0 %5919
  %5921 = vrot.lane.b32.xlu0 %v5785, 112
  %v5922 = vpop.permute.xlu0 %5921
  %5923 = vrot.lane.b32.xlu0 %v5786, 112
  %v5924 = vpop.permute.xlu0 %5923
  %5925 = vrot.lane.b32.xlu0 %v5787, 112
  %v5926 = vpop.permute.xlu0 %5925
  %5927 = vrot.lane.b32.xlu0 %v5788, 112
  %v5928 = vpop.permute.xlu0 %5927
  %5929 = vrot.lane.b32.xlu0 %v5789, 112
  %v5930 = vpop.permute.xlu0 %5929
  %5931 = vrot.lane.b32.xlu0 %v5790, 112
  %v5932 = vpop.permute.xlu0 %5931
  %5933 = vrot.lane.b32.xlu0 %v5791, 112
  %v5934 = vpop.permute.xlu0 %5933
  %5935 = vrot.lane.b32.xlu0 %v5792, 112
  %v5936 = vpop.permute.xlu0 %5935
  %5937 = vrot.lane.b32.xlu0 %v5793, 112
  %v5938 = vpop.permute.xlu0 %5937
  %5939 = vrot.lane.b32.xlu0 %v5794, 112
  %v5940 = vpop.permute.xlu0 %5939
  %5941 = vrot.lane.b32.xlu0 %v5795, 112
  %v5942 = vpop.permute.xlu0 %5941
  %5943 = vrot.lane.b32.xlu0 %v5796, 112
  %v5944 = vpop.permute.xlu0 %5943
  %5945 = vrot.lane.b32.xlu0 %v5797, 112
  %v5946 = vpop.permute.xlu0 %5945
  %5947 = vrot.lane.b32.xlu0 %v5798, 112
  %v5948 = vpop.permute.xlu0 %5947
  %5949 = vrot.lane.b32.xlu0 %v5799, 112
  %v5950 = vpop.permute.xlu0 %5949
  %5951 = vrot.lane.b32.xlu0 %v5800, 112
  %v5952 = vpop.permute.xlu0 %5951
  %5953 = vrot.lane.b32.xlu0 %v5801, 112
  %v5954 = vpop.permute.xlu0 %5953
  %5955 = vrot.lane.b32.xlu0 %v5802, 112
  %v5956 = vpop.permute.xlu0 %5955
  %5957 = vrot.lane.b32.xlu0 %v5803, 112
  %v5958 = vpop.permute.xlu0 %5957
  %5959 = vrot.lane.b32.xlu0 %v5804, 112
  %v5960 = vpop.permute.xlu0 %5959
  %5961 = vrot.lane.b32.xlu0 %v5805, 112
  %v5962 = vpop.permute.xlu0 %5961
  %5963 = vrot.lane.b32.xlu0 %v5806, 112
  %v5964 = vpop.permute.xlu0 %5963
  %5965 = vrot.lane.b32.xlu0 %v5807, 112
  %v5966 = vpop.permute.xlu0 %5965
  %5967 = vrot.lane.b32.xlu0 %v5808, 112
  %v5968 = vpop.permute.xlu0 %5967
  %5969 = vrot.lane.b32.xlu0 %v5809, 112
  %v5970 = vpop.permute.xlu0 %5969
  %5971 = vrot.lane.b32.xlu0 %v5810, 112
  %v5972 = vpop.permute.xlu0 %5971
  %5973 = vrot.lane.b32.xlu0 %v5811, 112
  %v5974 = vpop.permute.xlu0 %5973
  %5975 = vrot.lane.b32.xlu0 %v5812, 112
  %v5976 = vpop.permute.xlu0 %5975
  %5977 = vrot.lane.b32.xlu0 %v5813, 112
  %v5978 = vpop.permute.xlu0 %5977
  %5979 = vrot.lane.b32.xlu0 %v5814, 112
  %v5980 = vpop.permute.xlu0 %5979
  %5981 = vrot.lane.b32.xlu0 %v5815, 112
  %v5982 = vpop.permute.xlu0 %5981
  %5983 = vrot.lane.b32.xlu0 %v5816, 112
  %v5984 = vpop.permute.xlu0 %5983
  %5985 = vrot.lane.b32.xlu0 %v5817, 112
  %v5986 = vpop.permute.xlu0 %5985
  %5987 = vrot.lane.b32.xlu0 %v5818, 112
  %v5988 = vpop.permute.xlu0 %5987
  %5989 = vrot.lane.b32.xlu0 %v5819, 112
  %v5990 = vpop.permute.xlu0 %5989
  %5991 = vrot.lane.b32.xlu0 %v5820, 112
  %v5992 = vpop.permute.xlu0 %5991
  %5993 = vrot.lane.b32.xlu0 %v5821, 112
  %v5994 = vpop.permute.xlu0 %5993
  %5995 = vrot.lane.b32.xlu0 %v5822, 112
  %v5996 = vpop.permute.xlu0 %5995
  %5997 = vrot.lane.b32.xlu0 %v5823, 112
  %v5998 = vpop.permute.xlu0 %5997
  %5999 = vrot.lane.b32.xlu0 %v5824, 112
  %v6000 = vpop.permute.xlu0 %5999
  %6001 = vrot.lane.b32.xlu0 %v5825, 112
  %v6002 = vpop.permute.xlu0 %6001
  %6003 = vrot.lane.b32.xlu0 %v5826, 112
  %v6004 = vpop.permute.xlu0 %6003
  %6005 = vrot.lane.b32.xlu0 %v5827, 112
  %v6006 = vpop.permute.xlu0 %6005
  %6007 = vrot.lane.b32.xlu0 %v5828, 112
  %v6008 = vpop.permute.xlu0 %6007
  %6009 = vrot.lane.b32.xlu0 %v5829, 112
  %v6010 = vpop.permute.xlu0 %6009
  %6011 = vrot.lane.b32.xlu0 %v5830, 112
  %v6012 = vpop.permute.xlu0 %6011
  %6013 = vrot.lane.b32.xlu0 %v5831, 112
  %v6014 = vpop.permute.xlu0 %6013
  %6015 = vrot.lane.b32.xlu0 %v5832, 112
  %v6016 = vpop.permute.xlu0 %6015
  %6017 = vrot.lane.b32.xlu0 %v5833, 112
  %v6018 = vpop.permute.xlu0 %6017
  %6019 = vrot.lane.b32.xlu0 %v5834, 112
  %v6020 = vpop.permute.xlu0 %6019
  %vm6021 = vcmask 916480
  %v6022 = vsel %vm6021, %v5898, %v5900
  %v6023 = vsel %vm6021, %v5902, %v5904
  %v6024 = vsel %vm6021, %v5906, %v5908
  %v6025 = vsel %vm6021, %v5910, %v5912
  %v6026 = vsel %vm6021, %v5914, %v5916
  %v6027 = vsel %vm6021, %v5918, %v5920
  %v6028 = vsel %vm6021, %v5922, %v5924
  %v6029 = vsel %vm6021, %v5926, %v5928
  %v6030 = vsel %vm6021, %v5930, %v5932
  %v6031 = vsel %vm6021, %v5934, %v5936
  %v6032 = vsel %vm6021, %v5938, %v5940
  %v6033 = vsel %vm6021, %v5942, %v5944
  %v6034 = vsel %vm6021, %v5946, %v5948
  %v6035 = vsel %vm6021, %v5950, %v5952
  %v6036 = vsel %vm6021, %v5954, %v5956
  %v6037 = vsel %vm6021, %v5958, %v5960
  %v6038 = vsel %vm6021, %v5962, %v5964
  %v6039 = vsel %vm6021, %v5966, %v5968
  %v6040 = vsel %vm6021, %v5970, %v5972
  %v6041 = vsel %vm6021, %v5974, %v5976
  %v6042 = vsel %vm6021, %v5978, %v5980
  %v6043 = vsel %vm6021, %v5982, %v5984
  %v6044 = vsel %vm6021, %v5986, %v5988
  %v6045 = vsel %vm6021, %v5990, %v5992
  %v6046 = vsel %vm6021, %v5994, %v5996
  %v6047 = vsel %vm6021, %v5998, %v6000
  %v6048 = vsel %vm6021, %v6002, %v6004
  %v6049 = vsel %vm6021, %v6006, %v6008
  %v6050 = vsel %vm6021, %v6010, %v6012
  %v6051 = vsel %vm6021, %v6014, %v6016
  %v6052 = vsel %vm6021, %v6018, %v6020
  %v6115 = vmax.f32 %v5773, %v6022
  %v6116 = vmax.f32 %v5774, %v5900
  %v6117 = vmax.f32 %v5775, %v6023
  %v6118 = vmax.f32 %v5776, %v5904
  %v6119 = vmax.f32 %v5777, %v6024
  %v6120 = vmax.f32 %v5778, %v5908
  %v6121 = vmax.f32 %v5779, %v6025
  %v6122 = vmax.f32 %v5780, %v5912
  %v6123 = vmax.f32 %v5781, %v6026
  %v6124 = vmax.f32 %v5782, %v5916
  %v6125 = vmax.f32 %v5783, %v6027
  %v6126 = vmax.f32 %v5784, %v5920
  %v6127 = vmax.f32 %v5785, %v6028
  %v6128 = vmax.f32 %v5786, %v5924
  %v6129 = vmax.f32 %v5787, %v6029
  %v6130 = vmax.f32 %v5788, %v5928
  %v6131 = vmax.f32 %v5789, %v6030
  %v6132 = vmax.f32 %v5790, %v5932
  %v6133 = vmax.f32 %v5791, %v6031
  %v6134 = vmax.f32 %v5792, %v5936
  %v6135 = vmax.f32 %v5793, %v6032
  %v6136 = vmax.f32 %v5794, %v5940
  %v6137 = vmax.f32 %v5795, %v6033
  %v6138 = vmax.f32 %v5796, %v5944
  %v6139 = vmax.f32 %v5797, %v6034
  %v6140 = vmax.f32 %v5798, %v5948
  %v6141 = vmax.f32 %v5799, %v6035
  %v6142 = vmax.f32 %v5800, %v5952
  %v6143 = vmax.f32 %v5801, %v6036
  %v6144 = vmax.f32 %v5802, %v5956
  %v6145 = vmax.f32 %v5803, %v6037
  %v6146 = vmax.f32 %v5804, %v5960
  %v6147 = vmax.f32 %v5805, %v6038
  %v6148 = vmax.f32 %v5806, %v5964
  %v6149 = vmax.f32 %v5807, %v6039
  %v6150 = vmax.f32 %v5808, %v5968
  %v6151 = vmax.f32 %v5809, %v6040
  %v6152 = vmax.f32 %v5810, %v5972
  %v6153 = vmax.f32 %v5811, %v6041
  %v6154 = vmax.f32 %v5812, %v5976
  %v6155 = vmax.f32 %v5813, %v6042
  %v6156 = vmax.f32 %v5814, %v5980
  %v6157 = vmax.f32 %v5815, %v6043
  %v6158 = vmax.f32 %v5816, %v5984
  %v6159 = vmax.f32 %v5817, %v6044
  %v6160 = vmax.f32 %v5818, %v5988
  %v6161 = vmax.f32 %v5819, %v6045
  %v6162 = vmax.f32 %v5820, %v5992
  %v6163 = vmax.f32 %v5821, %v6046
  %v6164 = vmax.f32 %v5822, %v5996
  %v6165 = vmax.f32 %v5823, %v6047
  %v6166 = vmax.f32 %v5824, %v6000
  %v6167 = vmax.f32 %v5825, %v6048
  %v6168 = vmax.f32 %v5826, %v6004
  %v6169 = vmax.f32 %v5827, %v6049
  %v6170 = vmax.f32 %v5828, %v6008
  %v6171 = vmax.f32 %v5829, %v6050
  %v6172 = vmax.f32 %v5830, %v6012
  %v6173 = vmax.f32 %v5831, %v6051
  %v6174 = vmax.f32 %v5832, %v6016
  %v6175 = vmax.f32 %v5833, %v6052
  %v6176 = vmax.f32 %v5834, %v6020
  %v6177 = vpack.c.bf16 %v6117, %v6115
  %v6178 = vpack.c.bf16 %v6118, %v6116
  %v6179 = vpack.c.bf16 %v6121, %v6119
  %v6180 = vpack.c.bf16 %v6122, %v6120
  %v6181 = vpack.c.bf16 %v6125, %v6123
  %v6182 = vpack.c.bf16 %v6126, %v6124
  %v6183 = vpack.c.bf16 %v6129, %v6127
  %v6184 = vpack.c.bf16 %v6130, %v6128
  %v6185 = vpack.c.bf16 %v6133, %v6131
  %v6186 = vpack.c.bf16 %v6134, %v6132
  %v6187 = vpack.c.bf16 %v6137, %v6135
  %v6188 = vpack.c.bf16 %v6138, %v6136
  %v6189 = vpack.c.bf16 %v6141, %v6139
  %v6190 = vpack.c.bf16 %v6142, %v6140
  %v6191 = vpack.c.bf16 %v6145, %v6143
  %v6192 = vpack.c.bf16 %v6146, %v6144
  %v6193 = vpack.c.bf16 %v6149, %v6147
  %v6194 = vpack.c.bf16 %v6150, %v6148
  %v6195 = vpack.c.bf16 %v6153, %v6151
  %v6196 = vpack.c.bf16 %v6154, %v6152
  %v6197 = vpack.c.bf16 %v6157, %v6155
  %v6198 = vpack.c.bf16 %v6158, %v6156
  %v6199 = vpack.c.bf16 %v6161, %v6159
  %v6200 = vpack.c.bf16 %v6162, %v6160
  %v6201 = vpack.c.bf16 %v6165, %v6163
  %v6202 = vpack.c.bf16 %v6166, %v6164
  %v6203 = vpack.c.bf16 %v6169, %v6167
  %v6204 = vpack.c.bf16 %v6170, %v6168
  %v6205 = vpack.c.bf16 %v6173, %v6171
  %v6206 = vpack.c.bf16 %v6174, %v6172
  %v6207 = vpack.c.bf16 %v6175, %v6175
  %v6208 = vpack.c.bf16 %v6176, %v6176
  %v6209 = vld [vmem:[%s5] sm:$0xf]
  %v6210 = vld [vmem:[%s5 + $0x4] sm:$0xf]
  %v6211 = vld [vmem:[%s5 + $0x8] sm:$0xf]
  %v6212 = vld [vmem:[%s5 + $0xc] sm:$0xf]
  %v6213 = vld [vmem:[%s5 + $0x10] sm:$0xf]
  %v6214 = vld [vmem:[%s5 + $0x14] sm:$0xf]
  %v6215 = vld [vmem:[%s5 + $0x18] sm:$0xf]
  %v6216 = vld [vmem:[%s5 + $0x1c] sm:$0xf]
  %v6217 = vld [vmem:[%s5 + $0x20] sm:$0xf]
  %v6218 = vld [vmem:[%s5 + $0x24] sm:$0xf]
  %v6219 = vld [vmem:[%s5 + $0x28] sm:$0xf]
  %v6220 = vld [vmem:[%s5 + $0x2c] sm:$0xf]
  %v6221 = vld [vmem:[%s5 + $0x30] sm:$0xf]
  %v6222 = vld [vmem:[%s5 + $0x34] sm:$0xf]
  %v6223 = vld [vmem:[%s5 + $0x38] sm:$0xf]
  %v6224 = vld [vmem:[%s5 + $0x3c] sm:$0xf]
  %v6225 = vld [vmem:[%s5 + $0x40] sm:$0xf]
  %v6226 = vld [vmem:[%s5 + $0x44] sm:$0xf]
  %s6227 = scalar_lea.vmem %s5, 72
  %v6228 = vld [vmem:[%s6227] sm:$0xf]
  %v6229 = vld [vmem:[%s6227 + $0x4] sm:$0xf]
  %v6230 = vld [vmem:[%s6227 + $0x8] sm:$0xf]
  %v6231 = vld [vmem:[%s6227 + $0xc] sm:$0xf]
  %v6232 = vld [vmem:[%s6227 + $0x10] sm:$0xf]
  %v6233 = vld [vmem:[%s6227 + $0x14] sm:$0xf]
  %v6234 = vld [vmem:[%s6227 + $0x18] sm:$0xf]
  %v6235 = vld [vmem:[%s6227 + $0x1c] sm:$0xf]
  %v6236 = vld [vmem:[%s6227 + $0x20] sm:$0xf]
  %v6237 = vld [vmem:[%s6227 + $0x24] sm:$0xf]
  %v6238 = vld [vmem:[%s6227 + $0x28] sm:$0xf]
  %v6239 = vld [vmem:[%s6227 + $0x2c] sm:$0xf]
  %v6240 = vld [vmem:[%s6227 + $0x30] sm:$0xf]
  %v6241 = vld [vmem:[%s6227 + $0x34] sm:$0xf]
  %v6242 = vld [vmem:[%s6227 + $0x38] sm:$0xf]
  %v6243 = vld [vmem:[%s6227 + $0x3c] sm:$0xf]
  %v6244 = vld [vmem:[%s6227 + $0x40] sm:$0xf]
  %v6245 = vld [vmem:[%s6227 + $0x44] sm:$0xf]
  %v6276 = vrot.slane %v6177, 2
  %v6277 = vrot.slane %v6179, 2
  %v6278 = vsel %vm1756, %v6276, %v6277
  %v6279 = vrot.slane %v6178, 2
  %v6280 = vrot.slane %v6180, 2
  %v6281 = vsel %vm1756, %v6279, %v6280
  %v6282 = vrot.slane %v6181, 2
  %v6283 = vsel %vm1756, %v6277, %v6282
  %v6284 = vrot.slane %v6182, 2
  %v6285 = vsel %vm1756, %v6280, %v6284
  %v6286 = vrot.slane %v6183, 2
  %v6287 = vsel %vm1756, %v6282, %v6286
  %v6288 = vrot.slane %v6184, 2
  %v6289 = vsel %vm1756, %v6284, %v6288
  %v6290 = vrot.slane %v6185, 2
  %v6291 = vsel %vm1756, %v6286, %v6290
  %v6292 = vrot.slane %v6186, 2
  %v6293 = vsel %vm1756, %v6288, %v6292
  %v6294 = vrot.slane %v6187, 2
  %v6295 = vsel %vm1756, %v6290, %v6294
  %v6296 = vrot.slane %v6188, 2
  %v6297 = vsel %vm1756, %v6292, %v6296
  %v6298 = vrot.slane %v6189, 2
  %v6299 = vsel %vm1756, %v6294, %v6298
  %v6300 = vrot.slane %v6190, 2
  %v6301 = vsel %vm1756, %v6296, %v6300
  %v6302 = vrot.slane %v6191, 2
  %v6303 = vsel %vm1756, %v6298, %v6302
  %v6304 = vrot.slane %v6192, 2
  %v6305 = vsel %vm1756, %v6300, %v6304
  %v6306 = vrot.slane %v6193, 2
  %v6307 = vsel %vm1756, %v6302, %v6306
  %v6308 = vrot.slane %v6194, 2
  %v6309 = vsel %vm1756, %v6304, %v6308
  %v6310 = vrot.slane %v6195, 2
  %v6311 = vsel %vm1756, %v6306, %v6310
  %v6312 = vrot.slane %v6196, 2
  %v6313 = vsel %vm1756, %v6308, %v6312
  %v6314 = vrot.slane %v6197, 2
  %v6315 = vsel %vm1756, %v6310, %v6314
  %v6316 = vrot.slane %v6198, 2
  %v6317 = vsel %vm1756, %v6312, %v6316
  %v6318 = vrot.slane %v6199, 2
  %v6319 = vsel %vm1756, %v6314, %v6318
  %v6320 = vrot.slane %v6200, 2
  %v6321 = vsel %vm1756, %v6316, %v6320
  %v6322 = vrot.slane %v6201, 2
  %v6323 = vsel %vm1756, %v6318, %v6322
  %v6324 = vrot.slane %v6202, 2
  %v6325 = vsel %vm1756, %v6320, %v6324
  %v6326 = vrot.slane %v6203, 2
  %v6327 = vsel %vm1756, %v6322, %v6326
  %v6328 = vrot.slane %v6204, 2
  %v6329 = vsel %vm1756, %v6324, %v6328
  %v6330 = vrot.slane %v6205, 2
  %v6331 = vsel %vm1756, %v6326, %v6330
  %v6332 = vrot.slane %v6206, 2
  %v6333 = vsel %vm1756, %v6328, %v6332
  %v6367 = vunpack.c.l.b16 %v6228
  %v6368 = vunpack.c.l.b16 %v6229
  %v6369 = vunpack.c.l.b16 %v6230
  %v6370 = vunpack.c.l.b16 %v6231
  %v6371 = vunpack.c.l.b16 %v6232
  %v6372 = vunpack.c.l.b16 %v6233
  %v6373 = vunpack.c.l.b16 %v6234
  %v6374 = vunpack.c.l.b16 %v6235
  %v6375 = vunpack.c.l.b16 %v6236
  %v6376 = vunpack.c.l.b16 %v6237
  %v6377 = vunpack.c.l.b16 %v6238
  %v6378 = vunpack.c.l.b16 %v6239
  %v6379 = vunpack.c.l.b16 %v6240
  %v6380 = vunpack.c.l.b16 %v6241
  %v6381 = vunpack.c.l.b16 %v6242
  %v6382 = vunpack.c.l.b16 %v6243
  %v6383 = vunpack.c.l.b16 %v6244
  %v6384 = vunpack.c.l.b16 %v6245
  %v6385 = vpack.c.b16 %v6368, %v6367
  %v6386 = vpack.c.b16 %v6370, %v6369
  %v6387 = vpack.c.b16 %v6372, %v6371
  %v6388 = vpack.c.b16 %v6374, %v6373
  %v6389 = vpack.c.b16 %v6376, %v6375
  %v6390 = vpack.c.b16 %v6378, %v6377
  %v6391 = vpack.c.b16 %v6380, %v6379
  %v6392 = vpack.c.b16 %v6382, %v6381
  %v6393 = vpack.c.b16 %v6384, %v6383
  %vm6403 = vcmask 130048
  %v6405 = vsel %vm6403, %v6281, 0
  %v6408 = vsel %vm6403, %v6285, 0
  %v6411 = vsel %vm6403, %v6289, 0
  %v6414 = vsel %vm6403, %v6293, 0
  %v6417 = vsel %vm6403, %v6297, 0
  %v6420 = vsel %vm6403, %v6301, 0
  %v6423 = vsel %vm6403, %v6305, 0
  %v6426 = vsel %vm6403, %v6309, 0
  %v6429 = vsel %vm6403, %v6313, 0
  %v6432 = vsel %vm6403, %v6317, 0
  %v6435 = vsel %vm6403, %v6321, 0
  %v6438 = vsel %vm6403, %v6325, 0
  %v6441 = vsel %vm6403, %v6329, 0
  %v6444 = vsel %vm6403, %v6333, 0
  %v6447 = vsel %vm6403, %v6332, 0
  %6449 = vmatprep.subr.bf16.mxu0 0
  %6450 = vmatpush1.bf16.msra.mxu0 %v6392
  %6451 = vmatprep.subr.bf16.mxu0 0
  %6452 = vmatpush1.bf16.msra.mxu0 %v6391
  %6453 = vmatprep.subr.bf16.mxu0 0
  %6454 = vmatpush1.bf16.msra.mxu0 %v6390
  %6455 = vmatprep.subr.bf16.mxu0 0
  %6456 = vmatpush1.bf16.msra.mxu0 %v6389
  %6457 = vmatprep.subr.bf16.mxu0 0
  %6458 = vmatpush1.bf16.msra.mxu0 %v6388
  %6459 = vmatprep.subr.bf16.mxu0 0
  %6460 = vmatpush1.bf16.msra.mxu0 %v6387
  %6461 = vmatprep.subr.bf16.mxu0 0
  %6462 = vmatpush1.bf16.msra.mxu0 %v6386
  %6463 = vmatprep.subr.bf16.mxu0 0
  %6464 = vmatpush1.bf16.msra.mxu0 %v6385
  %6465 = vmatprep.subr.bf16.mxu0 0
  %6466 = vmatpush2.bf16.msra.mxu0 0
  %6467 = vmatprep.subr.bf16.mxu0 0
  %6468 = vmatpush2.bf16.msra.mxu0 0
  %6469 = vmatprep.subr.bf16.mxu0 0
  %6470 = vmatpush2.bf16.msra.mxu0 0
  %6471 = vmatprep.subr.bf16.mxu0 0
  %6472 = vmatpush2.bf16.msra.mxu0 0
  %6473 = vmatprep.subr.bf16.mxu0 0
  %6474 = vmatpush2.bf16.msra.mxu0 0
  %6475 = vmatprep.subr.bf16.mxu0 0
  %6476 = vmatpush2.bf16.msra.mxu0 0
  %6477 = vmatprep.subr.bf16.mxu0 0
  %6478 = vmatpush2.bf16.msra.mxu0 0
  %6479 = vmatprep.subr.bf16.mxu0 0
  %6480 = vmatpush2.bf16.msra.mxu0 %v6393
  %6481 = vmatprep.mubr.bf16.mxu0 %v6405
  %6482 = vmatmul.mubr.bf16.gmra.mxu0 %v6278
  %v6483 = vpop.f32.mrf.mxu0
  %v6484 = vadd.f32 0.0, %v6483
  %v6485 = vpop.f32.mrf.mxu0
  %v6486 = vpop.f32.mrf.mxu0
  %v6487 = vpop.f32.mrf.mxu0
  %6488 = vmatprep.mubr.bf16.mxu0 %v6408
  %6489 = vmatmul.mubr.bf16.gmra.mxu0 %v6283
  %v6490 = vpop.f32.mrf.mxu0
  %v6491 = vpop.f32.mrf.mxu0
  %v6492 = vpop.f32.mrf.mxu0
  %v6493 = vpop.f32.mrf.mxu0
  %6494 = vmatprep.mubr.bf16.mxu0 %v6411
  %6495 = vmatmul.mubr.bf16.gmra.mxu0 %v6287
  %v6496 = vpop.f32.mrf.mxu0
  %v6497 = vadd.f32 0.0, %v6496
  %v6498 = vpop.f32.mrf.mxu0
  %v6499 = vpop.f32.mrf.mxu0
  %v6500 = vpop.f32.mrf.mxu0
  %6501 = vmatprep.mubr.bf16.mxu0 %v6414
  %6502 = vmatmul.mubr.bf16.gmra.mxu0 %v6291
  %v6503 = vpop.f32.mrf.mxu0
  %v6504 = vpop.f32.mrf.mxu0
  %v6505 = vpop.f32.mrf.mxu0
  %v6506 = vpop.f32.mrf.mxu0
  %6507 = vmatprep.mubr.bf16.mxu0 %v6417
  %6508 = vmatmul.mubr.bf16.gmra.mxu0 %v6295
  %v6509 = vpop.f32.mrf.mxu0
  %v6510 = vadd.f32 0.0, %v6509
  %v6511 = vpop.f32.mrf.mxu0
  %v6512 = vpop.f32.mrf.mxu0
  %v6513 = vpop.f32.mrf.mxu0
  %6514 = vmatprep.mubr.bf16.mxu0 %v6420
  %6515 = vmatmul.mubr.bf16.gmra.mxu0 %v6299
  %v6516 = vpop.f32.mrf.mxu0
  %v6517 = vpop.f32.mrf.mxu0
  %v6518 = vpop.f32.mrf.mxu0
  %v6519 = vpop.f32.mrf.mxu0
  %6520 = vmatprep.mubr.bf16.mxu0 %v6423
  %6521 = vmatmul.mubr.bf16.gmra.mxu0 %v6303
  %v6522 = vpop.f32.mrf.mxu0
  %v6523 = vadd.f32 0.0, %v6522
  %v6524 = vpop.f32.mrf.mxu0
  %v6525 = vpop.f32.mrf.mxu0
  %v6526 = vpop.f32.mrf.mxu0
  %6527 = vmatprep.mubr.bf16.mxu0 %v6426
  %6528 = vmatmul.mubr.bf16.gmra.mxu0 %v6307
  %v6529 = vpop.f32.mrf.mxu0
  %v6530 = vpop.f32.mrf.mxu0
  %v6531 = vpop.f32.mrf.mxu0
  %v6532 = vpop.f32.mrf.mxu0
  %6533 = vmatprep.mubr.bf16.mxu0 %v6429
  %6534 = vmatmul.mubr.bf16.gmra.mxu0 %v6311
  %v6535 = vpop.f32.mrf.mxu0
  %v6536 = vadd.f32 0.0, %v6535
  %v6537 = vpop.f32.mrf.mxu0
  %v6538 = vpop.f32.mrf.mxu0
  %v6539 = vpop.f32.mrf.mxu0
  %6540 = vmatprep.mubr.bf16.mxu0 %v6432
  %6541 = vmatmul.mubr.bf16.gmra.mxu0 %v6315
  %v6542 = vpop.f32.mrf.mxu0
  %v6543 = vpop.f32.mrf.mxu0
  %v6544 = vpop.f32.mrf.mxu0
  %v6545 = vpop.f32.mrf.mxu0
  %6546 = vmatprep.mubr.bf16.mxu0 %v6435
  %6547 = vmatmul.mubr.bf16.gmra.mxu0 %v6319
  %v6548 = vpop.f32.mrf.mxu0
  %v6549 = vadd.f32 0.0, %v6548
  %v6550 = vpop.f32.mrf.mxu0
  %v6551 = vpop.f32.mrf.mxu0
  %v6552 = vpop.f32.mrf.mxu0
  %6553 = vmatprep.mubr.bf16.mxu0 %v6438
  %6554 = vmatmul.mubr.bf16.gmra.mxu0 %v6323
  %v6555 = vpop.f32.mrf.mxu0
  %v6556 = vpop.f32.mrf.mxu0
  %v6557 = vpop.f32.mrf.mxu0
  %v6558 = vpop.f32.mrf.mxu0
  %6559 = vmatprep.mubr.bf16.mxu0 %v6441
  %6560 = vmatmul.mubr.bf16.gmra.mxu0 %v6327
  %v6561 = vpop.f32.mrf.mxu0
  %v6562 = vadd.f32 0.0, %v6561
  %v6563 = vpop.f32.mrf.mxu0
  %v6564 = vpop.f32.mrf.mxu0
  %v6565 = vpop.f32.mrf.mxu0
  %6566 = vmatprep.mubr.bf16.mxu0 %v6444
  %6567 = vmatmul.mubr.bf16.gmra.mxu0 %v6331
  %v6568 = vpop.f32.mrf.mxu0
  %v6569 = vpop.f32.mrf.mxu0
  %v6570 = vpop.f32.mrf.mxu0
  %v6571 = vpop.f32.mrf.mxu0
  %6572 = vmatprep.mubr.bf16.mxu0 %v6447
  %6573 = vmatmul.mubr.bf16.gmra.mxu0 %v6330
  %v6574 = vpop.f32.mrf.mxu0
  %v6575 = vadd.f32 0.0, %v6574
  %v6576 = vpop.f32.mrf.mxu0
  %v6577 = vpop.f32.mrf.mxu0
  %v6578 = vpop.f32.mrf.mxu0
  %6579 = vdwg.mxu0
  %v6598 = vunpack.c.l.b16 %v6209
  %v6599 = vunpack.c.l.b16 %v6210
  %v6600 = vunpack.c.l.b16 %v6211
  %v6601 = vunpack.c.l.b16 %v6212
  %v6602 = vunpack.c.l.b16 %v6213
  %v6603 = vunpack.c.l.b16 %v6214
  %v6604 = vunpack.c.l.b16 %v6215
  %v6605 = vunpack.c.l.b16 %v6216
  %v6606 = vunpack.c.l.b16 %v6217
  %v6607 = vunpack.c.l.b16 %v6218
  %v6608 = vunpack.c.l.b16 %v6219
  %v6609 = vunpack.c.l.b16 %v6220
  %v6610 = vunpack.c.l.b16 %v6221
  %v6611 = vunpack.c.l.b16 %v6222
  %v6612 = vunpack.c.l.b16 %v6223
  %v6613 = vunpack.c.l.b16 %v6224
  %v6614 = vunpack.c.l.b16 %v6225
  %v6615 = vunpack.c.l.b16 %v6226
  %v6616 = vpack.c.b16 %v6599, %v6598
  %v6617 = vpack.c.b16 %v6601, %v6600
  %v6618 = vpack.c.b16 %v6603, %v6602
  %v6619 = vpack.c.b16 %v6605, %v6604
  %v6620 = vpack.c.b16 %v6607, %v6606
  %v6621 = vpack.c.b16 %v6609, %v6608
  %v6622 = vpack.c.b16 %v6611, %v6610
  %v6623 = vpack.c.b16 %v6613, %v6612
  %v6624 = vpack.c.b16 %v6615, %v6614
  %v6635 = vsel %vm6403, %v6178, 0
  %v6638 = vsel %vm6403, %v6180, 0
  %v6641 = vsel %vm6403, %v6182, 0
  %v6644 = vsel %vm6403, %v6184, 0
  %v6647 = vsel %vm6403, %v6186, 0
  %v6650 = vsel %vm6403, %v6188, 0
  %v6653 = vsel %vm6403, %v6190, 0
  %v6656 = vsel %vm6403, %v6192, 0
  %v6659 = vsel %vm6403, %v6194, 0
  %v6662 = vsel %vm6403, %v6196, 0
  %v6665 = vsel %vm6403, %v6198, 0
  %v6668 = vsel %vm6403, %v6200, 0
  %v6671 = vsel %vm6403, %v6202, 0
  %v6674 = vsel %vm6403, %v6204, 0
  %v6677 = vsel %vm6403, %v6206, 0
  %6679 = vmatprep.subr.bf16.mxu0 0
  %6680 = vmatpush1.bf16.msra.mxu0 %v6623
  %6681 = vmatprep.subr.bf16.mxu0 0
  %6682 = vmatpush1.bf16.msra.mxu0 %v6622
  %6683 = vmatprep.subr.bf16.mxu0 0
  %6684 = vmatpush1.bf16.msra.mxu0 %v6621
  %6685 = vmatprep.subr.bf16.mxu0 0
  %6686 = vmatpush1.bf16.msra.mxu0 %v6620
  %6687 = vmatprep.subr.bf16.mxu0 0
  %6688 = vmatpush1.bf16.msra.mxu0 %v6619
  %6689 = vmatprep.subr.bf16.mxu0 0
  %6690 = vmatpush1.bf16.msra.mxu0 %v6618
  %6691 = vmatprep.subr.bf16.mxu0 0
  %6692 = vmatpush1.bf16.msra.mxu0 %v6617
  %6693 = vmatprep.subr.bf16.mxu0 0
  %6694 = vmatpush1.bf16.msra.mxu0 %v6616
  %6695 = vmatprep.subr.bf16.mxu0 0
  %6696 = vmatpush2.bf16.msra.mxu0 0
  %6697 = vmatprep.subr.bf16.mxu0 0
  %6698 = vmatpush2.bf16.msra.mxu0 0
  %6699 = vmatprep.subr.bf16.mxu0 0
  %6700 = vmatpush2.bf16.msra.mxu0 0
  %6701 = vmatprep.subr.bf16.mxu0 0
  %6702 = vmatpush2.bf16.msra.mxu0 0
  %6703 = vmatprep.subr.bf16.mxu0 0
  %6704 = vmatpush2.bf16.msra.mxu0 0
  %6705 = vmatprep.subr.bf16.mxu0 0
  %6706 = vmatpush2.bf16.msra.mxu0 0
  %6707 = vmatprep.subr.bf16.mxu0 0
  %6708 = vmatpush2.bf16.msra.mxu0 0
  %6709 = vmatprep.subr.bf16.mxu0 0
  %6710 = vmatpush2.bf16.msra.mxu0 %v6624
  %6711 = vmatprep.mubr.bf16.mxu0 %v6635
  %6712 = vmatmul.mubr.bf16.gmra.mxu0 %v6177
  %v6713 = vpop.f32.mrf.mxu0
  %v6714 = vadd.f32 %v6484, %v6713
  %v6715 = vpop.f32.mrf.mxu0
  %v6716 = vpop.f32.mrf.mxu0
  %v6717 = vpop.f32.mrf.mxu0
  %6718 = vmatprep.mubr.bf16.mxu0 %v6638
  %6719 = vmatmul.mubr.bf16.gmra.mxu0 %v6179
  %v6720 = vpop.f32.mrf.mxu0
  %v6721 = vpop.f32.mrf.mxu0
  %v6722 = vpop.f32.mrf.mxu0
  %v6723 = vpop.f32.mrf.mxu0
  %6724 = vmatprep.mubr.bf16.mxu0 %v6641
  %6725 = vmatmul.mubr.bf16.gmra.mxu0 %v6181
  %v6726 = vpop.f32.mrf.mxu0
  %v6727 = vadd.f32 %v6497, %v6726
  %v6728 = vpop.f32.mrf.mxu0
  %v6729 = vpop.f32.mrf.mxu0
  %v6730 = vpop.f32.mrf.mxu0
  %6731 = vmatprep.mubr.bf16.mxu0 %v6644
  %6732 = vmatmul.mubr.bf16.gmra.mxu0 %v6183
  %v6733 = vpop.f32.mrf.mxu0
  %v6734 = vpop.f32.mrf.mxu0
  %v6735 = vpop.f32.mrf.mxu0
  %v6736 = vpop.f32.mrf.mxu0
  %6737 = vmatprep.mubr.bf16.mxu0 %v6647
  %6738 = vmatmul.mubr.bf16.gmra.mxu0 %v6185
  %v6739 = vpop.f32.mrf.mxu0
  %v6740 = vadd.f32 %v6510, %v6739
  %v6741 = vpop.f32.mrf.mxu0
  %v6742 = vpop.f32.mrf.mxu0
  %v6743 = vpop.f32.mrf.mxu0
  %6744 = vmatprep.mubr.bf16.mxu0 %v6650
  %6745 = vmatmul.mubr.bf16.gmra.mxu0 %v6187
  %v6746 = vpop.f32.mrf.mxu0
  %v6747 = vpop.f32.mrf.mxu0
  %v6748 = vpop.f32.mrf.mxu0
  %v6749 = vpop.f32.mrf.mxu0
  %6750 = vmatprep.mubr.bf16.mxu0 %v6653
  %6751 = vmatmul.mubr.bf16.gmra.mxu0 %v6189
  %v6752 = vpop.f32.mrf.mxu0
  %v6753 = vadd.f32 %v6523, %v6752
  %v6754 = vpop.f32.mrf.mxu0
  %v6755 = vpop.f32.mrf.mxu0
  %v6756 = vpop.f32.mrf.mxu0
  %6757 = vmatprep.mubr.bf16.mxu0 %v6656
  %6758 = vmatmul.mubr.bf16.gmra.mxu0 %v6191
  %v6759 = vpop.f32.mrf.mxu0
  %v6760 = vpop.f32.mrf.mxu0
  %v6761 = vpop.f32.mrf.mxu0
  %v6762 = vpop.f32.mrf.mxu0
  %6763 = vmatprep.mubr.bf16.mxu0 %v6659
  %6764 = vmatmul.mubr.bf16.gmra.mxu0 %v6193
  %v6765 = vpop.f32.mrf.mxu0
  %v6766 = vadd.f32 %v6536, %v6765
  %v6767 = vpop.f32.mrf.mxu0
  %v6768 = vpop.f32.mrf.mxu0
  %v6769 = vpop.f32.mrf.mxu0
  %6770 = vmatprep.mubr.bf16.mxu0 %v6662
  %6771 = vmatmul.mubr.bf16.gmra.mxu0 %v6195
  %v6772 = vpop.f32.mrf.mxu0
  %v6773 = vpop.f32.mrf.mxu0
  %v6774 = vpop.f32.mrf.mxu0
  %v6775 = vpop.f32.mrf.mxu0
  %6776 = vmatprep.mubr.bf16.mxu0 %v6665
  %6777 = vmatmul.mubr.bf16.gmra.mxu0 %v6197
  %v6778 = vpop.f32.mrf.mxu0
  %v6779 = vadd.f32 %v6549, %v6778
  %v6780 = vpop.f32.mrf.mxu0
  %v6781 = vpop.f32.mrf.mxu0
  %v6782 = vpop.f32.mrf.mxu0
  %6783 = vmatprep.mubr.bf16.mxu0 %v6668
  %6784 = vmatmul.mubr.bf16.gmra.mxu0 %v6199
  %v6785 = vpop.f32.mrf.mxu0
  %v6786 = vpop.f32.mrf.mxu0
  %v6787 = vpop.f32.mrf.mxu0
  %v6788 = vpop.f32.mrf.mxu0
  %6789 = vmatprep.mubr.bf16.mxu0 %v6671
  %6790 = vmatmul.mubr.bf16.gmra.mxu0 %v6201
  %v6791 = vpop.f32.mrf.mxu0
  %v6792 = vadd.f32 %v6562, %v6791
  %v6793 = vpop.f32.mrf.mxu0
  %v6794 = vpop.f32.mrf.mxu0
  %v6795 = vpop.f32.mrf.mxu0
  %6796 = vmatprep.mubr.bf16.mxu0 %v6674
  %6797 = vmatmul.mubr.bf16.gmra.mxu0 %v6203
  %v6798 = vpop.f32.mrf.mxu0
  %v6799 = vpop.f32.mrf.mxu0
  %v6800 = vpop.f32.mrf.mxu0
  %v6801 = vpop.f32.mrf.mxu0
  %6802 = vmatprep.mubr.bf16.mxu0 %v6677
  %6803 = vmatmul.mubr.bf16.gmra.mxu0 %v6205
  %v6804 = vpop.f32.mrf.mxu0
  %v6805 = vadd.f32 %v6575, %v6804
  %v6806 = vpop.f32.mrf.mxu0
  %v6807 = vpop.f32.mrf.mxu0
  %v6808 = vpop.f32.mrf.mxu0
  %6809 = vdwg.mxu0
  %s6810 = scalar_lea.vmem %s5, 144
  %v6811 = vld [vmem:[%s6810] sm:$0xf]
  %v6812 = vld [vmem:[%s6810 + $0x4] sm:$0xf]
  %v6813 = vld [vmem:[%s6810 + $0x8] sm:$0xf]
  %v6814 = vld [vmem:[%s6810 + $0xc] sm:$0xf]
  %v6815 = vld [vmem:[%s6810 + $0x10] sm:$0xf]
  %v6816 = vld [vmem:[%s6810 + $0x14] sm:$0xf]
  %v6817 = vld [vmem:[%s6810 + $0x18] sm:$0xf]
  %v6818 = vld [vmem:[%s6810 + $0x1c] sm:$0xf]
  %v6819 = vld [vmem:[%s6810 + $0x20] sm:$0xf]
  %v6820 = vld [vmem:[%s6810 + $0x24] sm:$0xf]
  %v6821 = vld [vmem:[%s6810 + $0x28] sm:$0xf]
  %v6822 = vld [vmem:[%s6810 + $0x2c] sm:$0xf]
  %v6823 = vld [vmem:[%s6810 + $0x30] sm:$0xf]
  %v6824 = vld [vmem:[%s6810 + $0x34] sm:$0xf]
  %v6825 = vld [vmem:[%s6810 + $0x38] sm:$0xf]
  %v6826 = vld [vmem:[%s6810 + $0x3c] sm:$0xf]
  %v6827 = vld [vmem:[%s6810 + $0x40] sm:$0xf]
  %v6828 = vld [vmem:[%s6810 + $0x44] sm:$0xf]
  %v6829 = vrot.slane %v6177, 4
  %v6830 = vrot.slane %v6179, 4
  %v6831 = vsel %vm4899, %v6829, %v6830
  %v6832 = vrot.slane %v6178, 4
  %v6833 = vrot.slane %v6180, 4
  %v6834 = vsel %vm4899, %v6832, %v6833
  %v6835 = vrot.slane %v6181, 4
  %v6836 = vsel %vm4899, %v6830, %v6835
  %v6837 = vrot.slane %v6182, 4
  %v6838 = vsel %vm4899, %v6833, %v6837
  %v6839 = vrot.slane %v6183, 4
  %v6840 = vsel %vm4899, %v6835, %v6839
  %v6841 = vrot.slane %v6184, 4
  %v6842 = vsel %vm4899, %v6837, %v6841
  %v6843 = vrot.slane %v6185, 4
  %v6844 = vsel %vm4899, %v6839, %v6843
  %v6845 = vrot.slane %v6186, 4
  %v6846 = vsel %vm4899, %v6841, %v6845
  %v6847 = vrot.slane %v6187, 4
  %v6848 = vsel %vm4899, %v6843, %v6847
  %v6849 = vrot.slane %v6188, 4
  %v6850 = vsel %vm4899, %v6845, %v6849
  %v6851 = vrot.slane %v6189, 4
  %v6852 = vsel %vm4899, %v6847, %v6851
  %v6853 = vrot.slane %v6190, 4
  %v6854 = vsel %vm4899, %v6849, %v6853
  %v6855 = vrot.slane %v6191, 4
  %v6856 = vsel %vm4899, %v6851, %v6855
  %v6857 = vrot.slane %v6192, 4
  %v6858 = vsel %vm4899, %v6853, %v6857
  %v6859 = vrot.slane %v6193, 4
  %v6860 = vsel %vm4899, %v6855, %v6859
  %v6861 = vrot.slane %v6194, 4
  %v6862 = vsel %vm4899, %v6857, %v6861
  %v6863 = vrot.slane %v6195, 4
  %v6864 = vsel %vm4899, %v6859, %v6863
  %v6865 = vrot.slane %v6196, 4
  %v6866 = vsel %vm4899, %v6861, %v6865
  %v6867 = vrot.slane %v6197, 4
  %v6868 = vsel %vm4899, %v6863, %v6867
  %v6869 = vrot.slane %v6198, 4
  %v6870 = vsel %vm4899, %v6865, %v6869
  %v6871 = vrot.slane %v6199, 4
  %v6872 = vsel %vm4899, %v6867, %v6871
  %v6873 = vrot.slane %v6200, 4
  %v6874 = vsel %vm4899, %v6869, %v6873
  %v6875 = vrot.slane %v6201, 4
  %v6876 = vsel %vm4899, %v6871, %v6875
  %v6877 = vrot.slane %v6202, 4
  %v6878 = vsel %vm4899, %v6873, %v6877
  %v6879 = vrot.slane %v6203, 4
  %v6880 = vsel %vm4899, %v6875, %v6879
  %v6881 = vrot.slane %v6204, 4
  %v6882 = vsel %vm4899, %v6877, %v6881
  %v6883 = vrot.slane %v6205, 4
  %v6884 = vsel %vm4899, %v6879, %v6883
  %v6885 = vrot.slane %v6206, 4
  %v6886 = vsel %vm4899, %v6881, %v6885
  %v6920 = vunpack.c.l.b16 %v6811
  %v6921 = vunpack.c.l.b16 %v6812
  %v6922 = vunpack.c.l.b16 %v6813
  %v6923 = vunpack.c.l.b16 %v6814
  %v6924 = vunpack.c.l.b16 %v6815
  %v6925 = vunpack.c.l.b16 %v6816
  %v6926 = vunpack.c.l.b16 %v6817
  %v6927 = vunpack.c.l.b16 %v6818
  %v6928 = vunpack.c.l.b16 %v6819
  %v6929 = vunpack.c.l.b16 %v6820
  %v6930 = vunpack.c.l.b16 %v6821
  %v6931 = vunpack.c.l.b16 %v6822
  %v6932 = vunpack.c.l.b16 %v6823
  %v6933 = vunpack.c.l.b16 %v6824
  %v6934 = vunpack.c.l.b16 %v6825
  %v6935 = vunpack.c.l.b16 %v6826
  %v6936 = vunpack.c.l.b16 %v6827
  %v6937 = vunpack.c.l.b16 %v6828
  %v6938 = vpack.c.b16 %v6921, %v6920
  %v6939 = vpack.c.b16 %v6923, %v6922
  %v6940 = vpack.c.b16 %v6925, %v6924
  %v6941 = vpack.c.b16 %v6927, %v6926
  %v6942 = vpack.c.b16 %v6929, %v6928
  %v6943 = vpack.c.b16 %v6931, %v6930
  %v6944 = vpack.c.b16 %v6933, %v6932
  %v6945 = vpack.c.b16 %v6935, %v6934
  %v6946 = vpack.c.b16 %v6937, %v6936
  %v6957 = vsel %vm6403, %v6834, 0
  %v6960 = vsel %vm6403, %v6838, 0
  %v6963 = vsel %vm6403, %v6842, 0
  %v6966 = vsel %vm6403, %v6846, 0
  %v6969 = vsel %vm6403, %v6850, 0
  %v6972 = vsel %vm6403, %v6854, 0
  %v6975 = vsel %vm6403, %v6858, 0
  %v6978 = vsel %vm6403, %v6862, 0
  %v6981 = vsel %vm6403, %v6866, 0
  %v6984 = vsel %vm6403, %v6870, 0
  %v6987 = vsel %vm6403, %v6874, 0
  %v6990 = vsel %vm6403, %v6878, 0
  %v6993 = vsel %vm6403, %v6882, 0
  %v6996 = vsel %vm6403, %v6886, 0
  %v6999 = vsel %vm6403, %v6885, 0
  %7001 = vmatprep.subr.bf16.mxu0 0
  %7002 = vmatpush1.bf16.msra.mxu0 %v6945
  %7003 = vmatprep.subr.bf16.mxu0 0
  %7004 = vmatpush1.bf16.msra.mxu0 %v6944
  %7005 = vmatprep.subr.bf16.mxu0 0
  %7006 = vmatpush1.bf16.msra.mxu0 %v6943
  %7007 = vmatprep.subr.bf16.mxu0 0
  %7008 = vmatpush1.bf16.msra.mxu0 %v6942
  %7009 = vmatprep.subr.bf16.mxu0 0
  %7010 = vmatpush1.bf16.msra.mxu0 %v6941
  %7011 = vmatprep.subr.bf16.mxu0 0
  %7012 = vmatpush1.bf16.msra.mxu0 %v6940
  %7013 = vmatprep.subr.bf16.mxu0 0
  %7014 = vmatpush1.bf16.msra.mxu0 %v6939
  %7015 = vmatprep.subr.bf16.mxu0 0
  %7016 = vmatpush1.bf16.msra.mxu0 %v6938
  %7017 = vmatprep.subr.bf16.mxu0 0
  %7018 = vmatpush2.bf16.msra.mxu0 0
  %7019 = vmatprep.subr.bf16.mxu0 0
  %7020 = vmatpush2.bf16.msra.mxu0 0
  %7021 = vmatprep.subr.bf16.mxu0 0
  %7022 = vmatpush2.bf16.msra.mxu0 0
  %7023 = vmatprep.subr.bf16.mxu0 0
  %7024 = vmatpush2.bf16.msra.mxu0 0
  %7025 = vmatprep.subr.bf16.mxu0 0
  %7026 = vmatpush2.bf16.msra.mxu0 0
  %7027 = vmatprep.subr.bf16.mxu0 0
  %7028 = vmatpush2.bf16.msra.mxu0 0
  %7029 = vmatprep.subr.bf16.mxu0 0
  %7030 = vmatpush2.bf16.msra.mxu0 0
  %7031 = vmatprep.subr.bf16.mxu0 0
  %7032 = vmatpush2.bf16.msra.mxu0 %v6946
  %7033 = vmatprep.mubr.bf16.mxu0 %v6957
  %7034 = vmatmul.mubr.bf16.gmra.mxu0 %v6831
  %v7035 = vpop.f32.mrf.mxu0
  %v7036 = vadd.f32 0.0, %v7035
  %v7037 = vpop.f32.mrf.mxu0
  %v7038 = vpop.f32.mrf.mxu0
  %v7039 = vpop.f32.mrf.mxu0
  %7040 = vmatprep.mubr.bf16.mxu0 %v6960
  %7041 = vmatmul.mubr.bf16.gmra.mxu0 %v6836
  %v7042 = vpop.f32.mrf.mxu0
  %v7043 = vpop.f32.mrf.mxu0
  %v7044 = vpop.f32.mrf.mxu0
  %v7045 = vpop.f32.mrf.mxu0
  %7046 = vmatprep.mubr.bf16.mxu0 %v6963
  %7047 = vmatmul.mubr.bf16.gmra.mxu0 %v6840
  %v7048 = vpop.f32.mrf.mxu0
  %v7049 = vadd.f32 0.0, %v7048
  %v7050 = vpop.f32.mrf.mxu0
  %v7051 = vpop.f32.mrf.mxu0
  %v7052 = vpop.f32.mrf.mxu0
  %7053 = vmatprep.mubr.bf16.mxu0 %v6966
  %7054 = vmatmul.mubr.bf16.gmra.mxu0 %v6844
  %v7055 = vpop.f32.mrf.mxu0
  %v7056 = vpop.f32.mrf.mxu0
  %v7057 = vpop.f32.mrf.mxu0
  %v7058 = vpop.f32.mrf.mxu0
  %7059 = vmatprep.mubr.bf16.mxu0 %v6969
  %7060 = vmatmul.mubr.bf16.gmra.mxu0 %v6848
  %v7061 = vpop.f32.mrf.mxu0
  %v7062 = vadd.f32 0.0, %v7061
  %v7063 = vpop.f32.mrf.mxu0
  %v7064 = vpop.f32.mrf.mxu0
  %v7065 = vpop.f32.mrf.mxu0
  %7066 = vmatprep.mubr.bf16.mxu0 %v6972
  %7067 = vmatmul.mubr.bf16.gmra.mxu0 %v6852
  %v7068 = vpop.f32.mrf.mxu0
  %v7069 = vpop.f32.mrf.mxu0
  %v7070 = vpop.f32.mrf.mxu0
  %v7071 = vpop.f32.mrf.mxu0
  %7072 = vmatprep.mubr.bf16.mxu0 %v6975
  %7073 = vmatmul.mubr.bf16.gmra.mxu0 %v6856
  %v7074 = vpop.f32.mrf.mxu0
  %v7075 = vadd.f32 0.0, %v7074
  %v7076 = vpop.f32.mrf.mxu0
  %v7077 = vpop.f32.mrf.mxu0
  %v7078 = vpop.f32.mrf.mxu0
  %7079 = vmatprep.mubr.bf16.mxu0 %v6978
  %7080 = vmatmul.mubr.bf16.gmra.mxu0 %v6860
  %v7081 = vpop.f32.mrf.mxu0
  %v7082 = vpop.f32.mrf.mxu0
  %v7083 = vpop.f32.mrf.mxu0
  %v7084 = vpop.f32.mrf.mxu0
  %7085 = vmatprep.mubr.bf16.mxu0 %v6981
  %7086 = vmatmul.mubr.bf16.gmra.mxu0 %v6864
  %v7087 = vpop.f32.mrf.mxu0
  %v7088 = vadd.f32 0.0, %v7087
  %v7089 = vpop.f32.mrf.mxu0
  %v7090 = vpop.f32.mrf.mxu0
  %v7091 = vpop.f32.mrf.mxu0
  %7092 = vmatprep.mubr.bf16.mxu0 %v6984
  %7093 = vmatmul.mubr.bf16.gmra.mxu0 %v6868
  %v7094 = vpop.f32.mrf.mxu0
  %v7095 = vpop.f32.mrf.mxu0
  %v7096 = vpop.f32.mrf.mxu0
  %v7097 = vpop.f32.mrf.mxu0
  %7098 = vmatprep.mubr.bf16.mxu0 %v6987
  %7099 = vmatmul.mubr.bf16.gmra.mxu0 %v6872
  %v7100 = vpop.f32.mrf.mxu0
  %v7101 = vadd.f32 0.0, %v7100
  %v7102 = vpop.f32.mrf.mxu0
  %v7103 = vpop.f32.mrf.mxu0
  %v7104 = vpop.f32.mrf.mxu0
  %7105 = vmatprep.mubr.bf16.mxu0 %v6990
  %7106 = vmatmul.mubr.bf16.gmra.mxu0 %v6876
  %v7107 = vpop.f32.mrf.mxu0
  %v7108 = vpop.f32.mrf.mxu0
  %v7109 = vpop.f32.mrf.mxu0
  %v7110 = vpop.f32.mrf.mxu0
  %7111 = vmatprep.mubr.bf16.mxu0 %v6993
  %7112 = vmatmul.mubr.bf16.gmra.mxu0 %v6880
  %v7113 = vpop.f32.mrf.mxu0
  %v7114 = vadd.f32 0.0, %v7113
  %v7115 = vpop.f32.mrf.mxu0
  %v7116 = vpop.f32.mrf.mxu0
  %v7117 = vpop.f32.mrf.mxu0
  %7118 = vmatprep.mubr.bf16.mxu0 %v6996
  %7119 = vmatmul.mubr.bf16.gmra.mxu0 %v6884
  %v7120 = vpop.f32.mrf.mxu0
  %v7121 = vpop.f32.mrf.mxu0
  %v7122 = vpop.f32.mrf.mxu0
  %v7123 = vpop.f32.mrf.mxu0
  %7124 = vmatprep.mubr.bf16.mxu0 %v6999
  %7125 = vmatmul.mubr.bf16.gmra.mxu0 %v6883
  %v7126 = vpop.f32.mrf.mxu0
  %v7127 = vadd.f32 0.0, %v7126
  %v7128 = vpop.f32.mrf.mxu0
  %v7129 = vpop.f32.mrf.mxu0
  %v7130 = vpop.f32.mrf.mxu0
  %7131 = vdwg.mxu0
  %v7132 = vadd.f32 %v6714, %v7036
  %v7133 = vadd.f32 %v6727, %v7049
  %v7134 = vadd.f32 %v6740, %v7062
  %v7135 = vadd.f32 %v6753, %v7075
  %v7136 = vadd.f32 %v6766, %v7088
  %v7137 = vadd.f32 %v6779, %v7101
  %v7138 = vadd.f32 %v6792, %v7114
  %v7139 = vadd.f32 %v6805, %v7127
  %s7140 = scalar_lea.vmem %s5, 216
  %v7141 = vld [vmem:[%s7140] sm:$0xf]
  %v7142 = vld [vmem:[%s7140 + $0x4] sm:$0xf]
  %v7143 = vld [vmem:[%s7140 + $0x8] sm:$0xf]
  %v7144 = vld [vmem:[%s7140 + $0xc] sm:$0xf]
  %v7145 = vld [vmem:[%s7140 + $0x10] sm:$0xf]
  %v7146 = vld [vmem:[%s7140 + $0x14] sm:$0xf]
  %v7147 = vld [vmem:[%s7140 + $0x18] sm:$0xf]
  %v7148 = vld [vmem:[%s7140 + $0x1c] sm:$0xf]
  %v7149 = vld [vmem:[%s7140 + $0x20] sm:$0xf]
  %v7150 = vld [vmem:[%s7140 + $0x24] sm:$0xf]
  %v7151 = vld [vmem:[%s7140 + $0x28] sm:$0xf]
  %v7152 = vld [vmem:[%s7140 + $0x2c] sm:$0xf]
  %v7153 = vld [vmem:[%s7140 + $0x30] sm:$0xf]
  %v7154 = vld [vmem:[%s7140 + $0x34] sm:$0xf]
  %v7155 = vld [vmem:[%s7140 + $0x38] sm:$0xf]
  %v7156 = vld [vmem:[%s7140 + $0x3c] sm:$0xf]
  %v7157 = vld [vmem:[%s7140 + $0x40] sm:$0xf]
  %v7158 = vld [vmem:[%s7140 + $0x44] sm:$0xf]
  %vm7159 = vcmask 1041408
  %v7160 = vrot.slane %v6177, 6
  %v7161 = vrot.slane %v6179, 6
  %v7162 = vsel %vm7159, %v7160, %v7161
  %v7163 = vrot.slane %v6178, 6
  %v7164 = vrot.slane %v6180, 6
  %v7165 = vsel %vm7159, %v7163, %v7164
  %v7166 = vrot.slane %v6181, 6
  %v7167 = vsel %vm7159, %v7161, %v7166
  %v7168 = vrot.slane %v6182, 6
  %v7169 = vsel %vm7159, %v7164, %v7168
  %v7170 = vrot.slane %v6183, 6
  %v7171 = vsel %vm7159, %v7166, %v7170
  %v7172 = vrot.slane %v6184, 6
  %v7173 = vsel %vm7159, %v7168, %v7172
  %v7174 = vrot.slane %v6185, 6
  %v7175 = vsel %vm7159, %v7170, %v7174
  %v7176 = vrot.slane %v6186, 6
  %v7177 = vsel %vm7159, %v7172, %v7176
  %v7178 = vrot.slane %v6187, 6
  %v7179 = vsel %vm7159, %v7174, %v7178
  %v7180 = vrot.slane %v6188, 6
  %v7181 = vsel %vm7159, %v7176, %v7180
  %v7182 = vrot.slane %v6189, 6
  %v7183 = vsel %vm7159, %v7178, %v7182
  %v7184 = vrot.slane %v6190, 6
  %v7185 = vsel %vm7159, %v7180, %v7184
  %v7186 = vrot.slane %v6191, 6
  %v7187 = vsel %vm7159, %v7182, %v7186
  %v7188 = vrot.slane %v6192, 6
  %v7189 = vsel %vm7159, %v7184, %v7188
  %v7190 = vrot.slane %v6193, 6
  %v7191 = vsel %vm7159, %v7186, %v7190
  %v7192 = vrot.slane %v6194, 6
  %v7193 = vsel %vm7159, %v7188, %v7192
  %v7194 = vrot.slane %v6195, 6
  %v7195 = vsel %vm7159, %v7190, %v7194
  %v7196 = vrot.slane %v6196, 6
  %v7197 = vsel %vm7159, %v7192, %v7196
  %v7198 = vrot.slane %v6197, 6
  %v7199 = vsel %vm7159, %v7194, %v7198
  %v7200 = vrot.slane %v6198, 6
  %v7201 = vsel %vm7159, %v7196, %v7200
  %v7202 = vrot.slane %v6199, 6
  %v7203 = vsel %vm7159, %v7198, %v7202
  %v7204 = vrot.slane %v6200, 6
  %v7205 = vsel %vm7159, %v7200, %v7204
  %v7206 = vrot.slane %v6201, 6
  %v7207 = vsel %vm7159, %v7202, %v7206
  %v7208 = vrot.slane %v6202, 6
  %v7209 = vsel %vm7159, %v7204, %v7208
  %v7210 = vrot.slane %v6203, 6
  %v7211 = vsel %vm7159, %v7206, %v7210
  %v7212 = vrot.slane %v6204, 6
  %v7213 = vsel %vm7159, %v7208, %v7212
  %v7214 = vrot.slane %v6205, 6
  %v7215 = vsel %vm7159, %v7210, %v7214
  %v7216 = vrot.slane %v6206, 6
  %v7217 = vsel %vm7159, %v7212, %v7216
  %v7251 = vunpack.c.l.b16 %v7141
  %v7252 = vunpack.c.l.b16 %v7142
  %v7253 = vunpack.c.l.b16 %v7143
  %v7254 = vunpack.c.l.b16 %v7144
  %v7255 = vunpack.c.l.b16 %v7145
  %v7256 = vunpack.c.l.b16 %v7146
  %v7257 = vunpack.c.l.b16 %v7147
  %v7258 = vunpack.c.l.b16 %v7148
  %v7259 = vunpack.c.l.b16 %v7149
  %v7260 = vunpack.c.l.b16 %v7150
  %v7261 = vunpack.c.l.b16 %v7151
  %v7262 = vunpack.c.l.b16 %v7152
  %v7263 = vunpack.c.l.b16 %v7153
  %v7264 = vunpack.c.l.b16 %v7154
  %v7265 = vunpack.c.l.b16 %v7155
  %v7266 = vunpack.c.l.b16 %v7156
  %v7267 = vunpack.c.l.b16 %v7157
  %v7268 = vunpack.c.l.b16 %v7158
  %v7269 = vpack.c.b16 %v7252, %v7251
  %v7270 = vpack.c.b16 %v7254, %v7253
  %v7271 = vpack.c.b16 %v7256, %v7255
  %v7272 = vpack.c.b16 %v7258, %v7257
  %v7273 = vpack.c.b16 %v7260, %v7259
  %v7274 = vpack.c.b16 %v7262, %v7261
  %v7275 = vpack.c.b16 %v7264, %v7263
  %v7276 = vpack.c.b16 %v7266, %v7265
  %v7277 = vpack.c.b16 %v7268, %v7267
  %v7288 = vsel %vm6403, %v7165, 0
  %v7291 = vsel %vm6403, %v7169, 0
  %v7294 = vsel %vm6403, %v7173, 0
  %v7297 = vsel %vm6403, %v7177, 0
  %v7300 = vsel %vm6403, %v7181, 0
  %v7303 = vsel %vm6403, %v7185, 0
  %v7306 = vsel %vm6403, %v7189, 0
  %v7309 = vsel %vm6403, %v7193, 0
  %v7312 = vsel %vm6403, %v7197, 0
  %v7315 = vsel %vm6403, %v7201, 0
  %v7318 = vsel %vm6403, %v7205, 0
  %v7321 = vsel %vm6403, %v7209, 0
  %v7324 = vsel %vm6403, %v7213, 0
  %v7327 = vsel %vm6403, %v7217, 0
  %v7330 = vsel %vm6403, %v7216, 0
  %7332 = vmatprep.subr.bf16.mxu0 0
  %7333 = vmatpush1.bf16.msra.mxu0 %v7276
  %7334 = vmatprep.subr.bf16.mxu0 0
  %7335 = vmatpush1.bf16.msra.mxu0 %v7275
  %7336 = vmatprep.subr.bf16.mxu0 0
  %7337 = vmatpush1.bf16.msra.mxu0 %v7274
  %7338 = vmatprep.subr.bf16.mxu0 0
  %7339 = vmatpush1.bf16.msra.mxu0 %v7273
  %7340 = vmatprep.subr.bf16.mxu0 0
  %7341 = vmatpush1.bf16.msra.mxu0 %v7272
  %7342 = vmatprep.subr.bf16.mxu0 0
  %7343 = vmatpush1.bf16.msra.mxu0 %v7271
  %7344 = vmatprep.subr.bf16.mxu0 0
  %7345 = vmatpush1.bf16.msra.mxu0 %v7270
  %7346 = vmatprep.subr.bf16.mxu0 0
  %7347 = vmatpush1.bf16.msra.mxu0 %v7269
  %7348 = vmatprep.subr.bf16.mxu0 0
  %7349 = vmatpush2.bf16.msra.mxu0 0
  %7350 = vmatprep.subr.bf16.mxu0 0
  %7351 = vmatpush2.bf16.msra.mxu0 0
  %7352 = vmatprep.subr.bf16.mxu0 0
  %7353 = vmatpush2.bf16.msra.mxu0 0
  %7354 = vmatprep.subr.bf16.mxu0 0
  %7355 = vmatpush2.bf16.msra.mxu0 0
  %7356 = vmatprep.subr.bf16.mxu0 0
  %7357 = vmatpush2.bf16.msra.mxu0 0
  %7358 = vmatprep.subr.bf16.mxu0 0
  %7359 = vmatpush2.bf16.msra.mxu0 0
  %7360 = vmatprep.subr.bf16.mxu0 0
  %7361 = vmatpush2.bf16.msra.mxu0 0
  %7362 = vmatprep.subr.bf16.mxu0 0
  %7363 = vmatpush2.bf16.msra.mxu0 %v7277
  %7364 = vmatprep.mubr.bf16.mxu0 %v7288
  %7365 = vmatmul.mubr.bf16.gmra.mxu0 %v7162
  %v7366 = vpop.f32.mrf.mxu0
  %v7367 = vadd.f32 0.0, %v7366
  %v7368 = vpop.f32.mrf.mxu0
  %v7369 = vpop.f32.mrf.mxu0
  %v7370 = vpop.f32.mrf.mxu0
  %7371 = vmatprep.mubr.bf16.mxu0 %v7291
  %7372 = vmatmul.mubr.bf16.gmra.mxu0 %v7167
  %v7373 = vpop.f32.mrf.mxu0
  %v7374 = vpop.f32.mrf.mxu0
  %v7375 = vpop.f32.mrf.mxu0
  %v7376 = vpop.f32.mrf.mxu0
  %7377 = vmatprep.mubr.bf16.mxu0 %v7294
  %7378 = vmatmul.mubr.bf16.gmra.mxu0 %v7171
  %v7379 = vpop.f32.mrf.mxu0
  %v7380 = vadd.f32 0.0, %v7379
  %v7381 = vpop.f32.mrf.mxu0
  %v7382 = vpop.f32.mrf.mxu0
  %v7383 = vpop.f32.mrf.mxu0
  %7384 = vmatprep.mubr.bf16.mxu0 %v7297
  %7385 = vmatmul.mubr.bf16.gmra.mxu0 %v7175
  %v7386 = vpop.f32.mrf.mxu0
  %v7387 = vpop.f32.mrf.mxu0
  %v7388 = vpop.f32.mrf.mxu0
  %v7389 = vpop.f32.mrf.mxu0
  %7390 = vmatprep.mubr.bf16.mxu0 %v7300
  %7391 = vmatmul.mubr.bf16.gmra.mxu0 %v7179
  %v7392 = vpop.f32.mrf.mxu0
  %v7393 = vadd.f32 0.0, %v7392
  %v7394 = vpop.f32.mrf.mxu0
  %v7395 = vpop.f32.mrf.mxu0
  %v7396 = vpop.f32.mrf.mxu0
  %7397 = vmatprep.mubr.bf16.mxu0 %v7303
  %7398 = vmatmul.mubr.bf16.gmra.mxu0 %v7183
  %v7399 = vpop.f32.mrf.mxu0
  %v7400 = vpop.f32.mrf.mxu0
  %v7401 = vpop.f32.mrf.mxu0
  %v7402 = vpop.f32.mrf.mxu0
  %7403 = vmatprep.mubr.bf16.mxu0 %v7306
  %7404 = vmatmul.mubr.bf16.gmra.mxu0 %v7187
  %v7405 = vpop.f32.mrf.mxu0
  %v7406 = vadd.f32 0.0, %v7405
  %v7407 = vpop.f32.mrf.mxu0
  %v7408 = vpop.f32.mrf.mxu0
  %v7409 = vpop.f32.mrf.mxu0
  %7410 = vmatprep.mubr.bf16.mxu0 %v7309
  %7411 = vmatmul.mubr.bf16.gmra.mxu0 %v7191
  %v7412 = vpop.f32.mrf.mxu0
  %v7413 = vpop.f32.mrf.mxu0
  %v7414 = vpop.f32.mrf.mxu0
  %v7415 = vpop.f32.mrf.mxu0
  %7416 = vmatprep.mubr.bf16.mxu0 %v7312
  %7417 = vmatmul.mubr.bf16.gmra.mxu0 %v7195
  %v7418 = vpop.f32.mrf.mxu0
  %v7419 = vadd.f32 0.0, %v7418
  %v7420 = vpop.f32.mrf.mxu0
  %v7421 = vpop.f32.mrf.mxu0
  %v7422 = vpop.f32.mrf.mxu0
  %7423 = vmatprep.mubr.bf16.mxu0 %v7315
  %7424 = vmatmul.mubr.bf16.gmra.mxu0 %v7199
  %v7425 = vpop.f32.mrf.mxu0
  %v7426 = vpop.f32.mrf.mxu0
  %v7427 = vpop.f32.mrf.mxu0
  %v7428 = vpop.f32.mrf.mxu0
  %7429 = vmatprep.mubr.bf16.mxu0 %v7318
  %7430 = vmatmul.mubr.bf16.gmra.mxu0 %v7203
  %v7431 = vpop.f32.mrf.mxu0
  %v7432 = vadd.f32 0.0, %v7431
  %v7433 = vpop.f32.mrf.mxu0
  %v7434 = vpop.f32.mrf.mxu0
  %v7435 = vpop.f32.mrf.mxu0
  %7436 = vmatprep.mubr.bf16.mxu0 %v7321
  %7437 = vmatmul.mubr.bf16.gmra.mxu0 %v7207
  %v7438 = vpop.f32.mrf.mxu0
  %v7439 = vpop.f32.mrf.mxu0
  %v7440 = vpop.f32.mrf.mxu0
  %v7441 = vpop.f32.mrf.mxu0
  %7442 = vmatprep.mubr.bf16.mxu0 %v7324
  %7443 = vmatmul.mubr.bf16.gmra.mxu0 %v7211
  %v7444 = vpop.f32.mrf.mxu0
  %v7445 = vadd.f32 0.0, %v7444
  %v7446 = vpop.f32.mrf.mxu0
  %v7447 = vpop.f32.mrf.mxu0
  %v7448 = vpop.f32.mrf.mxu0
  %7449 = vmatprep.mubr.bf16.mxu0 %v7327
  %7450 = vmatmul.mubr.bf16.gmra.mxu0 %v7215
  %v7451 = vpop.f32.mrf.mxu0
  %v7452 = vpop.f32.mrf.mxu0
  %v7453 = vpop.f32.mrf.mxu0
  %v7454 = vpop.f32.mrf.mxu0
  %7455 = vmatprep.mubr.bf16.mxu0 %v7330
  %7456 = vmatmul.mubr.bf16.gmra.mxu0 %v7214
  %v7457 = vpop.f32.mrf.mxu0
  %v7458 = vadd.f32 0.0, %v7457
  %v7459 = vpop.f32.mrf.mxu0
  %v7460 = vpop.f32.mrf.mxu0
  %v7461 = vpop.f32.mrf.mxu0
  %7462 = vdwg.mxu0
  %v7463 = vadd.f32 %v7132, %v7367
  %v7464 = vadd.f32 %v7133, %v7380
  %v7465 = vadd.f32 %v7134, %v7393
  %v7466 = vadd.f32 %v7135, %v7406
  %v7467 = vadd.f32 %v7136, %v7419
  %v7468 = vadd.f32 %v7137, %v7432
  %v7469 = vadd.f32 %v7138, %v7445
  %v7470 = vadd.f32 %v7139, %v7458
  %s7471 = scalar_lea.vmem %s5, 288
  %v7472 = vld [vmem:[%s7471] sm:$0xf]
  %v7473 = vld [vmem:[%s7471 + $0x4] sm:$0xf]
  %v7474 = vld [vmem:[%s7471 + $0x8] sm:$0xf]
  %v7475 = vld [vmem:[%s7471 + $0xc] sm:$0xf]
  %v7476 = vld [vmem:[%s7471 + $0x10] sm:$0xf]
  %v7477 = vld [vmem:[%s7471 + $0x14] sm:$0xf]
  %v7478 = vld [vmem:[%s7471 + $0x18] sm:$0xf]
  %v7479 = vld [vmem:[%s7471 + $0x1c] sm:$0xf]
  %v7480 = vld [vmem:[%s7471 + $0x20] sm:$0xf]
  %v7481 = vld [vmem:[%s7471 + $0x24] sm:$0xf]
  %v7482 = vld [vmem:[%s7471 + $0x28] sm:$0xf]
  %v7483 = vld [vmem:[%s7471 + $0x2c] sm:$0xf]
  %v7484 = vld [vmem:[%s7471 + $0x30] sm:$0xf]
  %v7485 = vld [vmem:[%s7471 + $0x34] sm:$0xf]
  %v7486 = vld [vmem:[%s7471 + $0x38] sm:$0xf]
  %v7487 = vld [vmem:[%s7471 + $0x3c] sm:$0xf]
  %v7488 = vld [vmem:[%s7471 + $0x40] sm:$0xf]
  %v7489 = vld [vmem:[%s7471 + $0x44] sm:$0xf]
  %v7508 = vunpack.c.l.b16 %v7472
  %v7509 = vunpack.c.l.b16 %v7473
  %v7510 = vunpack.c.l.b16 %v7474
  %v7511 = vunpack.c.l.b16 %v7475
  %v7512 = vunpack.c.l.b16 %v7476
  %v7513 = vunpack.c.l.b16 %v7477
  %v7514 = vunpack.c.l.b16 %v7478
  %v7515 = vunpack.c.l.b16 %v7479
  %v7516 = vunpack.c.l.b16 %v7480
  %v7517 = vunpack.c.l.b16 %v7481
  %v7518 = vunpack.c.l.b16 %v7482
  %v7519 = vunpack.c.l.b16 %v7483
  %v7520 = vunpack.c.l.b16 %v7484
  %v7521 = vunpack.c.l.b16 %v7485
  %v7522 = vunpack.c.l.b16 %v7486
  %v7523 = vunpack.c.l.b16 %v7487
  %v7524 = vunpack.c.l.b16 %v7488
  %v7525 = vunpack.c.l.b16 %v7489
  %v7526 = vpack.c.b16 %v7509, %v7508
  %v7527 = vpack.c.b16 %v7511, %v7510
  %v7528 = vpack.c.b16 %v7513, %v7512
  %v7529 = vpack.c.b16 %v7515, %v7514
  %v7530 = vpack.c.b16 %v7517, %v7516
  %v7531 = vpack.c.b16 %v7519, %v7518
  %v7532 = vpack.c.b16 %v7521, %v7520
  %v7533 = vpack.c.b16 %v7523, %v7522
  %v7534 = vpack.c.b16 %v7525, %v7524
  %v7545 = vsel %vm6403, %v6208, 0
  %7547 = vmatprep.subr.bf16.mxu0 0
  %7548 = vmatpush1.bf16.msra.mxu0 %v7533
  %7549 = vmatprep.subr.bf16.mxu0 0
  %7550 = vmatpush1.bf16.msra.mxu0 %v7532
  %7551 = vmatprep.subr.bf16.mxu0 0
  %7552 = vmatpush1.bf16.msra.mxu0 %v7531
  %7553 = vmatprep.subr.bf16.mxu0 0
  %7554 = vmatpush1.bf16.msra.mxu0 %v7530
  %7555 = vmatprep.subr.bf16.mxu0 0
  %7556 = vmatpush1.bf16.msra.mxu0 %v7529
  %7557 = vmatprep.subr.bf16.mxu0 0
  %7558 = vmatpush1.bf16.msra.mxu0 %v7528
  %7559 = vmatprep.subr.bf16.mxu0 0
  %7560 = vmatpush1.bf16.msra.mxu0 %v7527
  %7561 = vmatprep.subr.bf16.mxu0 0
  %7562 = vmatpush1.bf16.msra.mxu0 %v7526
  %7563 = vmatprep.subr.bf16.mxu0 0
  %7564 = vmatpush2.bf16.msra.mxu0 0
  %7565 = vmatprep.subr.bf16.mxu0 0
  %7566 = vmatpush2.bf16.msra.mxu0 0
  %7567 = vmatprep.subr.bf16.mxu0 0
  %7568 = vmatpush2.bf16.msra.mxu0 0
  %7569 = vmatprep.subr.bf16.mxu0 0
  %7570 = vmatpush2.bf16.msra.mxu0 0
  %7571 = vmatprep.subr.bf16.mxu0 0
  %7572 = vmatpush2.bf16.msra.mxu0 0
  %7573 = vmatprep.subr.bf16.mxu0 0
  %7574 = vmatpush2.bf16.msra.mxu0 0
  %7575 = vmatprep.subr.bf16.mxu0 0
  %7576 = vmatpush2.bf16.msra.mxu0 0
  %7577 = vmatprep.subr.bf16.mxu0 0
  %7578 = vmatpush2.bf16.msra.mxu0 %v7534
  %7579 = vmatprep.mubr.bf16.mxu0 %v6638
  %7580 = vmatmul.mubr.bf16.gmra.mxu0 %v6179
  %v7581 = vpop.f32.mrf.mxu0
  %v7582 = vadd.f32 0.0, %v7581
  %v7583 = vpop.f32.mrf.mxu0
  %v7584 = vpop.f32.mrf.mxu0
  %v7585 = vpop.f32.mrf.mxu0
  %7586 = vmatprep.mubr.bf16.mxu0 %v6641
  %7587 = vmatmul.mubr.bf16.gmra.mxu0 %v6181
  %v7588 = vpop.f32.mrf.mxu0
  %v7589 = vpop.f32.mrf.mxu0
  %v7590 = vpop.f32.mrf.mxu0
  %v7591 = vpop.f32.mrf.mxu0
  %7592 = vmatprep.mubr.bf16.mxu0 %v6644
  %7593 = vmatmul.mubr.bf16.gmra.mxu0 %v6183
  %v7594 = vpop.f32.mrf.mxu0
  %v7595 = vadd.f32 0.0, %v7594
  %v7596 = vpop.f32.mrf.mxu0
  %v7597 = vpop.f32.mrf.mxu0
  %v7598 = vpop.f32.mrf.mxu0
  %7599 = vmatprep.mubr.bf16.mxu0 %v6647
  %7600 = vmatmul.mubr.bf16.gmra.mxu0 %v6185
  %v7601 = vpop.f32.mrf.mxu0
  %v7602 = vpop.f32.mrf.mxu0
  %v7603 = vpop.f32.mrf.mxu0
  %v7604 = vpop.f32.mrf.mxu0
  %7605 = vmatprep.mubr.bf16.mxu0 %v6650
  %7606 = vmatmul.mubr.bf16.gmra.mxu0 %v6187
  %v7607 = vpop.f32.mrf.mxu0
  %v7608 = vadd.f32 0.0, %v7607
  %v7609 = vpop.f32.mrf.mxu0
  %v7610 = vpop.f32.mrf.mxu0
  %v7611 = vpop.f32.mrf.mxu0
  %7612 = vmatprep.mubr.bf16.mxu0 %v6653
  %7613 = vmatmul.mubr.bf16.gmra.mxu0 %v6189
  %v7614 = vpop.f32.mrf.mxu0
  %v7615 = vpop.f32.mrf.mxu0
  %v7616 = vpop.f32.mrf.mxu0
  %v7617 = vpop.f32.mrf.mxu0
  %7618 = vmatprep.mubr.bf16.mxu0 %v6656
  %7619 = vmatmul.mubr.bf16.gmra.mxu0 %v6191
  %v7620 = vpop.f32.mrf.mxu0
  %v7621 = vadd.f32 0.0, %v7620
  %v7622 = vpop.f32.mrf.mxu0
  %v7623 = vpop.f32.mrf.mxu0
  %v7624 = vpop.f32.mrf.mxu0
  %7625 = vmatprep.mubr.bf16.mxu0 %v6659
  %7626 = vmatmul.mubr.bf16.gmra.mxu0 %v6193
  %v7627 = vpop.f32.mrf.mxu0
  %v7628 = vpop.f32.mrf.mxu0
  %v7629 = vpop.f32.mrf.mxu0
  %v7630 = vpop.f32.mrf.mxu0
  %7631 = vmatprep.mubr.bf16.mxu0 %v6662
  %7632 = vmatmul.mubr.bf16.gmra.mxu0 %v6195
  %v7633 = vpop.f32.mrf.mxu0
  %v7634 = vadd.f32 0.0, %v7633
  %v7635 = vpop.f32.mrf.mxu0
  %v7636 = vpop.f32.mrf.mxu0
  %v7637 = vpop.f32.mrf.mxu0
  %7638 = vmatprep.mubr.bf16.mxu0 %v6665
  %7639 = vmatmul.mubr.bf16.gmra.mxu0 %v6197
  %v7640 = vpop.f32.mrf.mxu0
  %v7641 = vpop.f32.mrf.mxu0
  %v7642 = vpop.f32.mrf.mxu0
  %v7643 = vpop.f32.mrf.mxu0
  %7644 = vmatprep.mubr.bf16.mxu0 %v6668
  %7645 = vmatmul.mubr.bf16.gmra.mxu0 %v6199
  %v7646 = vpop.f32.mrf.mxu0
  %v7647 = vadd.f32 0.0, %v7646
  %v7648 = vpop.f32.mrf.mxu0
  %v7649 = vpop.f32.mrf.mxu0
  %v7650 = vpop.f32.mrf.mxu0
  %7651 = vmatprep.mubr.bf16.mxu0 %v6671
  %7652 = vmatmul.mubr.bf16.gmra.mxu0 %v6201
  %v7653 = vpop.f32.mrf.mxu0
  %v7654 = vpop.f32.mrf.mxu0
  %v7655 = vpop.f32.mrf.mxu0
  %v7656 = vpop.f32.mrf.mxu0
  %7657 = vmatprep.mubr.bf16.mxu0 %v6674
  %7658 = vmatmul.mubr.bf16.gmra.mxu0 %v6203
  %v7659 = vpop.f32.mrf.mxu0
  %v7660 = vadd.f32 0.0, %v7659
  %v7661 = vpop.f32.mrf.mxu0
  %v7662 = vpop.f32.mrf.mxu0
  %v7663 = vpop.f32.mrf.mxu0
  %7664 = vmatprep.mubr.bf16.mxu0 %v6677
  %7665 = vmatmul.mubr.bf16.gmra.mxu0 %v6205
  %v7666 = vpop.f32.mrf.mxu0
  %v7667 = vpop.f32.mrf.mxu0
  %v7668 = vpop.f32.mrf.mxu0
  %v7669 = vpop.f32.mrf.mxu0
  %7670 = vmatprep.mubr.bf16.mxu0 %v7545
  %7671 = vmatmul.mubr.bf16.gmra.mxu0 %v6207
  %v7672 = vpop.f32.mrf.mxu0
  %v7673 = vadd.f32 0.0, %v7672
  %v7674 = vpop.f32.mrf.mxu0
  %v7675 = vpop.f32.mrf.mxu0
  %v7676 = vpop.f32.mrf.mxu0
  %7677 = vdwg.mxu0
  %v7678 = vadd.f32 %v7463, %v7582
  %v7679 = vadd.f32 %v7464, %v7595
  %v7680 = vadd.f32 %v7465, %v7608
  %v7681 = vadd.f32 %v7466, %v7621
  %v7682 = vadd.f32 %v7467, %v7634
  %v7683 = vadd.f32 %v7468, %v7647
  %v7684 = vadd.f32 %v7469, %v7660
  %v7685 = vadd.f32 %v7470, %v7673
  %v7687 = vrot.slane %v7679, 7
  %v7690 = vrot.slane %v7680, 6
  %v7693 = vrot.slane %v7681, 5
  %v7696 = vrot.slane %v7682, 4
  %v7699 = vrot.slane %v7683, 3
  %v7702 = vrot.slane %v7684, 2
  %v7705 = vrot.slane %v7685, 1
  %v7707 = vsel %vm3304, %v7678, %v7687
  %vm7708 = vcmask 1041408
  %v7709 = vsel %vm7708, %v7707, %v7690
  %vm7710 = vcmask 1042432
  %v7711 = vsel %vm7710, %v7709, %v7693
  %vm7712 = vcmask 1043456
  %v7713 = vsel %vm7712, %v7711, %v7696
  %vm7714 = vcmask 1044480
  %v7715 = vsel %vm7714, %v7713, %v7699
  %v7716 = vsel %vm5588, %v7715, %v7702
  %v7717 = vsel %vm2357, %v7716, %v7705
  %v7718 = vld [vmem:[%s6] sm:$0x1]
  %v7720 = vlaneseq
  %v7721 = vshrl.u32 %v7720, 7
  %v7722 = vsub.s32 0, %v7721
  %v7723 = vrot.slane %v7718, %v7722
  %v7725 = vadd.f32 %v7717, %v7723
  %v7726 = vmax.f32 %v7725, 0.0
  %v7727 = vpack.c.bf16 %v7726, %v7726
  %v7728 = vld [vmem:[%s7] sm:$0xf]
  %v7729 = vld [vmem:[%s7 + $0x4] sm:$0xf]
  %v7730 = vld [vmem:[%s7 + $0x8] sm:$0xf]
  %v7731 = vld [vmem:[%s7 + $0xc] sm:$0xf]
  %v7732 = vld [vmem:[%s7 + $0x10] sm:$0xf]
  %v7733 = vld [vmem:[%s7 + $0x14] sm:$0xf]
  %v7734 = vld [vmem:[%s7 + $0x18] sm:$0xf]
  %v7735 = vld [vmem:[%s7 + $0x1c] sm:$0xf]
  %v7736 = vld [vmem:[%s7 + $0x20] sm:$0xf]
  %v7737 = vld [vmem:[%s7 + $0x24] sm:$0xf]
  %v7738 = vld [vmem:[%s7 + $0x28] sm:$0xf]
  %v7739 = vld [vmem:[%s7 + $0x2c] sm:$0xf]
  %v7740 = vld [vmem:[%s7 + $0x30] sm:$0xf]
  %v7741 = vld [vmem:[%s7 + $0x34] sm:$0xf]
  %v7742 = vld [vmem:[%s7 + $0x38] sm:$0xf]
  %v7743 = vld [vmem:[%s7 + $0x3c] sm:$0xf]
  %v7744 = vld [vmem:[%s8] sm:$0x1]
  %v7746 = vlaneseq
  %v7747 = vshrl.u32 %v7746, 7
  %v7748 = vsub.s32 0, %v7747
  %v7749 = vrot.slane %v7744, %v7748
  %v7767 = vunpack.c.l.b16 %v7728
  %v7768 = vunpack.c.l.b16 %v7729
  %v7769 = vunpack.c.l.b16 %v7730
  %v7770 = vunpack.c.l.b16 %v7731
  %v7771 = vunpack.c.l.b16 %v7732
  %v7772 = vunpack.c.l.b16 %v7733
  %v7773 = vunpack.c.l.b16 %v7734
  %v7774 = vunpack.c.l.b16 %v7735
  %v7775 = vunpack.c.l.b16 %v7736
  %v7776 = vunpack.c.l.b16 %v7737
  %v7777 = vunpack.c.l.b16 %v7738
  %v7778 = vunpack.c.l.b16 %v7739
  %v7779 = vunpack.c.l.b16 %v7740
  %v7780 = vunpack.c.l.b16 %v7741
  %v7781 = vunpack.c.l.b16 %v7742
  %v7782 = vunpack.c.l.b16 %v7743
  %v7783 = vpack.c.b16 %v7768, %v7767
  %v7784 = vpack.c.b16 %v7770, %v7769
  %v7785 = vpack.c.b16 %v7772, %v7771
  %v7786 = vpack.c.b16 %v7774, %v7773
  %v7787 = vpack.c.b16 %v7776, %v7775
  %v7788 = vpack.c.b16 %v7778, %v7777
  %v7789 = vpack.c.b16 %v7780, %v7779
  %v7790 = vpack.c.b16 %v7782, %v7781
  %7799 = vmatprep.subr.bf16.mxu0 0
  %7800 = vmatpush1.bf16.msra.mxu0 %v7790
  %7801 = vmatprep.subr.bf16.mxu0 0
  %7802 = vmatpush1.bf16.msra.mxu0 %v7789
  %7803 = vmatprep.subr.bf16.mxu0 0
  %7804 = vmatpush1.bf16.msra.mxu0 %v7788
  %7805 = vmatprep.subr.bf16.mxu0 0
  %7806 = vmatpush1.bf16.msra.mxu0 %v7787
  %7807 = vmatprep.subr.bf16.mxu0 0
  %7808 = vmatpush1.bf16.msra.mxu0 %v7786
  %7809 = vmatprep.subr.bf16.mxu0 0
  %7810 = vmatpush1.bf16.msra.mxu0 %v7785
  %7811 = vmatprep.subr.bf16.mxu0 0
  %7812 = vmatpush1.bf16.msra.mxu0 %v7784
  %7813 = vmatprep.subr.bf16.mxu0 0
  %7814 = vmatpush1.bf16.msra.mxu0 %v7783
  %7815 = vmatprep.subr.bf16.mxu0 0
  %7816 = vmatpush2.bf16.msra.mxu0 0
  %7817 = vmatprep.subr.bf16.mxu0 0
  %7818 = vmatpush2.bf16.msra.mxu0 0
  %7819 = vmatprep.subr.bf16.mxu0 0
  %7820 = vmatpush2.bf16.msra.mxu0 0
  %7821 = vmatprep.subr.bf16.mxu0 0
  %7822 = vmatpush2.bf16.msra.mxu0 0
  %7823 = vmatprep.subr.bf16.mxu0 0
  %7824 = vmatpush2.bf16.msra.mxu0 0
  %7825 = vmatprep.subr.bf16.mxu0 0
  %7826 = vmatpush2.bf16.msra.mxu0 0
  %7827 = vmatprep.subr.bf16.mxu0 0
  %7828 = vmatpush2.bf16.msra.mxu0 0
  %7829 = vmatprep.subr.bf16.mxu0 0
  %7830 = vmatpush2.bf16.msra.mxu0 0
  %7831 = vmatprep.mubr.bf16.mxu0 0
  %7832 = vmatmul.mubr.bf16.gmra.mxu0 %v7727
  %v7833 = vpop.f32.mrf.mxu0
  %v7834 = vadd.f32 %v7749, %v7833
  %v7835 = vpop.f32.mrf.mxu0
  %v7836 = vpop.f32.mrf.mxu0
  %v7837 = vpop.f32.mrf.mxu0
  %7838 = vdwg.mxu0
  %v7839 = vmax.f32 %v7834, 0.0
  %v7840 = vpack.c.bf16 %v7839, %v7839
  %v7841 = vld [vmem:[%s9] sm:$0xf]
  %v7842 = vld [vmem:[%s9 + $0x4] sm:$0xf]
  %v7843 = vld [vmem:[%s9 + $0x8] sm:$0xf]
  %v7844 = vld [vmem:[%s9 + $0xc] sm:$0xf]
  %v7845 = vld [vmem:[%s9 + $0x10] sm:$0xf]
  %v7846 = vld [vmem:[%s9 + $0x14] sm:$0xf]
  %v7847 = vld [vmem:[%s9 + $0x18] sm:$0xf]
  %v7848 = vld [vmem:[%s9 + $0x1c] sm:$0xf]
  %v7849 = vld [vmem:[%s9 + $0x20] sm:$0xf]
  %v7850 = vld [vmem:[%s9 + $0x24] sm:$0xf]
  %v7851 = vld [vmem:[%s9 + $0x28] sm:$0xf]
  %v7852 = vld [vmem:[%s9 + $0x2c] sm:$0xf]
  %v7853 = vld [vmem:[%s9 + $0x30] sm:$0xf]
  %v7854 = vld [vmem:[%s9 + $0x34] sm:$0xf]
  %v7855 = vld [vmem:[%s9 + $0x38] sm:$0xf]
  %v7856 = vld [vmem:[%s9 + $0x3c] sm:$0xf]
  %v7857 = vld [vmem:[%s10] sm:$0x1]
  %v7859 = vlaneseq
  %v7860 = vshrl.u32 %v7859, 7
  %v7861 = vsub.s32 0, %v7860
  %v7862 = vrot.slane %v7857, %v7861
  %v7880 = vunpack.c.l.b16 %v7841
  %v7881 = vunpack.c.l.b16 %v7842
  %v7882 = vunpack.c.l.b16 %v7843
  %v7883 = vunpack.c.l.b16 %v7844
  %v7884 = vunpack.c.l.b16 %v7845
  %v7885 = vunpack.c.l.b16 %v7846
  %v7886 = vunpack.c.l.b16 %v7847
  %v7887 = vunpack.c.l.b16 %v7848
  %v7888 = vunpack.c.l.b16 %v7849
  %v7889 = vunpack.c.l.b16 %v7850
  %v7890 = vunpack.c.l.b16 %v7851
  %v7891 = vunpack.c.l.b16 %v7852
  %v7892 = vunpack.c.l.b16 %v7853
  %v7893 = vunpack.c.l.b16 %v7854
  %v7894 = vunpack.c.l.b16 %v7855
  %v7895 = vunpack.c.l.b16 %v7856
  %v7896 = vpack.c.b16 %v7881, %v7880
  %v7897 = vpack.c.b16 %v7883, %v7882
  %v7898 = vpack.c.b16 %v7885, %v7884
  %v7899 = vpack.c.b16 %v7887, %v7886
  %v7900 = vpack.c.b16 %v7889, %v7888
  %v7901 = vpack.c.b16 %v7891, %v7890
  %v7902 = vpack.c.b16 %v7893, %v7892
  %v7903 = vpack.c.b16 %v7895, %v7894
  %7912 = vmatprep.subr.bf16.mxu0 0
  %7913 = vmatpush1.bf16.msra.mxu0 %v7903
  %7914 = vmatprep.subr.bf16.mxu0 0
  %7915 = vmatpush1.bf16.msra.mxu0 %v7902
  %7916 = vmatprep.subr.bf16.mxu0 0
  %7917 = vmatpush1.bf16.msra.mxu0 %v7901
  %7918 = vmatprep.subr.bf16.mxu0 0
  %7919 = vmatpush1.bf16.msra.mxu0 %v7900
  %7920 = vmatprep.subr.bf16.mxu0 0
  %7921 = vmatpush1.bf16.msra.mxu0 %v7899
  %7922 = vmatprep.subr.bf16.mxu0 0
  %7923 = vmatpush1.bf16.msra.mxu0 %v7898
  %7924 = vmatprep.subr.bf16.mxu0 0
  %7925 = vmatpush1.bf16.msra.mxu0 %v7897
  %7926 = vmatprep.subr.bf16.mxu0 0
  %7927 = vmatpush1.bf16.msra.mxu0 %v7896
  %7928 = vmatprep.subr.bf16.mxu0 0
  %7929 = vmatpush2.bf16.msra.mxu0 0
  %7930 = vmatprep.subr.bf16.mxu0 0
  %7931 = vmatpush2.bf16.msra.mxu0 0
  %7932 = vmatprep.subr.bf16.mxu0 0
  %7933 = vmatpush2.bf16.msra.mxu0 0
  %7934 = vmatprep.subr.bf16.mxu0 0
  %7935 = vmatpush2.bf16.msra.mxu0 0
  %7936 = vmatprep.subr.bf16.mxu0 0
  %7937 = vmatpush2.bf16.msra.mxu0 0
  %7938 = vmatprep.subr.bf16.mxu0 0
  %7939 = vmatpush2.bf16.msra.mxu0 0
  %7940 = vmatprep.subr.bf16.mxu0 0
  %7941 = vmatpush2.bf16.msra.mxu0 0
  %7942 = vmatprep.subr.bf16.mxu0 0
  %7943 = vmatpush2.bf16.msra.mxu0 0
  %7944 = vmatprep.mubr.bf16.mxu0 0
  %7945 = vmatmul.mubr.bf16.gmra.mxu0 %v7840
  %v7946 = vpop.f32.mrf.mxu0
  %v7947 = vadd.f32 %v7862, %v7946
  %v7948 = vpop.f32.mrf.mxu0
  %v7949 = vpop.f32.mrf.mxu0
  %v7950 = vpop.f32.mrf.mxu0
  %7951 = vdwg.mxu0
  %7952 = vst [vmem:[%s11] sm:$0xff] %v7947
  // Predicated region
  $region46: #{net_forward.1} parent=0 // pred_check
    _
  $region47: #{net_forward.1} parent=0 // pred_check_branch
    %7954 = sbr.rel (0) target = $region49
  $region48: #{net_forward.1} parent=0 // pred_region
    _
  $region49: #{net_forward.1} parent=0 // pred_fallthru
    _
  // Predicated region
  $region50: #{net_forward.1} parent=0 // pred_check
    _
  $region51: #{net_forward.1} parent=0 // pred_check_branch
    %7956 = sbr.rel (0) target = $region53
  $region52: #{net_forward.1} parent=0 // pred_region
    _
  $region53: #{net_forward.1} parent=0 // pred_fallthru
    _

</llo_original>
